<compile_context>
chip_gen: v6e
topology: v6e:2x2x1
jax: 0.10.0
libtpu: 0.0.40
codegen_flags: <defaults>
</compile_context>

<pallas_src>
import functools

import jax
import jax.numpy as jnp
from jax import lax
from jax.experimental import pallas as pl
from jax.experimental.pallas import tpu as pltpu


LANE = 128

_CONV_CP = pltpu.CompilerParams(dimension_semantics=("parallel",),
                                vmem_limit_bytes=32 * 1024 * 1024)
_VQ_CP = pltpu.CompilerParams(vmem_limit_bytes=32 * 1024 * 1024)


def _rup(n, m=LANE):
    return ((n + m - 1) // m) * m


# --------------------------------------------------------------------------
# Pallas kernels
# --------------------------------------------------------------------------
def _conv1d_kernel(x_ref, w_ref, b_ref, o_ref, *, K, dil, t_out, relu, pre_relu):
    """Fused Conv1d: in-kernel im2col (K tap matmuls), bias, optional ReLUs."""
    x = x_ref[0]                                      # (Tp, Cin) f32
    if pre_relu:
        x = jnp.maximum(x, 0.0)
    acc = b_ref[...]                                  # (1, Cout) f32 -> broadcasts
    for k in range(K):
        tap = x[k * dil:k * dil + t_out, :].astype(jnp.bfloat16)
        acc = acc + jnp.dot(tap, w_ref[k], preferred_element_type=jnp.float32)
    if relu:
        acc = jnp.maximum(acc, 0.0)
    o_ref[0] = acc


def _resblock_kernel(x_ref, w1_ref, b1_ref, w2_ref, b2_ref, o_ref, *, dil, t_out):
    """Fused ResConv1DBlock: relu -> dilated K=3 conv -> relu -> 1x1 conv -> +x."""
    x = x_ref[0]                                      # (t_out + 2*dil, C) f32
    xr = jnp.maximum(x, 0.0)                          # pre-activation ReLU
    h = b1_ref[...]
    for k in range(3):
        tap = xr[k * dil:k * dil + t_out, :].astype(jnp.bfloat16)
        h = h + jnp.dot(tap, w1_ref[k], preferred_element_type=jnp.float32)
    h = jnp.maximum(h, 0.0).astype(jnp.bfloat16)
    out = b2_ref[...] + jnp.dot(h, w2_ref[0], preferred_element_type=jnp.float32)
    o_ref[0] = out + x[dil:dil + t_out, :]            # residual add (f32)


def _upconv_kernel(x_ref, we_ref, wo_ref, b_ref, oe_ref, oo_ref, *, t_out):
    """Fused nearest x2 upsample + Conv1d(K=3, pad=1): even/odd output phases."""
    x = x_ref[0]                                      # (t_out + 2, Cin) f32
    b = b_ref[...]
    x0 = x[0:t_out, :].astype(jnp.bfloat16)
    x1 = x[1:1 + t_out, :].astype(jnp.bfloat16)
    x2 = x[2:2 + t_out, :].astype(jnp.bfloat16)
    ye = (b + jnp.dot(x0, we_ref[0], preferred_element_type=jnp.float32)
            + jnp.dot(x1, we_ref[1], preferred_element_type=jnp.float32))
    yo = (b + jnp.dot(x1, wo_ref[0], preferred_element_type=jnp.float32)
            + jnp.dot(x2, wo_ref[1], preferred_element_type=jnp.float32))
    oe_ref[0] = ye
    oo_ref[0] = yo


def _vq_kernel(x_ref, cbt_ref, c2_ref, cb_ref, xd_ref, idx_ref, cnt_ref):
    """Nearest-code search (first index on ties), dequantize and code counts."""
    x = x_ref[...]                                    # (M, Dp) f32
    # ||x||^2 is constant along the codebook axis -> dropped (argmin unchanged).
    dist = c2_ref[...] - 2.0 * jnp.dot(x, cbt_ref[...],
                                       preferred_element_type=jnp.float32)
    min_d = jnp.min(dist, axis=-1, keepdims=True)
    ids = lax.broadcasted_iota(jnp.int32, dist.shape, 1)
    idx = jnp.min(jnp.where(dist <= min_d, ids, jnp.int32(2147483647)),
                  axis=-1, keepdims=True)             # (M, 1)
    onehot = (ids == idx).astype(jnp.float32)         # exact one-hot (tie-broken)
    xd_ref[...] = jnp.dot(onehot, cb_ref[...], preferred_element_type=jnp.float32)
    idx_ref[...] = idx
    cnt_ref[...] = jnp.sum(onehot, axis=0, keepdims=True)


# --------------------------------------------------------------------------
# Kernel wrappers
# --------------------------------------------------------------------------
def conv1d(x, p, *, dil=1, pad=0, relu=False, pre_relu=False):
    """x: (N, T, Cin_pad) f32.  p['w']: (K, Cin_pad, Cout_pad) bf16, p['b']: (1, Cout_pad) f32."""
    N, T, Cin = x.shape
    K, Cin_w, Cout = p["w"].shape
    assert Cin == Cin_w
    if pad:
        x = jnp.pad(x, ((0, 0), (pad, pad), (0, 0)))
    Tp = T + 2 * pad
    t_out = Tp - dil * (K - 1)
    kernel = functools.partial(_conv1d_kernel, K=K, dil=dil, t_out=t_out,
                               relu=relu, pre_relu=pre_relu)
    return pl.pallas_call(
        kernel,
        grid=(N,),
        in_specs=[pl.BlockSpec((1, Tp, Cin), lambda n: (n, 0, 0)),
                  pl.BlockSpec((K, Cin, Cout), lambda n: (0, 0, 0)),
                  pl.BlockSpec((1, Cout), lambda n: (0, 0))],
        out_specs=pl.BlockSpec((1, t_out, Cout), lambda n: (n, 0, 0)),
        out_shape=jax.ShapeDtypeStruct((N, t_out, Cout), jnp.float32),
        compiler_params=_CONV_CP,
    )(x, p["w"], p["b"])


def resblock(x, p, dil):
    N, T, C = x.shape
    xpad = jnp.pad(x, ((0, 0), (dil, dil), (0, 0)))
    Tp = T + 2 * dil
    kernel = functools.partial(_resblock_kernel, dil=dil, t_out=T)
    return pl.pallas_call(
        kernel,
        grid=(N,),
        in_specs=[pl.BlockSpec((1, Tp, C), lambda n: (n, 0, 0)),
                  pl.BlockSpec((3, C, C), lambda n: (0, 0, 0)),
                  pl.BlockSpec((1, C), lambda n: (0, 0)),
                  pl.BlockSpec((1, C, C), lambda n: (0, 0, 0)),
                  pl.BlockSpec((1, C), lambda n: (0, 0))],
        out_specs=pl.BlockSpec((1, T, C), lambda n: (n, 0, 0)),
        out_shape=jax.ShapeDtypeStruct((N, T, C), jnp.float32),
        compiler_params=_CONV_CP,
    )(xpad, p["conv1"]["w"], p["conv1"]["b"], p["conv2"]["w"], p["conv2"]["b"])


def down_conv(x, p):
    """Conv1d(K=4, stride=2, pad=1) via phase-packing: reshape (N,T,C)->(N,T/2,2C)
    (a free row-major view) + K=3 stride-1 conv with pre-packed weights."""
    N, T, C = x.shape
    u = x.reshape(N, T // 2, 2 * C)
    return conv1d(u, p, pad=1)


def up_conv(x, p):
    """Fused nn.Upsample(x2, nearest) + Conv1d(K=3, pad=1)."""
    N, T, Cin = x.shape
    Cout = p["we"].shape[2]
    xpad = jnp.pad(x, ((0, 0), (1, 1), (0, 0)))
    kernel = functools.partial(_upconv_kernel, t_out=T)
    ye, yo = pl.pallas_call(
        kernel,
        grid=(N,),
        in_specs=[pl.BlockSpec((1, T + 2, Cin), lambda n: (n, 0, 0)),
                  pl.BlockSpec((2, Cin, Cout), lambda n: (0, 0, 0)),
                  pl.BlockSpec((2, Cin, Cout), lambda n: (0, 0, 0)),
                  pl.BlockSpec((1, Cout), lambda n: (0, 0))],
        out_specs=(pl.BlockSpec((1, T, Cout), lambda n: (n, 0, 0)),
                   pl.BlockSpec((1, T, Cout), lambda n: (n, 0, 0))),
        out_shape=(jax.ShapeDtypeStruct((N, T, Cout), jnp.float32),
                   jax.ShapeDtypeStruct((N, T, Cout), jnp.float32)),
        compiler_params=_CONV_CP,
    )(xpad, p["we"], p["wo"], p["b"])
    # interleave even/odd output phases -> (N, 2T, C)
    return jnp.stack([ye, yo], axis=2).reshape(N, 2 * T, Cout)


def vq_quantize(xf, q):
    """xf: (M, Dp) f32.  Returns dequantized (M, Dp), indices (M,), counts (nbp,)."""
    M, Dp = xf.shape
    nbp = q["cbt"].shape[1]
    xd, idx, cnt = pl.pallas_call(
        _vq_kernel,
        out_shape=(jax.ShapeDtypeStruct((M, Dp), jnp.float32),
                   jax.ShapeDtypeStruct((M, 1), jnp.int32),
                   jax.ShapeDtypeStruct((1, nbp), jnp.float32)),
        compiler_params=_VQ_CP,
    )(xf, q["cbt"], q["c2"], q["cb"])
    return xd, idx[:, 0], cnt[0]


# --------------------------------------------------------------------------
# Parameter init (deterministic synthetic weights, pre-packed kernel layouts)
# --------------------------------------------------------------------------
class _KeyGen:
    def __init__(self, key):
        self.key = key

    def __call__(self):
        self.key, sub = jax.random.split(self.key)
        return sub


def _conv_params(kg, cin, cout, K):
    cip, cop = _rup(cin), _rup(cout)
    scale = 1.0 / float(cin * K) ** 0.5
    w = jax.random.normal(kg(), (K, cin, cout), jnp.float32) * scale
    wp = jnp.zeros((K, cip, cop), jnp.bfloat16).at[:, :cin, :cout].set(
        w.astype(jnp.bfloat16))
    b = jax.random.normal(kg(), (cout,), jnp.float32) * 0.01
    bp = jnp.zeros((1, cop), jnp.float32).at[0, :cout].set(b)
    return {"w": wp, "b": bp}


def _down_conv_params(kg, c):
    """Conv1d(c, c, K=4, stride=2, pad=1) repacked for the phase-packed K=3 conv."""
    cp = _rup(c)
    scale = 1.0 / float(c * 4) ** 0.5
    w = jax.random.normal(kg(), (4, c, c), jnp.float32) * scale   # per-tap (cin, cout)
    wb = w.astype(jnp.bfloat16)
    wp = jnp.zeros((3, 2 * cp, cp), jnp.bfloat16)
    wp = wp.at[0, cp:cp + c, :c].set(wb[0])   # u[t-1] odd phase  <- tap 0
    wp = wp.at[1, :c, :c].set(wb[1])          # u[t]   even phase <- tap 1
    wp = wp.at[1, cp:cp + c, :c].set(wb[2])   # u[t]   odd phase  <- tap 2
    wp = wp.at[2, :c, :c].set(wb[3])          # u[t+1] even phase <- tap 3
    b = jax.random.normal(kg(), (c,), jnp.float32) * 0.01
    bp = jnp.zeros((1, cp), jnp.float32).at[0, :c].set(b)
    return {"w": wp, "b": bp}


def _up_conv_params(kg, cin, cout):
    """Upsample(x2) + Conv1d(K=3, pad=1), pre-folded into even/odd phase weights."""
    cip, cop = _rup(cin), _rup(cout)
    scale = 1.0 / float(cin * 3) ** 0.5
    w = jax.random.normal(kg(), (3, cin, cout), jnp.float32) * scale
    we = jnp.stack([w[0], w[1] + w[2]], axis=0)        # even outputs: xp[t], xp[t+1]
    wo = jnp.stack([w[0] + w[1], w[2]], axis=0)        # odd  outputs: xp[t+1], xp[t+2]
    wep = jnp.zeros((2, cip, cop), jnp.bfloat16).at[:, :cin, :cout].set(
        we.astype(jnp.bfloat16))
    wop = jnp.zeros((2, cip, cop), jnp.bfloat16).at[:, :cin, :cout].set(
        wo.astype(jnp.bfloat16))
    b = jax.random.normal(kg(), (cout,), jnp.float32) * 0.01
    bp = jnp.zeros((1, cop), jnp.float32).at[0, :cout].set(b)
    return {"we": wep, "wo": wop, "b": bp}


def _codebook_params(kg, nb, dim):
    nbp, dp = _rup(nb), _rup(dim)
    cb = jax.random.normal(kg(), (nb, dim), jnp.float32)
    cb_p = jnp.zeros((nbp, dp), jnp.float32).at[:nb, :dim].set(cb)
    c2 = jnp.sum(cb * cb, axis=-1)
    c2_p = jnp.full((1, nbp), 1e30, jnp.float32).at[0, :nb].set(c2)  # mask padded codes
    return {"cb": cb_p, "cbt": jnp.transpose(cb_p), "c2": c2_p}


def init_params(key, *, nfeats, nb_code, code_dim, output_emb_width, width,
                down_t, depth):
    assert code_dim == output_emb_width
    kg = _KeyGen(key)

    def res_stack():
        return [{"conv1": _conv_params(kg, width, width, 3),
                 "conv2": _conv_params(kg, width, width, 1)} for _ in range(depth)]

    enc = {"conv_in": _conv_params(kg, nfeats, width, 3),
           "downs": [{"down": _down_conv_params(kg, width), "res": res_stack()}
                     for _ in range(down_t)],
           "conv_out": _conv_params(kg, width, output_emb_width, 3)}
    dec = {"conv_in": _conv_params(kg, output_emb_width, width, 3),
           "ups": [{"res": res_stack(), "up": _up_conv_params(kg, width, width)}
                   for _ in range(down_t)],
           "conv_mid": _conv_params(kg, width, width, 3),
           "conv_out": _conv_params(kg, width, nfeats, 3)}
    quant = _codebook_params(kg, nb_code, code_dim)
    return {"enc": enc, "dec": dec, "quant": quant}


# --------------------------------------------------------------------------
# Model forward (all conv / VQ compute runs in the Pallas kernels)
# --------------------------------------------------------------------------
def encoder_fwd(p, x, depth, dgr):
    x = conv1d(x, p["conv_in"], pad=1, relu=True)
    dils = [dgr ** i for i in range(depth)][::-1]      # reverse_dilation (T2M-GPT default)
    for blk in p["downs"]:
        x = down_conv(x, blk["down"])
        for rb, d in zip(blk["res"], dils):
            x = resblock(x, rb, d)
    x = conv1d(x, p["conv_out"], pad=1)
    return x


def decoder_fwd(p, x, depth, dgr):
    x = conv1d(x, p["conv_in"], pad=1, relu=True)
    dils = [dgr ** i for i in range(depth)][::-1]
    for blk in p["ups"]:
        for rb, d in zip(blk["res"], dils):
            x = resblock(x, rb, d)
        x = up_conv(x, blk["up"])
    x = conv1d(x, p["conv_mid"], pad=1, relu=True)
    x = conv1d(x, p["conv_out"], pad=1)
    return x


def quantizer_fwd(q, x, code_dim, nb_code):
    """Eval-mode QuantizeEMAReset: straight-through quantize + losses + perplexity."""
    N, T, Dp = x.shape
    xf = x.reshape(N * T, Dp)
    xd, _idx, cnt = vq_quantize(xf, q)
    denom = jnp.float32(N * T * code_dim)              # padded channel diffs are 0
    d1 = xf - lax.stop_gradient(xd)
    d2 = lax.stop_gradient(xf) - xd
    commit_x = jnp.sum(d1 * d1) / denom                # F.mse_loss(x, x_d.detach())
    commit_x_d = jnp.sum(d2 * d2) / denom              # F.mse_loss(x.detach(), x_d)
    prob = cnt[:nb_code] / jnp.float32(N * T)
    perplexity = jnp.exp(-jnp.sum(prob * jnp.log(prob + 1e-7)))
    x_st = xf + lax.stop_gradient(xd - xf)             # straight-through
    return x_st.reshape(N, T, Dp), (commit_x, commit_x_d), perplexity


def spatial_transformer_human_vqvae_forward(params, x, *, code_dim, nb_code,
                                            depth, dgr):
    """x: (N, T, nfeats) -> (x_out, (commit_x, commit_x_d), perplexity)."""
    N, T, F = x.shape
    Fp = _rup(F)
    # preprocess: channels-last kept; pad channels to the 128-lane width once.
    xp = jnp.pad(x.astype(jnp.float32), ((0, 0), (0, 0), (0, Fp - F)))
    x_enc = encoder_fwd(params["enc"], xp, depth, dgr)
    x_q, (commit_x, commit_x_d), perplexity = quantizer_fwd(
        params["quant"], x_enc, code_dim, nb_code)
    x_dec = decoder_fwd(params["dec"], x_q, depth, dgr)
    x_out = x_dec[:, :, :F]                            # postprocess -> (N, T, nfeats)
    return x_out, (commit_x, commit_x_d), perplexity


# --------------------------------------------------------------------------
if __name__ == "__main__":
    # small demo config (T divisible by 2**down_t)
    N, T = 2, 32
    nfeats = 8
    width = 32
    output_emb_width = code_dim = 32
    nb_code = 64
    down_t, depth, dgr = 2, 2, 3

    key = jax.random.PRNGKey(0)
    kp, kx = jax.random.split(key)
    params = init_params(kp, nfeats=nfeats, nb_code=nb_code, code_dim=code_dim,
                         output_emb_width=output_emb_width, width=width,
                         down_t=down_t, depth=depth)
    x = jax.random.normal(kx, (N, T, nfeats), jnp.float32)

    fwd = jax.jit(functools.partial(
        spatial_transformer_human_vqvae_forward,
        code_dim=code_dim, nb_code=nb_code, depth=depth, dgr=dgr))
    x_out, (commit_x, commit_x_d), perplexity = fwd(params, x)
    jax.block_until_ready((x_out, commit_x, commit_x_d, perplexity))

    assert x_out.shape == (N, T, nfeats)
    assert commit_x.shape == () and commit_x_d.shape == () and perplexity.shape == ()
    assert bool(jnp.isfinite(x_out).all())
    assert bool(jnp.isfinite(commit_x)) and bool(jnp.isfinite(perplexity))
    print("KERNEL_OK")
</pallas_src>

<mosaic_0001>
module attributes {stable_mosaic.version = 11 : i64} {
  func.func @_conv1d_kernel(%arg0: i32, %arg1: memref<1x34x128xf32, #tpu.memory_space<vmem>>, %arg2: memref<3x128x128xbf16, #tpu.memory_space<vmem>>, %arg3: memref<1x128xf32, #tpu.memory_space<vmem>>, %arg4: memref<1x32x128xf32, #tpu.memory_space<vmem>>) attributes {dimension_semantics = [#tpu.dimension_semantics<parallel>], iteration_bounds = array<i64: 2>, scalar_prefetch = 0 : i64, scratch_operands = 0 : i64, tpu.core_type = #tpu.core_type<tc>, window_params = [{transform_indices = @transform_0, window_bounds = array<i64: 1, 34, 128>}, {pipeline_mode = #tpu.pipeline_mode<synchronous>, transform_indices = @transform_1, window_bounds = array<i64: 3, 128, 128>}, {pipeline_mode = #tpu.pipeline_mode<synchronous>, transform_indices = @transform_2, window_bounds = array<i64: 1, 128>}, {transform_indices = @transform_3, window_bounds = array<i64: 1, 32, 128>}]} {
    %c0 = arith.constant 0 : index
    %c0_0 = arith.constant 0 : index
    %c0_1 = arith.constant 0 : index
    %0 = vector.load %arg1[%c0, %c0_0, %c0_1] : memref<1x34x128xf32, #tpu.memory_space<vmem>>, vector<1x34x128xf32>
    %1 = vector.shape_cast %0 : vector<1x34x128xf32> to vector<34x128xf32>
    %c0_2 = arith.constant 0 : index
    %c0_3 = arith.constant 0 : index
    %2 = vector.load %arg3[%c0_2, %c0_3] : memref<1x128xf32, #tpu.memory_space<vmem>>, vector<1x128xf32>
    %3 = vector.extract_strided_slice %1 {offsets = [0, 0], sizes = [32, 128], strides = [1, 1]} : vector<34x128xf32> to vector<32x128xf32>
    %4 = arith.truncf %3 : vector<32x128xf32> to vector<32x128xbf16>
    %c0_4 = arith.constant 0 : index
    %c0_5 = arith.constant 0 : index
    %c0_6 = arith.constant 0 : index
    %5 = vector.load %arg2[%c0_4, %c0_5, %c0_6] : memref<3x128x128xbf16, #tpu.memory_space<vmem>>, vector<1x128x128xbf16>
    %6 = vector.shape_cast %5 : vector<1x128x128xbf16> to vector<128x128xbf16>
    %cst = arith.constant dense<0.000000e+00> : vector<32x128xf32>
    %7 = tpu.matmul %4, %6, %cst {dimension_numbers = #tpu.dot_dimension_numbers<[1], [0], [0], [1], [0, 0, 1, 1], [], []>} : vector<32x128xbf16>, vector<128x128xbf16>, vector<32x128xf32> -> vector<32x128xf32>
    %8 = vector.broadcast %2 : vector<1x128xf32> to vector<32x128xf32>
    %9 = arith.addf %8, %7 : vector<32x128xf32>
    %10 = vector.extract_strided_slice %1 {offsets = [1, 0], sizes = [32, 128], strides = [1, 1]} : vector<34x128xf32> to vector<32x128xf32>
    %11 = arith.truncf %10 : vector<32x128xf32> to vector<32x128xbf16>
    %c1 = arith.constant 1 : index
    %c0_7 = arith.constant 0 : index
    %c0_8 = arith.constant 0 : index
    %12 = vector.load %arg2[%c1, %c0_7, %c0_8] : memref<3x128x128xbf16, #tpu.memory_space<vmem>>, vector<1x128x128xbf16>
    %13 = vector.shape_cast %12 : vector<1x128x128xbf16> to vector<128x128xbf16>
    %cst_9 = arith.constant dense<0.000000e+00> : vector<32x128xf32>
    %14 = tpu.matmul %11, %13, %cst_9 {dimension_numbers = #tpu.dot_dimension_numbers<[1], [0], [0], [1], [0, 0, 1, 1], [], []>} : vector<32x128xbf16>, vector<128x128xbf16>, vector<32x128xf32> -> vector<32x128xf32>
    %15 = arith.addf %9, %14 : vector<32x128xf32>
    %16 = vector.extract_strided_slice %1 {offsets = [2, 0], sizes = [32, 128], strides = [1, 1]} : vector<34x128xf32> to vector<32x128xf32>
    %17 = arith.truncf %16 : vector<32x128xf32> to vector<32x128xbf16>
    %c2 = arith.constant 2 : index
    %c0_10 = arith.constant 0 : index
    %c0_11 = arith.constant 0 : index
    %18 = vector.load %arg2[%c2, %c0_10, %c0_11] : memref<3x128x128xbf16, #tpu.memory_space<vmem>>, vector<1x128x128xbf16>
    %19 = vector.shape_cast %18 : vector<1x128x128xbf16> to vector<128x128xbf16>
    %cst_12 = arith.constant dense<0.000000e+00> : vector<32x128xf32>
    %20 = tpu.matmul %17, %19, %cst_12 {dimension_numbers = #tpu.dot_dimension_numbers<[1], [0], [0], [1], [0, 0, 1, 1], [], []>} : vector<32x128xbf16>, vector<128x128xbf16>, vector<32x128xf32> -> vector<32x128xf32>
    %21 = arith.addf %15, %20 : vector<32x128xf32>
    %cst_13 = arith.constant 0.000000e+00 : f32
    %22 = vector.broadcast %cst_13 : f32 to vector<32x128xf32>
    %23 = arith.maximumf %21, %22 : vector<32x128xf32>
    %c0_14 = arith.constant 0 : index
    %c0_15 = arith.constant 0 : index
    %c0_16 = arith.constant 0 : index
    %24 = vector.load %arg4[%c0_14, %c0_15, %c0_16] : memref<1x32x128xf32, #tpu.memory_space<vmem>>, vector<1x32x128xf32>
    %25 = vector.shape_cast %24 : vector<1x32x128xf32> to vector<32x128xf32>
    %26 = vector.shape_cast %23 : vector<32x128xf32> to vector<1x32x128xf32>
    tpu.vector_store %arg4[%c0_14, %c0_15, %c0_16], %26 {strides = array<i32>} : memref<1x32x128xf32, #tpu.memory_space<vmem>>, vector<1x32x128xf32>,
    return
  }
  func.func @transform_0(%arg0: i32) -> (i32, i32, i32) {
    %c0_i32 = arith.constant 0 : i32
    %c0_i32_0 = arith.constant 0 : i32
    %c0_i32_1 = arith.constant 0 : i32
    return %arg0, %c0_i32, %c0_i32_0 : i32, i32, i32
  }
  func.func @transform_1(%arg0: i32) -> (i32, i32, i32) {
    %c0_i32 = arith.constant 0 : i32
    %c0_i32_0 = arith.constant 0 : i32
    %c0_i32_1 = arith.constant 0 : i32
    %c0_i32_2 = arith.constant 0 : i32
    return %c0_i32, %c0_i32_0, %c0_i32_1 : i32, i32, i32
  }
  func.func @transform_2(%arg0: i32) -> (i32, i32) {
    %c0_i32 = arith.constant 0 : i32
    %c0_i32_0 = arith.constant 0 : i32
    %c0_i32_1 = arith.constant 0 : i32
    return %c0_i32, %c0_i32_0 : i32, i32
  }
  func.func @transform_3(%arg0: i32) -> (i32, i32, i32) {
    %c0_i32 = arith.constant 0 : i32
    %c0_i32_0 = arith.constant 0 : i32
    %c0_i32_1 = arith.constant 0 : i32
    return %arg0, %c0_i32, %c0_i32_0 : i32, i32, i32
  }
}

module attributes {stable_mosaic.version = 11 : i64} {
  func.func @_resblock_kernel(%arg0: i32, %arg1: memref<1x22x128xf32, #tpu.memory_space<vmem>>, %arg2: memref<3x128x128xbf16, #tpu.memory_space<vmem>>, %arg3: memref<1x128xf32, #tpu.memory_space<vmem>>, %arg4: memref<1x128x128xbf16, #tpu.memory_space<vmem>>, %arg5: memref<1x128xf32, #tpu.memory_space<vmem>>, %arg6: memref<1x16x128xf32, #tpu.memory_space<vmem>>) attributes {dimension_semantics = [#tpu.dimension_semantics<parallel>], iteration_bounds = array<i64: 2>, scalar_prefetch = 0 : i64, scratch_operands = 0 : i64, tpu.core_type = #tpu.core_type<tc>, window_params = [{transform_indices = @transform_0, window_bounds = array<i64: 1, 22, 128>}, {pipeline_mode = #tpu.pipeline_mode<synchronous>, transform_indices = @transform_1, window_bounds = array<i64: 3, 128, 128>}, {pipeline_mode = #tpu.pipeline_mode<synchronous>, transform_indices = @transform_2, window_bounds = array<i64: 1, 128>}, {pipeline_mode = #tpu.pipeline_mode<synchronous>, transform_indices = @transform_3, window_bounds = array<i64: 1, 128, 128>}, {pipeline_mode = #tpu.pipeline_mode<synchronous>, transform_indices = @transform_4, window_bounds = array<i64: 1, 128>}, {transform_indices = @transform_5, window_bounds = array<i64: 1, 16, 128>}]} {
    %c0 = arith.constant 0 : index
    %c0_0 = arith.constant 0 : index
    %c0_1 = arith.constant 0 : index
    %0 = vector.load %arg1[%c0, %c0_0, %c0_1] : memref<1x22x128xf32, #tpu.memory_space<vmem>>, vector<1x22x128xf32>
    %1 = vector.shape_cast %0 : vector<1x22x128xf32> to vector<22x128xf32>
    %cst = arith.constant 0.000000e+00 : f32
    %2 = vector.broadcast %cst : f32 to vector<22x128xf32>
    %3 = arith.maximumf %1, %2 : vector<22x128xf32>
    %c0_2 = arith.constant 0 : index
    %c0_3 = arith.constant 0 : index
    %4 = vector.load %arg3[%c0_2, %c0_3] : memref<1x128xf32, #tpu.memory_space<vmem>>, vector<1x128xf32>
    %5 = vector.extract_strided_slice %3 {offsets = [0, 0], sizes = [16, 128], strides = [1, 1]} : vector<22x128xf32> to vector<16x128xf32>
    %6 = arith.truncf %5 : vector<16x128xf32> to vector<16x128xbf16>
    %c0_4 = arith.constant 0 : index
    %c0_5 = arith.constant 0 : index
    %c0_6 = arith.constant 0 : index
    %7 = vector.load %arg2[%c0_4, %c0_5, %c0_6] : memref<3x128x128xbf16, #tpu.memory_space<vmem>>, vector<1x128x128xbf16>
    %8 = vector.shape_cast %7 : vector<1x128x128xbf16> to vector<128x128xbf16>
    %cst_7 = arith.constant dense<0.000000e+00> : vector<16x128xf32>
    %9 = tpu.matmul %6, %8, %cst_7 {dimension_numbers = #tpu.dot_dimension_numbers<[1], [0], [0], [1], [0, 0, 1, 1], [], []>} : vector<16x128xbf16>, vector<128x128xbf16>, vector<16x128xf32> -> vector<16x128xf32>
    %10 = vector.broadcast %4 : vector<1x128xf32> to vector<16x128xf32>
    %11 = arith.addf %10, %9 : vector<16x128xf32>
    %12 = vector.extract_strided_slice %3 {offsets = [3, 0], sizes = [16, 128], strides = [1, 1]} : vector<22x128xf32> to vector<16x128xf32>
    %13 = arith.truncf %12 : vector<16x128xf32> to vector<16x128xbf16>
    %c1 = arith.constant 1 : index
    %c0_8 = arith.constant 0 : index
    %c0_9 = arith.constant 0 : index
    %14 = vector.load %arg2[%c1, %c0_8, %c0_9] : memref<3x128x128xbf16, #tpu.memory_space<vmem>>, vector<1x128x128xbf16>
    %15 = vector.shape_cast %14 : vector<1x128x128xbf16> to vector<128x128xbf16>
    %cst_10 = arith.constant dense<0.000000e+00> : vector<16x128xf32>
    %16 = tpu.matmul %13, %15, %cst_10 {dimension_numbers = #tpu.dot_dimension_numbers<[1], [0], [0], [1], [0, 0, 1, 1], [], []>} : vector<16x128xbf16>, vector<128x128xbf16>, vector<16x128xf32> -> vector<16x128xf32>
    %17 = arith.addf %11, %16 : vector<16x128xf32>
    %18 = vector.extract_strided_slice %3 {offsets = [6, 0], sizes = [16, 128], strides = [1, 1]} : vector<22x128xf32> to vector<16x128xf32>
    %19 = arith.truncf %18 : vector<16x128xf32> to vector<16x128xbf16>
    %c2 = arith.constant 2 : index
    %c0_11 = arith.constant 0 : index
    %c0_12 = arith.constant 0 : index
    %20 = vector.load %arg2[%c2, %c0_11, %c0_12] : memref<3x128x128xbf16, #tpu.memory_space<vmem>>, vector<1x128x128xbf16>
    %21 = vector.shape_cast %20 : vector<1x128x128xbf16> to vector<128x128xbf16>
    %cst_13 = arith.constant dense<0.000000e+00> : vector<16x128xf32>
    %22 = tpu.matmul %19, %21, %cst_13 {dimension_numbers = #tpu.dot_dimension_numbers<[1], [0], [0], [1], [0, 0, 1, 1], [], []>} : vector<16x128xbf16>, vector<128x128xbf16>, vector<16x128xf32> -> vector<16x128xf32>
    %23 = arith.addf %17, %22 : vector<16x128xf32>
    %cst_14 = arith.constant 0.000000e+00 : f32
    %24 = vector.broadcast %cst_14 : f32 to vector<16x128xf32>
    %25 = arith.maximumf %23, %24 : vector<16x128xf32>
    %26 = arith.truncf %25 : vector<16x128xf32> to vector<16x128xbf16>
    %c0_15 = arith.constant 0 : index
    %c0_16 = arith.constant 0 : index
    %27 = vector.load %arg5[%c0_15, %c0_16] : memref<1x128xf32, #tpu.memory_space<vmem>>, vector<1x128xf32>
    %c0_17 = arith.constant 0 : index
    %c0_18 = arith.constant 0 : index
    %c0_19 = arith.constant 0 : index
    %28 = vector.load %arg4[%c0_17, %c0_18, %c0_19] : memref<1x128x128xbf16, #tpu.memory_space<vmem>>, vector<1x128x128xbf16>
    %29 = vector.shape_cast %28 : vector<1x128x128xbf16> to vector<128x128xbf16>
    %cst_20 = arith.constant dense<0.000000e+00> : vector<16x128xf32>
    %30 = tpu.matmul %26, %29, %cst_20 {dimension_numbers = #tpu.dot_dimension_numbers<[1], [0], [0], [1], [0, 0, 1, 1], [], []>} : vector<16x128xbf16>, vector<128x128xbf16>, vector<16x128xf32> -> vector<16x128xf32>
    %31 = vector.broadcast %27 : vector<1x128xf32> to vector<16x128xf32>
    %32 = arith.addf %31, %30 : vector<16x128xf32>
    %33 = vector.extract_strided_slice %1 {offsets = [3, 0], sizes = [16, 128], strides = [1, 1]} : vector<22x128xf32> to vector<16x128xf32>
    %34 = arith.addf %32, %33 : vector<16x128xf32>
    %c0_21 = arith.constant 0 : index
    %c0_22 = arith.constant 0 : index
    %c0_23 = arith.constant 0 : index
    %35 = vector.load %arg6[%c0_21, %c0_22, %c0_23] : memref<1x16x128xf32, #tpu.memory_space<vmem>>, vector<1x16x128xf32>
    %36 = vector.shape_cast %35 : vector<1x16x128xf32> to vector<16x128xf32>
    %37 = vector.shape_cast %34 : vector<16x128xf32> to vector<1x16x128xf32>
    tpu.vector_store %arg6[%c0_21, %c0_22, %c0_23], %37 {strides = array<i32>} : memref<1x16x128xf32, #tpu.memory_space<vmem>>, vector<1x16x128xf32>,
    return
  }
  func.func @transform_0(%arg0: i32) -> (i32, i32, i32) {
    %c0_i32 = arith.constant 0 : i32
    %c0_i32_0 = arith.constant 0 : i32
    %c0_i32_1 = arith.constant 0 : i32
    return %arg0, %c0_i32, %c0_i32_0 : i32, i32, i32
  }
  func.func @transform_1(%arg0: i32) -> (i32, i32, i32) {
    %c0_i32 = arith.constant 0 : i32
    %c0_i32_0 = arith.constant 0 : i32
    %c0_i32_1 = arith.constant 0 : i32
    %c0_i32_2 = arith.constant 0 : i32
    return %c0_i32, %c0_i32_0, %c0_i32_1 : i32, i32, i32
  }
  func.func @transform_2(%arg0: i32) -> (i32, i32) {
    %c0_i32 = arith.constant 0 : i32
    %c0_i32_0 = arith.constant 0 : i32
    %c0_i32_1 = arith.constant 0 : i32
    return %c0_i32, %c0_i32_0 : i32, i32
  }
  func.func @transform_3(%arg0: i32) -> (i32, i32, i32) {
    %c0_i32 = arith.constant 0 : i32
    %c0_i32_0 = arith.constant 0 : i32
    %c0_i32_1 = arith.constant 0 : i32
    %c0_i32_2 = arith.constant 0 : i32
    return %c0_i32, %c0_i32_0, %c0_i32_1 : i32, i32, i32
  }
  func.func @transform_4(%arg0: i32) -> (i32, i32) {
    %c0_i32 = arith.constant 0 : i32
    %c0_i32_0 = arith.constant 0 : i32
    %c0_i32_1 = arith.constant 0 : i32
    return %c0_i32, %c0_i32_0 : i32, i32
  }
  func.func @transform_5(%arg0: i32) -> (i32, i32, i32) {
    %c0_i32 = arith.constant 0 : i32
    %c0_i32_0 = arith.constant 0 : i32
    %c0_i32_1 = arith.constant 0 : i32
    return %arg0, %c0_i32, %c0_i32_0 : i32, i32, i32
  }
}

module attributes {stable_mosaic.version = 11 : i64} {
  func.func @_conv1d_kernel(%arg0: i32, %arg1: memref<1x18x256xf32, #tpu.memory_space<vmem>>, %arg2: memref<3x256x128xbf16, #tpu.memory_space<vmem>>, %arg3: memref<1x128xf32, #tpu.memory_space<vmem>>, %arg4: memref<1x16x128xf32, #tpu.memory_space<vmem>>) attributes {dimension_semantics = [#tpu.dimension_semantics<parallel>], iteration_bounds = array<i64: 2>, scalar_prefetch = 0 : i64, scratch_operands = 0 : i64, tpu.core_type = #tpu.core_type<tc>, window_params = [{transform_indices = @transform_0, window_bounds = array<i64: 1, 18, 256>}, {pipeline_mode = #tpu.pipeline_mode<synchronous>, transform_indices = @transform_1, window_bounds = array<i64: 3, 256, 128>}, {pipeline_mode = #tpu.pipeline_mode<synchronous>, transform_indices = @transform_2, window_bounds = array<i64: 1, 128>}, {transform_indices = @transform_3, window_bounds = array<i64: 1, 16, 128>}]} {
    %c0 = arith.constant 0 : index
    %c0_0 = arith.constant 0 : index
    %c0_1 = arith.constant 0 : index
    %0 = vector.load %arg1[%c0, %c0_0, %c0_1] : memref<1x18x256xf32, #tpu.memory_space<vmem>>, vector<1x18x256xf32>
    %1 = vector.shape_cast %0 : vector<1x18x256xf32> to vector<18x256xf32>
    %c0_2 = arith.constant 0 : index
    %c0_3 = arith.constant 0 : index
    %2 = vector.load %arg3[%c0_2, %c0_3] : memref<1x128xf32, #tpu.memory_space<vmem>>, vector<1x128xf32>
    %3 = vector.extract_strided_slice %1 {offsets = [0, 0], sizes = [16, 256], strides = [1, 1]} : vector<18x256xf32> to vector<16x256xf32>
    %4 = arith.truncf %3 : vector<16x256xf32> to vector<16x256xbf16>
    %c0_4 = arith.constant 0 : index
    %c0_5 = arith.constant 0 : index
    %c0_6 = arith.constant 0 : index
    %5 = vector.load %arg2[%c0_4, %c0_5, %c0_6] : memref<3x256x128xbf16, #tpu.memory_space<vmem>>, vector<1x256x128xbf16>
    %6 = vector.shape_cast %5 : vector<1x256x128xbf16> to vector<256x128xbf16>
    %cst = arith.constant dense<0.000000e+00> : vector<16x128xf32>
    %7 = tpu.matmul %4, %6, %cst {dimension_numbers = #tpu.dot_dimension_numbers<[1], [0], [0], [1], [0, 0, 1, 1], [], []>} : vector<16x256xbf16>, vector<256x128xbf16>, vector<16x128xf32> -> vector<16x128xf32>
    %8 = vector.broadcast %2 : vector<1x128xf32> to vector<16x128xf32>
    %9 = arith.addf %8, %7 : vector<16x128xf32>
    %10 = vector.extract_strided_slice %1 {offsets = [1, 0], sizes = [16, 256], strides = [1, 1]} : vector<18x256xf32> to vector<16x256xf32>
    %11 = arith.truncf %10 : vector<16x256xf32> to vector<16x256xbf16>
    %c1 = arith.constant 1 : index
    %c0_7 = arith.constant 0 : index
    %c0_8 = arith.constant 0 : index
    %12 = vector.load %arg2[%c1, %c0_7, %c0_8] : memref<3x256x128xbf16, #tpu.memory_space<vmem>>, vector<1x256x128xbf16>
    %13 = vector.shape_cast %12 : vector<1x256x128xbf16> to vector<256x128xbf16>
    %cst_9 = arith.constant dense<0.000000e+00> : vector<16x128xf32>
    %14 = tpu.matmul %11, %13, %cst_9 {dimension_numbers = #tpu.dot_dimension_numbers<[1], [0], [0], [1], [0, 0, 1, 1], [], []>} : vector<16x256xbf16>, vector<256x128xbf16>, vector<16x128xf32> -> vector<16x128xf32>
    %15 = arith.addf %9, %14 : vector<16x128xf32>
    %16 = vector.extract_strided_slice %1 {offsets = [2, 0], sizes = [16, 256], strides = [1, 1]} : vector<18x256xf32> to vector<16x256xf32>
    %17 = arith.truncf %16 : vector<16x256xf32> to vector<16x256xbf16>
    %c2 = arith.constant 2 : index
    %c0_10 = arith.constant 0 : index
    %c0_11 = arith.constant 0 : index
    %18 = vector.load %arg2[%c2, %c0_10, %c0_11] : memref<3x256x128xbf16, #tpu.memory_space<vmem>>, vector<1x256x128xbf16>
    %19 = vector.shape_cast %18 : vector<1x256x128xbf16> to vector<256x128xbf16>
    %cst_12 = arith.constant dense<0.000000e+00> : vector<16x128xf32>
    %20 = tpu.matmul %17, %19, %cst_12 {dimension_numbers = #tpu.dot_dimension_numbers<[1], [0], [0], [1], [0, 0, 1, 1], [], []>} : vector<16x256xbf16>, vector<256x128xbf16>, vector<16x128xf32> -> vector<16x128xf32>
    %21 = arith.addf %15, %20 : vector<16x128xf32>
    %c0_13 = arith.constant 0 : index
    %c0_14 = arith.constant 0 : index
    %c0_15 = arith.constant 0 : index
    %22 = vector.load %arg4[%c0_13, %c0_14, %c0_15] : memref<1x16x128xf32, #tpu.memory_space<vmem>>, vector<1x16x128xf32>
    %23 = vector.shape_cast %22 : vector<1x16x128xf32> to vector<16x128xf32>
    %24 = vector.shape_cast %21 : vector<16x128xf32> to vector<1x16x128xf32>
    tpu.vector_store %arg4[%c0_13, %c0_14, %c0_15], %24 {strides = array<i32>} : memref<1x16x128xf32, #tpu.memory_space<vmem>>, vector<1x16x128xf32>,
    return
  }
  func.func @transform_0(%arg0: i32) -> (i32, i32, i32) {
    %c0_i32 = arith.constant 0 : i32
    %c0_i32_0 = arith.constant 0 : i32
    %c0_i32_1 = arith.constant 0 : i32
    return %arg0, %c0_i32, %c0_i32_0 : i32, i32, i32
  }
  func.func @transform_1(%arg0: i32) -> (i32, i32, i32) {
    %c0_i32 = arith.constant 0 : i32
    %c0_i32_0 = arith.constant 0 : i32
    %c0_i32_1 = arith.constant 0 : i32
    %c0_i32_2 = arith.constant 0 : i32
    return %c0_i32, %c0_i32_0, %c0_i32_1 : i32, i32, i32
  }
  func.func @transform_2(%arg0: i32) -> (i32, i32) {
    %c0_i32 = arith.constant 0 : i32
    %c0_i32_0 = arith.constant 0 : i32
    %c0_i32_1 = arith.constant 0 : i32
    return %c0_i32, %c0_i32_0 : i32, i32
  }
  func.func @transform_3(%arg0: i32) -> (i32, i32, i32) {
    %c0_i32 = arith.constant 0 : i32
    %c0_i32_0 = arith.constant 0 : i32
    %c0_i32_1 = arith.constant 0 : i32
    return %arg0, %c0_i32, %c0_i32_0 : i32, i32, i32
  }
}

module attributes {stable_mosaic.version = 11 : i64} {
  func.func @_resblock_kernel(%arg0: i32, %arg1: memref<1x18x128xf32, #tpu.memory_space<vmem>>, %arg2: memref<3x128x128xbf16, #tpu.memory_space<vmem>>, %arg3: memref<1x128xf32, #tpu.memory_space<vmem>>, %arg4: memref<1x128x128xbf16, #tpu.memory_space<vmem>>, %arg5: memref<1x128xf32, #tpu.memory_space<vmem>>, %arg6: memref<1x16x128xf32, #tpu.memory_space<vmem>>) attributes {dimension_semantics = [#tpu.dimension_semantics<parallel>], iteration_bounds = array<i64: 2>, scalar_prefetch = 0 : i64, scratch_operands = 0 : i64, tpu.core_type = #tpu.core_type<tc>, window_params = [{transform_indices = @transform_0, window_bounds = array<i64: 1, 18, 128>}, {pipeline_mode = #tpu.pipeline_mode<synchronous>, transform_indices = @transform_1, window_bounds = array<i64: 3, 128, 128>}, {pipeline_mode = #tpu.pipeline_mode<synchronous>, transform_indices = @transform_2, window_bounds = array<i64: 1, 128>}, {pipeline_mode = #tpu.pipeline_mode<synchronous>, transform_indices = @transform_3, window_bounds = array<i64: 1, 128, 128>}, {pipeline_mode = #tpu.pipeline_mode<synchronous>, transform_indices = @transform_4, window_bounds = array<i64: 1, 128>}, {transform_indices = @transform_5, window_bounds = array<i64: 1, 16, 128>}]} {
    %c0 = arith.constant 0 : index
    %c0_0 = arith.constant 0 : index
    %c0_1 = arith.constant 0 : index
    %0 = vector.load %arg1[%c0, %c0_0, %c0_1] : memref<1x18x128xf32, #tpu.memory_space<vmem>>, vector<1x18x128xf32>
    %1 = vector.shape_cast %0 : vector<1x18x128xf32> to vector<18x128xf32>
    %cst = arith.constant 0.000000e+00 : f32
    %2 = vector.broadcast %cst : f32 to vector<18x128xf32>
    %3 = arith.maximumf %1, %2 : vector<18x128xf32>
    %c0_2 = arith.constant 0 : index
    %c0_3 = arith.constant 0 : index
    %4 = vector.load %arg3[%c0_2, %c0_3] : memref<1x128xf32, #tpu.memory_space<vmem>>, vector<1x128xf32>
    %5 = vector.extract_strided_slice %3 {offsets = [0, 0], sizes = [16, 128], strides = [1, 1]} : vector<18x128xf32> to vector<16x128xf32>
    %6 = arith.truncf %5 : vector<16x128xf32> to vector<16x128xbf16>
    %c0_4 = arith.constant 0 : index
    %c0_5 = arith.constant 0 : index
    %c0_6 = arith.constant 0 : index
    %7 = vector.load %arg2[%c0_4, %c0_5, %c0_6] : memref<3x128x128xbf16, #tpu.memory_space<vmem>>, vector<1x128x128xbf16>
    %8 = vector.shape_cast %7 : vector<1x128x128xbf16> to vector<128x128xbf16>
    %cst_7 = arith.constant dense<0.000000e+00> : vector<16x128xf32>
    %9 = tpu.matmul %6, %8, %cst_7 {dimension_numbers = #tpu.dot_dimension_numbers<[1], [0], [0], [1], [0, 0, 1, 1], [], []>} : vector<16x128xbf16>, vector<128x128xbf16>, vector<16x128xf32> -> vector<16x128xf32>
    %10 = vector.broadcast %4 : vector<1x128xf32> to vector<16x128xf32>
    %11 = arith.addf %10, %9 : vector<16x128xf32>
    %12 = vector.extract_strided_slice %3 {offsets = [1, 0], sizes = [16, 128], strides = [1, 1]} : vector<18x128xf32> to vector<16x128xf32>
    %13 = arith.truncf %12 : vector<16x128xf32> to vector<16x128xbf16>
    %c1 = arith.constant 1 : index
    %c0_8 = arith.constant 0 : index
    %c0_9 = arith.constant 0 : index
    %14 = vector.load %arg2[%c1, %c0_8, %c0_9] : memref<3x128x128xbf16, #tpu.memory_space<vmem>>, vector<1x128x128xbf16>
    %15 = vector.shape_cast %14 : vector<1x128x128xbf16> to vector<128x128xbf16>
    %cst_10 = arith.constant dense<0.000000e+00> : vector<16x128xf32>
    %16 = tpu.matmul %13, %15, %cst_10 {dimension_numbers = #tpu.dot_dimension_numbers<[1], [0], [0], [1], [0, 0, 1, 1], [], []>} : vector<16x128xbf16>, vector<128x128xbf16>, vector<16x128xf32> -> vector<16x128xf32>
    %17 = arith.addf %11, %16 : vector<16x128xf32>
    %18 = vector.extract_strided_slice %3 {offsets = [2, 0], sizes = [16, 128], strides = [1, 1]} : vector<18x128xf32> to vector<16x128xf32>
    %19 = arith.truncf %18 : vector<16x128xf32> to vector<16x128xbf16>
    %c2 = arith.constant 2 : index
    %c0_11 = arith.constant 0 : index
    %c0_12 = arith.constant 0 : index
    %20 = vector.load %arg2[%c2, %c0_11, %c0_12] : memref<3x128x128xbf16, #tpu.memory_space<vmem>>, vector<1x128x128xbf16>
    %21 = vector.shape_cast %20 : vector<1x128x128xbf16> to vector<128x128xbf16>
    %cst_13 = arith.constant dense<0.000000e+00> : vector<16x128xf32>
    %22 = tpu.matmul %19, %21, %cst_13 {dimension_numbers = #tpu.dot_dimension_numbers<[1], [0], [0], [1], [0, 0, 1, 1], [], []>} : vector<16x128xbf16>, vector<128x128xbf16>, vector<16x128xf32> -> vector<16x128xf32>
    %23 = arith.addf %17, %22 : vector<16x128xf32>
    %cst_14 = arith.constant 0.000000e+00 : f32
    %24 = vector.broadcast %cst_14 : f32 to vector<16x128xf32>
    %25 = arith.maximumf %23, %24 : vector<16x128xf32>
    %26 = arith.truncf %25 : vector<16x128xf32> to vector<16x128xbf16>
    %c0_15 = arith.constant 0 : index
    %c0_16 = arith.constant 0 : index
    %27 = vector.load %arg5[%c0_15, %c0_16] : memref<1x128xf32, #tpu.memory_space<vmem>>, vector<1x128xf32>
    %c0_17 = arith.constant 0 : index
    %c0_18 = arith.constant 0 : index
    %c0_19 = arith.constant 0 : index
    %28 = vector.load %arg4[%c0_17, %c0_18, %c0_19] : memref<1x128x128xbf16, #tpu.memory_space<vmem>>, vector<1x128x128xbf16>
    %29 = vector.shape_cast %28 : vector<1x128x128xbf16> to vector<128x128xbf16>
    %cst_20 = arith.constant dense<0.000000e+00> : vector<16x128xf32>
    %30 = tpu.matmul %26, %29, %cst_20 {dimension_numbers = #tpu.dot_dimension_numbers<[1], [0], [0], [1], [0, 0, 1, 1], [], []>} : vector<16x128xbf16>, vector<128x128xbf16>, vector<16x128xf32> -> vector<16x128xf32>
    %31 = vector.broadcast %27 : vector<1x128xf32> to vector<16x128xf32>
    %32 = arith.addf %31, %30 : vector<16x128xf32>
    %33 = vector.extract_strided_slice %1 {offsets = [1, 0], sizes = [16, 128], strides = [1, 1]} : vector<18x128xf32> to vector<16x128xf32>
    %34 = arith.addf %32, %33 : vector<16x128xf32>
    %c0_21 = arith.constant 0 : index
    %c0_22 = arith.constant 0 : index
    %c0_23 = arith.constant 0 : index
    %35 = vector.load %arg6[%c0_21, %c0_22, %c0_23] : memref<1x16x128xf32, #tpu.memory_space<vmem>>, vector<1x16x128xf32>
    %36 = vector.shape_cast %35 : vector<1x16x128xf32> to vector<16x128xf32>
    %37 = vector.shape_cast %34 : vector<16x128xf32> to vector<1x16x128xf32>
    tpu.vector_store %arg6[%c0_21, %c0_22, %c0_23], %37 {strides = array<i32>} : memref<1x16x128xf32, #tpu.memory_space<vmem>>, vector<1x16x128xf32>,
    return
  }
  func.func @transform_0(%arg0: i32) -> (i32, i32, i32) {
    %c0_i32 = arith.constant 0 : i32
    %c0_i32_0 = arith.constant 0 : i32
    %c0_i32_1 = arith.constant 0 : i32
    return %arg0, %c0_i32, %c0_i32_0 : i32, i32, i32
  }
  func.func @transform_1(%arg0: i32) -> (i32, i32, i32) {
    %c0_i32 = arith.constant 0 : i32
    %c0_i32_0 = arith.constant 0 : i32
    %c0_i32_1 = arith.constant 0 : i32
    %c0_i32_2 = arith.constant 0 : i32
    return %c0_i32, %c0_i32_0, %c0_i32_1 : i32, i32, i32
  }
  func.func @transform_2(%arg0: i32) -> (i32, i32) {
    %c0_i32 = arith.constant 0 : i32
    %c0_i32_0 = arith.constant 0 : i32
    %c0_i32_1 = arith.constant 0 : i32
    return %c0_i32, %c0_i32_0 : i32, i32
  }
  func.func @transform_3(%arg0: i32) -> (i32, i32, i32) {
    %c0_i32 = arith.constant 0 : i32
    %c0_i32_0 = arith.constant 0 : i32
    %c0_i32_1 = arith.constant 0 : i32
    %c0_i32_2 = arith.constant 0 : i32
    return %c0_i32, %c0_i32_0, %c0_i32_1 : i32, i32, i32
  }
  func.func @transform_4(%arg0: i32) -> (i32, i32) {
    %c0_i32 = arith.constant 0 : i32
    %c0_i32_0 = arith.constant 0 : i32
    %c0_i32_1 = arith.constant 0 : i32
    return %c0_i32, %c0_i32_0 : i32, i32
  }
  func.func @transform_5(%arg0: i32) -> (i32, i32, i32) {
    %c0_i32 = arith.constant 0 : i32
    %c0_i32_0 = arith.constant 0 : i32
    %c0_i32_1 = arith.constant 0 : i32
    return %arg0, %c0_i32, %c0_i32_0 : i32, i32, i32
  }
}

module attributes {stable_mosaic.version = 11 : i64} {
  func.func @_conv1d_kernel(%arg0: i32, %arg1: memref<1x10x256xf32, #tpu.memory_space<vmem>>, %arg2: memref<3x256x128xbf16, #tpu.memory_space<vmem>>, %arg3: memref<1x128xf32, #tpu.memory_space<vmem>>, %arg4: memref<1x8x128xf32, #tpu.memory_space<vmem>>) attributes {dimension_semantics = [#tpu.dimension_semantics<parallel>], iteration_bounds = array<i64: 2>, scalar_prefetch = 0 : i64, scratch_operands = 0 : i64, tpu.core_type = #tpu.core_type<tc>, window_params = [{transform_indices = @transform_0, window_bounds = array<i64: 1, 10, 256>}, {pipeline_mode = #tpu.pipeline_mode<synchronous>, transform_indices = @transform_1, window_bounds = array<i64: 3, 256, 128>}, {pipeline_mode = #tpu.pipeline_mode<synchronous>, transform_indices = @transform_2, window_bounds = array<i64: 1, 128>}, {transform_indices = @transform_3, window_bounds = array<i64: 1, 8, 128>}]} {
    %c0 = arith.constant 0 : index
    %c0_0 = arith.constant 0 : index
    %c0_1 = arith.constant 0 : index
    %0 = vector.load %arg1[%c0, %c0_0, %c0_1] : memref<1x10x256xf32, #tpu.memory_space<vmem>>, vector<1x10x256xf32>
    %1 = vector.shape_cast %0 : vector<1x10x256xf32> to vector<10x256xf32>
    %c0_2 = arith.constant 0 : index
    %c0_3 = arith.constant 0 : index
    %2 = vector.load %arg3[%c0_2, %c0_3] : memref<1x128xf32, #tpu.memory_space<vmem>>, vector<1x128xf32>
    %3 = vector.extract_strided_slice %1 {offsets = [0, 0], sizes = [8, 256], strides = [1, 1]} : vector<10x256xf32> to vector<8x256xf32>
    %4 = arith.truncf %3 : vector<8x256xf32> to vector<8x256xbf16>
    %c0_4 = arith.constant 0 : index
    %c0_5 = arith.constant 0 : index
    %c0_6 = arith.constant 0 : index
    %5 = vector.load %arg2[%c0_4, %c0_5, %c0_6] : memref<3x256x128xbf16, #tpu.memory_space<vmem>>, vector<1x256x128xbf16>
    %6 = vector.shape_cast %5 : vector<1x256x128xbf16> to vector<256x128xbf16>
    %cst = arith.constant dense<0.000000e+00> : vector<8x128xf32>
    %7 = tpu.matmul %4, %6, %cst {dimension_numbers = #tpu.dot_dimension_numbers<[1], [0], [0], [1], [0, 0, 1, 1], [], []>} : vector<8x256xbf16>, vector<256x128xbf16>, vector<8x128xf32> -> vector<8x128xf32>
    %8 = vector.broadcast %2 : vector<1x128xf32> to vector<8x128xf32>
    %9 = arith.addf %8, %7 : vector<8x128xf32>
    %10 = vector.extract_strided_slice %1 {offsets = [1, 0], sizes = [8, 256], strides = [1, 1]} : vector<10x256xf32> to vector<8x256xf32>
    %11 = arith.truncf %10 : vector<8x256xf32> to vector<8x256xbf16>
    %c1 = arith.constant 1 : index
    %c0_7 = arith.constant 0 : index
    %c0_8 = arith.constant 0 : index
    %12 = vector.load %arg2[%c1, %c0_7, %c0_8] : memref<3x256x128xbf16, #tpu.memory_space<vmem>>, vector<1x256x128xbf16>
    %13 = vector.shape_cast %12 : vector<1x256x128xbf16> to vector<256x128xbf16>
    %cst_9 = arith.constant dense<0.000000e+00> : vector<8x128xf32>
    %14 = tpu.matmul %11, %13, %cst_9 {dimension_numbers = #tpu.dot_dimension_numbers<[1], [0], [0], [1], [0, 0, 1, 1], [], []>} : vector<8x256xbf16>, vector<256x128xbf16>, vector<8x128xf32> -> vector<8x128xf32>
    %15 = arith.addf %9, %14 : vector<8x128xf32>
    %16 = vector.extract_strided_slice %1 {offsets = [2, 0], sizes = [8, 256], strides = [1, 1]} : vector<10x256xf32> to vector<8x256xf32>
    %17 = arith.truncf %16 : vector<8x256xf32> to vector<8x256xbf16>
    %c2 = arith.constant 2 : index
    %c0_10 = arith.constant 0 : index
    %c0_11 = arith.constant 0 : index
    %18 = vector.load %arg2[%c2, %c0_10, %c0_11] : memref<3x256x128xbf16, #tpu.memory_space<vmem>>, vector<1x256x128xbf16>
    %19 = vector.shape_cast %18 : vector<1x256x128xbf16> to vector<256x128xbf16>
    %cst_12 = arith.constant dense<0.000000e+00> : vector<8x128xf32>
    %20 = tpu.matmul %17, %19, %cst_12 {dimension_numbers = #tpu.dot_dimension_numbers<[1], [0], [0], [1], [0, 0, 1, 1], [], []>} : vector<8x256xbf16>, vector<256x128xbf16>, vector<8x128xf32> -> vector<8x128xf32>
    %21 = arith.addf %15, %20 : vector<8x128xf32>
    %c0_13 = arith.constant 0 : index
    %c0_14 = arith.constant 0 : index
    %c0_15 = arith.constant 0 : index
    %22 = vector.load %arg4[%c0_13, %c0_14, %c0_15] : memref<1x8x128xf32, #tpu.memory_space<vmem>>, vector<1x8x128xf32>
    %23 = vector.shape_cast %22 : vector<1x8x128xf32> to vector<8x128xf32>
    %24 = vector.shape_cast %21 : vector<8x128xf32> to vector<1x8x128xf32>
    tpu.vector_store %arg4[%c0_13, %c0_14, %c0_15], %24 {strides = array<i32>} : memref<1x8x128xf32, #tpu.memory_space<vmem>>, vector<1x8x128xf32>,
    return
  }
  func.func @transform_0(%arg0: i32) -> (i32, i32, i32) {
    %c0_i32 = arith.constant 0 : i32
    %c0_i32_0 = arith.constant 0 : i32
    %c0_i32_1 = arith.constant 0 : i32
    return %arg0, %c0_i32, %c0_i32_0 : i32, i32, i32
  }
  func.func @transform_1(%arg0: i32) -> (i32, i32, i32) {
    %c0_i32 = arith.constant 0 : i32
    %c0_i32_0 = arith.constant 0 : i32
    %c0_i32_1 = arith.constant 0 : i32
    %c0_i32_2 = arith.constant 0 : i32
    return %c0_i32, %c0_i32_0, %c0_i32_1 : i32, i32, i32
  }
  func.func @transform_2(%arg0: i32) -> (i32, i32) {
    %c0_i32 = arith.constant 0 : i32
    %c0_i32_0 = arith.constant 0 : i32
    %c0_i32_1 = arith.constant 0 : i32
    return %c0_i32, %c0_i32_0 : i32, i32
  }
  func.func @transform_3(%arg0: i32) -> (i32, i32, i32) {
    %c0_i32 = arith.constant 0 : i32
    %c0_i32_0 = arith.constant 0 : i32
    %c0_i32_1 = arith.constant 0 : i32
    return %arg0, %c0_i32, %c0_i32_0 : i32, i32, i32
  }
}

module attributes {stable_mosaic.version = 11 : i64} {
  func.func @_resblock_kernel(%arg0: i32, %arg1: memref<1x14x128xf32, #tpu.memory_space<vmem>>, %arg2: memref<3x128x128xbf16, #tpu.memory_space<vmem>>, %arg3: memref<1x128xf32, #tpu.memory_space<vmem>>, %arg4: memref<1x128x128xbf16, #tpu.memory_space<vmem>>, %arg5: memref<1x128xf32, #tpu.memory_space<vmem>>, %arg6: memref<1x8x128xf32, #tpu.memory_space<vmem>>) attributes {dimension_semantics = [#tpu.dimension_semantics<parallel>], iteration_bounds = array<i64: 2>, scalar_prefetch = 0 : i64, scratch_operands = 0 : i64, tpu.core_type = #tpu.core_type<tc>, window_params = [{transform_indices = @transform_0, window_bounds = array<i64: 1, 14, 128>}, {pipeline_mode = #tpu.pipeline_mode<synchronous>, transform_indices = @transform_1, window_bounds = array<i64: 3, 128, 128>}, {pipeline_mode = #tpu.pipeline_mode<synchronous>, transform_indices = @transform_2, window_bounds = array<i64: 1, 128>}, {pipeline_mode = #tpu.pipeline_mode<synchronous>, transform_indices = @transform_3, window_bounds = array<i64: 1, 128, 128>}, {pipeline_mode = #tpu.pipeline_mode<synchronous>, transform_indices = @transform_4, window_bounds = array<i64: 1, 128>}, {transform_indices = @transform_5, window_bounds = array<i64: 1, 8, 128>}]} {
    %c0 = arith.constant 0 : index
    %c0_0 = arith.constant 0 : index
    %c0_1 = arith.constant 0 : index
    %0 = vector.load %arg1[%c0, %c0_0, %c0_1] : memref<1x14x128xf32, #tpu.memory_space<vmem>>, vector<1x14x128xf32>
    %1 = vector.shape_cast %0 : vector<1x14x128xf32> to vector<14x128xf32>
    %cst = arith.constant 0.000000e+00 : f32
    %2 = vector.broadcast %cst : f32 to vector<14x128xf32>
    %3 = arith.maximumf %1, %2 : vector<14x128xf32>
    %c0_2 = arith.constant 0 : index
    %c0_3 = arith.constant 0 : index
    %4 = vector.load %arg3[%c0_2, %c0_3] : memref<1x128xf32, #tpu.memory_space<vmem>>, vector<1x128xf32>
    %5 = vector.extract_strided_slice %3 {offsets = [0, 0], sizes = [8, 128], strides = [1, 1]} : vector<14x128xf32> to vector<8x128xf32>
    %6 = arith.truncf %5 : vector<8x128xf32> to vector<8x128xbf16>
    %c0_4 = arith.constant 0 : index
    %c0_5 = arith.constant 0 : index
    %c0_6 = arith.constant 0 : index
    %7 = vector.load %arg2[%c0_4, %c0_5, %c0_6] : memref<3x128x128xbf16, #tpu.memory_space<vmem>>, vector<1x128x128xbf16>
    %8 = vector.shape_cast %7 : vector<1x128x128xbf16> to vector<128x128xbf16>
    %cst_7 = arith.constant dense<0.000000e+00> : vector<8x128xf32>
    %9 = tpu.matmul %6, %8, %cst_7 {dimension_numbers = #tpu.dot_dimension_numbers<[1], [0], [0], [1], [0, 0, 1, 1], [], []>} : vector<8x128xbf16>, vector<128x128xbf16>, vector<8x128xf32> -> vector<8x128xf32>
    %10 = vector.broadcast %4 : vector<1x128xf32> to vector<8x128xf32>
    %11 = arith.addf %10, %9 : vector<8x128xf32>
    %12 = vector.extract_strided_slice %3 {offsets = [3, 0], sizes = [8, 128], strides = [1, 1]} : vector<14x128xf32> to vector<8x128xf32>
    %13 = arith.truncf %12 : vector<8x128xf32> to vector<8x128xbf16>
    %c1 = arith.constant 1 : index
    %c0_8 = arith.constant 0 : index
    %c0_9 = arith.constant 0 : index
    %14 = vector.load %arg2[%c1, %c0_8, %c0_9] : memref<3x128x128xbf16, #tpu.memory_space<vmem>>, vector<1x128x128xbf16>
    %15 = vector.shape_cast %14 : vector<1x128x128xbf16> to vector<128x128xbf16>
    %cst_10 = arith.constant dense<0.000000e+00> : vector<8x128xf32>
    %16 = tpu.matmul %13, %15, %cst_10 {dimension_numbers = #tpu.dot_dimension_numbers<[1], [0], [0], [1], [0, 0, 1, 1], [], []>} : vector<8x128xbf16>, vector<128x128xbf16>, vector<8x128xf32> -> vector<8x128xf32>
    %17 = arith.addf %11, %16 : vector<8x128xf32>
    %18 = vector.extract_strided_slice %3 {offsets = [6, 0], sizes = [8, 128], strides = [1, 1]} : vector<14x128xf32> to vector<8x128xf32>
    %19 = arith.truncf %18 : vector<8x128xf32> to vector<8x128xbf16>
    %c2 = arith.constant 2 : index
    %c0_11 = arith.constant 0 : index
    %c0_12 = arith.constant 0 : index
    %20 = vector.load %arg2[%c2, %c0_11, %c0_12] : memref<3x128x128xbf16, #tpu.memory_space<vmem>>, vector<1x128x128xbf16>
    %21 = vector.shape_cast %20 : vector<1x128x128xbf16> to vector<128x128xbf16>
    %cst_13 = arith.constant dense<0.000000e+00> : vector<8x128xf32>
    %22 = tpu.matmul %19, %21, %cst_13 {dimension_numbers = #tpu.dot_dimension_numbers<[1], [0], [0], [1], [0, 0, 1, 1], [], []>} : vector<8x128xbf16>, vector<128x128xbf16>, vector<8x128xf32> -> vector<8x128xf32>
    %23 = arith.addf %17, %22 : vector<8x128xf32>
    %cst_14 = arith.constant 0.000000e+00 : f32
    %24 = vector.broadcast %cst_14 : f32 to vector<8x128xf32>
    %25 = arith.maximumf %23, %24 : vector<8x128xf32>
    %26 = arith.truncf %25 : vector<8x128xf32> to vector<8x128xbf16>
    %c0_15 = arith.constant 0 : index
    %c0_16 = arith.constant 0 : index
    %27 = vector.load %arg5[%c0_15, %c0_16] : memref<1x128xf32, #tpu.memory_space<vmem>>, vector<1x128xf32>
    %c0_17 = arith.constant 0 : index
    %c0_18 = arith.constant 0 : index
    %c0_19 = arith.constant 0 : index
    %28 = vector.load %arg4[%c0_17, %c0_18, %c0_19] : memref<1x128x128xbf16, #tpu.memory_space<vmem>>, vector<1x128x128xbf16>
    %29 = vector.shape_cast %28 : vector<1x128x128xbf16> to vector<128x128xbf16>
    %cst_20 = arith.constant dense<0.000000e+00> : vector<8x128xf32>
    %30 = tpu.matmul %26, %29, %cst_20 {dimension_numbers = #tpu.dot_dimension_numbers<[1], [0], [0], [1], [0, 0, 1, 1], [], []>} : vector<8x128xbf16>, vector<128x128xbf16>, vector<8x128xf32> -> vector<8x128xf32>
    %31 = vector.broadcast %27 : vector<1x128xf32> to vector<8x128xf32>
    %32 = arith.addf %31, %30 : vector<8x128xf32>
    %33 = vector.extract_strided_slice %1 {offsets = [3, 0], sizes = [8, 128], strides = [1, 1]} : vector<14x128xf32> to vector<8x128xf32>
    %34 = arith.addf %32, %33 : vector<8x128xf32>
    %c0_21 = arith.constant 0 : index
    %c0_22 = arith.constant 0 : index
    %c0_23 = arith.constant 0 : index
    %35 = vector.load %arg6[%c0_21, %c0_22, %c0_23] : memref<1x8x128xf32, #tpu.memory_space<vmem>>, vector<1x8x128xf32>
    %36 = vector.shape_cast %35 : vector<1x8x128xf32> to vector<8x128xf32>
    %37 = vector.shape_cast %34 : vector<8x128xf32> to vector<1x8x128xf32>
    tpu.vector_store %arg6[%c0_21, %c0_22, %c0_23], %37 {strides = array<i32>} : memref<1x8x128xf32, #tpu.memory_space<vmem>>, vector<1x8x128xf32>,
    return
  }
  func.func @transform_0(%arg0: i32) -> (i32, i32, i32) {
    %c0_i32 = arith.constant 0 : i32
    %c0_i32_0 = arith.constant 0 : i32
    %c0_i32_1 = arith.constant 0 : i32
    return %arg0, %c0_i32, %c0_i32_0 : i32, i32, i32
  }
  func.func @transform_1(%arg0: i32) -> (i32, i32, i32) {
    %c0_i32 = arith.constant 0 : i32
    %c0_i32_0 = arith.constant 0 : i32
    %c0_i32_1 = arith.constant 0 : i32
    %c0_i32_2 = arith.constant 0 : i32
    return %c0_i32, %c0_i32_0, %c0_i32_1 : i32, i32, i32
  }
  func.func @transform_2(%arg0: i32) -> (i32, i32) {
    %c0_i32 = arith.constant 0 : i32
    %c0_i32_0 = arith.constant 0 : i32
    %c0_i32_1 = arith.constant 0 : i32
    return %c0_i32, %c0_i32_0 : i32, i32
  }
  func.func @transform_3(%arg0: i32) -> (i32, i32, i32) {
    %c0_i32 = arith.constant 0 : i32
    %c0_i32_0 = arith.constant 0 : i32
    %c0_i32_1 = arith.constant 0 : i32
    %c0_i32_2 = arith.constant 0 : i32
    return %c0_i32, %c0_i32_0, %c0_i32_1 : i32, i32, i32
  }
  func.func @transform_4(%arg0: i32) -> (i32, i32) {
    %c0_i32 = arith.constant 0 : i32
    %c0_i32_0 = arith.constant 0 : i32
    %c0_i32_1 = arith.constant 0 : i32
    return %c0_i32, %c0_i32_0 : i32, i32
  }
  func.func @transform_5(%arg0: i32) -> (i32, i32, i32) {
    %c0_i32 = arith.constant 0 : i32
    %c0_i32_0 = arith.constant 0 : i32
    %c0_i32_1 = arith.constant 0 : i32
    return %arg0, %c0_i32, %c0_i32_0 : i32, i32, i32
  }
}

module attributes {stable_mosaic.version = 11 : i64} {
  func.func @_resblock_kernel(%arg0: i32, %arg1: memref<1x10x128xf32, #tpu.memory_space<vmem>>, %arg2: memref<3x128x128xbf16, #tpu.memory_space<vmem>>, %arg3: memref<1x128xf32, #tpu.memory_space<vmem>>, %arg4: memref<1x128x128xbf16, #tpu.memory_space<vmem>>, %arg5: memref<1x128xf32, #tpu.memory_space<vmem>>, %arg6: memref<1x8x128xf32, #tpu.memory_space<vmem>>) attributes {dimension_semantics = [#tpu.dimension_semantics<parallel>], iteration_bounds = array<i64: 2>, scalar_prefetch = 0 : i64, scratch_operands = 0 : i64, tpu.core_type = #tpu.core_type<tc>, window_params = [{transform_indices = @transform_0, window_bounds = array<i64: 1, 10, 128>}, {pipeline_mode = #tpu.pipeline_mode<synchronous>, transform_indices = @transform_1, window_bounds = array<i64: 3, 128, 128>}, {pipeline_mode = #tpu.pipeline_mode<synchronous>, transform_indices = @transform_2, window_bounds = array<i64: 1, 128>}, {pipeline_mode = #tpu.pipeline_mode<synchronous>, transform_indices = @transform_3, window_bounds = array<i64: 1, 128, 128>}, {pipeline_mode = #tpu.pipeline_mode<synchronous>, transform_indices = @transform_4, window_bounds = array<i64: 1, 128>}, {transform_indices = @transform_5, window_bounds = array<i64: 1, 8, 128>}]} {
    %c0 = arith.constant 0 : index
    %c0_0 = arith.constant 0 : index
    %c0_1 = arith.constant 0 : index
    %0 = vector.load %arg1[%c0, %c0_0, %c0_1] : memref<1x10x128xf32, #tpu.memory_space<vmem>>, vector<1x10x128xf32>
    %1 = vector.shape_cast %0 : vector<1x10x128xf32> to vector<10x128xf32>
    %cst = arith.constant 0.000000e+00 : f32
    %2 = vector.broadcast %cst : f32 to vector<10x128xf32>
    %3 = arith.maximumf %1, %2 : vector<10x128xf32>
    %c0_2 = arith.constant 0 : index
    %c0_3 = arith.constant 0 : index
    %4 = vector.load %arg3[%c0_2, %c0_3] : memref<1x128xf32, #tpu.memory_space<vmem>>, vector<1x128xf32>
    %5 = vector.extract_strided_slice %3 {offsets = [0, 0], sizes = [8, 128], strides = [1, 1]} : vector<10x128xf32> to vector<8x128xf32>
    %6 = arith.truncf %5 : vector<8x128xf32> to vector<8x128xbf16>
    %c0_4 = arith.constant 0 : index
    %c0_5 = arith.constant 0 : index
    %c0_6 = arith.constant 0 : index
    %7 = vector.load %arg2[%c0_4, %c0_5, %c0_6] : memref<3x128x128xbf16, #tpu.memory_space<vmem>>, vector<1x128x128xbf16>
    %8 = vector.shape_cast %7 : vector<1x128x128xbf16> to vector<128x128xbf16>
    %cst_7 = arith.constant dense<0.000000e+00> : vector<8x128xf32>
    %9 = tpu.matmul %6, %8, %cst_7 {dimension_numbers = #tpu.dot_dimension_numbers<[1], [0], [0], [1], [0, 0, 1, 1], [], []>} : vector<8x128xbf16>, vector<128x128xbf16>, vector<8x128xf32> -> vector<8x128xf32>
    %10 = vector.broadcast %4 : vector<1x128xf32> to vector<8x128xf32>
    %11 = arith.addf %10, %9 : vector<8x128xf32>
    %12 = vector.extract_strided_slice %3 {offsets = [1, 0], sizes = [8, 128], strides = [1, 1]} : vector<10x128xf32> to vector<8x128xf32>
    %13 = arith.truncf %12 : vector<8x128xf32> to vector<8x128xbf16>
    %c1 = arith.constant 1 : index
    %c0_8 = arith.constant 0 : index
    %c0_9 = arith.constant 0 : index
    %14 = vector.load %arg2[%c1, %c0_8, %c0_9] : memref<3x128x128xbf16, #tpu.memory_space<vmem>>, vector<1x128x128xbf16>
    %15 = vector.shape_cast %14 : vector<1x128x128xbf16> to vector<128x128xbf16>
    %cst_10 = arith.constant dense<0.000000e+00> : vector<8x128xf32>
    %16 = tpu.matmul %13, %15, %cst_10 {dimension_numbers = #tpu.dot_dimension_numbers<[1], [0], [0], [1], [0, 0, 1, 1], [], []>} : vector<8x128xbf16>, vector<128x128xbf16>, vector<8x128xf32> -> vector<8x128xf32>
    %17 = arith.addf %11, %16 : vector<8x128xf32>
    %18 = vector.extract_strided_slice %3 {offsets = [2, 0], sizes = [8, 128], strides = [1, 1]} : vector<10x128xf32> to vector<8x128xf32>
    %19 = arith.truncf %18 : vector<8x128xf32> to vector<8x128xbf16>
    %c2 = arith.constant 2 : index
    %c0_11 = arith.constant 0 : index
    %c0_12 = arith.constant 0 : index
    %20 = vector.load %arg2[%c2, %c0_11, %c0_12] : memref<3x128x128xbf16, #tpu.memory_space<vmem>>, vector<1x128x128xbf16>
    %21 = vector.shape_cast %20 : vector<1x128x128xbf16> to vector<128x128xbf16>
    %cst_13 = arith.constant dense<0.000000e+00> : vector<8x128xf32>
    %22 = tpu.matmul %19, %21, %cst_13 {dimension_numbers = #tpu.dot_dimension_numbers<[1], [0], [0], [1], [0, 0, 1, 1], [], []>} : vector<8x128xbf16>, vector<128x128xbf16>, vector<8x128xf32> -> vector<8x128xf32>
    %23 = arith.addf %17, %22 : vector<8x128xf32>
    %cst_14 = arith.constant 0.000000e+00 : f32
    %24 = vector.broadcast %cst_14 : f32 to vector<8x128xf32>
    %25 = arith.maximumf %23, %24 : vector<8x128xf32>
    %26 = arith.truncf %25 : vector<8x128xf32> to vector<8x128xbf16>
    %c0_15 = arith.constant 0 : index
    %c0_16 = arith.constant 0 : index
    %27 = vector.load %arg5[%c0_15, %c0_16] : memref<1x128xf32, #tpu.memory_space<vmem>>, vector<1x128xf32>
    %c0_17 = arith.constant 0 : index
    %c0_18 = arith.constant 0 : index
    %c0_19 = arith.constant 0 : index
    %28 = vector.load %arg4[%c0_17, %c0_18, %c0_19] : memref<1x128x128xbf16, #tpu.memory_space<vmem>>, vector<1x128x128xbf16>
    %29 = vector.shape_cast %28 : vector<1x128x128xbf16> to vector<128x128xbf16>
    %cst_20 = arith.constant dense<0.000000e+00> : vector<8x128xf32>
    %30 = tpu.matmul %26, %29, %cst_20 {dimension_numbers = #tpu.dot_dimension_numbers<[1], [0], [0], [1], [0, 0, 1, 1], [], []>} : vector<8x128xbf16>, vector<128x128xbf16>, vector<8x128xf32> -> vector<8x128xf32>
    %31 = vector.broadcast %27 : vector<1x128xf32> to vector<8x128xf32>
    %32 = arith.addf %31, %30 : vector<8x128xf32>
    %33 = vector.extract_strided_slice %1 {offsets = [1, 0], sizes = [8, 128], strides = [1, 1]} : vector<10x128xf32> to vector<8x128xf32>
    %34 = arith.addf %32, %33 : vector<8x128xf32>
    %c0_21 = arith.constant 0 : index
    %c0_22 = arith.constant 0 : index
    %c0_23 = arith.constant 0 : index
    %35 = vector.load %arg6[%c0_21, %c0_22, %c0_23] : memref<1x8x128xf32, #tpu.memory_space<vmem>>, vector<1x8x128xf32>
    %36 = vector.shape_cast %35 : vector<1x8x128xf32> to vector<8x128xf32>
    %37 = vector.shape_cast %34 : vector<8x128xf32> to vector<1x8x128xf32>
    tpu.vector_store %arg6[%c0_21, %c0_22, %c0_23], %37 {strides = array<i32>} : memref<1x8x128xf32, #tpu.memory_space<vmem>>, vector<1x8x128xf32>,
    return
  }
  func.func @transform_0(%arg0: i32) -> (i32, i32, i32) {
    %c0_i32 = arith.constant 0 : i32
    %c0_i32_0 = arith.constant 0 : i32
    %c0_i32_1 = arith.constant 0 : i32
    return %arg0, %c0_i32, %c0_i32_0 : i32, i32, i32
  }
  func.func @transform_1(%arg0: i32) -> (i32, i32, i32) {
    %c0_i32 = arith.constant 0 : i32
    %c0_i32_0 = arith.constant 0 : i32
    %c0_i32_1 = arith.constant 0 : i32
    %c0_i32_2 = arith.constant 0 : i32
    return %c0_i32, %c0_i32_0, %c0_i32_1 : i32, i32, i32
  }
  func.func @transform_2(%arg0: i32) -> (i32, i32) {
    %c0_i32 = arith.constant 0 : i32
    %c0_i32_0 = arith.constant 0 : i32
    %c0_i32_1 = arith.constant 0 : i32
    return %c0_i32, %c0_i32_0 : i32, i32
  }
  func.func @transform_3(%arg0: i32) -> (i32, i32, i32) {
    %c0_i32 = arith.constant 0 : i32
    %c0_i32_0 = arith.constant 0 : i32
    %c0_i32_1 = arith.constant 0 : i32
    %c0_i32_2 = arith.constant 0 : i32
    return %c0_i32, %c0_i32_0, %c0_i32_1 : i32, i32, i32
  }
  func.func @transform_4(%arg0: i32) -> (i32, i32) {
    %c0_i32 = arith.constant 0 : i32
    %c0_i32_0 = arith.constant 0 : i32
    %c0_i32_1 = arith.constant 0 : i32
    return %c0_i32, %c0_i32_0 : i32, i32
  }
  func.func @transform_5(%arg0: i32) -> (i32, i32, i32) {
    %c0_i32 = arith.constant 0 : i32
    %c0_i32_0 = arith.constant 0 : i32
    %c0_i32_1 = arith.constant 0 : i32
    return %arg0, %c0_i32, %c0_i32_0 : i32, i32, i32
  }
}

module attributes {stable_mosaic.version = 11 : i64} {
  func.func @_conv1d_kernel(%arg0: i32, %arg1: memref<1x10x128xf32, #tpu.memory_space<vmem>>, %arg2: memref<3x128x128xbf16, #tpu.memory_space<vmem>>, %arg3: memref<1x128xf32, #tpu.memory_space<vmem>>, %arg4: memref<1x8x128xf32, #tpu.memory_space<vmem>>) attributes {dimension_semantics = [#tpu.dimension_semantics<parallel>], iteration_bounds = array<i64: 2>, scalar_prefetch = 0 : i64, scratch_operands = 0 : i64, tpu.core_type = #tpu.core_type<tc>, window_params = [{transform_indices = @transform_0, window_bounds = array<i64: 1, 10, 128>}, {pipeline_mode = #tpu.pipeline_mode<synchronous>, transform_indices = @transform_1, window_bounds = array<i64: 3, 128, 128>}, {pipeline_mode = #tpu.pipeline_mode<synchronous>, transform_indices = @transform_2, window_bounds = array<i64: 1, 128>}, {transform_indices = @transform_3, window_bounds = array<i64: 1, 8, 128>}]} {
    %c0 = arith.constant 0 : index
    %c0_0 = arith.constant 0 : index
    %c0_1 = arith.constant 0 : index
    %0 = vector.load %arg1[%c0, %c0_0, %c0_1] : memref<1x10x128xf32, #tpu.memory_space<vmem>>, vector<1x10x128xf32>
    %1 = vector.shape_cast %0 : vector<1x10x128xf32> to vector<10x128xf32>
    %c0_2 = arith.constant 0 : index
    %c0_3 = arith.constant 0 : index
    %2 = vector.load %arg3[%c0_2, %c0_3] : memref<1x128xf32, #tpu.memory_space<vmem>>, vector<1x128xf32>
    %3 = vector.extract_strided_slice %1 {offsets = [0, 0], sizes = [8, 128], strides = [1, 1]} : vector<10x128xf32> to vector<8x128xf32>
    %4 = arith.truncf %3 : vector<8x128xf32> to vector<8x128xbf16>
    %c0_4 = arith.constant 0 : index
    %c0_5 = arith.constant 0 : index
    %c0_6 = arith.constant 0 : index
    %5 = vector.load %arg2[%c0_4, %c0_5, %c0_6] : memref<3x128x128xbf16, #tpu.memory_space<vmem>>, vector<1x128x128xbf16>
    %6 = vector.shape_cast %5 : vector<1x128x128xbf16> to vector<128x128xbf16>
    %cst = arith.constant dense<0.000000e+00> : vector<8x128xf32>
    %7 = tpu.matmul %4, %6, %cst {dimension_numbers = #tpu.dot_dimension_numbers<[1], [0], [0], [1], [0, 0, 1, 1], [], []>} : vector<8x128xbf16>, vector<128x128xbf16>, vector<8x128xf32> -> vector<8x128xf32>
    %8 = vector.broadcast %2 : vector<1x128xf32> to vector<8x128xf32>
    %9 = arith.addf %8, %7 : vector<8x128xf32>
    %10 = vector.extract_strided_slice %1 {offsets = [1, 0], sizes = [8, 128], strides = [1, 1]} : vector<10x128xf32> to vector<8x128xf32>
    %11 = arith.truncf %10 : vector<8x128xf32> to vector<8x128xbf16>
    %c1 = arith.constant 1 : index
    %c0_7 = arith.constant 0 : index
    %c0_8 = arith.constant 0 : index
    %12 = vector.load %arg2[%c1, %c0_7, %c0_8] : memref<3x128x128xbf16, #tpu.memory_space<vmem>>, vector<1x128x128xbf16>
    %13 = vector.shape_cast %12 : vector<1x128x128xbf16> to vector<128x128xbf16>
    %cst_9 = arith.constant dense<0.000000e+00> : vector<8x128xf32>
    %14 = tpu.matmul %11, %13, %cst_9 {dimension_numbers = #tpu.dot_dimension_numbers<[1], [0], [0], [1], [0, 0, 1, 1], [], []>} : vector<8x128xbf16>, vector<128x128xbf16>, vector<8x128xf32> -> vector<8x128xf32>
    %15 = arith.addf %9, %14 : vector<8x128xf32>
    %16 = vector.extract_strided_slice %1 {offsets = [2, 0], sizes = [8, 128], strides = [1, 1]} : vector<10x128xf32> to vector<8x128xf32>
    %17 = arith.truncf %16 : vector<8x128xf32> to vector<8x128xbf16>
    %c2 = arith.constant 2 : index
    %c0_10 = arith.constant 0 : index
    %c0_11 = arith.constant 0 : index
    %18 = vector.load %arg2[%c2, %c0_10, %c0_11] : memref<3x128x128xbf16, #tpu.memory_space<vmem>>, vector<1x128x128xbf16>
    %19 = vector.shape_cast %18 : vector<1x128x128xbf16> to vector<128x128xbf16>
    %cst_12 = arith.constant dense<0.000000e+00> : vector<8x128xf32>
    %20 = tpu.matmul %17, %19, %cst_12 {dimension_numbers = #tpu.dot_dimension_numbers<[1], [0], [0], [1], [0, 0, 1, 1], [], []>} : vector<8x128xbf16>, vector<128x128xbf16>, vector<8x128xf32> -> vector<8x128xf32>
    %21 = arith.addf %15, %20 : vector<8x128xf32>
    %c0_13 = arith.constant 0 : index
    %c0_14 = arith.constant 0 : index
    %c0_15 = arith.constant 0 : index
    %22 = vector.load %arg4[%c0_13, %c0_14, %c0_15] : memref<1x8x128xf32, #tpu.memory_space<vmem>>, vector<1x8x128xf32>
    %23 = vector.shape_cast %22 : vector<1x8x128xf32> to vector<8x128xf32>
    %24 = vector.shape_cast %21 : vector<8x128xf32> to vector<1x8x128xf32>
    tpu.vector_store %arg4[%c0_13, %c0_14, %c0_15], %24 {strides = array<i32>} : memref<1x8x128xf32, #tpu.memory_space<vmem>>, vector<1x8x128xf32>,
    return
  }
  func.func @transform_0(%arg0: i32) -> (i32, i32, i32) {
    %c0_i32 = arith.constant 0 : i32
    %c0_i32_0 = arith.constant 0 : i32
    %c0_i32_1 = arith.constant 0 : i32
    return %arg0, %c0_i32, %c0_i32_0 : i32, i32, i32
  }
  func.func @transform_1(%arg0: i32) -> (i32, i32, i32) {
    %c0_i32 = arith.constant 0 : i32
    %c0_i32_0 = arith.constant 0 : i32
    %c0_i32_1 = arith.constant 0 : i32
    %c0_i32_2 = arith.constant 0 : i32
    return %c0_i32, %c0_i32_0, %c0_i32_1 : i32, i32, i32
  }
  func.func @transform_2(%arg0: i32) -> (i32, i32) {
    %c0_i32 = arith.constant 0 : i32
    %c0_i32_0 = arith.constant 0 : i32
    %c0_i32_1 = arith.constant 0 : i32
    return %c0_i32, %c0_i32_0 : i32, i32
  }
  func.func @transform_3(%arg0: i32) -> (i32, i32, i32) {
    %c0_i32 = arith.constant 0 : i32
    %c0_i32_0 = arith.constant 0 : i32
    %c0_i32_1 = arith.constant 0 : i32
    return %arg0, %c0_i32, %c0_i32_0 : i32, i32, i32
  }
}

module attributes {stable_mosaic.version = 11 : i64} {
  func.func @_vq_kernel(%arg0: memref<16x128xf32, #tpu.memory_space<vmem>>, %arg1: memref<128x128xf32, #tpu.memory_space<vmem>>, %arg2: memref<1x128xf32, #tpu.memory_space<vmem>>, %arg3: memref<128x128xf32, #tpu.memory_space<vmem>>, %arg4: memref<16x128xf32, #tpu.memory_space<vmem>>, %arg5: memref<16x1xi32, #tpu.memory_space<vmem>>, %arg6: memref<1x128xf32, #tpu.memory_space<vmem>>) attributes {dimension_semantics = [], scalar_prefetch = 0 : i64, scratch_operands = 0 : i64, tpu.core_type = #tpu.core_type<tc>} {
    %c0 = arith.constant 0 : index
    %c0_0 = arith.constant 0 : index
    %0 = vector.load %arg0[%c0, %c0_0] : memref<16x128xf32, #tpu.memory_space<vmem>>, vector<16x128xf32>
    %c0_1 = arith.constant 0 : index
    %c0_2 = arith.constant 0 : index
    %1 = vector.load %arg2[%c0_1, %c0_2] : memref<1x128xf32, #tpu.memory_space<vmem>>, vector<1x128xf32>
    %c0_3 = arith.constant 0 : index
    %c0_4 = arith.constant 0 : index
    %2 = vector.load %arg1[%c0_3, %c0_4] : memref<128x128xf32, #tpu.memory_space<vmem>>, vector<128x128xf32>
    %cst = arith.constant dense<0.000000e+00> : vector<16x128xf32>
    %3 = tpu.matmul %0, %2, %cst {dimension_numbers = #tpu.dot_dimension_numbers<[1], [0], [0], [1], [0, 0, 1, 1], [], []>} : vector<16x128xf32>, vector<128x128xf32>, vector<16x128xf32> -> vector<16x128xf32>
    %cst_5 = arith.constant 2.000000e+00 : f32
    %4 = vector.broadcast %cst_5 : f32 to vector<16x128xf32>
    %5 = arith.mulf %4, %3 : vector<16x128xf32>
    %6 = vector.broadcast %1 : vector<1x128xf32> to vector<16x128xf32>
    %7 = arith.subf %6, %5 : vector<16x128xf32>
    %cst_6 = arith.constant dense<0x7F800000> : vector<16xf32>
    %8 = vector.multi_reduction <minimumf>, %7, %cst_6 [1] : vector<16x128xf32> to vector<16xf32>
    %9 = vector.shape_cast %8 : vector<16xf32> to vector<16x1xf32>
    %10 = tpu.iota {dimensions = array<i32: 1>} : vector<16x128xi32>
    %11 = vector.broadcast %9 : vector<16x1xf32> to vector<16x128xf32>
    %12 = arith.cmpf ole, %7, %11 : vector<16x128xf32>
    %c2147483647_i32 = arith.constant 2147483647 : i32
    %13 = vector.broadcast %c2147483647_i32 : i32 to vector<16x128xi32>
    %14 = arith.select %12, %10, %13 : vector<16x128xi1>, vector<16x128xi32>
    %cst_7 = arith.constant dense<2147483647> : vector<16xi32>
    %15 = vector.multi_reduction <minsi>, %14, %cst_7 [1] : vector<16x128xi32> to vector<16xi32>
    %16 = vector.shape_cast %15 : vector<16xi32> to vector<16x1xi32>
    %17 = vector.broadcast %16 : vector<16x1xi32> to vector<16x128xi32>
    %18 = arith.cmpi eq, %10, %17 : vector<16x128xi32>
    %19 = arith.extui %18 : vector<16x128xi1> to vector<16x128xi32>
    %20 = arith.sitofp %19 : vector<16x128xi32> to vector<16x128xf32>
    %c0_8 = arith.constant 0 : index
    %c0_9 = arith.constant 0 : index
    %21 = vector.load %arg3[%c0_8, %c0_9] : memref<128x128xf32, #tpu.memory_space<vmem>>, vector<128x128xf32>
    %cst_10 = arith.constant dense<0.000000e+00> : vector<16x128xf32>
    %22 = tpu.matmul %20, %21, %cst_10 {dimension_numbers = #tpu.dot_dimension_numbers<[1], [0], [0], [1], [0, 0, 1, 1], [], []>} : vector<16x128xf32>, vector<128x128xf32>, vector<16x128xf32> -> vector<16x128xf32>
    %c0_11 = arith.constant 0 : index
    %c0_12 = arith.constant 0 : index
    %23 = vector.load %arg4[%c0_11, %c0_12] : memref<16x128xf32, #tpu.memory_space<vmem>>, vector<16x128xf32>
    tpu.vector_store %arg4[%c0_11, %c0_12], %22 {strides = array<i32>} : memref<16x128xf32, #tpu.memory_space<vmem>>, vector<16x128xf32>,
    %c0_13 = arith.constant 0 : index
    %c0_14 = arith.constant 0 : index
    %24 = vector.load %arg5[%c0_13, %c0_14] : memref<16x1xi32, #tpu.memory_space<vmem>>, vector<16x1xi32>
    tpu.vector_store %arg5[%c0_13, %c0_14], %16 {strides = array<i32>} : memref<16x1xi32, #tpu.memory_space<vmem>>, vector<16x1xi32>,
    %cst_15 = arith.constant dense<0.000000e+00> : vector<128xf32>
    %25 = vector.multi_reduction <add>, %20, %cst_15 [0] : vector<16x128xf32> to vector<128xf32>
    %26 = vector.shape_cast %25 : vector<128xf32> to vector<1x128xf32>
    %c0_16 = arith.constant 0 : index
    %c0_17 = arith.constant 0 : index
    %27 = vector.load %arg6[%c0_16, %c0_17] : memref<1x128xf32, #tpu.memory_space<vmem>>, vector<1x128xf32>
    tpu.vector_store %arg6[%c0_16, %c0_17], %26 {strides = array<i32>} : memref<1x128xf32, #tpu.memory_space<vmem>>, vector<1x128xf32>,
    return
  }
}

module attributes {stable_mosaic.version = 11 : i64} {
  func.func @_upconv_kernel(%arg0: i32, %arg1: memref<1x10x128xf32, #tpu.memory_space<vmem>>, %arg2: memref<2x128x128xbf16, #tpu.memory_space<vmem>>, %arg3: memref<2x128x128xbf16, #tpu.memory_space<vmem>>, %arg4: memref<1x128xf32, #tpu.memory_space<vmem>>, %arg5: memref<1x8x128xf32, #tpu.memory_space<vmem>>, %arg6: memref<1x8x128xf32, #tpu.memory_space<vmem>>) attributes {dimension_semantics = [#tpu.dimension_semantics<parallel>], iteration_bounds = array<i64: 2>, scalar_prefetch = 0 : i64, scratch_operands = 0 : i64, tpu.core_type = #tpu.core_type<tc>, window_params = [{transform_indices = @transform_0, window_bounds = array<i64: 1, 10, 128>}, {pipeline_mode = #tpu.pipeline_mode<synchronous>, transform_indices = @transform_1, window_bounds = array<i64: 2, 128, 128>}, {pipeline_mode = #tpu.pipeline_mode<synchronous>, transform_indices = @transform_2, window_bounds = array<i64: 2, 128, 128>}, {pipeline_mode = #tpu.pipeline_mode<synchronous>, transform_indices = @transform_3, window_bounds = array<i64: 1, 128>}, {transform_indices = @transform_4, window_bounds = array<i64: 1, 8, 128>}, {transform_indices = @transform_5, window_bounds = array<i64: 1, 8, 128>}]} {
    %c0 = arith.constant 0 : index
    %c0_0 = arith.constant 0 : index
    %c0_1 = arith.constant 0 : index
    %0 = vector.load %arg1[%c0, %c0_0, %c0_1] : memref<1x10x128xf32, #tpu.memory_space<vmem>>, vector<1x10x128xf32>
    %1 = vector.shape_cast %0 : vector<1x10x128xf32> to vector<10x128xf32>
    %c0_2 = arith.constant 0 : index
    %c0_3 = arith.constant 0 : index
    %2 = vector.load %arg4[%c0_2, %c0_3] : memref<1x128xf32, #tpu.memory_space<vmem>>, vector<1x128xf32>
    %3 = vector.extract_strided_slice %1 {offsets = [0, 0], sizes = [8, 128], strides = [1, 1]} : vector<10x128xf32> to vector<8x128xf32>
    %4 = arith.truncf %3 : vector<8x128xf32> to vector<8x128xbf16>
    %5 = vector.extract_strided_slice %1 {offsets = [1, 0], sizes = [8, 128], strides = [1, 1]} : vector<10x128xf32> to vector<8x128xf32>
    %6 = arith.truncf %5 : vector<8x128xf32> to vector<8x128xbf16>
    %7 = vector.extract_strided_slice %1 {offsets = [2, 0], sizes = [8, 128], strides = [1, 1]} : vector<10x128xf32> to vector<8x128xf32>
    %8 = arith.truncf %7 : vector<8x128xf32> to vector<8x128xbf16>
    %c0_4 = arith.constant 0 : index
    %c0_5 = arith.constant 0 : index
    %c0_6 = arith.constant 0 : index
    %9 = vector.load %arg2[%c0_4, %c0_5, %c0_6] : memref<2x128x128xbf16, #tpu.memory_space<vmem>>, vector<1x128x128xbf16>
    %10 = vector.shape_cast %9 : vector<1x128x128xbf16> to vector<128x128xbf16>
    %cst = arith.constant dense<0.000000e+00> : vector<8x128xf32>
    %11 = tpu.matmul %4, %10, %cst {dimension_numbers = #tpu.dot_dimension_numbers<[1], [0], [0], [1], [0, 0, 1, 1], [], []>} : vector<8x128xbf16>, vector<128x128xbf16>, vector<8x128xf32> -> vector<8x128xf32>
    %12 = vector.broadcast %2 : vector<1x128xf32> to vector<8x128xf32>
    %13 = arith.addf %12, %11 : vector<8x128xf32>
    %c1 = arith.constant 1 : index
    %c0_7 = arith.constant 0 : index
    %c0_8 = arith.constant 0 : index
    %14 = vector.load %arg2[%c1, %c0_7, %c0_8] : memref<2x128x128xbf16, #tpu.memory_space<vmem>>, vector<1x128x128xbf16>
    %15 = vector.shape_cast %14 : vector<1x128x128xbf16> to vector<128x128xbf16>
    %cst_9 = arith.constant dense<0.000000e+00> : vector<8x128xf32>
    %16 = tpu.matmul %6, %15, %cst_9 {dimension_numbers = #tpu.dot_dimension_numbers<[1], [0], [0], [1], [0, 0, 1, 1], [], []>} : vector<8x128xbf16>, vector<128x128xbf16>, vector<8x128xf32> -> vector<8x128xf32>
    %17 = arith.addf %13, %16 : vector<8x128xf32>
    %c0_10 = arith.constant 0 : index
    %c0_11 = arith.constant 0 : index
    %c0_12 = arith.constant 0 : index
    %18 = vector.load %arg3[%c0_10, %c0_11, %c0_12] : memref<2x128x128xbf16, #tpu.memory_space<vmem>>, vector<1x128x128xbf16>
    %19 = vector.shape_cast %18 : vector<1x128x128xbf16> to vector<128x128xbf16>
    %cst_13 = arith.constant dense<0.000000e+00> : vector<8x128xf32>
    %20 = tpu.matmul %6, %19, %cst_13 {dimension_numbers = #tpu.dot_dimension_numbers<[1], [0], [0], [1], [0, 0, 1, 1], [], []>} : vector<8x128xbf16>, vector<128x128xbf16>, vector<8x128xf32> -> vector<8x128xf32>
    %21 = vector.broadcast %2 : vector<1x128xf32> to vector<8x128xf32>
    %22 = arith.addf %21, %20 : vector<8x128xf32>
    %c1_14 = arith.constant 1 : index
    %c0_15 = arith.constant 0 : index
    %c0_16 = arith.constant 0 : index
    %23 = vector.load %arg3[%c1_14, %c0_15, %c0_16] : memref<2x128x128xbf16, #tpu.memory_space<vmem>>, vector<1x128x128xbf16>
    %24 = vector.shape_cast %23 : vector<1x128x128xbf16> to vector<128x128xbf16>
    %cst_17 = arith.constant dense<0.000000e+00> : vector<8x128xf32>
    %25 = tpu.matmul %8, %24, %cst_17 {dimension_numbers = #tpu.dot_dimension_numbers<[1], [0], [0], [1], [0, 0, 1, 1], [], []>} : vector<8x128xbf16>, vector<128x128xbf16>, vector<8x128xf32> -> vector<8x128xf32>
    %26 = arith.addf %22, %25 : vector<8x128xf32>
    %c0_18 = arith.constant 0 : index
    %c0_19 = arith.constant 0 : index
    %c0_20 = arith.constant 0 : index
    %27 = vector.load %arg5[%c0_18, %c0_19, %c0_20] : memref<1x8x128xf32, #tpu.memory_space<vmem>>, vector<1x8x128xf32>
    %28 = vector.shape_cast %27 : vector<1x8x128xf32> to vector<8x128xf32>
    %29 = vector.shape_cast %17 : vector<8x128xf32> to vector<1x8x128xf32>
    tpu.vector_store %arg5[%c0_18, %c0_19, %c0_20], %29 {strides = array<i32>} : memref<1x8x128xf32, #tpu.memory_space<vmem>>, vector<1x8x128xf32>,
    %c0_21 = arith.constant 0 : index
    %c0_22 = arith.constant 0 : index
    %c0_23 = arith.constant 0 : index
    %30 = vector.load %arg6[%c0_21, %c0_22, %c0_23] : memref<1x8x128xf32, #tpu.memory_space<vmem>>, vector<1x8x128xf32>
    %31 = vector.shape_cast %30 : vector<1x8x128xf32> to vector<8x128xf32>
    %32 = vector.shape_cast %26 : vector<8x128xf32> to vector<1x8x128xf32>
    tpu.vector_store %arg6[%c0_21, %c0_22, %c0_23], %32 {strides = array<i32>} : memref<1x8x128xf32, #tpu.memory_space<vmem>>, vector<1x8x128xf32>,
    return
  }
  func.func @transform_0(%arg0: i32) -> (i32, i32, i32) {
    %c0_i32 = arith.constant 0 : i32
    %c0_i32_0 = arith.constant 0 : i32
    %c0_i32_1 = arith.constant 0 : i32
    return %arg0, %c0_i32, %c0_i32_0 : i32, i32, i32
  }
  func.func @transform_1(%arg0: i32) -> (i32, i32, i32) {
    %c0_i32 = arith.constant 0 : i32
    %c0_i32_0 = arith.constant 0 : i32
    %c0_i32_1 = arith.constant 0 : i32
    %c0_i32_2 = arith.constant 0 : i32
    return %c0_i32, %c0_i32_0, %c0_i32_1 : i32, i32, i32
  }
  func.func @transform_2(%arg0: i32) -> (i32, i32, i32) {
    %c0_i32 = arith.constant 0 : i32
    %c0_i32_0 = arith.constant 0 : i32
    %c0_i32_1 = arith.constant 0 : i32
    %c0_i32_2 = arith.constant 0 : i32
    return %c0_i32, %c0_i32_0, %c0_i32_1 : i32, i32, i32
  }
  func.func @transform_3(%arg0: i32) -> (i32, i32) {
    %c0_i32 = arith.constant 0 : i32
    %c0_i32_0 = arith.constant 0 : i32
    %c0_i32_1 = arith.constant 0 : i32
    return %c0_i32, %c0_i32_0 : i32, i32
  }
  func.func @transform_4(%arg0: i32) -> (i32, i32, i32) {
    %c0_i32 = arith.constant 0 : i32
    %c0_i32_0 = arith.constant 0 : i32
    %c0_i32_1 = arith.constant 0 : i32
    return %arg0, %c0_i32, %c0_i32_0 : i32, i32, i32
  }
  func.func @transform_5(%arg0: i32) -> (i32, i32, i32) {
    %c0_i32 = arith.constant 0 : i32
    %c0_i32_0 = arith.constant 0 : i32
    %c0_i32_1 = arith.constant 0 : i32
    return %arg0, %c0_i32, %c0_i32_0 : i32, i32, i32
  }
}

module attributes {stable_mosaic.version = 11 : i64} {
  func.func @_conv1d_kernel(%arg0: i32, %arg1: memref<1x10x128xf32, #tpu.memory_space<vmem>>, %arg2: memref<3x128x128xbf16, #tpu.memory_space<vmem>>, %arg3: memref<1x128xf32, #tpu.memory_space<vmem>>, %arg4: memref<1x8x128xf32, #tpu.memory_space<vmem>>) attributes {dimension_semantics = [#tpu.dimension_semantics<parallel>], iteration_bounds = array<i64: 2>, scalar_prefetch = 0 : i64, scratch_operands = 0 : i64, tpu.core_type = #tpu.core_type<tc>, window_params = [{transform_indices = @transform_0, window_bounds = array<i64: 1, 10, 128>}, {pipeline_mode = #tpu.pipeline_mode<synchronous>, transform_indices = @transform_1, window_bounds = array<i64: 3, 128, 128>}, {pipeline_mode = #tpu.pipeline_mode<synchronous>, transform_indices = @transform_2, window_bounds = array<i64: 1, 128>}, {transform_indices = @transform_3, window_bounds = array<i64: 1, 8, 128>}]} {
    %c0 = arith.constant 0 : index
    %c0_0 = arith.constant 0 : index
    %c0_1 = arith.constant 0 : index
    %0 = vector.load %arg1[%c0, %c0_0, %c0_1] : memref<1x10x128xf32, #tpu.memory_space<vmem>>, vector<1x10x128xf32>
    %1 = vector.shape_cast %0 : vector<1x10x128xf32> to vector<10x128xf32>
    %c0_2 = arith.constant 0 : index
    %c0_3 = arith.constant 0 : index
    %2 = vector.load %arg3[%c0_2, %c0_3] : memref<1x128xf32, #tpu.memory_space<vmem>>, vector<1x128xf32>
    %3 = vector.extract_strided_slice %1 {offsets = [0, 0], sizes = [8, 128], strides = [1, 1]} : vector<10x128xf32> to vector<8x128xf32>
    %4 = arith.truncf %3 : vector<8x128xf32> to vector<8x128xbf16>
    %c0_4 = arith.constant 0 : index
    %c0_5 = arith.constant 0 : index
    %c0_6 = arith.constant 0 : index
    %5 = vector.load %arg2[%c0_4, %c0_5, %c0_6] : memref<3x128x128xbf16, #tpu.memory_space<vmem>>, vector<1x128x128xbf16>
    %6 = vector.shape_cast %5 : vector<1x128x128xbf16> to vector<128x128xbf16>
    %cst = arith.constant dense<0.000000e+00> : vector<8x128xf32>
    %7 = tpu.matmul %4, %6, %cst {dimension_numbers = #tpu.dot_dimension_numbers<[1], [0], [0], [1], [0, 0, 1, 1], [], []>} : vector<8x128xbf16>, vector<128x128xbf16>, vector<8x128xf32> -> vector<8x128xf32>
    %8 = vector.broadcast %2 : vector<1x128xf32> to vector<8x128xf32>
    %9 = arith.addf %8, %7 : vector<8x128xf32>
    %10 = vector.extract_strided_slice %1 {offsets = [1, 0], sizes = [8, 128], strides = [1, 1]} : vector<10x128xf32> to vector<8x128xf32>
    %11 = arith.truncf %10 : vector<8x128xf32> to vector<8x128xbf16>
    %c1 = arith.constant 1 : index
    %c0_7 = arith.constant 0 : index
    %c0_8 = arith.constant 0 : index
    %12 = vector.load %arg2[%c1, %c0_7, %c0_8] : memref<3x128x128xbf16, #tpu.memory_space<vmem>>, vector<1x128x128xbf16>
    %13 = vector.shape_cast %12 : vector<1x128x128xbf16> to vector<128x128xbf16>
    %cst_9 = arith.constant dense<0.000000e+00> : vector<8x128xf32>
    %14 = tpu.matmul %11, %13, %cst_9 {dimension_numbers = #tpu.dot_dimension_numbers<[1], [0], [0], [1], [0, 0, 1, 1], [], []>} : vector<8x128xbf16>, vector<128x128xbf16>, vector<8x128xf32> -> vector<8x128xf32>
    %15 = arith.addf %9, %14 : vector<8x128xf32>
    %16 = vector.extract_strided_slice %1 {offsets = [2, 0], sizes = [8, 128], strides = [1, 1]} : vector<10x128xf32> to vector<8x128xf32>
    %17 = arith.truncf %16 : vector<8x128xf32> to vector<8x128xbf16>
    %c2 = arith.constant 2 : index
    %c0_10 = arith.constant 0 : index
    %c0_11 = arith.constant 0 : index
    %18 = vector.load %arg2[%c2, %c0_10, %c0_11] : memref<3x128x128xbf16, #tpu.memory_space<vmem>>, vector<1x128x128xbf16>
    %19 = vector.shape_cast %18 : vector<1x128x128xbf16> to vector<128x128xbf16>
    %cst_12 = arith.constant dense<0.000000e+00> : vector<8x128xf32>
    %20 = tpu.matmul %17, %19, %cst_12 {dimension_numbers = #tpu.dot_dimension_numbers<[1], [0], [0], [1], [0, 0, 1, 1], [], []>} : vector<8x128xbf16>, vector<128x128xbf16>, vector<8x128xf32> -> vector<8x128xf32>
    %21 = arith.addf %15, %20 : vector<8x128xf32>
    %cst_13 = arith.constant 0.000000e+00 : f32
    %22 = vector.broadcast %cst_13 : f32 to vector<8x128xf32>
    %23 = arith.maximumf %21, %22 : vector<8x128xf32>
    %c0_14 = arith.constant 0 : index
    %c0_15 = arith.constant 0 : index
    %c0_16 = arith.constant 0 : index
    %24 = vector.load %arg4[%c0_14, %c0_15, %c0_16] : memref<1x8x128xf32, #tpu.memory_space<vmem>>, vector<1x8x128xf32>
    %25 = vector.shape_cast %24 : vector<1x8x128xf32> to vector<8x128xf32>
    %26 = vector.shape_cast %23 : vector<8x128xf32> to vector<1x8x128xf32>
    tpu.vector_store %arg4[%c0_14, %c0_15, %c0_16], %26 {strides = array<i32>} : memref<1x8x128xf32, #tpu.memory_space<vmem>>, vector<1x8x128xf32>,
    return
  }
  func.func @transform_0(%arg0: i32) -> (i32, i32, i32) {
    %c0_i32 = arith.constant 0 : i32
    %c0_i32_0 = arith.constant 0 : i32
    %c0_i32_1 = arith.constant 0 : i32
    return %arg0, %c0_i32, %c0_i32_0 : i32, i32, i32
  }
  func.func @transform_1(%arg0: i32) -> (i32, i32, i32) {
    %c0_i32 = arith.constant 0 : i32
    %c0_i32_0 = arith.constant 0 : i32
    %c0_i32_1 = arith.constant 0 : i32
    %c0_i32_2 = arith.constant 0 : i32
    return %c0_i32, %c0_i32_0, %c0_i32_1 : i32, i32, i32
  }
  func.func @transform_2(%arg0: i32) -> (i32, i32) {
    %c0_i32 = arith.constant 0 : i32
    %c0_i32_0 = arith.constant 0 : i32
    %c0_i32_1 = arith.constant 0 : i32
    return %c0_i32, %c0_i32_0 : i32, i32
  }
  func.func @transform_3(%arg0: i32) -> (i32, i32, i32) {
    %c0_i32 = arith.constant 0 : i32
    %c0_i32_0 = arith.constant 0 : i32
    %c0_i32_1 = arith.constant 0 : i32
    return %arg0, %c0_i32, %c0_i32_0 : i32, i32, i32
  }
}

module attributes {stable_mosaic.version = 11 : i64} {
  func.func @_upconv_kernel(%arg0: i32, %arg1: memref<1x18x128xf32, #tpu.memory_space<vmem>>, %arg2: memref<2x128x128xbf16, #tpu.memory_space<vmem>>, %arg3: memref<2x128x128xbf16, #tpu.memory_space<vmem>>, %arg4: memref<1x128xf32, #tpu.memory_space<vmem>>, %arg5: memref<1x16x128xf32, #tpu.memory_space<vmem>>, %arg6: memref<1x16x128xf32, #tpu.memory_space<vmem>>) attributes {dimension_semantics = [#tpu.dimension_semantics<parallel>], iteration_bounds = array<i64: 2>, scalar_prefetch = 0 : i64, scratch_operands = 0 : i64, tpu.core_type = #tpu.core_type<tc>, window_params = [{transform_indices = @transform_0, window_bounds = array<i64: 1, 18, 128>}, {pipeline_mode = #tpu.pipeline_mode<synchronous>, transform_indices = @transform_1, window_bounds = array<i64: 2, 128, 128>}, {pipeline_mode = #tpu.pipeline_mode<synchronous>, transform_indices = @transform_2, window_bounds = array<i64: 2, 128, 128>}, {pipeline_mode = #tpu.pipeline_mode<synchronous>, transform_indices = @transform_3, window_bounds = array<i64: 1, 128>}, {transform_indices = @transform_4, window_bounds = array<i64: 1, 16, 128>}, {transform_indices = @transform_5, window_bounds = array<i64: 1, 16, 128>}]} {
    %c0 = arith.constant 0 : index
    %c0_0 = arith.constant 0 : index
    %c0_1 = arith.constant 0 : index
    %0 = vector.load %arg1[%c0, %c0_0, %c0_1] : memref<1x18x128xf32, #tpu.memory_space<vmem>>, vector<1x18x128xf32>
    %1 = vector.shape_cast %0 : vector<1x18x128xf32> to vector<18x128xf32>
    %c0_2 = arith.constant 0 : index
    %c0_3 = arith.constant 0 : index
    %2 = vector.load %arg4[%c0_2, %c0_3] : memref<1x128xf32, #tpu.memory_space<vmem>>, vector<1x128xf32>
    %3 = vector.extract_strided_slice %1 {offsets = [0, 0], sizes = [16, 128], strides = [1, 1]} : vector<18x128xf32> to vector<16x128xf32>
    %4 = arith.truncf %3 : vector<16x128xf32> to vector<16x128xbf16>
    %5 = vector.extract_strided_slice %1 {offsets = [1, 0], sizes = [16, 128], strides = [1, 1]} : vector<18x128xf32> to vector<16x128xf32>
    %6 = arith.truncf %5 : vector<16x128xf32> to vector<16x128xbf16>
    %7 = vector.extract_strided_slice %1 {offsets = [2, 0], sizes = [16, 128], strides = [1, 1]} : vector<18x128xf32> to vector<16x128xf32>
    %8 = arith.truncf %7 : vector<16x128xf32> to vector<16x128xbf16>
    %c0_4 = arith.constant 0 : index
    %c0_5 = arith.constant 0 : index
    %c0_6 = arith.constant 0 : index
    %9 = vector.load %arg2[%c0_4, %c0_5, %c0_6] : memref<2x128x128xbf16, #tpu.memory_space<vmem>>, vector<1x128x128xbf16>
    %10 = vector.shape_cast %9 : vector<1x128x128xbf16> to vector<128x128xbf16>
    %cst = arith.constant dense<0.000000e+00> : vector<16x128xf32>
    %11 = tpu.matmul %4, %10, %cst {dimension_numbers = #tpu.dot_dimension_numbers<[1], [0], [0], [1], [0, 0, 1, 1], [], []>} : vector<16x128xbf16>, vector<128x128xbf16>, vector<16x128xf32> -> vector<16x128xf32>
    %12 = vector.broadcast %2 : vector<1x128xf32> to vector<16x128xf32>
    %13 = arith.addf %12, %11 : vector<16x128xf32>
    %c1 = arith.constant 1 : index
    %c0_7 = arith.constant 0 : index
    %c0_8 = arith.constant 0 : index
    %14 = vector.load %arg2[%c1, %c0_7, %c0_8] : memref<2x128x128xbf16, #tpu.memory_space<vmem>>, vector<1x128x128xbf16>
    %15 = vector.shape_cast %14 : vector<1x128x128xbf16> to vector<128x128xbf16>
    %cst_9 = arith.constant dense<0.000000e+00> : vector<16x128xf32>
    %16 = tpu.matmul %6, %15, %cst_9 {dimension_numbers = #tpu.dot_dimension_numbers<[1], [0], [0], [1], [0, 0, 1, 1], [], []>} : vector<16x128xbf16>, vector<128x128xbf16>, vector<16x128xf32> -> vector<16x128xf32>
    %17 = arith.addf %13, %16 : vector<16x128xf32>
    %c0_10 = arith.constant 0 : index
    %c0_11 = arith.constant 0 : index
    %c0_12 = arith.constant 0 : index
    %18 = vector.load %arg3[%c0_10, %c0_11, %c0_12] : memref<2x128x128xbf16, #tpu.memory_space<vmem>>, vector<1x128x128xbf16>
    %19 = vector.shape_cast %18 : vector<1x128x128xbf16> to vector<128x128xbf16>
    %cst_13 = arith.constant dense<0.000000e+00> : vector<16x128xf32>
    %20 = tpu.matmul %6, %19, %cst_13 {dimension_numbers = #tpu.dot_dimension_numbers<[1], [0], [0], [1], [0, 0, 1, 1], [], []>} : vector<16x128xbf16>, vector<128x128xbf16>, vector<16x128xf32> -> vector<16x128xf32>
    %21 = vector.broadcast %2 : vector<1x128xf32> to vector<16x128xf32>
    %22 = arith.addf %21, %20 : vector<16x128xf32>
    %c1_14 = arith.constant 1 : index
    %c0_15 = arith.constant 0 : index
    %c0_16 = arith.constant 0 : index
    %23 = vector.load %arg3[%c1_14, %c0_15, %c0_16] : memref<2x128x128xbf16, #tpu.memory_space<vmem>>, vector<1x128x128xbf16>
    %24 = vector.shape_cast %23 : vector<1x128x128xbf16> to vector<128x128xbf16>
    %cst_17 = arith.constant dense<0.000000e+00> : vector<16x128xf32>
    %25 = tpu.matmul %8, %24, %cst_17 {dimension_numbers = #tpu.dot_dimension_numbers<[1], [0], [0], [1], [0, 0, 1, 1], [], []>} : vector<16x128xbf16>, vector<128x128xbf16>, vector<16x128xf32> -> vector<16x128xf32>
    %26 = arith.addf %22, %25 : vector<16x128xf32>
    %c0_18 = arith.constant 0 : index
    %c0_19 = arith.constant 0 : index
    %c0_20 = arith.constant 0 : index
    %27 = vector.load %arg5[%c0_18, %c0_19, %c0_20] : memref<1x16x128xf32, #tpu.memory_space<vmem>>, vector<1x16x128xf32>
    %28 = vector.shape_cast %27 : vector<1x16x128xf32> to vector<16x128xf32>
    %29 = vector.shape_cast %17 : vector<16x128xf32> to vector<1x16x128xf32>
    tpu.vector_store %arg5[%c0_18, %c0_19, %c0_20], %29 {strides = array<i32>} : memref<1x16x128xf32, #tpu.memory_space<vmem>>, vector<1x16x128xf32>,
    %c0_21 = arith.constant 0 : index
    %c0_22 = arith.constant 0 : index
    %c0_23 = arith.constant 0 : index
    %30 = vector.load %arg6[%c0_21, %c0_22, %c0_23] : memref<1x16x128xf32, #tpu.memory_space<vmem>>, vector<1x16x128xf32>
    %31 = vector.shape_cast %30 : vector<1x16x128xf32> to vector<16x128xf32>
    %32 = vector.shape_cast %26 : vector<16x128xf32> to vector<1x16x128xf32>
    tpu.vector_store %arg6[%c0_21, %c0_22, %c0_23], %32 {strides = array<i32>} : memref<1x16x128xf32, #tpu.memory_space<vmem>>, vector<1x16x128xf32>,
    return
  }
  func.func @transform_0(%arg0: i32) -> (i32, i32, i32) {
    %c0_i32 = arith.constant 0 : i32
    %c0_i32_0 = arith.constant 0 : i32
    %c0_i32_1 = arith.constant 0 : i32
    return %arg0, %c0_i32, %c0_i32_0 : i32, i32, i32
  }
  func.func @transform_1(%arg0: i32) -> (i32, i32, i32) {
    %c0_i32 = arith.constant 0 : i32
    %c0_i32_0 = arith.constant 0 : i32
    %c0_i32_1 = arith.constant 0 : i32
    %c0_i32_2 = arith.constant 0 : i32
    return %c0_i32, %c0_i32_0, %c0_i32_1 : i32, i32, i32
  }
  func.func @transform_2(%arg0: i32) -> (i32, i32, i32) {
    %c0_i32 = arith.constant 0 : i32
    %c0_i32_0 = arith.constant 0 : i32
    %c0_i32_1 = arith.constant 0 : i32
    %c0_i32_2 = arith.constant 0 : i32
    return %c0_i32, %c0_i32_0, %c0_i32_1 : i32, i32, i32
  }
  func.func @transform_3(%arg0: i32) -> (i32, i32) {
    %c0_i32 = arith.constant 0 : i32
    %c0_i32_0 = arith.constant 0 : i32
    %c0_i32_1 = arith.constant 0 : i32
    return %c0_i32, %c0_i32_0 : i32, i32
  }
  func.func @transform_4(%arg0: i32) -> (i32, i32, i32) {
    %c0_i32 = arith.constant 0 : i32
    %c0_i32_0 = arith.constant 0 : i32
    %c0_i32_1 = arith.constant 0 : i32
    return %arg0, %c0_i32, %c0_i32_0 : i32, i32, i32
  }
  func.func @transform_5(%arg0: i32) -> (i32, i32, i32) {
    %c0_i32 = arith.constant 0 : i32
    %c0_i32_0 = arith.constant 0 : i32
    %c0_i32_1 = arith.constant 0 : i32
    return %arg0, %c0_i32, %c0_i32_0 : i32, i32, i32
  }
}

module attributes {stable_mosaic.version = 11 : i64} {
  func.func @_conv1d_kernel(%arg0: i32, %arg1: memref<1x34x128xf32, #tpu.memory_space<vmem>>, %arg2: memref<3x128x128xbf16, #tpu.memory_space<vmem>>, %arg3: memref<1x128xf32, #tpu.memory_space<vmem>>, %arg4: memref<1x32x128xf32, #tpu.memory_space<vmem>>) attributes {dimension_semantics = [#tpu.dimension_semantics<parallel>], iteration_bounds = array<i64: 2>, scalar_prefetch = 0 : i64, scratch_operands = 0 : i64, tpu.core_type = #tpu.core_type<tc>, window_params = [{transform_indices = @transform_0, window_bounds = array<i64: 1, 34, 128>}, {pipeline_mode = #tpu.pipeline_mode<synchronous>, transform_indices = @transform_1, window_bounds = array<i64: 3, 128, 128>}, {pipeline_mode = #tpu.pipeline_mode<synchronous>, transform_indices = @transform_2, window_bounds = array<i64: 1, 128>}, {transform_indices = @transform_3, window_bounds = array<i64: 1, 32, 128>}]} {
    %c0 = arith.constant 0 : index
    %c0_0 = arith.constant 0 : index
    %c0_1 = arith.constant 0 : index
    %0 = vector.load %arg1[%c0, %c0_0, %c0_1] : memref<1x34x128xf32, #tpu.memory_space<vmem>>, vector<1x34x128xf32>
    %1 = vector.shape_cast %0 : vector<1x34x128xf32> to vector<34x128xf32>
    %c0_2 = arith.constant 0 : index
    %c0_3 = arith.constant 0 : index
    %2 = vector.load %arg3[%c0_2, %c0_3] : memref<1x128xf32, #tpu.memory_space<vmem>>, vector<1x128xf32>
    %3 = vector.extract_strided_slice %1 {offsets = [0, 0], sizes = [32, 128], strides = [1, 1]} : vector<34x128xf32> to vector<32x128xf32>
    %4 = arith.truncf %3 : vector<32x128xf32> to vector<32x128xbf16>
    %c0_4 = arith.constant 0 : index
    %c0_5 = arith.constant 0 : index
    %c0_6 = arith.constant 0 : index
    %5 = vector.load %arg2[%c0_4, %c0_5, %c0_6] : memref<3x128x128xbf16, #tpu.memory_space<vmem>>, vector<1x128x128xbf16>
    %6 = vector.shape_cast %5 : vector<1x128x128xbf16> to vector<128x128xbf16>
    %cst = arith.constant dense<0.000000e+00> : vector<32x128xf32>
    %7 = tpu.matmul %4, %6, %cst {dimension_numbers = #tpu.dot_dimension_numbers<[1], [0], [0], [1], [0, 0, 1, 1], [], []>} : vector<32x128xbf16>, vector<128x128xbf16>, vector<32x128xf32> -> vector<32x128xf32>
    %8 = vector.broadcast %2 : vector<1x128xf32> to vector<32x128xf32>
    %9 = arith.addf %8, %7 : vector<32x128xf32>
    %10 = vector.extract_strided_slice %1 {offsets = [1, 0], sizes = [32, 128], strides = [1, 1]} : vector<34x128xf32> to vector<32x128xf32>
    %11 = arith.truncf %10 : vector<32x128xf32> to vector<32x128xbf16>
    %c1 = arith.constant 1 : index
    %c0_7 = arith.constant 0 : index
    %c0_8 = arith.constant 0 : index
    %12 = vector.load %arg2[%c1, %c0_7, %c0_8] : memref<3x128x128xbf16, #tpu.memory_space<vmem>>, vector<1x128x128xbf16>
    %13 = vector.shape_cast %12 : vector<1x128x128xbf16> to vector<128x128xbf16>
    %cst_9 = arith.constant dense<0.000000e+00> : vector<32x128xf32>
    %14 = tpu.matmul %11, %13, %cst_9 {dimension_numbers = #tpu.dot_dimension_numbers<[1], [0], [0], [1], [0, 0, 1, 1], [], []>} : vector<32x128xbf16>, vector<128x128xbf16>, vector<32x128xf32> -> vector<32x128xf32>
    %15 = arith.addf %9, %14 : vector<32x128xf32>
    %16 = vector.extract_strided_slice %1 {offsets = [2, 0], sizes = [32, 128], strides = [1, 1]} : vector<34x128xf32> to vector<32x128xf32>
    %17 = arith.truncf %16 : vector<32x128xf32> to vector<32x128xbf16>
    %c2 = arith.constant 2 : index
    %c0_10 = arith.constant 0 : index
    %c0_11 = arith.constant 0 : index
    %18 = vector.load %arg2[%c2, %c0_10, %c0_11] : memref<3x128x128xbf16, #tpu.memory_space<vmem>>, vector<1x128x128xbf16>
    %19 = vector.shape_cast %18 : vector<1x128x128xbf16> to vector<128x128xbf16>
    %cst_12 = arith.constant dense<0.000000e+00> : vector<32x128xf32>
    %20 = tpu.matmul %17, %19, %cst_12 {dimension_numbers = #tpu.dot_dimension_numbers<[1], [0], [0], [1], [0, 0, 1, 1], [], []>} : vector<32x128xbf16>, vector<128x128xbf16>, vector<32x128xf32> -> vector<32x128xf32>
    %21 = arith.addf %15, %20 : vector<32x128xf32>
    %c0_13 = arith.constant 0 : index
    %c0_14 = arith.constant 0 : index
    %c0_15 = arith.constant 0 : index
    %22 = vector.load %arg4[%c0_13, %c0_14, %c0_15] : memref<1x32x128xf32, #tpu.memory_space<vmem>>, vector<1x32x128xf32>
    %23 = vector.shape_cast %22 : vector<1x32x128xf32> to vector<32x128xf32>
    %24 = vector.shape_cast %21 : vector<32x128xf32> to vector<1x32x128xf32>
    tpu.vector_store %arg4[%c0_13, %c0_14, %c0_15], %24 {strides = array<i32>} : memref<1x32x128xf32, #tpu.memory_space<vmem>>, vector<1x32x128xf32>,
    return
  }
  func.func @transform_0(%arg0: i32) -> (i32, i32, i32) {
    %c0_i32 = arith.constant 0 : i32
    %c0_i32_0 = arith.constant 0 : i32
    %c0_i32_1 = arith.constant 0 : i32
    return %arg0, %c0_i32, %c0_i32_0 : i32, i32, i32
  }
  func.func @transform_1(%arg0: i32) -> (i32, i32, i32) {
    %c0_i32 = arith.constant 0 : i32
    %c0_i32_0 = arith.constant 0 : i32
    %c0_i32_1 = arith.constant 0 : i32
    %c0_i32_2 = arith.constant 0 : i32
    return %c0_i32, %c0_i32_0, %c0_i32_1 : i32, i32, i32
  }
  func.func @transform_2(%arg0: i32) -> (i32, i32) {
    %c0_i32 = arith.constant 0 : i32
    %c0_i32_0 = arith.constant 0 : i32
    %c0_i32_1 = arith.constant 0 : i32
    return %c0_i32, %c0_i32_0 : i32, i32
  }
  func.func @transform_3(%arg0: i32) -> (i32, i32, i32) {
    %c0_i32 = arith.constant 0 : i32
    %c0_i32_0 = arith.constant 0 : i32
    %c0_i32_1 = arith.constant 0 : i32
    return %arg0, %c0_i32, %c0_i32_0 : i32, i32, i32
  }
}

</mosaic_0001>

<llo_original>
// kernel: spatial_transformer_human_vqvae_forward.18
$region0: #{spatial_transformer_human_vqvae_forward.18}
  #allocation0 [shape = 'u32[]', space=smem, size = 0x4, offset = 0x4, fixed_abs, tag = 'smem constant byte address 0x4 - core index']
  #allocation1 [shape = 'u32[144,128]{1,0:T(1,128)}', space=vmem, size = 0x12000, scoped, tag = 'internal scratch']
  %s0 = inlined_call_operand.vmem [shape: f32[2,34,128], index: 0, kind: input, shape index: {}]
  %s1 = inlined_call_operand.vmem [shape: bf16[3,128,128], index: 1, kind: input, shape index: {}]
  %s2 = inlined_call_operand.vmem [shape: f32[1,128], index: 2, kind: input, shape index: {}]
  %s3 = inlined_call_operand.vmem [shape: f32[2,32,128], index: 3, kind: output, shape index: {}]
  %s4 = sld [smem:[#allocation0]]
  $region45: #{spatial_transformer_human_vqvae_forward.18} parent=0
    _
  %s6 = ssub.s32 1, %s4
  %s7 = scalar_select 0, %s6, %s4
  loop: start=0, step=1, limit=4
  $region2: #{spatial_transformer_human_vqvae_forward.18} parent=0 // loop_pre_header
    _
  $region3: #{spatial_transformer_human_vqvae_forward.18} parent=0 // loop_header
    %s9 = sphi 0, %s13
    %p10 = scmp.ge.s32.totalorder %s9, 4
    %s19 = sphi 0, %s21
    %s22 = sphi 0, %s19
    %s23 = sphi 0, %s22
    %s39 = sphi 0, %s23
    %s43 = sphi 0, %s43
    %s45 = sphi 0, %s43
    %s46 = sphi 0, %s45
    %s60 = sphi 0, %s46
    %s64 = sphi 0, %s64
    %s66 = sphi 0, %s64
    %s67 = sphi 0, %s66
    %s81 = sphi 0, %s67
    %s87 = sphi 0, %s89
    %s90 = sphi 0, %s87
    %s91 = sphi 0, %s90
    %s107 = sphi 0, %s91
  $region4: #{spatial_transformer_human_vqvae_forward.18} parent=0 // loop_header_branch
    %12 = sbr.rel (%p10) target = $region8
  $region5: #{spatial_transformer_human_vqvae_forward.18} parent=0 // loop_body
    %s14 = ssub.s32 %s9, 1
    %s15 = ssub.s32 %s9, 2
    %s16 = sadd.s32 %s9, 1
    %s17 = ssub.s32 %s9, %s16
    %p18 = scmp.eq.s32.totalorder %s17, 0
    %s20 = sadd.s32 %s19, 1
    %s21 = scalar_select %p18, %s19, %s20
    %p24 = pneg %p18
    %p25 = scmp.eq.s32.totalorder %s9, 1
    %p26 = por %p24, %p25
    %p27 = scmp.ne.s32.totalorder %s19, %s22
    %p28 = scmp.eq.s32.totalorder %s9, 0
    %p29 = por %p27, %p28
    %p30 = scmp.ne.s32.totalorder %s19, %s22
    %p31 = scmp.eq.s32.totalorder %s14, 1
    %p32 = por %p30, %p31
    %p33 = scmp.ne.s32.totalorder %s22, %s23
    %p34 = scmp.eq.s32.totalorder %s14, 0
    %p35 = por %p33, %p34
    %p36 = scmp.ne.s32.totalorder %s22, %s23
    %p37 = scmp.eq.s32.totalorder %s15, 1
    %p38 = por %p36, %p37
    %p40 = scmp.ne.s32.totalorder %s23, %s39
    %p41 = scmp.eq.s32.totalorder %s15, 0
    %p42 = por %p40, %p41
    %s44 = sadd.s32 %s43, 1
    %p47 = scmp.eq.s32.totalorder %s9, 1
    %p48 = scmp.ne.s32.totalorder %s43, %s45
    %p49 = scmp.eq.s32.totalorder %s9, 0
    %p50 = por %p48, %p49
    %p51 = scmp.ne.s32.totalorder %s43, %s45
    %p52 = scmp.eq.s32.totalorder %s14, 1
    %p53 = por %p51, %p52
    %p54 = scmp.ne.s32.totalorder %s45, %s46
    %p55 = scmp.eq.s32.totalorder %s14, 0
    %p56 = por %p54, %p55
    %p57 = scmp.ne.s32.totalorder %s45, %s46
    %p58 = scmp.eq.s32.totalorder %s15, 1
    %p59 = por %p57, %p58
    %p61 = scmp.ne.s32.totalorder %s46, %s60
    %p62 = scmp.eq.s32.totalorder %s15, 0
    %p63 = por %p61, %p62
    %s65 = sadd.s32 %s64, 1
    %p68 = scmp.eq.s32.totalorder %s9, 1
    %p69 = scmp.ne.s32.totalorder %s64, %s66
    %p70 = scmp.eq.s32.totalorder %s9, 0
    %p71 = por %p69, %p70
    %p72 = scmp.ne.s32.totalorder %s64, %s66
    %p73 = scmp.eq.s32.totalorder %s14, 1
    %p74 = por %p72, %p73
    %p75 = scmp.ne.s32.totalorder %s66, %s67
    %p76 = scmp.eq.s32.totalorder %s14, 0
    %p77 = por %p75, %p76
    %p78 = scmp.ne.s32.totalorder %s66, %s67
    %p79 = scmp.eq.s32.totalorder %s15, 1
    %p80 = por %p78, %p79
    %p82 = scmp.ne.s32.totalorder %s67, %s81
    %p83 = scmp.eq.s32.totalorder %s15, 0
    %p84 = por %p82, %p83
    %s85 = ssub.s32 %s9, %s16
    %p86 = scmp.eq.s32.totalorder %s85, 0
    %s88 = sadd.s32 %s87, 1
    %s89 = scalar_select %p86, %s87, %s88
    %p92 = pneg %p86
    %p93 = scmp.eq.s32.totalorder %s9, 1
    %p94 = por %p92, %p93
    %p95 = scmp.ne.s32.totalorder %s87, %s90
    %p96 = scmp.eq.s32.totalorder %s9, 0
    %p97 = por %p95, %p96
    %p98 = scmp.ne.s32.totalorder %s87, %s90
    %p99 = scmp.eq.s32.totalorder %s14, 1
    %p100 = por %p98, %p99
    %p101 = scmp.ne.s32.totalorder %s90, %s91
    %p102 = scmp.eq.s32.totalorder %s14, 0
    %p103 = por %p101, %p102
    %p104 = scmp.ne.s32.totalorder %s90, %s91
    %p105 = scmp.eq.s32.totalorder %s15, 1
    %p106 = por %p104, %p105
    %p108 = scmp.ne.s32.totalorder %s91, %s107
    %p109 = scmp.eq.s32.totalorder %s15, 0
    %p110 = por %p108, %p109
    %p111 = scmp.le.s32.totalorder 1, %s9
    %p112 = scmp.lt.s32.totalorder %s9, 3
    %p113 = pnand %p111, %p112
    %p114 = pneg %p113
    // Predicated region
    $region9: #{spatial_transformer_human_vqvae_forward.18} parent=5 // pred_check
      _
    $region10: #{spatial_transformer_human_vqvae_forward.18} parent=5 // pred_check_branch
      %116 = sbr.rel (%p113) target = $region12
    $region11: #{spatial_transformer_human_vqvae_forward.18} parent=5 // pred_region
      %s117 = ssub.s32 %s9, 1
      // Predicated region
      $region13: #{spatial_transformer_human_vqvae_forward.18} parent=11 // pred_check
        %p118 = pneg %p56
      $region14: #{spatial_transformer_human_vqvae_forward.18} parent=11 // pred_check_branch
        %120 = sbr.rel (%p118) target = $region16
      $region15: #{spatial_transformer_human_vqvae_forward.18} parent=11 // pred_region
        _
      $region16: #{spatial_transformer_human_vqvae_forward.18} parent=11 // pred_fallthru
        _
      // Predicated region
      $region17: #{spatial_transformer_human_vqvae_forward.18} parent=11 // pred_check
        %p121 = pneg %p77
      $region18: #{spatial_transformer_human_vqvae_forward.18} parent=11 // pred_check_branch
        %123 = sbr.rel (%p121) target = $region20
      $region19: #{spatial_transformer_human_vqvae_forward.18} parent=11 // pred_region
        _
      $region20: #{spatial_transformer_human_vqvae_forward.18} parent=11 // pred_fallthru
        _
    $region12: #{spatial_transformer_human_vqvae_forward.18} parent=5 // pred_fallthru
      _
    %p124 = scmp.lt.s32.totalorder %s9, 2
    // Predicated region
    $region21: #{spatial_transformer_human_vqvae_forward.18} parent=5 // pred_check
      %p125 = pneg %p124
    $region22: #{spatial_transformer_human_vqvae_forward.18} parent=5 // pred_check_branch
      %127 = sbr.rel (%p125) target = $region24
    $region23: #{spatial_transformer_human_vqvae_forward.18} parent=5 // pred_region
      // Predicated region
      $region25: #{spatial_transformer_human_vqvae_forward.18} parent=23 // pred_check
        %p128 = pneg %p29
      $region26: #{spatial_transformer_human_vqvae_forward.18} parent=23 // pred_check_branch
        %130 = sbr.rel (%p128) target = $region28
      $region27: #{spatial_transformer_human_vqvae_forward.18} parent=23 // pred_region
        %p131 = scmp.lt.s32.totalorder %s9, 1
        %s132 = scalar_select %p131, %s9, 1
        %s133 = smul.addr %s132, 5
        %s134 = smul.addr %s133, 8
        %s135 = scalar_lea.vmem %s0, %s134
      $region28: #{spatial_transformer_human_vqvae_forward.18} parent=23 // pred_fallthru
        _
    $region24: #{spatial_transformer_human_vqvae_forward.18} parent=5 // pred_fallthru
      _
    %p136 = scmp.le.s32.totalorder 1, %s9
    %p137 = scmp.lt.s32.totalorder %s9, 3
    %p138 = pnand %p136, %p137
    %p139 = pneg %p138
    // Predicated region
    $region29: #{spatial_transformer_human_vqvae_forward.18} parent=5 // pred_check
      _
    $region30: #{spatial_transformer_human_vqvae_forward.18} parent=5 // pred_check_branch
      %141 = sbr.rel (%p138) target = $region32
    $region31: #{spatial_transformer_human_vqvae_forward.18} parent=5 // pred_region
      %s142 = ssub.s32 %s9, 1
      %p143 = scmp.lt.s32.totalorder %s14, 1
      %s144 = scalar_select %p143, %s14, 1
      %s145 = smul.addr %s144, 5
      %s146 = smul.addr %s145, 8
      %s147 = scalar_lea.vmem %s0, %s146
      %p148 = pneg %p35
      %p149 = pneg %p32
      %p150 = pneg %p56
      %p151 = pneg %p53
      %p152 = pneg %p77
      %p153 = pneg %p74
      %p154 = pneg %p103
      %p155 = pneg %p100
      %p156 = scmp.lt.s32.totalorder %s14, 1
      %s157 = scalar_select %p156, %s14, 1
      %s158 = smul.addr %s157, 4
      %s159 = smul.addr %s158, 8
      %s160 = scalar_lea.vmem %s3, %s159
      %p161 = scmp.lt.s32.totalorder %s14, 1
      %s162 = scalar_select %p161, %s14, 1
      %s163 = smul.addr %s162, 5
      %s164 = smul.addr %s163, 8
      %s165 = scalar_lea.vmem %s0, %s164
      %p166 = scmp.lt.s32.totalorder %s14, 1
      %s167 = scalar_select %p166, %s14, 1
      %s168 = smul.addr %s167, 4
      %s169 = smul.addr %s168, 8
      %s170 = scalar_lea.vmem %s3, %s169
      %v172 = vld [vmem:[%s165] sm:$0xff]
      %v173 = vld [vmem:[%s165 + $0x8] sm:$0xff]
      %v174 = vld [vmem:[%s165 + $0x10] sm:$0xff]
      %v175 = vld [vmem:[%s165 + $0x18] sm:$0xff]
      %v176 = vld [vmem:[%s165 + $0x20] sm:$0x3]
      %v177 = vld [vmem:[%s2] sm:$0x1]
      %v178 = vpack.c.bf16 %v173, %v172
      %v179 = vpack.c.bf16 %v175, %v174
      %v180 = vld [vmem:[%s1] sm:$0xf]
      %v181 = vld [vmem:[%s1 + $0x4] sm:$0xf]
      %v182 = vld [vmem:[%s1 + $0x8] sm:$0xf]
      %v183 = vld [vmem:[%s1 + $0xc] sm:$0xf]
      %v184 = vld [vmem:[%s1 + $0x10] sm:$0xf]
      %v185 = vld [vmem:[%s1 + $0x14] sm:$0xf]
      %v186 = vld [vmem:[%s1 + $0x18] sm:$0xf]
      %v187 = vld [vmem:[%s1 + $0x1c] sm:$0xf]
      %v188 = vld [vmem:[%s1 + $0x20] sm:$0xf]
      %v189 = vld [vmem:[%s1 + $0x24] sm:$0xf]
      %v190 = vld [vmem:[%s1 + $0x28] sm:$0xf]
      %v191 = vld [vmem:[%s1 + $0x2c] sm:$0xf]
      %v192 = vld [vmem:[%s1 + $0x30] sm:$0xf]
      %v193 = vld [vmem:[%s1 + $0x34] sm:$0xf]
      %v194 = vld [vmem:[%s1 + $0x38] sm:$0xf]
      %v195 = vld [vmem:[%s1 + $0x3c] sm:$0xf]
      %v212 = vunpack.c.l.b16 %v180
      %v213 = vunpack.c.l.b16 %v181
      %v214 = vunpack.c.l.b16 %v182
      %v215 = vunpack.c.l.b16 %v183
      %v216 = vunpack.c.l.b16 %v184
      %v217 = vunpack.c.l.b16 %v185
      %v218 = vunpack.c.l.b16 %v186
      %v219 = vunpack.c.l.b16 %v187
      %v220 = vunpack.c.l.b16 %v188
      %v221 = vunpack.c.l.b16 %v189
      %v222 = vunpack.c.l.b16 %v190
      %v223 = vunpack.c.l.b16 %v191
      %v224 = vunpack.c.l.b16 %v192
      %v225 = vunpack.c.l.b16 %v193
      %v226 = vunpack.c.l.b16 %v194
      %v227 = vunpack.c.l.b16 %v195
      %v228 = vpack.c.b16 %v213, %v212
      %v229 = vpack.c.b16 %v215, %v214
      %v230 = vpack.c.b16 %v217, %v216
      %v231 = vpack.c.b16 %v219, %v218
      %v232 = vpack.c.b16 %v221, %v220
      %v233 = vpack.c.b16 %v223, %v222
      %v234 = vpack.c.b16 %v225, %v224
      %v235 = vpack.c.b16 %v227, %v226
      %244 = vmatprep.subr.bf16.mxu0 0
      %245 = vmatpush1.bf16.msra.mxu0 %v235
      %246 = vmatprep.subr.bf16.mxu0 0
      %247 = vmatpush1.bf16.msra.mxu0 %v234
      %248 = vmatprep.subr.bf16.mxu0 0
      %249 = vmatpush1.bf16.msra.mxu0 %v233
      %250 = vmatprep.subr.bf16.mxu0 0
      %251 = vmatpush1.bf16.msra.mxu0 %v232
      %252 = vmatprep.subr.bf16.mxu0 0
      %253 = vmatpush1.bf16.msra.mxu0 %v231
      %254 = vmatprep.subr.bf16.mxu0 0
      %255 = vmatpush1.bf16.msra.mxu0 %v230
      %256 = vmatprep.subr.bf16.mxu0 0
      %257 = vmatpush1.bf16.msra.mxu0 %v229
      %258 = vmatprep.subr.bf16.mxu0 0
      %259 = vmatpush1.bf16.msra.mxu0 %v228
      %260 = vmatprep.subr.bf16.mxu0 0
      %261 = vmatpush2.bf16.msra.mxu0 0
      %262 = vmatprep.subr.bf16.mxu0 0
      %263 = vmatpush2.bf16.msra.mxu0 0
      %264 = vmatprep.subr.bf16.mxu0 0
      %265 = vmatpush2.bf16.msra.mxu0 0
      %266 = vmatprep.subr.bf16.mxu0 0
      %267 = vmatpush2.bf16.msra.mxu0 0
      %268 = vmatprep.subr.bf16.mxu0 0
      %269 = vmatpush2.bf16.msra.mxu0 0
      %270 = vmatprep.subr.bf16.mxu0 0
      %271 = vmatpush2.bf16.msra.mxu0 0
      %272 = vmatprep.subr.bf16.mxu0 0
      %273 = vmatpush2.bf16.msra.mxu0 0
      %274 = vmatprep.subr.bf16.mxu0 0
      %275 = vmatpush2.bf16.msra.mxu0 0
      %276 = vmatprep.mubr.bf16.mxu0 0
      %277 = vmatmul.mubr.bf16.gmra.mxu0 %v178
      %v278 = vpop.f32.mrf.mxu0
      %v279 = vadd.f32 0.0, %v278
      %v280 = vpop.f32.mrf.mxu0
      %v281 = vpop.f32.mrf.mxu0
      %v282 = vadd.f32 0.0, %v281
      %v283 = vpop.f32.mrf.mxu0
      %284 = vmatprep.mubr.bf16.mxu0 0
      %285 = vmatmul.mubr.bf16.gmra.mxu0 %v179
      %v286 = vpop.f32.mrf.mxu0
      %v287 = vadd.f32 0.0, %v286
      %v288 = vpop.f32.mrf.mxu0
      %v289 = vpop.f32.mrf.mxu0
      %v290 = vadd.f32 0.0, %v289
      %v291 = vpop.f32.mrf.mxu0
      %292 = vdwg.mxu0
      %v294 = vlaneseq
      %v295 = vshrl.u32 %v294, 7
      %v296 = vsub.s32 0, %v295
      %v297 = vrot.slane %v177, %v296
      %v299 = vadd.f32 %v297, %v279
      %v300 = vadd.f32 %v297, %v282
      %v301 = vadd.f32 %v297, %v287
      %v302 = vadd.f32 %v297, %v290
      %v303 = vpack.c.bf16 %v176, %v176
      %s304 = scalar_lea.vmem %s1, 64
      %v305 = vld [vmem:[%s304] sm:$0xf]
      %v306 = vld [vmem:[%s304 + $0x4] sm:$0xf]
      %v307 = vld [vmem:[%s304 + $0x8] sm:$0xf]
      %v308 = vld [vmem:[%s304 + $0xc] sm:$0xf]
      %v309 = vld [vmem:[%s304 + $0x10] sm:$0xf]
      %v310 = vld [vmem:[%s304 + $0x14] sm:$0xf]
      %v311 = vld [vmem:[%s304 + $0x18] sm:$0xf]
      %v312 = vld [vmem:[%s304 + $0x1c] sm:$0xf]
      %v313 = vld [vmem:[%s304 + $0x20] sm:$0xf]
      %v314 = vld [vmem:[%s304 + $0x24] sm:$0xf]
      %v315 = vld [vmem:[%s304 + $0x28] sm:$0xf]
      %v316 = vld [vmem:[%s304 + $0x2c] sm:$0xf]
      %v317 = vld [vmem:[%s304 + $0x30] sm:$0xf]
      %v318 = vld [vmem:[%s304 + $0x34] sm:$0xf]
      %v319 = vld [vmem:[%s304 + $0x38] sm:$0xf]
      %v320 = vld [vmem:[%s304 + $0x3c] sm:$0xf]
      %vm321 = vsmask.f32 7424
      %v323 = vshrl.u32 %v178, 16
      %v325 = vshll.u32 %v178, 16
      %v327 = vrot.slane %v325, 1
      %v328 = vor.u32 %v323, %v327
      %v330 = vshll.u32 %v179, 16
      %v332 = vrot.slane %v330, 1
      %v333 = vsel %vm321, %v328, %v332
      %v334 = vshrl.u32 %v179, 16
      %v336 = vor.u32 %v334, %v332
      %v338 = vshll.u32 %v303, 16
      %v340 = vrot.slane %v338, 1
      %v341 = vsel %vm321, %v336, %v340
      %v360 = vunpack.c.l.b16 %v305
      %v361 = vunpack.c.l.b16 %v306
      %v362 = vunpack.c.l.b16 %v307
      %v363 = vunpack.c.l.b16 %v308
      %v364 = vunpack.c.l.b16 %v309
      %v365 = vunpack.c.l.b16 %v310
      %v366 = vunpack.c.l.b16 %v311
      %v367 = vunpack.c.l.b16 %v312
      %v368 = vunpack.c.l.b16 %v313
      %v369 = vunpack.c.l.b16 %v314
      %v370 = vunpack.c.l.b16 %v315
      %v371 = vunpack.c.l.b16 %v316
      %v372 = vunpack.c.l.b16 %v317
      %v373 = vunpack.c.l.b16 %v318
      %v374 = vunpack.c.l.b16 %v319
      %v375 = vunpack.c.l.b16 %v320
      %v376 = vpack.c.b16 %v361, %v360
      %v377 = vpack.c.b16 %v363, %v362
      %v378 = vpack.c.b16 %v365, %v364
      %v379 = vpack.c.b16 %v367, %v366
      %v380 = vpack.c.b16 %v369, %v368
      %v381 = vpack.c.b16 %v371, %v370
      %v382 = vpack.c.b16 %v373, %v372
      %v383 = vpack.c.b16 %v375, %v374
      %392 = vmatprep.subr.bf16.mxu0 0
      %393 = vmatpush1.bf16.msra.mxu0 %v383
      %394 = vmatprep.subr.bf16.mxu0 0
      %395 = vmatpush1.bf16.msra.mxu0 %v382
      %396 = vmatprep.subr.bf16.mxu0 0
      %397 = vmatpush1.bf16.msra.mxu0 %v381
      %398 = vmatprep.subr.bf16.mxu0 0
      %399 = vmatpush1.bf16.msra.mxu0 %v380
      %400 = vmatprep.subr.bf16.mxu0 0
      %401 = vmatpush1.bf16.msra.mxu0 %v379
      %402 = vmatprep.subr.bf16.mxu0 0
      %403 = vmatpush1.bf16.msra.mxu0 %v378
      %404 = vmatprep.subr.bf16.mxu0 0
      %405 = vmatpush1.bf16.msra.mxu0 %v377
      %406 = vmatprep.subr.bf16.mxu0 0
      %407 = vmatpush1.bf16.msra.mxu0 %v376
      %408 = vmatprep.subr.bf16.mxu0 0
      %409 = vmatpush2.bf16.msra.mxu0 0
      %410 = vmatprep.subr.bf16.mxu0 0
      %411 = vmatpush2.bf16.msra.mxu0 0
      %412 = vmatprep.subr.bf16.mxu0 0
      %413 = vmatpush2.bf16.msra.mxu0 0
      %414 = vmatprep.subr.bf16.mxu0 0
      %415 = vmatpush2.bf16.msra.mxu0 0
      %416 = vmatprep.subr.bf16.mxu0 0
      %417 = vmatpush2.bf16.msra.mxu0 0
      %418 = vmatprep.subr.bf16.mxu0 0
      %419 = vmatpush2.bf16.msra.mxu0 0
      %420 = vmatprep.subr.bf16.mxu0 0
      %421 = vmatpush2.bf16.msra.mxu0 0
      %422 = vmatprep.subr.bf16.mxu0 0
      %423 = vmatpush2.bf16.msra.mxu0 0
      %424 = vmatprep.mubr.bf16.mxu0 0
      %425 = vmatmul.mubr.bf16.gmra.mxu0 %v333
      %v426 = vpop.f32.mrf.mxu0
      %v427 = vadd.f32 0.0, %v426
      %v428 = vpop.f32.mrf.mxu0
      %v429 = vpop.f32.mrf.mxu0
      %v430 = vadd.f32 0.0, %v429
      %v431 = vpop.f32.mrf.mxu0
      %432 = vmatprep.mubr.bf16.mxu0 0
      %433 = vmatmul.mubr.bf16.gmra.mxu0 %v341
      %v434 = vpop.f32.mrf.mxu0
      %v435 = vadd.f32 0.0, %v434
      %v436 = vpop.f32.mrf.mxu0
      %v437 = vpop.f32.mrf.mxu0
      %v438 = vadd.f32 0.0, %v437
      %v439 = vpop.f32.mrf.mxu0
      %440 = vdwg.mxu0
      %v441 = vadd.f32 %v299, %v427
      %v442 = vadd.f32 %v300, %v430
      %v443 = vadd.f32 %v301, %v435
      %v444 = vadd.f32 %v302, %v438
      %s445 = scalar_lea.vmem %s1, 128
      %v446 = vld [vmem:[%s445] sm:$0xf]
      %v447 = vld [vmem:[%s445 + $0x4] sm:$0xf]
      %v448 = vld [vmem:[%s445 + $0x8] sm:$0xf]
      %v449 = vld [vmem:[%s445 + $0xc] sm:$0xf]
      %v450 = vld [vmem:[%s445 + $0x10] sm:$0xf]
      %v451 = vld [vmem:[%s445 + $0x14] sm:$0xf]
      %v452 = vld [vmem:[%s445 + $0x18] sm:$0xf]
      %v453 = vld [vmem:[%s445 + $0x1c] sm:$0xf]
      %v454 = vld [vmem:[%s445 + $0x20] sm:$0xf]
      %v455 = vld [vmem:[%s445 + $0x24] sm:$0xf]
      %v456 = vld [vmem:[%s445 + $0x28] sm:$0xf]
      %v457 = vld [vmem:[%s445 + $0x2c] sm:$0xf]
      %v458 = vld [vmem:[%s445 + $0x30] sm:$0xf]
      %v459 = vld [vmem:[%s445 + $0x34] sm:$0xf]
      %v460 = vld [vmem:[%s445 + $0x38] sm:$0xf]
      %v461 = vld [vmem:[%s445 + $0x3c] sm:$0xf]
      %vm465 = vcmask 1046528
      %v466 = vrot.slane %v178, 1
      %v467 = vrot.slane %v179, 1
      %v468 = vsel %vm465, %v466, %v467
      %v469 = vrot.slane %v303, 1
      %v470 = vsel %vm465, %v467, %v469
      %v489 = vunpack.c.l.b16 %v446
      %v490 = vunpack.c.l.b16 %v447
      %v491 = vunpack.c.l.b16 %v448
      %v492 = vunpack.c.l.b16 %v449
      %v493 = vunpack.c.l.b16 %v450
      %v494 = vunpack.c.l.b16 %v451
      %v495 = vunpack.c.l.b16 %v452
      %v496 = vunpack.c.l.b16 %v453
      %v497 = vunpack.c.l.b16 %v454
      %v498 = vunpack.c.l.b16 %v455
      %v499 = vunpack.c.l.b16 %v456
      %v500 = vunpack.c.l.b16 %v457
      %v501 = vunpack.c.l.b16 %v458
      %v502 = vunpack.c.l.b16 %v459
      %v503 = vunpack.c.l.b16 %v460
      %v504 = vunpack.c.l.b16 %v461
      %v505 = vpack.c.b16 %v490, %v489
      %v506 = vpack.c.b16 %v492, %v491
      %v507 = vpack.c.b16 %v494, %v493
      %v508 = vpack.c.b16 %v496, %v495
      %v509 = vpack.c.b16 %v498, %v497
      %v510 = vpack.c.b16 %v500, %v499
      %v511 = vpack.c.b16 %v502, %v501
      %v512 = vpack.c.b16 %v504, %v503
      %521 = vmatprep.subr.bf16.mxu0 0
      %522 = vmatpush1.bf16.msra.mxu0 %v512
      %523 = vmatprep.subr.bf16.mxu0 0
      %524 = vmatpush1.bf16.msra.mxu0 %v511
      %525 = vmatprep.subr.bf16.mxu0 0
      %526 = vmatpush1.bf16.msra.mxu0 %v510
      %527 = vmatprep.subr.bf16.mxu0 0
      %528 = vmatpush1.bf16.msra.mxu0 %v509
      %529 = vmatprep.subr.bf16.mxu0 0
      %530 = vmatpush1.bf16.msra.mxu0 %v508
      %531 = vmatprep.subr.bf16.mxu0 0
      %532 = vmatpush1.bf16.msra.mxu0 %v507
      %533 = vmatprep.subr.bf16.mxu0 0
      %534 = vmatpush1.bf16.msra.mxu0 %v506
      %535 = vmatprep.subr.bf16.mxu0 0
      %536 = vmatpush1.bf16.msra.mxu0 %v505
      %537 = vmatprep.subr.bf16.mxu0 0
      %538 = vmatpush2.bf16.msra.mxu0 0
      %539 = vmatprep.subr.bf16.mxu0 0
      %540 = vmatpush2.bf16.msra.mxu0 0
      %541 = vmatprep.subr.bf16.mxu0 0
      %542 = vmatpush2.bf16.msra.mxu0 0
      %543 = vmatprep.subr.bf16.mxu0 0
      %544 = vmatpush2.bf16.msra.mxu0 0
      %545 = vmatprep.subr.bf16.mxu0 0
      %546 = vmatpush2.bf16.msra.mxu0 0
      %547 = vmatprep.subr.bf16.mxu0 0
      %548 = vmatpush2.bf16.msra.mxu0 0
      %549 = vmatprep.subr.bf16.mxu0 0
      %550 = vmatpush2.bf16.msra.mxu0 0
      %551 = vmatprep.subr.bf16.mxu0 0
      %552 = vmatpush2.bf16.msra.mxu0 0
      %553 = vmatprep.mubr.bf16.mxu0 0
      %554 = vmatmul.mubr.bf16.gmra.mxu0 %v468
      %v555 = vpop.f32.mrf.mxu0
      %v556 = vadd.f32 0.0, %v555
      %v557 = vpop.f32.mrf.mxu0
      %v558 = vpop.f32.mrf.mxu0
      %v559 = vadd.f32 0.0, %v558
      %v560 = vpop.f32.mrf.mxu0
      %561 = vmatprep.mubr.bf16.mxu0 0
      %562 = vmatmul.mubr.bf16.gmra.mxu0 %v470
      %v563 = vpop.f32.mrf.mxu0
      %v564 = vadd.f32 0.0, %v563
      %v565 = vpop.f32.mrf.mxu0
      %v566 = vpop.f32.mrf.mxu0
      %v567 = vadd.f32 0.0, %v566
      %v568 = vpop.f32.mrf.mxu0
      %569 = vdwg.mxu0
      %v570 = vadd.f32 %v441, %v556
      %v571 = vadd.f32 %v442, %v559
      %v572 = vadd.f32 %v443, %v564
      %v573 = vadd.f32 %v444, %v567
      %v574 = vmax.f32 %v570, 0.0
      %v575 = vmax.f32 %v571, 0.0
      %v576 = vmax.f32 %v572, 0.0
      %v577 = vmax.f32 %v573, 0.0
      %578 = vst [vmem:[%s170] sm:$0xff] %v574
      %579 = vst [vmem:[%s170 + $0x8] sm:$0xff] %v575
      %580 = vst [vmem:[%s170 + $0x10] sm:$0xff] %v576
      %581 = vst [vmem:[%s170 + $0x18] sm:$0xff] %v577
      %p582 = scmp.lt.s32.totalorder %s14, 1
      %s583 = scalar_select %p582, %s14, 1
      %s584 = smul.addr %s583, 4
      %s585 = smul.addr %s584, 8
      %s586 = scalar_lea.vmem %s3, %s585
      // Predicated region
      $region33: #{spatial_transformer_human_vqvae_forward.18} parent=31 // pred_check
        %p587 = pneg %p100
      $region34: #{spatial_transformer_human_vqvae_forward.18} parent=31 // pred_check_branch
        %589 = sbr.rel (%p587) target = $region36
      $region35: #{spatial_transformer_human_vqvae_forward.18} parent=31 // pred_region
        _
      $region36: #{spatial_transformer_human_vqvae_forward.18} parent=31 // pred_fallthru
        _
    $region32: #{spatial_transformer_human_vqvae_forward.18} parent=5 // pred_fallthru
      _
    %p590 = scmp.le.s32.totalorder 2, %s9
    // Predicated region
    $region37: #{spatial_transformer_human_vqvae_forward.18} parent=5 // pred_check
      %p591 = pneg %p590
    $region38: #{spatial_transformer_human_vqvae_forward.18} parent=5 // pred_check_branch
      %593 = sbr.rel (%p591) target = $region40
    $region39: #{spatial_transformer_human_vqvae_forward.18} parent=5 // pred_region
      %s594 = ssub.s32 %s9, 2
      // Predicated region
      $region41: #{spatial_transformer_human_vqvae_forward.18} parent=39 // pred_check
        %p595 = pneg %p106
      $region42: #{spatial_transformer_human_vqvae_forward.18} parent=39 // pred_check_branch
        %597 = sbr.rel (%p595) target = $region44
      $region43: #{spatial_transformer_human_vqvae_forward.18} parent=39 // pred_region
        %p598 = scmp.lt.s32.totalorder %s15, 1
        %s599 = scalar_select %p598, %s15, 1
        %s600 = smul.addr %s599, 4
        %s601 = smul.addr %s600, 8
        %s602 = scalar_lea.vmem %s3, %s601
      $region44: #{spatial_transformer_human_vqvae_forward.18} parent=39 // pred_fallthru
        _
    $region40: #{spatial_transformer_human_vqvae_forward.18} parent=5 // pred_fallthru
      _
  $region6: #{spatial_transformer_human_vqvae_forward.18} parent=0 // loop_footer
    %s13 = sadd.s32 1, %s9
  $region7: #{spatial_transformer_human_vqvae_forward.18} parent=0 // loop_footer_branch
    %8 = sbr.rel target = $region3
  $region8: #{spatial_transformer_human_vqvae_forward.18} parent=0 // loop_exit
    _

// kernel: spatial_transformer_human_vqvae_forward.20
$region0: #{spatial_transformer_human_vqvae_forward.20}
  #allocation0 [shape = 'u32[]', space=smem, size = 0x4, offset = 0x4, fixed_abs, tag = 'smem constant byte address 0x4 - core index']
  #allocation1 [shape = 'u32[144,128]{1,0:T(1,128)}', space=vmem, size = 0x12000, scoped, tag = 'internal scratch']
  %s0 = inlined_call_operand.vmem [shape: f32[2,22,128], index: 0, kind: input, shape index: {}]
  %s1 = inlined_call_operand.vmem [shape: bf16[3,128,128], index: 1, kind: input, shape index: {}]
  %s2 = inlined_call_operand.vmem [shape: f32[1,128], index: 2, kind: input, shape index: {}]
  %s3 = inlined_call_operand.vmem [shape: bf16[1,128,128], index: 3, kind: input, shape index: {}]
  %s4 = inlined_call_operand.vmem [shape: f32[1,128], index: 4, kind: input, shape index: {}]
  %s5 = inlined_call_operand.vmem [shape: f32[2,16,128], index: 5, kind: output, shape index: {}]
  %s6 = sld [smem:[#allocation0]]
  $region53: #{spatial_transformer_human_vqvae_forward.20} parent=0
    _
  %s8 = ssub.s32 1, %s6
  %s9 = scalar_select 0, %s8, %s6
  loop: start=0, step=1, limit=4
  $region2: #{spatial_transformer_human_vqvae_forward.20} parent=0 // loop_pre_header
    _
  $region3: #{spatial_transformer_human_vqvae_forward.20} parent=0 // loop_header
    %s11 = sphi 0, %s15
    %p12 = scmp.ge.s32.totalorder %s11, 4
    %s21 = sphi 0, %s23
    %s24 = sphi 0, %s21
    %s25 = sphi 0, %s24
    %s41 = sphi 0, %s25
    %s45 = sphi 0, %s45
    %s47 = sphi 0, %s45
    %s48 = sphi 0, %s47
    %s62 = sphi 0, %s48
    %s66 = sphi 0, %s66
    %s68 = sphi 0, %s66
    %s69 = sphi 0, %s68
    %s83 = sphi 0, %s69
    %s87 = sphi 0, %s87
    %s89 = sphi 0, %s87
    %s90 = sphi 0, %s89
    %s104 = sphi 0, %s90
    %s108 = sphi 0, %s108
    %s110 = sphi 0, %s108
    %s111 = sphi 0, %s110
    %s125 = sphi 0, %s111
    %s131 = sphi 0, %s133
    %s134 = sphi 0, %s131
    %s135 = sphi 0, %s134
    %s151 = sphi 0, %s135
  $region4: #{spatial_transformer_human_vqvae_forward.20} parent=0 // loop_header_branch
    %14 = sbr.rel (%p12) target = $region8
  $region5: #{spatial_transformer_human_vqvae_forward.20} parent=0 // loop_body
    %s16 = ssub.s32 %s11, 1
    %s17 = ssub.s32 %s11, 2
    %s18 = sadd.s32 %s11, 1
    %s19 = ssub.s32 %s11, %s18
    %p20 = scmp.eq.s32.totalorder %s19, 0
    %s22 = sadd.s32 %s21, 1
    %s23 = scalar_select %p20, %s21, %s22
    %p26 = pneg %p20
    %p27 = scmp.eq.s32.totalorder %s11, 1
    %p28 = por %p26, %p27
    %p29 = scmp.ne.s32.totalorder %s21, %s24
    %p30 = scmp.eq.s32.totalorder %s11, 0
    %p31 = por %p29, %p30
    %p32 = scmp.ne.s32.totalorder %s21, %s24
    %p33 = scmp.eq.s32.totalorder %s16, 1
    %p34 = por %p32, %p33
    %p35 = scmp.ne.s32.totalorder %s24, %s25
    %p36 = scmp.eq.s32.totalorder %s16, 0
    %p37 = por %p35, %p36
    %p38 = scmp.ne.s32.totalorder %s24, %s25
    %p39 = scmp.eq.s32.totalorder %s17, 1
    %p40 = por %p38, %p39
    %p42 = scmp.ne.s32.totalorder %s25, %s41
    %p43 = scmp.eq.s32.totalorder %s17, 0
    %p44 = por %p42, %p43
    %s46 = sadd.s32 %s45, 1
    %p49 = scmp.eq.s32.totalorder %s11, 1
    %p50 = scmp.ne.s32.totalorder %s45, %s47
    %p51 = scmp.eq.s32.totalorder %s11, 0
    %p52 = por %p50, %p51
    %p53 = scmp.ne.s32.totalorder %s45, %s47
    %p54 = scmp.eq.s32.totalorder %s16, 1
    %p55 = por %p53, %p54
    %p56 = scmp.ne.s32.totalorder %s47, %s48
    %p57 = scmp.eq.s32.totalorder %s16, 0
    %p58 = por %p56, %p57
    %p59 = scmp.ne.s32.totalorder %s47, %s48
    %p60 = scmp.eq.s32.totalorder %s17, 1
    %p61 = por %p59, %p60
    %p63 = scmp.ne.s32.totalorder %s48, %s62
    %p64 = scmp.eq.s32.totalorder %s17, 0
    %p65 = por %p63, %p64
    %s67 = sadd.s32 %s66, 1
    %p70 = scmp.eq.s32.totalorder %s11, 1
    %p71 = scmp.ne.s32.totalorder %s66, %s68
    %p72 = scmp.eq.s32.totalorder %s11, 0
    %p73 = por %p71, %p72
    %p74 = scmp.ne.s32.totalorder %s66, %s68
    %p75 = scmp.eq.s32.totalorder %s16, 1
    %p76 = por %p74, %p75
    %p77 = scmp.ne.s32.totalorder %s68, %s69
    %p78 = scmp.eq.s32.totalorder %s16, 0
    %p79 = por %p77, %p78
    %p80 = scmp.ne.s32.totalorder %s68, %s69
    %p81 = scmp.eq.s32.totalorder %s17, 1
    %p82 = por %p80, %p81
    %p84 = scmp.ne.s32.totalorder %s69, %s83
    %p85 = scmp.eq.s32.totalorder %s17, 0
    %p86 = por %p84, %p85
    %s88 = sadd.s32 %s87, 1
    %p91 = scmp.eq.s32.totalorder %s11, 1
    %p92 = scmp.ne.s32.totalorder %s87, %s89
    %p93 = scmp.eq.s32.totalorder %s11, 0
    %p94 = por %p92, %p93
    %p95 = scmp.ne.s32.totalorder %s87, %s89
    %p96 = scmp.eq.s32.totalorder %s16, 1
    %p97 = por %p95, %p96
    %p98 = scmp.ne.s32.totalorder %s89, %s90
    %p99 = scmp.eq.s32.totalorder %s16, 0
    %p100 = por %p98, %p99
    %p101 = scmp.ne.s32.totalorder %s89, %s90
    %p102 = scmp.eq.s32.totalorder %s17, 1
    %p103 = por %p101, %p102
    %p105 = scmp.ne.s32.totalorder %s90, %s104
    %p106 = scmp.eq.s32.totalorder %s17, 0
    %p107 = por %p105, %p106
    %s109 = sadd.s32 %s108, 1
    %p112 = scmp.eq.s32.totalorder %s11, 1
    %p113 = scmp.ne.s32.totalorder %s108, %s110
    %p114 = scmp.eq.s32.totalorder %s11, 0
    %p115 = por %p113, %p114
    %p116 = scmp.ne.s32.totalorder %s108, %s110
    %p117 = scmp.eq.s32.totalorder %s16, 1
    %p118 = por %p116, %p117
    %p119 = scmp.ne.s32.totalorder %s110, %s111
    %p120 = scmp.eq.s32.totalorder %s16, 0
    %p121 = por %p119, %p120
    %p122 = scmp.ne.s32.totalorder %s110, %s111
    %p123 = scmp.eq.s32.totalorder %s17, 1
    %p124 = por %p122, %p123
    %p126 = scmp.ne.s32.totalorder %s111, %s125
    %p127 = scmp.eq.s32.totalorder %s17, 0
    %p128 = por %p126, %p127
    %s129 = ssub.s32 %s11, %s18
    %p130 = scmp.eq.s32.totalorder %s129, 0
    %s132 = sadd.s32 %s131, 1
    %s133 = scalar_select %p130, %s131, %s132
    %p136 = pneg %p130
    %p137 = scmp.eq.s32.totalorder %s11, 1
    %p138 = por %p136, %p137
    %p139 = scmp.ne.s32.totalorder %s131, %s134
    %p140 = scmp.eq.s32.totalorder %s11, 0
    %p141 = por %p139, %p140
    %p142 = scmp.ne.s32.totalorder %s131, %s134
    %p143 = scmp.eq.s32.totalorder %s16, 1
    %p144 = por %p142, %p143
    %p145 = scmp.ne.s32.totalorder %s134, %s135
    %p146 = scmp.eq.s32.totalorder %s16, 0
    %p147 = por %p145, %p146
    %p148 = scmp.ne.s32.totalorder %s134, %s135
    %p149 = scmp.eq.s32.totalorder %s17, 1
    %p150 = por %p148, %p149
    %p152 = scmp.ne.s32.totalorder %s135, %s151
    %p153 = scmp.eq.s32.totalorder %s17, 0
    %p154 = por %p152, %p153
    %p155 = scmp.le.s32.totalorder 1, %s11
    %p156 = scmp.lt.s32.totalorder %s11, 3
    %p157 = pnand %p155, %p156
    %p158 = pneg %p157
    // Predicated region
    $region9: #{spatial_transformer_human_vqvae_forward.20} parent=5 // pred_check
      _
    $region10: #{spatial_transformer_human_vqvae_forward.20} parent=5 // pred_check_branch
      %160 = sbr.rel (%p157) target = $region12
    $region11: #{spatial_transformer_human_vqvae_forward.20} parent=5 // pred_region
      %s161 = ssub.s32 %s11, 1
      // Predicated region
      $region13: #{spatial_transformer_human_vqvae_forward.20} parent=11 // pred_check
        %p162 = pneg %p58
      $region14: #{spatial_transformer_human_vqvae_forward.20} parent=11 // pred_check_branch
        %164 = sbr.rel (%p162) target = $region16
      $region15: #{spatial_transformer_human_vqvae_forward.20} parent=11 // pred_region
        _
      $region16: #{spatial_transformer_human_vqvae_forward.20} parent=11 // pred_fallthru
        _
      // Predicated region
      $region17: #{spatial_transformer_human_vqvae_forward.20} parent=11 // pred_check
        %p165 = pneg %p79
      $region18: #{spatial_transformer_human_vqvae_forward.20} parent=11 // pred_check_branch
        %167 = sbr.rel (%p165) target = $region20
      $region19: #{spatial_transformer_human_vqvae_forward.20} parent=11 // pred_region
        _
      $region20: #{spatial_transformer_human_vqvae_forward.20} parent=11 // pred_fallthru
        _
      // Predicated region
      $region21: #{spatial_transformer_human_vqvae_forward.20} parent=11 // pred_check
        %p168 = pneg %p100
      $region22: #{spatial_transformer_human_vqvae_forward.20} parent=11 // pred_check_branch
        %170 = sbr.rel (%p168) target = $region24
      $region23: #{spatial_transformer_human_vqvae_forward.20} parent=11 // pred_region
        _
      $region24: #{spatial_transformer_human_vqvae_forward.20} parent=11 // pred_fallthru
        _
      // Predicated region
      $region25: #{spatial_transformer_human_vqvae_forward.20} parent=11 // pred_check
        %p171 = pneg %p121
      $region26: #{spatial_transformer_human_vqvae_forward.20} parent=11 // pred_check_branch
        %173 = sbr.rel (%p171) target = $region28
      $region27: #{spatial_transformer_human_vqvae_forward.20} parent=11 // pred_region
        _
      $region28: #{spatial_transformer_human_vqvae_forward.20} parent=11 // pred_fallthru
        _
    $region12: #{spatial_transformer_human_vqvae_forward.20} parent=5 // pred_fallthru
      _
    %p174 = scmp.lt.s32.totalorder %s11, 2
    // Predicated region
    $region29: #{spatial_transformer_human_vqvae_forward.20} parent=5 // pred_check
      %p175 = pneg %p174
    $region30: #{spatial_transformer_human_vqvae_forward.20} parent=5 // pred_check_branch
      %177 = sbr.rel (%p175) target = $region32
    $region31: #{spatial_transformer_human_vqvae_forward.20} parent=5 // pred_region
      // Predicated region
      $region33: #{spatial_transformer_human_vqvae_forward.20} parent=31 // pred_check
        %p178 = pneg %p31
      $region34: #{spatial_transformer_human_vqvae_forward.20} parent=31 // pred_check_branch
        %180 = sbr.rel (%p178) target = $region36
      $region35: #{spatial_transformer_human_vqvae_forward.20} parent=31 // pred_region
        %p181 = scmp.lt.s32.totalorder %s11, 1
        %s182 = scalar_select %p181, %s11, 1
        %s183 = smul.addr %s182, 3
        %s184 = smul.addr %s183, 8
        %s185 = scalar_lea.vmem %s0, %s184
      $region36: #{spatial_transformer_human_vqvae_forward.20} parent=31 // pred_fallthru
        _
    $region32: #{spatial_transformer_human_vqvae_forward.20} parent=5 // pred_fallthru
      _
    %p186 = scmp.le.s32.totalorder 1, %s11
    %p187 = scmp.lt.s32.totalorder %s11, 3
    %p188 = pnand %p186, %p187
    %p189 = pneg %p188
    // Predicated region
    $region37: #{spatial_transformer_human_vqvae_forward.20} parent=5 // pred_check
      _
    $region38: #{spatial_transformer_human_vqvae_forward.20} parent=5 // pred_check_branch
      %191 = sbr.rel (%p188) target = $region40
    $region39: #{spatial_transformer_human_vqvae_forward.20} parent=5 // pred_region
      %s192 = ssub.s32 %s11, 1
      %p193 = scmp.lt.s32.totalorder %s16, 1
      %s194 = scalar_select %p193, %s16, 1
      %s195 = smul.addr %s194, 3
      %s196 = smul.addr %s195, 8
      %s197 = scalar_lea.vmem %s0, %s196
      %p198 = pneg %p37
      %p199 = pneg %p34
      %p200 = pneg %p58
      %p201 = pneg %p55
      %p202 = pneg %p79
      %p203 = pneg %p76
      %p204 = pneg %p100
      %p205 = pneg %p97
      %p206 = pneg %p121
      %p207 = pneg %p118
      %p208 = pneg %p147
      %p209 = pneg %p144
      %p210 = scmp.lt.s32.totalorder %s16, 1
      %s211 = scalar_select %p210, %s16, 1
      %s212 = smul.addr %s211, 2
      %s213 = smul.addr %s212, 8
      %s214 = scalar_lea.vmem %s5, %s213
      %p215 = scmp.lt.s32.totalorder %s16, 1
      %s216 = scalar_select %p215, %s16, 1
      %s217 = smul.addr %s216, 3
      %s218 = smul.addr %s217, 8
      %s219 = scalar_lea.vmem %s0, %s218
      %p220 = scmp.lt.s32.totalorder %s16, 1
      %s221 = scalar_select %p220, %s16, 1
      %s222 = smul.addr %s221, 2
      %s223 = smul.addr %s222, 8
      %s224 = scalar_lea.vmem %s5, %s223
      %v226 = vld [vmem:[%s219] sm:$0xff]
      %v227 = vld [vmem:[%s219 + $0x8] sm:$0xff]
      %v228 = vld [vmem:[%s219 + $0x10] sm:$0x3f]
      %v229 = vmax.f32 %v226, 0.0
      %v230 = vmax.f32 %v227, 0.0
      %v231 = vmax.f32 %v228, 0.0
      %v232 = vld [vmem:[%s2] sm:$0x1]
      %v233 = vpack.c.bf16 %v230, %v229
      %v234 = vld [vmem:[%s1] sm:$0xf]
      %v235 = vld [vmem:[%s1 + $0x4] sm:$0xf]
      %v236 = vld [vmem:[%s1 + $0x8] sm:$0xf]
      %v237 = vld [vmem:[%s1 + $0xc] sm:$0xf]
      %v238 = vld [vmem:[%s1 + $0x10] sm:$0xf]
      %v239 = vld [vmem:[%s1 + $0x14] sm:$0xf]
      %v240 = vld [vmem:[%s1 + $0x18] sm:$0xf]
      %v241 = vld [vmem:[%s1 + $0x1c] sm:$0xf]
      %v242 = vld [vmem:[%s1 + $0x20] sm:$0xf]
      %v243 = vld [vmem:[%s1 + $0x24] sm:$0xf]
      %v244 = vld [vmem:[%s1 + $0x28] sm:$0xf]
      %v245 = vld [vmem:[%s1 + $0x2c] sm:$0xf]
      %v246 = vld [vmem:[%s1 + $0x30] sm:$0xf]
      %v247 = vld [vmem:[%s1 + $0x34] sm:$0xf]
      %v248 = vld [vmem:[%s1 + $0x38] sm:$0xf]
      %v249 = vld [vmem:[%s1 + $0x3c] sm:$0xf]
      %v266 = vunpack.c.l.b16 %v234
      %v267 = vunpack.c.l.b16 %v235
      %v268 = vunpack.c.l.b16 %v236
      %v269 = vunpack.c.l.b16 %v237
      %v270 = vunpack.c.l.b16 %v238
      %v271 = vunpack.c.l.b16 %v239
      %v272 = vunpack.c.l.b16 %v240
      %v273 = vunpack.c.l.b16 %v241
      %v274 = vunpack.c.l.b16 %v242
      %v275 = vunpack.c.l.b16 %v243
      %v276 = vunpack.c.l.b16 %v244
      %v277 = vunpack.c.l.b16 %v245
      %v278 = vunpack.c.l.b16 %v246
      %v279 = vunpack.c.l.b16 %v247
      %v280 = vunpack.c.l.b16 %v248
      %v281 = vunpack.c.l.b16 %v249
      %v282 = vpack.c.b16 %v267, %v266
      %v283 = vpack.c.b16 %v269, %v268
      %v284 = vpack.c.b16 %v271, %v270
      %v285 = vpack.c.b16 %v273, %v272
      %v286 = vpack.c.b16 %v275, %v274
      %v287 = vpack.c.b16 %v277, %v276
      %v288 = vpack.c.b16 %v279, %v278
      %v289 = vpack.c.b16 %v281, %v280
      %298 = vmatprep.subr.bf16.mxu0 0
      %299 = vmatpush1.bf16.msra.mxu0 %v289
      %300 = vmatprep.subr.bf16.mxu0 0
      %301 = vmatpush1.bf16.msra.mxu0 %v288
      %302 = vmatprep.subr.bf16.mxu0 0
      %303 = vmatpush1.bf16.msra.mxu0 %v287
      %304 = vmatprep.subr.bf16.mxu0 0
      %305 = vmatpush1.bf16.msra.mxu0 %v286
      %306 = vmatprep.subr.bf16.mxu0 0
      %307 = vmatpush1.bf16.msra.mxu0 %v285
      %308 = vmatprep.subr.bf16.mxu0 0
      %309 = vmatpush1.bf16.msra.mxu0 %v284
      %310 = vmatprep.subr.bf16.mxu0 0
      %311 = vmatpush1.bf16.msra.mxu0 %v283
      %312 = vmatprep.subr.bf16.mxu0 0
      %313 = vmatpush1.bf16.msra.mxu0 %v282
      %314 = vmatprep.subr.bf16.mxu0 0
      %315 = vmatpush2.bf16.msra.mxu0 0
      %316 = vmatprep.subr.bf16.mxu0 0
      %317 = vmatpush2.bf16.msra.mxu0 0
      %318 = vmatprep.subr.bf16.mxu0 0
      %319 = vmatpush2.bf16.msra.mxu0 0
      %320 = vmatprep.subr.bf16.mxu0 0
      %321 = vmatpush2.bf16.msra.mxu0 0
      %322 = vmatprep.subr.bf16.mxu0 0
      %323 = vmatpush2.bf16.msra.mxu0 0
      %324 = vmatprep.subr.bf16.mxu0 0
      %325 = vmatpush2.bf16.msra.mxu0 0
      %326 = vmatprep.subr.bf16.mxu0 0
      %327 = vmatpush2.bf16.msra.mxu0 0
      %328 = vmatprep.subr.bf16.mxu0 0
      %329 = vmatpush2.bf16.msra.mxu0 0
      %330 = vmatprep.mubr.bf16.mxu0 0
      %331 = vmatmul.mubr.bf16.gmra.mxu0 %v233
      %v332 = vpop.f32.mrf.mxu0
      %v333 = vadd.f32 0.0, %v332
      %v334 = vpop.f32.mrf.mxu0
      %v335 = vpop.f32.mrf.mxu0
      %v336 = vadd.f32 0.0, %v335
      %v337 = vpop.f32.mrf.mxu0
      %338 = vdwg.mxu0
      %v340 = vlaneseq
      %v341 = vshrl.u32 %v340, 7
      %v342 = vsub.s32 0, %v341
      %v343 = vrot.slane %v232, %v342
      %v345 = vadd.f32 %v343, %v333
      %v346 = vadd.f32 %v343, %v336
      %v347 = vpack.c.bf16 %v231, %v231
      %s348 = scalar_lea.vmem %s1, 64
      %v349 = vld [vmem:[%s348] sm:$0xf]
      %v350 = vld [vmem:[%s348 + $0x4] sm:$0xf]
      %v351 = vld [vmem:[%s348 + $0x8] sm:$0xf]
      %v352 = vld [vmem:[%s348 + $0xc] sm:$0xf]
      %v353 = vld [vmem:[%s348 + $0x10] sm:$0xf]
      %v354 = vld [vmem:[%s348 + $0x14] sm:$0xf]
      %v355 = vld [vmem:[%s348 + $0x18] sm:$0xf]
      %v356 = vld [vmem:[%s348 + $0x1c] sm:$0xf]
      %v357 = vld [vmem:[%s348 + $0x20] sm:$0xf]
      %v358 = vld [vmem:[%s348 + $0x24] sm:$0xf]
      %v359 = vld [vmem:[%s348 + $0x28] sm:$0xf]
      %v360 = vld [vmem:[%s348 + $0x2c] sm:$0xf]
      %v361 = vld [vmem:[%s348 + $0x30] sm:$0xf]
      %v362 = vld [vmem:[%s348 + $0x34] sm:$0xf]
      %v363 = vld [vmem:[%s348 + $0x38] sm:$0xf]
      %v364 = vld [vmem:[%s348 + $0x3c] sm:$0xf]
      %vm365 = vsmask.f32 6400
      %v367 = vshrl.u32 %v233, 16
      %v369 = vrot.slane %v367, 1
      %v370 = vshll.u32 %v233, 16
      %v372 = vrot.slane %v370, 2
      %v373 = vor.u32 %v369, %v372
      %v375 = vshrl.u32 %v347, 16
      %v377 = vrot.slane %v375, 1
      %v378 = vshll.u32 %v347, 16
      %v380 = vrot.slane %v378, 2
      %v381 = vor.u32 %v377, %v380
      %v382 = vsel %vm365, %v373, %v381
      %v400 = vunpack.c.l.b16 %v349
      %v401 = vunpack.c.l.b16 %v350
      %v402 = vunpack.c.l.b16 %v351
      %v403 = vunpack.c.l.b16 %v352
      %v404 = vunpack.c.l.b16 %v353
      %v405 = vunpack.c.l.b16 %v354
      %v406 = vunpack.c.l.b16 %v355
      %v407 = vunpack.c.l.b16 %v356
      %v408 = vunpack.c.l.b16 %v357
      %v409 = vunpack.c.l.b16 %v358
      %v410 = vunpack.c.l.b16 %v359
      %v411 = vunpack.c.l.b16 %v360
      %v412 = vunpack.c.l.b16 %v361
      %v413 = vunpack.c.l.b16 %v362
      %v414 = vunpack.c.l.b16 %v363
      %v415 = vunpack.c.l.b16 %v364
      %v416 = vpack.c.b16 %v401, %v400
      %v417 = vpack.c.b16 %v403, %v402
      %v418 = vpack.c.b16 %v405, %v404
      %v419 = vpack.c.b16 %v407, %v406
      %v420 = vpack.c.b16 %v409, %v408
      %v421 = vpack.c.b16 %v411, %v410
      %v422 = vpack.c.b16 %v413, %v412
      %v423 = vpack.c.b16 %v415, %v414
      %432 = vmatprep.subr.bf16.mxu0 0
      %433 = vmatpush1.bf16.msra.mxu0 %v423
      %434 = vmatprep.subr.bf16.mxu0 0
      %435 = vmatpush1.bf16.msra.mxu0 %v422
      %436 = vmatprep.subr.bf16.mxu0 0
      %437 = vmatpush1.bf16.msra.mxu0 %v421
      %438 = vmatprep.subr.bf16.mxu0 0
      %439 = vmatpush1.bf16.msra.mxu0 %v420
      %440 = vmatprep.subr.bf16.mxu0 0
      %441 = vmatpush1.bf16.msra.mxu0 %v419
      %442 = vmatprep.subr.bf16.mxu0 0
      %443 = vmatpush1.bf16.msra.mxu0 %v418
      %444 = vmatprep.subr.bf16.mxu0 0
      %445 = vmatpush1.bf16.msra.mxu0 %v417
      %446 = vmatprep.subr.bf16.mxu0 0
      %447 = vmatpush1.bf16.msra.mxu0 %v416
      %448 = vmatprep.subr.bf16.mxu0 0
      %449 = vmatpush2.bf16.msra.mxu0 0
      %450 = vmatprep.subr.bf16.mxu0 0
      %451 = vmatpush2.bf16.msra.mxu0 0
      %452 = vmatprep.subr.bf16.mxu0 0
      %453 = vmatpush2.bf16.msra.mxu0 0
      %454 = vmatprep.subr.bf16.mxu0 0
      %455 = vmatpush2.bf16.msra.mxu0 0
      %456 = vmatprep.subr.bf16.mxu0 0
      %457 = vmatpush2.bf16.msra.mxu0 0
      %458 = vmatprep.subr.bf16.mxu0 0
      %459 = vmatpush2.bf16.msra.mxu0 0
      %460 = vmatprep.subr.bf16.mxu0 0
      %461 = vmatpush2.bf16.msra.mxu0 0
      %462 = vmatprep.subr.bf16.mxu0 0
      %463 = vmatpush2.bf16.msra.mxu0 0
      %464 = vmatprep.mubr.bf16.mxu0 0
      %465 = vmatmul.mubr.bf16.gmra.mxu0 %v382
      %v466 = vpop.f32.mrf.mxu0
      %v467 = vadd.f32 0.0, %v466
      %v468 = vpop.f32.mrf.mxu0
      %v469 = vpop.f32.mrf.mxu0
      %v470 = vadd.f32 0.0, %v469
      %v471 = vpop.f32.mrf.mxu0
      %472 = vdwg.mxu0
      %v473 = vadd.f32 %v345, %v467
      %v474 = vadd.f32 %v346, %v470
      %s475 = scalar_lea.vmem %s1, 128
      %v476 = vld [vmem:[%s475] sm:$0xf]
      %v477 = vld [vmem:[%s475 + $0x4] sm:$0xf]
      %v478 = vld [vmem:[%s475 + $0x8] sm:$0xf]
      %v479 = vld [vmem:[%s475 + $0xc] sm:$0xf]
      %v480 = vld [vmem:[%s475 + $0x10] sm:$0xf]
      %v481 = vld [vmem:[%s475 + $0x14] sm:$0xf]
      %v482 = vld [vmem:[%s475 + $0x18] sm:$0xf]
      %v483 = vld [vmem:[%s475 + $0x1c] sm:$0xf]
      %v484 = vld [vmem:[%s475 + $0x20] sm:$0xf]
      %v485 = vld [vmem:[%s475 + $0x24] sm:$0xf]
      %v486 = vld [vmem:[%s475 + $0x28] sm:$0xf]
      %v487 = vld [vmem:[%s475 + $0x2c] sm:$0xf]
      %v488 = vld [vmem:[%s475 + $0x30] sm:$0xf]
      %v489 = vld [vmem:[%s475 + $0x34] sm:$0xf]
      %v490 = vld [vmem:[%s475 + $0x38] sm:$0xf]
      %v491 = vld [vmem:[%s475 + $0x3c] sm:$0xf]
      %vm494 = vcmask 1044480
      %v495 = vrot.slane %v233, 3
      %v496 = vrot.slane %v347, 3
      %v497 = vsel %vm494, %v495, %v496
      %v515 = vunpack.c.l.b16 %v476
      %v516 = vunpack.c.l.b16 %v477
      %v517 = vunpack.c.l.b16 %v478
      %v518 = vunpack.c.l.b16 %v479
      %v519 = vunpack.c.l.b16 %v480
      %v520 = vunpack.c.l.b16 %v481
      %v521 = vunpack.c.l.b16 %v482
      %v522 = vunpack.c.l.b16 %v483
      %v523 = vunpack.c.l.b16 %v484
      %v524 = vunpack.c.l.b16 %v485
      %v525 = vunpack.c.l.b16 %v486
      %v526 = vunpack.c.l.b16 %v487
      %v527 = vunpack.c.l.b16 %v488
      %v528 = vunpack.c.l.b16 %v489
      %v529 = vunpack.c.l.b16 %v490
      %v530 = vunpack.c.l.b16 %v491
      %v531 = vpack.c.b16 %v516, %v515
      %v532 = vpack.c.b16 %v518, %v517
      %v533 = vpack.c.b16 %v520, %v519
      %v534 = vpack.c.b16 %v522, %v521
      %v535 = vpack.c.b16 %v524, %v523
      %v536 = vpack.c.b16 %v526, %v525
      %v537 = vpack.c.b16 %v528, %v527
      %v538 = vpack.c.b16 %v530, %v529
      %547 = vmatprep.subr.bf16.mxu0 0
      %548 = vmatpush1.bf16.msra.mxu0 %v538
      %549 = vmatprep.subr.bf16.mxu0 0
      %550 = vmatpush1.bf16.msra.mxu0 %v537
      %551 = vmatprep.subr.bf16.mxu0 0
      %552 = vmatpush1.bf16.msra.mxu0 %v536
      %553 = vmatprep.subr.bf16.mxu0 0
      %554 = vmatpush1.bf16.msra.mxu0 %v535
      %555 = vmatprep.subr.bf16.mxu0 0
      %556 = vmatpush1.bf16.msra.mxu0 %v534
      %557 = vmatprep.subr.bf16.mxu0 0
      %558 = vmatpush1.bf16.msra.mxu0 %v533
      %559 = vmatprep.subr.bf16.mxu0 0
      %560 = vmatpush1.bf16.msra.mxu0 %v532
      %561 = vmatprep.subr.bf16.mxu0 0
      %562 = vmatpush1.bf16.msra.mxu0 %v531
      %563 = vmatprep.subr.bf16.mxu0 0
      %564 = vmatpush2.bf16.msra.mxu0 0
      %565 = vmatprep.subr.bf16.mxu0 0
      %566 = vmatpush2.bf16.msra.mxu0 0
      %567 = vmatprep.subr.bf16.mxu0 0
      %568 = vmatpush2.bf16.msra.mxu0 0
      %569 = vmatprep.subr.bf16.mxu0 0
      %570 = vmatpush2.bf16.msra.mxu0 0
      %571 = vmatprep.subr.bf16.mxu0 0
      %572 = vmatpush2.bf16.msra.mxu0 0
      %573 = vmatprep.subr.bf16.mxu0 0
      %574 = vmatpush2.bf16.msra.mxu0 0
      %575 = vmatprep.subr.bf16.mxu0 0
      %576 = vmatpush2.bf16.msra.mxu0 0
      %577 = vmatprep.subr.bf16.mxu0 0
      %578 = vmatpush2.bf16.msra.mxu0 0
      %579 = vmatprep.mubr.bf16.mxu0 0
      %580 = vmatmul.mubr.bf16.gmra.mxu0 %v497
      %v581 = vpop.f32.mrf.mxu0
      %v582 = vadd.f32 0.0, %v581
      %v583 = vpop.f32.mrf.mxu0
      %v584 = vpop.f32.mrf.mxu0
      %v585 = vadd.f32 0.0, %v584
      %v586 = vpop.f32.mrf.mxu0
      %587 = vdwg.mxu0
      %v588 = vadd.f32 %v473, %v582
      %v589 = vadd.f32 %v474, %v585
      %v590 = vmax.f32 %v588, 0.0
      %v591 = vmax.f32 %v589, 0.0
      %v592 = vpack.c.bf16 %v591, %v590
      %v593 = vld [vmem:[%s4] sm:$0x1]
      %v594 = vld [vmem:[%s3] sm:$0xf]
      %v595 = vld [vmem:[%s3 + $0x4] sm:$0xf]
      %v596 = vld [vmem:[%s3 + $0x8] sm:$0xf]
      %v597 = vld [vmem:[%s3 + $0xc] sm:$0xf]
      %v598 = vld [vmem:[%s3 + $0x10] sm:$0xf]
      %v599 = vld [vmem:[%s3 + $0x14] sm:$0xf]
      %v600 = vld [vmem:[%s3 + $0x18] sm:$0xf]
      %v601 = vld [vmem:[%s3 + $0x1c] sm:$0xf]
      %v602 = vld [vmem:[%s3 + $0x20] sm:$0xf]
      %v603 = vld [vmem:[%s3 + $0x24] sm:$0xf]
      %v604 = vld [vmem:[%s3 + $0x28] sm:$0xf]
      %v605 = vld [vmem:[%s3 + $0x2c] sm:$0xf]
      %v606 = vld [vmem:[%s3 + $0x30] sm:$0xf]
      %v607 = vld [vmem:[%s3 + $0x34] sm:$0xf]
      %v608 = vld [vmem:[%s3 + $0x38] sm:$0xf]
      %v609 = vld [vmem:[%s3 + $0x3c] sm:$0xf]
      %v626 = vunpack.c.l.b16 %v594
      %v627 = vunpack.c.l.b16 %v595
      %v628 = vunpack.c.l.b16 %v596
      %v629 = vunpack.c.l.b16 %v597
      %v630 = vunpack.c.l.b16 %v598
      %v631 = vunpack.c.l.b16 %v599
      %v632 = vunpack.c.l.b16 %v600
      %v633 = vunpack.c.l.b16 %v601
      %v634 = vunpack.c.l.b16 %v602
      %v635 = vunpack.c.l.b16 %v603
      %v636 = vunpack.c.l.b16 %v604
      %v637 = vunpack.c.l.b16 %v605
      %v638 = vunpack.c.l.b16 %v606
      %v639 = vunpack.c.l.b16 %v607
      %v640 = vunpack.c.l.b16 %v608
      %v641 = vunpack.c.l.b16 %v609
      %v642 = vpack.c.b16 %v627, %v626
      %v643 = vpack.c.b16 %v629, %v628
      %v644 = vpack.c.b16 %v631, %v630
      %v645 = vpack.c.b16 %v633, %v632
      %v646 = vpack.c.b16 %v635, %v634
      %v647 = vpack.c.b16 %v637, %v636
      %v648 = vpack.c.b16 %v639, %v638
      %v649 = vpack.c.b16 %v641, %v640
      %658 = vmatprep.subr.bf16.mxu0 0
      %659 = vmatpush1.bf16.msra.mxu0 %v649
      %660 = vmatprep.subr.bf16.mxu0 0
      %661 = vmatpush1.bf16.msra.mxu0 %v648
      %662 = vmatprep.subr.bf16.mxu0 0
      %663 = vmatpush1.bf16.msra.mxu0 %v647
      %664 = vmatprep.subr.bf16.mxu0 0
      %665 = vmatpush1.bf16.msra.mxu0 %v646
      %666 = vmatprep.subr.bf16.mxu0 0
      %667 = vmatpush1.bf16.msra.mxu0 %v645
      %668 = vmatprep.subr.bf16.mxu0 0
      %669 = vmatpush1.bf16.msra.mxu0 %v644
      %670 = vmatprep.subr.bf16.mxu0 0
      %671 = vmatpush1.bf16.msra.mxu0 %v643
      %672 = vmatprep.subr.bf16.mxu0 0
      %673 = vmatpush1.bf16.msra.mxu0 %v642
      %674 = vmatprep.subr.bf16.mxu0 0
      %675 = vmatpush2.bf16.msra.mxu0 0
      %676 = vmatprep.subr.bf16.mxu0 0
      %677 = vmatpush2.bf16.msra.mxu0 0
      %678 = vmatprep.subr.bf16.mxu0 0
      %679 = vmatpush2.bf16.msra.mxu0 0
      %680 = vmatprep.subr.bf16.mxu0 0
      %681 = vmatpush2.bf16.msra.mxu0 0
      %682 = vmatprep.subr.bf16.mxu0 0
      %683 = vmatpush2.bf16.msra.mxu0 0
      %684 = vmatprep.subr.bf16.mxu0 0
      %685 = vmatpush2.bf16.msra.mxu0 0
      %686 = vmatprep.subr.bf16.mxu0 0
      %687 = vmatpush2.bf16.msra.mxu0 0
      %688 = vmatprep.subr.bf16.mxu0 0
      %689 = vmatpush2.bf16.msra.mxu0 0
      %690 = vmatprep.mubr.bf16.mxu0 0
      %691 = vmatmul.mubr.bf16.gmra.mxu0 %v592
      %v692 = vpop.f32.mrf.mxu0
      %v693 = vadd.f32 0.0, %v692
      %v694 = vpop.f32.mrf.mxu0
      %v695 = vpop.f32.mrf.mxu0
      %v696 = vadd.f32 0.0, %v695
      %v697 = vpop.f32.mrf.mxu0
      %698 = vdwg.mxu0
      %v700 = vlaneseq
      %v701 = vshrl.u32 %v700, 7
      %v702 = vsub.s32 0, %v701
      %v703 = vrot.slane %v593, %v702
      %v705 = vadd.f32 %v703, %v693
      %v706 = vadd.f32 %v703, %v696
      %vm710 = vcmask 1044480
      %v711 = vrot.slane %v226, 3
      %v712 = vrot.slane %v227, 3
      %v713 = vsel %vm710, %v711, %v712
      %v714 = vrot.slane %v228, 3
      %v715 = vsel %vm710, %v712, %v714
      %v718 = vadd.f32 %v705, %v713
      %v719 = vadd.f32 %v706, %v715
      %720 = vst [vmem:[%s224] sm:$0xff] %v718
      %721 = vst [vmem:[%s224 + $0x8] sm:$0xff] %v719
      %p722 = scmp.lt.s32.totalorder %s16, 1
      %s723 = scalar_select %p722, %s16, 1
      %s724 = smul.addr %s723, 2
      %s725 = smul.addr %s724, 8
      %s726 = scalar_lea.vmem %s5, %s725
      // Predicated region
      $region41: #{spatial_transformer_human_vqvae_forward.20} parent=39 // pred_check
        %p727 = pneg %p144
      $region42: #{spatial_transformer_human_vqvae_forward.20} parent=39 // pred_check_branch
        %729 = sbr.rel (%p727) target = $region44
      $region43: #{spatial_transformer_human_vqvae_forward.20} parent=39 // pred_region
        _
      $region44: #{spatial_transformer_human_vqvae_forward.20} parent=39 // pred_fallthru
        _
    $region40: #{spatial_transformer_human_vqvae_forward.20} parent=5 // pred_fallthru
      _
    %p730 = scmp.le.s32.totalorder 2, %s11
    // Predicated region
    $region45: #{spatial_transformer_human_vqvae_forward.20} parent=5 // pred_check
      %p731 = pneg %p730
    $region46: #{spatial_transformer_human_vqvae_forward.20} parent=5 // pred_check_branch
      %733 = sbr.rel (%p731) target = $region48
    $region47: #{spatial_transformer_human_vqvae_forward.20} parent=5 // pred_region
      %s734 = ssub.s32 %s11, 2
      // Predicated region
      $region49: #{spatial_transformer_human_vqvae_forward.20} parent=47 // pred_check
        %p735 = pneg %p150
      $region50: #{spatial_transformer_human_vqvae_forward.20} parent=47 // pred_check_branch
        %737 = sbr.rel (%p735) target = $region52
      $region51: #{spatial_transformer_human_vqvae_forward.20} parent=47 // pred_region
        %p738 = scmp.lt.s32.totalorder %s17, 1
        %s739 = scalar_select %p738, %s17, 1
        %s740 = smul.addr %s739, 2
        %s741 = smul.addr %s740, 8
        %s742 = scalar_lea.vmem %s5, %s741
      $region52: #{spatial_transformer_human_vqvae_forward.20} parent=47 // pred_fallthru
        _
    $region48: #{spatial_transformer_human_vqvae_forward.20} parent=5 // pred_fallthru
      _
  $region6: #{spatial_transformer_human_vqvae_forward.20} parent=0 // loop_footer
    %s15 = sadd.s32 1, %s11
  $region7: #{spatial_transformer_human_vqvae_forward.20} parent=0 // loop_footer_branch
    %10 = sbr.rel target = $region3
  $region8: #{spatial_transformer_human_vqvae_forward.20} parent=0 // loop_exit
    _

// kernel: spatial_transformer_human_vqvae_forward.19
$region0: #{spatial_transformer_human_vqvae_forward.19}
  #allocation0 [shape = 'u32[]', space=smem, size = 0x4, offset = 0x4, fixed_abs, tag = 'smem constant byte address 0x4 - core index']
  #allocation1 [shape = 'u32[144,128]{1,0:T(1,128)}', space=vmem, size = 0x12000, scoped, tag = 'internal scratch']
  %s0 = inlined_call_operand.vmem [shape: f32[2,18,256], index: 0, kind: input, shape index: {}]
  %s1 = inlined_call_operand.vmem [shape: bf16[3,256,128], index: 1, kind: input, shape index: {}]
  %s2 = inlined_call_operand.vmem [shape: f32[1,128], index: 2, kind: input, shape index: {}]
  %s3 = inlined_call_operand.vmem [shape: f32[2,16,128], index: 3, kind: output, shape index: {}]
  %s4 = sld [smem:[#allocation0]]
  $region45: #{spatial_transformer_human_vqvae_forward.19} parent=0
    _
  %s6 = ssub.s32 1, %s4
  %s7 = scalar_select 0, %s6, %s4
  loop: start=0, step=1, limit=4
  $region2: #{spatial_transformer_human_vqvae_forward.19} parent=0 // loop_pre_header
    _
  $region3: #{spatial_transformer_human_vqvae_forward.19} parent=0 // loop_header
    %s9 = sphi 0, %s13
    %p10 = scmp.ge.s32.totalorder %s9, 4
    %s19 = sphi 0, %s21
    %s22 = sphi 0, %s19
    %s23 = sphi 0, %s22
    %s39 = sphi 0, %s23
    %s43 = sphi 0, %s43
    %s45 = sphi 0, %s43
    %s46 = sphi 0, %s45
    %s60 = sphi 0, %s46
    %s64 = sphi 0, %s64
    %s66 = sphi 0, %s64
    %s67 = sphi 0, %s66
    %s81 = sphi 0, %s67
    %s87 = sphi 0, %s89
    %s90 = sphi 0, %s87
    %s91 = sphi 0, %s90
    %s107 = sphi 0, %s91
  $region4: #{spatial_transformer_human_vqvae_forward.19} parent=0 // loop_header_branch
    %12 = sbr.rel (%p10) target = $region8
  $region5: #{spatial_transformer_human_vqvae_forward.19} parent=0 // loop_body
    %s14 = ssub.s32 %s9, 1
    %s15 = ssub.s32 %s9, 2
    %s16 = sadd.s32 %s9, 1
    %s17 = ssub.s32 %s9, %s16
    %p18 = scmp.eq.s32.totalorder %s17, 0
    %s20 = sadd.s32 %s19, 1
    %s21 = scalar_select %p18, %s19, %s20
    %p24 = pneg %p18
    %p25 = scmp.eq.s32.totalorder %s9, 1
    %p26 = por %p24, %p25
    %p27 = scmp.ne.s32.totalorder %s19, %s22
    %p28 = scmp.eq.s32.totalorder %s9, 0
    %p29 = por %p27, %p28
    %p30 = scmp.ne.s32.totalorder %s19, %s22
    %p31 = scmp.eq.s32.totalorder %s14, 1
    %p32 = por %p30, %p31
    %p33 = scmp.ne.s32.totalorder %s22, %s23
    %p34 = scmp.eq.s32.totalorder %s14, 0
    %p35 = por %p33, %p34
    %p36 = scmp.ne.s32.totalorder %s22, %s23
    %p37 = scmp.eq.s32.totalorder %s15, 1
    %p38 = por %p36, %p37
    %p40 = scmp.ne.s32.totalorder %s23, %s39
    %p41 = scmp.eq.s32.totalorder %s15, 0
    %p42 = por %p40, %p41
    %s44 = sadd.s32 %s43, 1
    %p47 = scmp.eq.s32.totalorder %s9, 1
    %p48 = scmp.ne.s32.totalorder %s43, %s45
    %p49 = scmp.eq.s32.totalorder %s9, 0
    %p50 = por %p48, %p49
    %p51 = scmp.ne.s32.totalorder %s43, %s45
    %p52 = scmp.eq.s32.totalorder %s14, 1
    %p53 = por %p51, %p52
    %p54 = scmp.ne.s32.totalorder %s45, %s46
    %p55 = scmp.eq.s32.totalorder %s14, 0
    %p56 = por %p54, %p55
    %p57 = scmp.ne.s32.totalorder %s45, %s46
    %p58 = scmp.eq.s32.totalorder %s15, 1
    %p59 = por %p57, %p58
    %p61 = scmp.ne.s32.totalorder %s46, %s60
    %p62 = scmp.eq.s32.totalorder %s15, 0
    %p63 = por %p61, %p62
    %s65 = sadd.s32 %s64, 1
    %p68 = scmp.eq.s32.totalorder %s9, 1
    %p69 = scmp.ne.s32.totalorder %s64, %s66
    %p70 = scmp.eq.s32.totalorder %s9, 0
    %p71 = por %p69, %p70
    %p72 = scmp.ne.s32.totalorder %s64, %s66
    %p73 = scmp.eq.s32.totalorder %s14, 1
    %p74 = por %p72, %p73
    %p75 = scmp.ne.s32.totalorder %s66, %s67
    %p76 = scmp.eq.s32.totalorder %s14, 0
    %p77 = por %p75, %p76
    %p78 = scmp.ne.s32.totalorder %s66, %s67
    %p79 = scmp.eq.s32.totalorder %s15, 1
    %p80 = por %p78, %p79
    %p82 = scmp.ne.s32.totalorder %s67, %s81
    %p83 = scmp.eq.s32.totalorder %s15, 0
    %p84 = por %p82, %p83
    %s85 = ssub.s32 %s9, %s16
    %p86 = scmp.eq.s32.totalorder %s85, 0
    %s88 = sadd.s32 %s87, 1
    %s89 = scalar_select %p86, %s87, %s88
    %p92 = pneg %p86
    %p93 = scmp.eq.s32.totalorder %s9, 1
    %p94 = por %p92, %p93
    %p95 = scmp.ne.s32.totalorder %s87, %s90
    %p96 = scmp.eq.s32.totalorder %s9, 0
    %p97 = por %p95, %p96
    %p98 = scmp.ne.s32.totalorder %s87, %s90
    %p99 = scmp.eq.s32.totalorder %s14, 1
    %p100 = por %p98, %p99
    %p101 = scmp.ne.s32.totalorder %s90, %s91
    %p102 = scmp.eq.s32.totalorder %s14, 0
    %p103 = por %p101, %p102
    %p104 = scmp.ne.s32.totalorder %s90, %s91
    %p105 = scmp.eq.s32.totalorder %s15, 1
    %p106 = por %p104, %p105
    %p108 = scmp.ne.s32.totalorder %s91, %s107
    %p109 = scmp.eq.s32.totalorder %s15, 0
    %p110 = por %p108, %p109
    %p111 = scmp.le.s32.totalorder 1, %s9
    %p112 = scmp.lt.s32.totalorder %s9, 3
    %p113 = pnand %p111, %p112
    %p114 = pneg %p113
    // Predicated region
    $region9: #{spatial_transformer_human_vqvae_forward.19} parent=5 // pred_check
      _
    $region10: #{spatial_transformer_human_vqvae_forward.19} parent=5 // pred_check_branch
      %116 = sbr.rel (%p113) target = $region12
    $region11: #{spatial_transformer_human_vqvae_forward.19} parent=5 // pred_region
      %s117 = ssub.s32 %s9, 1
      // Predicated region
      $region13: #{spatial_transformer_human_vqvae_forward.19} parent=11 // pred_check
        %p118 = pneg %p56
      $region14: #{spatial_transformer_human_vqvae_forward.19} parent=11 // pred_check_branch
        %120 = sbr.rel (%p118) target = $region16
      $region15: #{spatial_transformer_human_vqvae_forward.19} parent=11 // pred_region
        _
      $region16: #{spatial_transformer_human_vqvae_forward.19} parent=11 // pred_fallthru
        _
      // Predicated region
      $region17: #{spatial_transformer_human_vqvae_forward.19} parent=11 // pred_check
        %p121 = pneg %p77
      $region18: #{spatial_transformer_human_vqvae_forward.19} parent=11 // pred_check_branch
        %123 = sbr.rel (%p121) target = $region20
      $region19: #{spatial_transformer_human_vqvae_forward.19} parent=11 // pred_region
        _
      $region20: #{spatial_transformer_human_vqvae_forward.19} parent=11 // pred_fallthru
        _
    $region12: #{spatial_transformer_human_vqvae_forward.19} parent=5 // pred_fallthru
      _
    %p124 = scmp.lt.s32.totalorder %s9, 2
    // Predicated region
    $region21: #{spatial_transformer_human_vqvae_forward.19} parent=5 // pred_check
      %p125 = pneg %p124
    $region22: #{spatial_transformer_human_vqvae_forward.19} parent=5 // pred_check_branch
      %127 = sbr.rel (%p125) target = $region24
    $region23: #{spatial_transformer_human_vqvae_forward.19} parent=5 // pred_region
      // Predicated region
      $region25: #{spatial_transformer_human_vqvae_forward.19} parent=23 // pred_check
        %p128 = pneg %p29
      $region26: #{spatial_transformer_human_vqvae_forward.19} parent=23 // pred_check_branch
        %130 = sbr.rel (%p128) target = $region28
      $region27: #{spatial_transformer_human_vqvae_forward.19} parent=23 // pred_region
        %p131 = scmp.lt.s32.totalorder %s9, 1
        %s132 = scalar_select %p131, %s9, 1
        %s133 = smul.addr %s132, 6
        %s134 = smul.addr %s133, 8
        %s135 = scalar_lea.vmem %s0, %s134
      $region28: #{spatial_transformer_human_vqvae_forward.19} parent=23 // pred_fallthru
        _
    $region24: #{spatial_transformer_human_vqvae_forward.19} parent=5 // pred_fallthru
      _
    %p136 = scmp.le.s32.totalorder 1, %s9
    %p137 = scmp.lt.s32.totalorder %s9, 3
    %p138 = pnand %p136, %p137
    %p139 = pneg %p138
    // Predicated region
    $region29: #{spatial_transformer_human_vqvae_forward.19} parent=5 // pred_check
      _
    $region30: #{spatial_transformer_human_vqvae_forward.19} parent=5 // pred_check_branch
      %141 = sbr.rel (%p138) target = $region32
    $region31: #{spatial_transformer_human_vqvae_forward.19} parent=5 // pred_region
      %s142 = ssub.s32 %s9, 1
      %p143 = scmp.lt.s32.totalorder %s14, 1
      %s144 = scalar_select %p143, %s14, 1
      %s145 = smul.addr %s144, 6
      %s146 = smul.addr %s145, 8
      %s147 = scalar_lea.vmem %s0, %s146
      %p148 = pneg %p35
      %p149 = pneg %p32
      %p150 = pneg %p56
      %p151 = pneg %p53
      %p152 = pneg %p77
      %p153 = pneg %p74
      %p154 = pneg %p103
      %p155 = pneg %p100
      %p156 = scmp.lt.s32.totalorder %s14, 1
      %s157 = scalar_select %p156, %s14, 1
      %s158 = smul.addr %s157, 2
      %s159 = smul.addr %s158, 8
      %s160 = scalar_lea.vmem %s3, %s159
      %p161 = scmp.lt.s32.totalorder %s14, 1
      %s162 = scalar_select %p161, %s14, 1
      %s163 = smul.addr %s162, 6
      %s164 = smul.addr %s163, 8
      %s165 = scalar_lea.vmem %s0, %s164
      %p166 = scmp.lt.s32.totalorder %s14, 1
      %s167 = scalar_select %p166, %s14, 1
      %s168 = smul.addr %s167, 2
      %s169 = smul.addr %s168, 8
      %s170 = scalar_lea.vmem %s3, %s169
      %v172 = vld [vmem:[%s165] sm:$0xff]
      %v173 = vld [vmem:[%s165 + $0x8] sm:$0xff]
      %v174 = vld [vmem:[%s165 + $0x10] sm:$0xff]
      %v175 = vld [vmem:[%s165 + $0x18] sm:$0xff]
      %v176 = vld [vmem:[%s165 + $0x20] sm:$0x3]
      %v177 = vld [vmem:[%s165 + $0x28] sm:$0x3]
      %v178 = vld [vmem:[%s2] sm:$0x1]
      %v179 = vpack.c.bf16 %v174, %v172
      %v180 = vpack.c.bf16 %v175, %v173
      %v181 = vld [vmem:[%s1] sm:$0xf]
      %v182 = vld [vmem:[%s1 + $0x4] sm:$0xf]
      %v183 = vld [vmem:[%s1 + $0x8] sm:$0xf]
      %v184 = vld [vmem:[%s1 + $0xc] sm:$0xf]
      %v185 = vld [vmem:[%s1 + $0x10] sm:$0xf]
      %v186 = vld [vmem:[%s1 + $0x14] sm:$0xf]
      %v187 = vld [vmem:[%s1 + $0x18] sm:$0xf]
      %v188 = vld [vmem:[%s1 + $0x1c] sm:$0xf]
      %v189 = vld [vmem:[%s1 + $0x20] sm:$0xf]
      %v190 = vld [vmem:[%s1 + $0x24] sm:$0xf]
      %v191 = vld [vmem:[%s1 + $0x28] sm:$0xf]
      %v192 = vld [vmem:[%s1 + $0x2c] sm:$0xf]
      %v193 = vld [vmem:[%s1 + $0x30] sm:$0xf]
      %v194 = vld [vmem:[%s1 + $0x34] sm:$0xf]
      %v195 = vld [vmem:[%s1 + $0x38] sm:$0xf]
      %v196 = vld [vmem:[%s1 + $0x3c] sm:$0xf]
      %v197 = vld [vmem:[%s1 + $0x40] sm:$0xf]
      %v198 = vld [vmem:[%s1 + $0x44] sm:$0xf]
      %v199 = vld [vmem:[%s1 + $0x48] sm:$0xf]
      %v200 = vld [vmem:[%s1 + $0x4c] sm:$0xf]
      %v201 = vld [vmem:[%s1 + $0x50] sm:$0xf]
      %v202 = vld [vmem:[%s1 + $0x54] sm:$0xf]
      %v203 = vld [vmem:[%s1 + $0x58] sm:$0xf]
      %v204 = vld [vmem:[%s1 + $0x5c] sm:$0xf]
      %v205 = vld [vmem:[%s1 + $0x60] sm:$0xf]
      %v206 = vld [vmem:[%s1 + $0x64] sm:$0xf]
      %v207 = vld [vmem:[%s1 + $0x68] sm:$0xf]
      %v208 = vld [vmem:[%s1 + $0x6c] sm:$0xf]
      %v209 = vld [vmem:[%s1 + $0x70] sm:$0xf]
      %v210 = vld [vmem:[%s1 + $0x74] sm:$0xf]
      %v211 = vld [vmem:[%s1 + $0x78] sm:$0xf]
      %v212 = vld [vmem:[%s1 + $0x7c] sm:$0xf]
      %v245 = vunpack.c.l.b16 %v181
      %v246 = vunpack.c.l.b16 %v182
      %v247 = vunpack.c.l.b16 %v183
      %v248 = vunpack.c.l.b16 %v184
      %v249 = vunpack.c.l.b16 %v185
      %v250 = vunpack.c.l.b16 %v186
      %v251 = vunpack.c.l.b16 %v187
      %v252 = vunpack.c.l.b16 %v188
      %v253 = vunpack.c.l.b16 %v189
      %v254 = vunpack.c.l.b16 %v190
      %v255 = vunpack.c.l.b16 %v191
      %v256 = vunpack.c.l.b16 %v192
      %v257 = vunpack.c.l.b16 %v193
      %v258 = vunpack.c.l.b16 %v194
      %v259 = vunpack.c.l.b16 %v195
      %v260 = vunpack.c.l.b16 %v196
      %v261 = vunpack.c.l.b16 %v197
      %v262 = vunpack.c.l.b16 %v198
      %v263 = vunpack.c.l.b16 %v199
      %v264 = vunpack.c.l.b16 %v200
      %v265 = vunpack.c.l.b16 %v201
      %v266 = vunpack.c.l.b16 %v202
      %v267 = vunpack.c.l.b16 %v203
      %v268 = vunpack.c.l.b16 %v204
      %v269 = vunpack.c.l.b16 %v205
      %v270 = vunpack.c.l.b16 %v206
      %v271 = vunpack.c.l.b16 %v207
      %v272 = vunpack.c.l.b16 %v208
      %v273 = vunpack.c.l.b16 %v209
      %v274 = vunpack.c.l.b16 %v210
      %v275 = vunpack.c.l.b16 %v211
      %v276 = vunpack.c.l.b16 %v212
      %v277 = vpack.c.b16 %v246, %v245
      %v278 = vpack.c.b16 %v248, %v247
      %v279 = vpack.c.b16 %v250, %v249
      %v280 = vpack.c.b16 %v252, %v251
      %v281 = vpack.c.b16 %v254, %v253
      %v282 = vpack.c.b16 %v256, %v255
      %v283 = vpack.c.b16 %v258, %v257
      %v284 = vpack.c.b16 %v260, %v259
      %v285 = vpack.c.b16 %v262, %v261
      %v286 = vpack.c.b16 %v264, %v263
      %v287 = vpack.c.b16 %v266, %v265
      %v288 = vpack.c.b16 %v268, %v267
      %v289 = vpack.c.b16 %v270, %v269
      %v290 = vpack.c.b16 %v272, %v271
      %v291 = vpack.c.b16 %v274, %v273
      %v292 = vpack.c.b16 %v276, %v275
      %309 = vmatprep.subr.bf16.mxu0 0
      %310 = vmatpush1.bf16.msra.mxu0 %v284
      %311 = vmatprep.subr.bf16.mxu0 0
      %312 = vmatpush1.bf16.msra.mxu0 %v283
      %313 = vmatprep.subr.bf16.mxu0 0
      %314 = vmatpush1.bf16.msra.mxu0 %v282
      %315 = vmatprep.subr.bf16.mxu0 0
      %316 = vmatpush1.bf16.msra.mxu0 %v281
      %317 = vmatprep.subr.bf16.mxu0 0
      %318 = vmatpush1.bf16.msra.mxu0 %v280
      %319 = vmatprep.subr.bf16.mxu0 0
      %320 = vmatpush1.bf16.msra.mxu0 %v279
      %321 = vmatprep.subr.bf16.mxu0 0
      %322 = vmatpush1.bf16.msra.mxu0 %v278
      %323 = vmatprep.subr.bf16.mxu0 0
      %324 = vmatpush1.bf16.msra.mxu0 %v277
      %325 = vmatprep.subr.bf16.mxu0 0
      %326 = vmatpush2.bf16.msra.mxu0 %v292
      %327 = vmatprep.subr.bf16.mxu0 0
      %328 = vmatpush2.bf16.msra.mxu0 %v291
      %329 = vmatprep.subr.bf16.mxu0 0
      %330 = vmatpush2.bf16.msra.mxu0 %v290
      %331 = vmatprep.subr.bf16.mxu0 0
      %332 = vmatpush2.bf16.msra.mxu0 %v289
      %333 = vmatprep.subr.bf16.mxu0 0
      %334 = vmatpush2.bf16.msra.mxu0 %v288
      %335 = vmatprep.subr.bf16.mxu0 0
      %336 = vmatpush2.bf16.msra.mxu0 %v287
      %337 = vmatprep.subr.bf16.mxu0 0
      %338 = vmatpush2.bf16.msra.mxu0 %v286
      %339 = vmatprep.subr.bf16.mxu0 0
      %340 = vmatpush2.bf16.msra.mxu0 %v285
      %341 = vmatprep.mubr.bf16.mxu0 %v180
      %342 = vmatmul.mubr.bf16.gmra.mxu0 %v179
      %v343 = vpop.f32.mrf.mxu0
      %v344 = vadd.f32 0.0, %v343
      %v345 = vpop.f32.mrf.mxu0
      %v346 = vpop.f32.mrf.mxu0
      %v347 = vadd.f32 0.0, %v346
      %v348 = vpop.f32.mrf.mxu0
      %349 = vdwg.mxu0
      %v351 = vlaneseq
      %v352 = vshrl.u32 %v351, 7
      %v353 = vsub.s32 0, %v352
      %v354 = vrot.slane %v178, %v353
      %v356 = vadd.f32 %v354, %v344
      %v357 = vadd.f32 %v354, %v347
      %v358 = vpack.c.bf16 %v176, %v176
      %v359 = vpack.c.bf16 %v177, %v177
      %s360 = scalar_lea.vmem %s1, 128
      %v361 = vld [vmem:[%s360] sm:$0xf]
      %v362 = vld [vmem:[%s360 + $0x4] sm:$0xf]
      %v363 = vld [vmem:[%s360 + $0x8] sm:$0xf]
      %v364 = vld [vmem:[%s360 + $0xc] sm:$0xf]
      %v365 = vld [vmem:[%s360 + $0x10] sm:$0xf]
      %v366 = vld [vmem:[%s360 + $0x14] sm:$0xf]
      %v367 = vld [vmem:[%s360 + $0x18] sm:$0xf]
      %v368 = vld [vmem:[%s360 + $0x1c] sm:$0xf]
      %v369 = vld [vmem:[%s360 + $0x20] sm:$0xf]
      %v370 = vld [vmem:[%s360 + $0x24] sm:$0xf]
      %v371 = vld [vmem:[%s360 + $0x28] sm:$0xf]
      %v372 = vld [vmem:[%s360 + $0x2c] sm:$0xf]
      %v373 = vld [vmem:[%s360 + $0x30] sm:$0xf]
      %v374 = vld [vmem:[%s360 + $0x34] sm:$0xf]
      %v375 = vld [vmem:[%s360 + $0x38] sm:$0xf]
      %v376 = vld [vmem:[%s360 + $0x3c] sm:$0xf]
      %v377 = vld [vmem:[%s360 + $0x40] sm:$0xf]
      %v378 = vld [vmem:[%s360 + $0x44] sm:$0xf]
      %v379 = vld [vmem:[%s360 + $0x48] sm:$0xf]
      %v380 = vld [vmem:[%s360 + $0x4c] sm:$0xf]
      %v381 = vld [vmem:[%s360 + $0x50] sm:$0xf]
      %v382 = vld [vmem:[%s360 + $0x54] sm:$0xf]
      %v383 = vld [vmem:[%s360 + $0x58] sm:$0xf]
      %v384 = vld [vmem:[%s360 + $0x5c] sm:$0xf]
      %v385 = vld [vmem:[%s360 + $0x60] sm:$0xf]
      %v386 = vld [vmem:[%s360 + $0x64] sm:$0xf]
      %v387 = vld [vmem:[%s360 + $0x68] sm:$0xf]
      %v388 = vld [vmem:[%s360 + $0x6c] sm:$0xf]
      %v389 = vld [vmem:[%s360 + $0x70] sm:$0xf]
      %v390 = vld [vmem:[%s360 + $0x74] sm:$0xf]
      %v391 = vld [vmem:[%s360 + $0x78] sm:$0xf]
      %v392 = vld [vmem:[%s360 + $0x7c] sm:$0xf]
      %vm393 = vsmask.f32 7424
      %v395 = vshrl.u32 %v179, 16
      %v397 = vshll.u32 %v179, 16
      %v399 = vrot.slane %v397, 1
      %v400 = vor.u32 %v395, %v399
      %v402 = vshll.u32 %v358, 16
      %v404 = vrot.slane %v402, 1
      %v405 = vsel %vm393, %v400, %v404
      %v407 = vshrl.u32 %v180, 16
      %v409 = vshll.u32 %v180, 16
      %v411 = vrot.slane %v409, 1
      %v412 = vor.u32 %v407, %v411
      %v414 = vshll.u32 %v359, 16
      %v416 = vrot.slane %v414, 1
      %v417 = vsel %vm393, %v412, %v416
      %v452 = vunpack.c.l.b16 %v361
      %v453 = vunpack.c.l.b16 %v362
      %v454 = vunpack.c.l.b16 %v363
      %v455 = vunpack.c.l.b16 %v364
      %v456 = vunpack.c.l.b16 %v365
      %v457 = vunpack.c.l.b16 %v366
      %v458 = vunpack.c.l.b16 %v367
      %v459 = vunpack.c.l.b16 %v368
      %v460 = vunpack.c.l.b16 %v369
      %v461 = vunpack.c.l.b16 %v370
      %v462 = vunpack.c.l.b16 %v371
      %v463 = vunpack.c.l.b16 %v372
      %v464 = vunpack.c.l.b16 %v373
      %v465 = vunpack.c.l.b16 %v374
      %v466 = vunpack.c.l.b16 %v375
      %v467 = vunpack.c.l.b16 %v376
      %v468 = vunpack.c.l.b16 %v377
      %v469 = vunpack.c.l.b16 %v378
      %v470 = vunpack.c.l.b16 %v379
      %v471 = vunpack.c.l.b16 %v380
      %v472 = vunpack.c.l.b16 %v381
      %v473 = vunpack.c.l.b16 %v382
      %v474 = vunpack.c.l.b16 %v383
      %v475 = vunpack.c.l.b16 %v384
      %v476 = vunpack.c.l.b16 %v385
      %v477 = vunpack.c.l.b16 %v386
      %v478 = vunpack.c.l.b16 %v387
      %v479 = vunpack.c.l.b16 %v388
      %v480 = vunpack.c.l.b16 %v389
      %v481 = vunpack.c.l.b16 %v390
      %v482 = vunpack.c.l.b16 %v391
      %v483 = vunpack.c.l.b16 %v392
      %v484 = vpack.c.b16 %v453, %v452
      %v485 = vpack.c.b16 %v455, %v454
      %v486 = vpack.c.b16 %v457, %v456
      %v487 = vpack.c.b16 %v459, %v458
      %v488 = vpack.c.b16 %v461, %v460
      %v489 = vpack.c.b16 %v463, %v462
      %v490 = vpack.c.b16 %v465, %v464
      %v491 = vpack.c.b16 %v467, %v466
      %v492 = vpack.c.b16 %v469, %v468
      %v493 = vpack.c.b16 %v471, %v470
      %v494 = vpack.c.b16 %v473, %v472
      %v495 = vpack.c.b16 %v475, %v474
      %v496 = vpack.c.b16 %v477, %v476
      %v497 = vpack.c.b16 %v479, %v478
      %v498 = vpack.c.b16 %v481, %v480
      %v499 = vpack.c.b16 %v483, %v482
      %516 = vmatprep.subr.bf16.mxu0 0
      %517 = vmatpush1.bf16.msra.mxu0 %v491
      %518 = vmatprep.subr.bf16.mxu0 0
      %519 = vmatpush1.bf16.msra.mxu0 %v490
      %520 = vmatprep.subr.bf16.mxu0 0
      %521 = vmatpush1.bf16.msra.mxu0 %v489
      %522 = vmatprep.subr.bf16.mxu0 0
      %523 = vmatpush1.bf16.msra.mxu0 %v488
      %524 = vmatprep.subr.bf16.mxu0 0
      %525 = vmatpush1.bf16.msra.mxu0 %v487
      %526 = vmatprep.subr.bf16.mxu0 0
      %527 = vmatpush1.bf16.msra.mxu0 %v486
      %528 = vmatprep.subr.bf16.mxu0 0
      %529 = vmatpush1.bf16.msra.mxu0 %v485
      %530 = vmatprep.subr.bf16.mxu0 0
      %531 = vmatpush1.bf16.msra.mxu0 %v484
      %532 = vmatprep.subr.bf16.mxu0 0
      %533 = vmatpush2.bf16.msra.mxu0 %v499
      %534 = vmatprep.subr.bf16.mxu0 0
      %535 = vmatpush2.bf16.msra.mxu0 %v498
      %536 = vmatprep.subr.bf16.mxu0 0
      %537 = vmatpush2.bf16.msra.mxu0 %v497
      %538 = vmatprep.subr.bf16.mxu0 0
      %539 = vmatpush2.bf16.msra.mxu0 %v496
      %540 = vmatprep.subr.bf16.mxu0 0
      %541 = vmatpush2.bf16.msra.mxu0 %v495
      %542 = vmatprep.subr.bf16.mxu0 0
      %543 = vmatpush2.bf16.msra.mxu0 %v494
      %544 = vmatprep.subr.bf16.mxu0 0
      %545 = vmatpush2.bf16.msra.mxu0 %v493
      %546 = vmatprep.subr.bf16.mxu0 0
      %547 = vmatpush2.bf16.msra.mxu0 %v492
      %548 = vmatprep.mubr.bf16.mxu0 %v417
      %549 = vmatmul.mubr.bf16.gmra.mxu0 %v405
      %v550 = vpop.f32.mrf.mxu0
      %v551 = vadd.f32 0.0, %v550
      %v552 = vpop.f32.mrf.mxu0
      %v553 = vpop.f32.mrf.mxu0
      %v554 = vadd.f32 0.0, %v553
      %v555 = vpop.f32.mrf.mxu0
      %556 = vdwg.mxu0
      %v557 = vadd.f32 %v356, %v551
      %v558 = vadd.f32 %v357, %v554
      %s559 = scalar_lea.vmem %s1, 256
      %v560 = vld [vmem:[%s559] sm:$0xf]
      %v561 = vld [vmem:[%s559 + $0x4] sm:$0xf]
      %v562 = vld [vmem:[%s559 + $0x8] sm:$0xf]
      %v563 = vld [vmem:[%s559 + $0xc] sm:$0xf]
      %v564 = vld [vmem:[%s559 + $0x10] sm:$0xf]
      %v565 = vld [vmem:[%s559 + $0x14] sm:$0xf]
      %v566 = vld [vmem:[%s559 + $0x18] sm:$0xf]
      %v567 = vld [vmem:[%s559 + $0x1c] sm:$0xf]
      %v568 = vld [vmem:[%s559 + $0x20] sm:$0xf]
      %v569 = vld [vmem:[%s559 + $0x24] sm:$0xf]
      %v570 = vld [vmem:[%s559 + $0x28] sm:$0xf]
      %v571 = vld [vmem:[%s559 + $0x2c] sm:$0xf]
      %v572 = vld [vmem:[%s559 + $0x30] sm:$0xf]
      %v573 = vld [vmem:[%s559 + $0x34] sm:$0xf]
      %v574 = vld [vmem:[%s559 + $0x38] sm:$0xf]
      %v575 = vld [vmem:[%s559 + $0x3c] sm:$0xf]
      %v576 = vld [vmem:[%s559 + $0x40] sm:$0xf]
      %v577 = vld [vmem:[%s559 + $0x44] sm:$0xf]
      %v578 = vld [vmem:[%s559 + $0x48] sm:$0xf]
      %v579 = vld [vmem:[%s559 + $0x4c] sm:$0xf]
      %v580 = vld [vmem:[%s559 + $0x50] sm:$0xf]
      %v581 = vld [vmem:[%s559 + $0x54] sm:$0xf]
      %v582 = vld [vmem:[%s559 + $0x58] sm:$0xf]
      %v583 = vld [vmem:[%s559 + $0x5c] sm:$0xf]
      %v584 = vld [vmem:[%s559 + $0x60] sm:$0xf]
      %v585 = vld [vmem:[%s559 + $0x64] sm:$0xf]
      %v586 = vld [vmem:[%s559 + $0x68] sm:$0xf]
      %v587 = vld [vmem:[%s559 + $0x6c] sm:$0xf]
      %v588 = vld [vmem:[%s559 + $0x70] sm:$0xf]
      %v589 = vld [vmem:[%s559 + $0x74] sm:$0xf]
      %v590 = vld [vmem:[%s559 + $0x78] sm:$0xf]
      %v591 = vld [vmem:[%s559 + $0x7c] sm:$0xf]
      %vm596 = vcmask 1046528
      %v597 = vrot.slane %v179, 1
      %v598 = vrot.slane %v358, 1
      %v599 = vsel %vm596, %v597, %v598
      %v600 = vrot.slane %v180, 1
      %v601 = vrot.slane %v359, 1
      %v602 = vsel %vm596, %v600, %v601
      %v637 = vunpack.c.l.b16 %v560
      %v638 = vunpack.c.l.b16 %v561
      %v639 = vunpack.c.l.b16 %v562
      %v640 = vunpack.c.l.b16 %v563
      %v641 = vunpack.c.l.b16 %v564
      %v642 = vunpack.c.l.b16 %v565
      %v643 = vunpack.c.l.b16 %v566
      %v644 = vunpack.c.l.b16 %v567
      %v645 = vunpack.c.l.b16 %v568
      %v646 = vunpack.c.l.b16 %v569
      %v647 = vunpack.c.l.b16 %v570
      %v648 = vunpack.c.l.b16 %v571
      %v649 = vunpack.c.l.b16 %v572
      %v650 = vunpack.c.l.b16 %v573
      %v651 = vunpack.c.l.b16 %v574
      %v652 = vunpack.c.l.b16 %v575
      %v653 = vunpack.c.l.b16 %v576
      %v654 = vunpack.c.l.b16 %v577
      %v655 = vunpack.c.l.b16 %v578
      %v656 = vunpack.c.l.b16 %v579
      %v657 = vunpack.c.l.b16 %v580
      %v658 = vunpack.c.l.b16 %v581
      %v659 = vunpack.c.l.b16 %v582
      %v660 = vunpack.c.l.b16 %v583
      %v661 = vunpack.c.l.b16 %v584
      %v662 = vunpack.c.l.b16 %v585
      %v663 = vunpack.c.l.b16 %v586
      %v664 = vunpack.c.l.b16 %v587
      %v665 = vunpack.c.l.b16 %v588
      %v666 = vunpack.c.l.b16 %v589
      %v667 = vunpack.c.l.b16 %v590
      %v668 = vunpack.c.l.b16 %v591
      %v669 = vpack.c.b16 %v638, %v637
      %v670 = vpack.c.b16 %v640, %v639
      %v671 = vpack.c.b16 %v642, %v641
      %v672 = vpack.c.b16 %v644, %v643
      %v673 = vpack.c.b16 %v646, %v645
      %v674 = vpack.c.b16 %v648, %v647
      %v675 = vpack.c.b16 %v650, %v649
      %v676 = vpack.c.b16 %v652, %v651
      %v677 = vpack.c.b16 %v654, %v653
      %v678 = vpack.c.b16 %v656, %v655
      %v679 = vpack.c.b16 %v658, %v657
      %v680 = vpack.c.b16 %v660, %v659
      %v681 = vpack.c.b16 %v662, %v661
      %v682 = vpack.c.b16 %v664, %v663
      %v683 = vpack.c.b16 %v666, %v665
      %v684 = vpack.c.b16 %v668, %v667
      %701 = vmatprep.subr.bf16.mxu0 0
      %702 = vmatpush1.bf16.msra.mxu0 %v676
      %703 = vmatprep.subr.bf16.mxu0 0
      %704 = vmatpush1.bf16.msra.mxu0 %v675
      %705 = vmatprep.subr.bf16.mxu0 0
      %706 = vmatpush1.bf16.msra.mxu0 %v674
      %707 = vmatprep.subr.bf16.mxu0 0
      %708 = vmatpush1.bf16.msra.mxu0 %v673
      %709 = vmatprep.subr.bf16.mxu0 0
      %710 = vmatpush1.bf16.msra.mxu0 %v672
      %711 = vmatprep.subr.bf16.mxu0 0
      %712 = vmatpush1.bf16.msra.mxu0 %v671
      %713 = vmatprep.subr.bf16.mxu0 0
      %714 = vmatpush1.bf16.msra.mxu0 %v670
      %715 = vmatprep.subr.bf16.mxu0 0
      %716 = vmatpush1.bf16.msra.mxu0 %v669
      %717 = vmatprep.subr.bf16.mxu0 0
      %718 = vmatpush2.bf16.msra.mxu0 %v684
      %719 = vmatprep.subr.bf16.mxu0 0
      %720 = vmatpush2.bf16.msra.mxu0 %v683
      %721 = vmatprep.subr.bf16.mxu0 0
      %722 = vmatpush2.bf16.msra.mxu0 %v682
      %723 = vmatprep.subr.bf16.mxu0 0
      %724 = vmatpush2.bf16.msra.mxu0 %v681
      %725 = vmatprep.subr.bf16.mxu0 0
      %726 = vmatpush2.bf16.msra.mxu0 %v680
      %727 = vmatprep.subr.bf16.mxu0 0
      %728 = vmatpush2.bf16.msra.mxu0 %v679
      %729 = vmatprep.subr.bf16.mxu0 0
      %730 = vmatpush2.bf16.msra.mxu0 %v678
      %731 = vmatprep.subr.bf16.mxu0 0
      %732 = vmatpush2.bf16.msra.mxu0 %v677
      %733 = vmatprep.mubr.bf16.mxu0 %v602
      %734 = vmatmul.mubr.bf16.gmra.mxu0 %v599
      %v735 = vpop.f32.mrf.mxu0
      %v736 = vadd.f32 0.0, %v735
      %v737 = vpop.f32.mrf.mxu0
      %v738 = vpop.f32.mrf.mxu0
      %v739 = vadd.f32 0.0, %v738
      %v740 = vpop.f32.mrf.mxu0
      %741 = vdwg.mxu0
      %v742 = vadd.f32 %v557, %v736
      %v743 = vadd.f32 %v558, %v739
      %744 = vst [vmem:[%s170] sm:$0xff] %v742
      %745 = vst [vmem:[%s170 + $0x8] sm:$0xff] %v743
      %p746 = scmp.lt.s32.totalorder %s14, 1
      %s747 = scalar_select %p746, %s14, 1
      %s748 = smul.addr %s747, 2
      %s749 = smul.addr %s748, 8
      %s750 = scalar_lea.vmem %s3, %s749
      // Predicated region
      $region33: #{spatial_transformer_human_vqvae_forward.19} parent=31 // pred_check
        %p751 = pneg %p100
      $region34: #{spatial_transformer_human_vqvae_forward.19} parent=31 // pred_check_branch
        %753 = sbr.rel (%p751) target = $region36
      $region35: #{spatial_transformer_human_vqvae_forward.19} parent=31 // pred_region
        _
      $region36: #{spatial_transformer_human_vqvae_forward.19} parent=31 // pred_fallthru
        _
    $region32: #{spatial_transformer_human_vqvae_forward.19} parent=5 // pred_fallthru
      _
    %p754 = scmp.le.s32.totalorder 2, %s9
    // Predicated region
    $region37: #{spatial_transformer_human_vqvae_forward.19} parent=5 // pred_check
      %p755 = pneg %p754
    $region38: #{spatial_transformer_human_vqvae_forward.19} parent=5 // pred_check_branch
      %757 = sbr.rel (%p755) target = $region40
    $region39: #{spatial_transformer_human_vqvae_forward.19} parent=5 // pred_region
      %s758 = ssub.s32 %s9, 2
      // Predicated region
      $region41: #{spatial_transformer_human_vqvae_forward.19} parent=39 // pred_check
        %p759 = pneg %p106
      $region42: #{spatial_transformer_human_vqvae_forward.19} parent=39 // pred_check_branch
        %761 = sbr.rel (%p759) target = $region44
      $region43: #{spatial_transformer_human_vqvae_forward.19} parent=39 // pred_region
        %p762 = scmp.lt.s32.totalorder %s15, 1
        %s763 = scalar_select %p762, %s15, 1
        %s764 = smul.addr %s763, 2
        %s765 = smul.addr %s764, 8
        %s766 = scalar_lea.vmem %s3, %s765
      $region44: #{spatial_transformer_human_vqvae_forward.19} parent=39 // pred_fallthru
        _
    $region40: #{spatial_transformer_human_vqvae_forward.19} parent=5 // pred_fallthru
      _
  $region6: #{spatial_transformer_human_vqvae_forward.19} parent=0 // loop_footer
    %s13 = sadd.s32 1, %s9
  $region7: #{spatial_transformer_human_vqvae_forward.19} parent=0 // loop_footer_branch
    %8 = sbr.rel target = $region3
  $region8: #{spatial_transformer_human_vqvae_forward.19} parent=0 // loop_exit
    _

// kernel: spatial_transformer_human_vqvae_forward.21
$region0: #{spatial_transformer_human_vqvae_forward.21}
  #allocation0 [shape = 'u32[]', space=smem, size = 0x4, offset = 0x4, fixed_abs, tag = 'smem constant byte address 0x4 - core index']
  #allocation1 [shape = 'u32[144,128]{1,0:T(1,128)}', space=vmem, size = 0x12000, scoped, tag = 'internal scratch']
  %s0 = inlined_call_operand.vmem [shape: f32[2,18,128], index: 0, kind: input, shape index: {}]
  %s1 = inlined_call_operand.vmem [shape: bf16[3,128,128], index: 1, kind: input, shape index: {}]
  %s2 = inlined_call_operand.vmem [shape: f32[1,128], index: 2, kind: input, shape index: {}]
  %s3 = inlined_call_operand.vmem [shape: bf16[1,128,128], index: 3, kind: input, shape index: {}]
  %s4 = inlined_call_operand.vmem [shape: f32[1,128], index: 4, kind: input, shape index: {}]
  %s5 = inlined_call_operand.vmem [shape: f32[2,16,128], index: 5, kind: output, shape index: {}]
  %s6 = sld [smem:[#allocation0]]
  $region53: #{spatial_transformer_human_vqvae_forward.21} parent=0
    _
  %s8 = ssub.s32 1, %s6
  %s9 = scalar_select 0, %s8, %s6
  loop: start=0, step=1, limit=4
  $region2: #{spatial_transformer_human_vqvae_forward.21} parent=0 // loop_pre_header
    _
  $region3: #{spatial_transformer_human_vqvae_forward.21} parent=0 // loop_header
    %s11 = sphi 0, %s15
    %p12 = scmp.ge.s32.totalorder %s11, 4
    %s21 = sphi 0, %s23
    %s24 = sphi 0, %s21
    %s25 = sphi 0, %s24
    %s41 = sphi 0, %s25
    %s45 = sphi 0, %s45
    %s47 = sphi 0, %s45
    %s48 = sphi 0, %s47
    %s62 = sphi 0, %s48
    %s66 = sphi 0, %s66
    %s68 = sphi 0, %s66
    %s69 = sphi 0, %s68
    %s83 = sphi 0, %s69
    %s87 = sphi 0, %s87
    %s89 = sphi 0, %s87
    %s90 = sphi 0, %s89
    %s104 = sphi 0, %s90
    %s108 = sphi 0, %s108
    %s110 = sphi 0, %s108
    %s111 = sphi 0, %s110
    %s125 = sphi 0, %s111
    %s131 = sphi 0, %s133
    %s134 = sphi 0, %s131
    %s135 = sphi 0, %s134
    %s151 = sphi 0, %s135
  $region4: #{spatial_transformer_human_vqvae_forward.21} parent=0 // loop_header_branch
    %14 = sbr.rel (%p12) target = $region8
  $region5: #{spatial_transformer_human_vqvae_forward.21} parent=0 // loop_body
    %s16 = ssub.s32 %s11, 1
    %s17 = ssub.s32 %s11, 2
    %s18 = sadd.s32 %s11, 1
    %s19 = ssub.s32 %s11, %s18
    %p20 = scmp.eq.s32.totalorder %s19, 0
    %s22 = sadd.s32 %s21, 1
    %s23 = scalar_select %p20, %s21, %s22
    %p26 = pneg %p20
    %p27 = scmp.eq.s32.totalorder %s11, 1
    %p28 = por %p26, %p27
    %p29 = scmp.ne.s32.totalorder %s21, %s24
    %p30 = scmp.eq.s32.totalorder %s11, 0
    %p31 = por %p29, %p30
    %p32 = scmp.ne.s32.totalorder %s21, %s24
    %p33 = scmp.eq.s32.totalorder %s16, 1
    %p34 = por %p32, %p33
    %p35 = scmp.ne.s32.totalorder %s24, %s25
    %p36 = scmp.eq.s32.totalorder %s16, 0
    %p37 = por %p35, %p36
    %p38 = scmp.ne.s32.totalorder %s24, %s25
    %p39 = scmp.eq.s32.totalorder %s17, 1
    %p40 = por %p38, %p39
    %p42 = scmp.ne.s32.totalorder %s25, %s41
    %p43 = scmp.eq.s32.totalorder %s17, 0
    %p44 = por %p42, %p43
    %s46 = sadd.s32 %s45, 1
    %p49 = scmp.eq.s32.totalorder %s11, 1
    %p50 = scmp.ne.s32.totalorder %s45, %s47
    %p51 = scmp.eq.s32.totalorder %s11, 0
    %p52 = por %p50, %p51
    %p53 = scmp.ne.s32.totalorder %s45, %s47
    %p54 = scmp.eq.s32.totalorder %s16, 1
    %p55 = por %p53, %p54
    %p56 = scmp.ne.s32.totalorder %s47, %s48
    %p57 = scmp.eq.s32.totalorder %s16, 0
    %p58 = por %p56, %p57
    %p59 = scmp.ne.s32.totalorder %s47, %s48
    %p60 = scmp.eq.s32.totalorder %s17, 1
    %p61 = por %p59, %p60
    %p63 = scmp.ne.s32.totalorder %s48, %s62
    %p64 = scmp.eq.s32.totalorder %s17, 0
    %p65 = por %p63, %p64
    %s67 = sadd.s32 %s66, 1
    %p70 = scmp.eq.s32.totalorder %s11, 1
    %p71 = scmp.ne.s32.totalorder %s66, %s68
    %p72 = scmp.eq.s32.totalorder %s11, 0
    %p73 = por %p71, %p72
    %p74 = scmp.ne.s32.totalorder %s66, %s68
    %p75 = scmp.eq.s32.totalorder %s16, 1
    %p76 = por %p74, %p75
    %p77 = scmp.ne.s32.totalorder %s68, %s69
    %p78 = scmp.eq.s32.totalorder %s16, 0
    %p79 = por %p77, %p78
    %p80 = scmp.ne.s32.totalorder %s68, %s69
    %p81 = scmp.eq.s32.totalorder %s17, 1
    %p82 = por %p80, %p81
    %p84 = scmp.ne.s32.totalorder %s69, %s83
    %p85 = scmp.eq.s32.totalorder %s17, 0
    %p86 = por %p84, %p85
    %s88 = sadd.s32 %s87, 1
    %p91 = scmp.eq.s32.totalorder %s11, 1
    %p92 = scmp.ne.s32.totalorder %s87, %s89
    %p93 = scmp.eq.s32.totalorder %s11, 0
    %p94 = por %p92, %p93
    %p95 = scmp.ne.s32.totalorder %s87, %s89
    %p96 = scmp.eq.s32.totalorder %s16, 1
    %p97 = por %p95, %p96
    %p98 = scmp.ne.s32.totalorder %s89, %s90
    %p99 = scmp.eq.s32.totalorder %s16, 0
    %p100 = por %p98, %p99
    %p101 = scmp.ne.s32.totalorder %s89, %s90
    %p102 = scmp.eq.s32.totalorder %s17, 1
    %p103 = por %p101, %p102
    %p105 = scmp.ne.s32.totalorder %s90, %s104
    %p106 = scmp.eq.s32.totalorder %s17, 0
    %p107 = por %p105, %p106
    %s109 = sadd.s32 %s108, 1
    %p112 = scmp.eq.s32.totalorder %s11, 1
    %p113 = scmp.ne.s32.totalorder %s108, %s110
    %p114 = scmp.eq.s32.totalorder %s11, 0
    %p115 = por %p113, %p114
    %p116 = scmp.ne.s32.totalorder %s108, %s110
    %p117 = scmp.eq.s32.totalorder %s16, 1
    %p118 = por %p116, %p117
    %p119 = scmp.ne.s32.totalorder %s110, %s111
    %p120 = scmp.eq.s32.totalorder %s16, 0
    %p121 = por %p119, %p120
    %p122 = scmp.ne.s32.totalorder %s110, %s111
    %p123 = scmp.eq.s32.totalorder %s17, 1
    %p124 = por %p122, %p123
    %p126 = scmp.ne.s32.totalorder %s111, %s125
    %p127 = scmp.eq.s32.totalorder %s17, 0
    %p128 = por %p126, %p127
    %s129 = ssub.s32 %s11, %s18
    %p130 = scmp.eq.s32.totalorder %s129, 0
    %s132 = sadd.s32 %s131, 1
    %s133 = scalar_select %p130, %s131, %s132
    %p136 = pneg %p130
    %p137 = scmp.eq.s32.totalorder %s11, 1
    %p138 = por %p136, %p137
    %p139 = scmp.ne.s32.totalorder %s131, %s134
    %p140 = scmp.eq.s32.totalorder %s11, 0
    %p141 = por %p139, %p140
    %p142 = scmp.ne.s32.totalorder %s131, %s134
    %p143 = scmp.eq.s32.totalorder %s16, 1
    %p144 = por %p142, %p143
    %p145 = scmp.ne.s32.totalorder %s134, %s135
    %p146 = scmp.eq.s32.totalorder %s16, 0
    %p147 = por %p145, %p146
    %p148 = scmp.ne.s32.totalorder %s134, %s135
    %p149 = scmp.eq.s32.totalorder %s17, 1
    %p150 = por %p148, %p149
    %p152 = scmp.ne.s32.totalorder %s135, %s151
    %p153 = scmp.eq.s32.totalorder %s17, 0
    %p154 = por %p152, %p153
    %p155 = scmp.le.s32.totalorder 1, %s11
    %p156 = scmp.lt.s32.totalorder %s11, 3
    %p157 = pnand %p155, %p156
    %p158 = pneg %p157
    // Predicated region
    $region9: #{spatial_transformer_human_vqvae_forward.21} parent=5 // pred_check
      _
    $region10: #{spatial_transformer_human_vqvae_forward.21} parent=5 // pred_check_branch
      %160 = sbr.rel (%p157) target = $region12
    $region11: #{spatial_transformer_human_vqvae_forward.21} parent=5 // pred_region
      %s161 = ssub.s32 %s11, 1
      // Predicated region
      $region13: #{spatial_transformer_human_vqvae_forward.21} parent=11 // pred_check
        %p162 = pneg %p58
      $region14: #{spatial_transformer_human_vqvae_forward.21} parent=11 // pred_check_branch
        %164 = sbr.rel (%p162) target = $region16
      $region15: #{spatial_transformer_human_vqvae_forward.21} parent=11 // pred_region
        _
      $region16: #{spatial_transformer_human_vqvae_forward.21} parent=11 // pred_fallthru
        _
      // Predicated region
      $region17: #{spatial_transformer_human_vqvae_forward.21} parent=11 // pred_check
        %p165 = pneg %p79
      $region18: #{spatial_transformer_human_vqvae_forward.21} parent=11 // pred_check_branch
        %167 = sbr.rel (%p165) target = $region20
      $region19: #{spatial_transformer_human_vqvae_forward.21} parent=11 // pred_region
        _
      $region20: #{spatial_transformer_human_vqvae_forward.21} parent=11 // pred_fallthru
        _
      // Predicated region
      $region21: #{spatial_transformer_human_vqvae_forward.21} parent=11 // pred_check
        %p168 = pneg %p100
      $region22: #{spatial_transformer_human_vqvae_forward.21} parent=11 // pred_check_branch
        %170 = sbr.rel (%p168) target = $region24
      $region23: #{spatial_transformer_human_vqvae_forward.21} parent=11 // pred_region
        _
      $region24: #{spatial_transformer_human_vqvae_forward.21} parent=11 // pred_fallthru
        _
      // Predicated region
      $region25: #{spatial_transformer_human_vqvae_forward.21} parent=11 // pred_check
        %p171 = pneg %p121
      $region26: #{spatial_transformer_human_vqvae_forward.21} parent=11 // pred_check_branch
        %173 = sbr.rel (%p171) target = $region28
      $region27: #{spatial_transformer_human_vqvae_forward.21} parent=11 // pred_region
        _
      $region28: #{spatial_transformer_human_vqvae_forward.21} parent=11 // pred_fallthru
        _
    $region12: #{spatial_transformer_human_vqvae_forward.21} parent=5 // pred_fallthru
      _
    %p174 = scmp.lt.s32.totalorder %s11, 2
    // Predicated region
    $region29: #{spatial_transformer_human_vqvae_forward.21} parent=5 // pred_check
      %p175 = pneg %p174
    $region30: #{spatial_transformer_human_vqvae_forward.21} parent=5 // pred_check_branch
      %177 = sbr.rel (%p175) target = $region32
    $region31: #{spatial_transformer_human_vqvae_forward.21} parent=5 // pred_region
      // Predicated region
      $region33: #{spatial_transformer_human_vqvae_forward.21} parent=31 // pred_check
        %p178 = pneg %p31
      $region34: #{spatial_transformer_human_vqvae_forward.21} parent=31 // pred_check_branch
        %180 = sbr.rel (%p178) target = $region36
      $region35: #{spatial_transformer_human_vqvae_forward.21} parent=31 // pred_region
        %p181 = scmp.lt.s32.totalorder %s11, 1
        %s182 = scalar_select %p181, %s11, 1
        %s183 = smul.addr %s182, 3
        %s184 = smul.addr %s183, 8
        %s185 = scalar_lea.vmem %s0, %s184
      $region36: #{spatial_transformer_human_vqvae_forward.21} parent=31 // pred_fallthru
        _
    $region32: #{spatial_transformer_human_vqvae_forward.21} parent=5 // pred_fallthru
      _
    %p186 = scmp.le.s32.totalorder 1, %s11
    %p187 = scmp.lt.s32.totalorder %s11, 3
    %p188 = pnand %p186, %p187
    %p189 = pneg %p188
    // Predicated region
    $region37: #{spatial_transformer_human_vqvae_forward.21} parent=5 // pred_check
      _
    $region38: #{spatial_transformer_human_vqvae_forward.21} parent=5 // pred_check_branch
      %191 = sbr.rel (%p188) target = $region40
    $region39: #{spatial_transformer_human_vqvae_forward.21} parent=5 // pred_region
      %s192 = ssub.s32 %s11, 1
      %p193 = scmp.lt.s32.totalorder %s16, 1
      %s194 = scalar_select %p193, %s16, 1
      %s195 = smul.addr %s194, 3
      %s196 = smul.addr %s195, 8
      %s197 = scalar_lea.vmem %s0, %s196
      %p198 = pneg %p37
      %p199 = pneg %p34
      %p200 = pneg %p58
      %p201 = pneg %p55
      %p202 = pneg %p79
      %p203 = pneg %p76
      %p204 = pneg %p100
      %p205 = pneg %p97
      %p206 = pneg %p121
      %p207 = pneg %p118
      %p208 = pneg %p147
      %p209 = pneg %p144
      %p210 = scmp.lt.s32.totalorder %s16, 1
      %s211 = scalar_select %p210, %s16, 1
      %s212 = smul.addr %s211, 2
      %s213 = smul.addr %s212, 8
      %s214 = scalar_lea.vmem %s5, %s213
      %p215 = scmp.lt.s32.totalorder %s16, 1
      %s216 = scalar_select %p215, %s16, 1
      %s217 = smul.addr %s216, 3
      %s218 = smul.addr %s217, 8
      %s219 = scalar_lea.vmem %s0, %s218
      %p220 = scmp.lt.s32.totalorder %s16, 1
      %s221 = scalar_select %p220, %s16, 1
      %s222 = smul.addr %s221, 2
      %s223 = smul.addr %s222, 8
      %s224 = scalar_lea.vmem %s5, %s223
      %v226 = vld [vmem:[%s219] sm:$0xff]
      %v227 = vld [vmem:[%s219 + $0x8] sm:$0xff]
      %v228 = vld [vmem:[%s219 + $0x10] sm:$0x3]
      %v229 = vmax.f32 %v226, 0.0
      %v230 = vmax.f32 %v227, 0.0
      %v231 = vmax.f32 %v228, 0.0
      %v232 = vld [vmem:[%s2] sm:$0x1]
      %v233 = vpack.c.bf16 %v230, %v229
      %v234 = vld [vmem:[%s1] sm:$0xf]
      %v235 = vld [vmem:[%s1 + $0x4] sm:$0xf]
      %v236 = vld [vmem:[%s1 + $0x8] sm:$0xf]
      %v237 = vld [vmem:[%s1 + $0xc] sm:$0xf]
      %v238 = vld [vmem:[%s1 + $0x10] sm:$0xf]
      %v239 = vld [vmem:[%s1 + $0x14] sm:$0xf]
      %v240 = vld [vmem:[%s1 + $0x18] sm:$0xf]
      %v241 = vld [vmem:[%s1 + $0x1c] sm:$0xf]
      %v242 = vld [vmem:[%s1 + $0x20] sm:$0xf]
      %v243 = vld [vmem:[%s1 + $0x24] sm:$0xf]
      %v244 = vld [vmem:[%s1 + $0x28] sm:$0xf]
      %v245 = vld [vmem:[%s1 + $0x2c] sm:$0xf]
      %v246 = vld [vmem:[%s1 + $0x30] sm:$0xf]
      %v247 = vld [vmem:[%s1 + $0x34] sm:$0xf]
      %v248 = vld [vmem:[%s1 + $0x38] sm:$0xf]
      %v249 = vld [vmem:[%s1 + $0x3c] sm:$0xf]
      %v266 = vunpack.c.l.b16 %v234
      %v267 = vunpack.c.l.b16 %v235
      %v268 = vunpack.c.l.b16 %v236
      %v269 = vunpack.c.l.b16 %v237
      %v270 = vunpack.c.l.b16 %v238
      %v271 = vunpack.c.l.b16 %v239
      %v272 = vunpack.c.l.b16 %v240
      %v273 = vunpack.c.l.b16 %v241
      %v274 = vunpack.c.l.b16 %v242
      %v275 = vunpack.c.l.b16 %v243
      %v276 = vunpack.c.l.b16 %v244
      %v277 = vunpack.c.l.b16 %v245
      %v278 = vunpack.c.l.b16 %v246
      %v279 = vunpack.c.l.b16 %v247
      %v280 = vunpack.c.l.b16 %v248
      %v281 = vunpack.c.l.b16 %v249
      %v282 = vpack.c.b16 %v267, %v266
      %v283 = vpack.c.b16 %v269, %v268
      %v284 = vpack.c.b16 %v271, %v270
      %v285 = vpack.c.b16 %v273, %v272
      %v286 = vpack.c.b16 %v275, %v274
      %v287 = vpack.c.b16 %v277, %v276
      %v288 = vpack.c.b16 %v279, %v278
      %v289 = vpack.c.b16 %v281, %v280
      %298 = vmatprep.subr.bf16.mxu0 0
      %299 = vmatpush1.bf16.msra.mxu0 %v289
      %300 = vmatprep.subr.bf16.mxu0 0
      %301 = vmatpush1.bf16.msra.mxu0 %v288
      %302 = vmatprep.subr.bf16.mxu0 0
      %303 = vmatpush1.bf16.msra.mxu0 %v287
      %304 = vmatprep.subr.bf16.mxu0 0
      %305 = vmatpush1.bf16.msra.mxu0 %v286
      %306 = vmatprep.subr.bf16.mxu0 0
      %307 = vmatpush1.bf16.msra.mxu0 %v285
      %308 = vmatprep.subr.bf16.mxu0 0
      %309 = vmatpush1.bf16.msra.mxu0 %v284
      %310 = vmatprep.subr.bf16.mxu0 0
      %311 = vmatpush1.bf16.msra.mxu0 %v283
      %312 = vmatprep.subr.bf16.mxu0 0
      %313 = vmatpush1.bf16.msra.mxu0 %v282
      %314 = vmatprep.subr.bf16.mxu0 0
      %315 = vmatpush2.bf16.msra.mxu0 0
      %316 = vmatprep.subr.bf16.mxu0 0
      %317 = vmatpush2.bf16.msra.mxu0 0
      %318 = vmatprep.subr.bf16.mxu0 0
      %319 = vmatpush2.bf16.msra.mxu0 0
      %320 = vmatprep.subr.bf16.mxu0 0
      %321 = vmatpush2.bf16.msra.mxu0 0
      %322 = vmatprep.subr.bf16.mxu0 0
      %323 = vmatpush2.bf16.msra.mxu0 0
      %324 = vmatprep.subr.bf16.mxu0 0
      %325 = vmatpush2.bf16.msra.mxu0 0
      %326 = vmatprep.subr.bf16.mxu0 0
      %327 = vmatpush2.bf16.msra.mxu0 0
      %328 = vmatprep.subr.bf16.mxu0 0
      %329 = vmatpush2.bf16.msra.mxu0 0
      %330 = vmatprep.mubr.bf16.mxu0 0
      %331 = vmatmul.mubr.bf16.gmra.mxu0 %v233
      %v332 = vpop.f32.mrf.mxu0
      %v333 = vadd.f32 0.0, %v332
      %v334 = vpop.f32.mrf.mxu0
      %v335 = vpop.f32.mrf.mxu0
      %v336 = vadd.f32 0.0, %v335
      %v337 = vpop.f32.mrf.mxu0
      %338 = vdwg.mxu0
      %v340 = vlaneseq
      %v341 = vshrl.u32 %v340, 7
      %v342 = vsub.s32 0, %v341
      %v343 = vrot.slane %v232, %v342
      %v345 = vadd.f32 %v343, %v333
      %v346 = vadd.f32 %v343, %v336
      %v347 = vpack.c.bf16 %v231, %v231
      %s348 = scalar_lea.vmem %s1, 64
      %v349 = vld [vmem:[%s348] sm:$0xf]
      %v350 = vld [vmem:[%s348 + $0x4] sm:$0xf]
      %v351 = vld [vmem:[%s348 + $0x8] sm:$0xf]
      %v352 = vld [vmem:[%s348 + $0xc] sm:$0xf]
      %v353 = vld [vmem:[%s348 + $0x10] sm:$0xf]
      %v354 = vld [vmem:[%s348 + $0x14] sm:$0xf]
      %v355 = vld [vmem:[%s348 + $0x18] sm:$0xf]
      %v356 = vld [vmem:[%s348 + $0x1c] sm:$0xf]
      %v357 = vld [vmem:[%s348 + $0x20] sm:$0xf]
      %v358 = vld [vmem:[%s348 + $0x24] sm:$0xf]
      %v359 = vld [vmem:[%s348 + $0x28] sm:$0xf]
      %v360 = vld [vmem:[%s348 + $0x2c] sm:$0xf]
      %v361 = vld [vmem:[%s348 + $0x30] sm:$0xf]
      %v362 = vld [vmem:[%s348 + $0x34] sm:$0xf]
      %v363 = vld [vmem:[%s348 + $0x38] sm:$0xf]
      %v364 = vld [vmem:[%s348 + $0x3c] sm:$0xf]
      %vm365 = vsmask.f32 7424
      %v367 = vshrl.u32 %v233, 16
      %v369 = vshll.u32 %v233, 16
      %v371 = vrot.slane %v369, 1
      %v372 = vor.u32 %v367, %v371
      %v374 = vshll.u32 %v347, 16
      %v376 = vrot.slane %v374, 1
      %v377 = vsel %vm365, %v372, %v376
      %v395 = vunpack.c.l.b16 %v349
      %v396 = vunpack.c.l.b16 %v350
      %v397 = vunpack.c.l.b16 %v351
      %v398 = vunpack.c.l.b16 %v352
      %v399 = vunpack.c.l.b16 %v353
      %v400 = vunpack.c.l.b16 %v354
      %v401 = vunpack.c.l.b16 %v355
      %v402 = vunpack.c.l.b16 %v356
      %v403 = vunpack.c.l.b16 %v357
      %v404 = vunpack.c.l.b16 %v358
      %v405 = vunpack.c.l.b16 %v359
      %v406 = vunpack.c.l.b16 %v360
      %v407 = vunpack.c.l.b16 %v361
      %v408 = vunpack.c.l.b16 %v362
      %v409 = vunpack.c.l.b16 %v363
      %v410 = vunpack.c.l.b16 %v364
      %v411 = vpack.c.b16 %v396, %v395
      %v412 = vpack.c.b16 %v398, %v397
      %v413 = vpack.c.b16 %v400, %v399
      %v414 = vpack.c.b16 %v402, %v401
      %v415 = vpack.c.b16 %v404, %v403
      %v416 = vpack.c.b16 %v406, %v405
      %v417 = vpack.c.b16 %v408, %v407
      %v418 = vpack.c.b16 %v410, %v409
      %427 = vmatprep.subr.bf16.mxu0 0
      %428 = vmatpush1.bf16.msra.mxu0 %v418
      %429 = vmatprep.subr.bf16.mxu0 0
      %430 = vmatpush1.bf16.msra.mxu0 %v417
      %431 = vmatprep.subr.bf16.mxu0 0
      %432 = vmatpush1.bf16.msra.mxu0 %v416
      %433 = vmatprep.subr.bf16.mxu0 0
      %434 = vmatpush1.bf16.msra.mxu0 %v415
      %435 = vmatprep.subr.bf16.mxu0 0
      %436 = vmatpush1.bf16.msra.mxu0 %v414
      %437 = vmatprep.subr.bf16.mxu0 0
      %438 = vmatpush1.bf16.msra.mxu0 %v413
      %439 = vmatprep.subr.bf16.mxu0 0
      %440 = vmatpush1.bf16.msra.mxu0 %v412
      %441 = vmatprep.subr.bf16.mxu0 0
      %442 = vmatpush1.bf16.msra.mxu0 %v411
      %443 = vmatprep.subr.bf16.mxu0 0
      %444 = vmatpush2.bf16.msra.mxu0 0
      %445 = vmatprep.subr.bf16.mxu0 0
      %446 = vmatpush2.bf16.msra.mxu0 0
      %447 = vmatprep.subr.bf16.mxu0 0
      %448 = vmatpush2.bf16.msra.mxu0 0
      %449 = vmatprep.subr.bf16.mxu0 0
      %450 = vmatpush2.bf16.msra.mxu0 0
      %451 = vmatprep.subr.bf16.mxu0 0
      %452 = vmatpush2.bf16.msra.mxu0 0
      %453 = vmatprep.subr.bf16.mxu0 0
      %454 = vmatpush2.bf16.msra.mxu0 0
      %455 = vmatprep.subr.bf16.mxu0 0
      %456 = vmatpush2.bf16.msra.mxu0 0
      %457 = vmatprep.subr.bf16.mxu0 0
      %458 = vmatpush2.bf16.msra.mxu0 0
      %459 = vmatprep.mubr.bf16.mxu0 0
      %460 = vmatmul.mubr.bf16.gmra.mxu0 %v377
      %v461 = vpop.f32.mrf.mxu0
      %v462 = vadd.f32 0.0, %v461
      %v463 = vpop.f32.mrf.mxu0
      %v464 = vpop.f32.mrf.mxu0
      %v465 = vadd.f32 0.0, %v464
      %v466 = vpop.f32.mrf.mxu0
      %467 = vdwg.mxu0
      %v468 = vadd.f32 %v345, %v462
      %v469 = vadd.f32 %v346, %v465
      %s470 = scalar_lea.vmem %s1, 128
      %v471 = vld [vmem:[%s470] sm:$0xf]
      %v472 = vld [vmem:[%s470 + $0x4] sm:$0xf]
      %v473 = vld [vmem:[%s470 + $0x8] sm:$0xf]
      %v474 = vld [vmem:[%s470 + $0xc] sm:$0xf]
      %v475 = vld [vmem:[%s470 + $0x10] sm:$0xf]
      %v476 = vld [vmem:[%s470 + $0x14] sm:$0xf]
      %v477 = vld [vmem:[%s470 + $0x18] sm:$0xf]
      %v478 = vld [vmem:[%s470 + $0x1c] sm:$0xf]
      %v479 = vld [vmem:[%s470 + $0x20] sm:$0xf]
      %v480 = vld [vmem:[%s470 + $0x24] sm:$0xf]
      %v481 = vld [vmem:[%s470 + $0x28] sm:$0xf]
      %v482 = vld [vmem:[%s470 + $0x2c] sm:$0xf]
      %v483 = vld [vmem:[%s470 + $0x30] sm:$0xf]
      %v484 = vld [vmem:[%s470 + $0x34] sm:$0xf]
      %v485 = vld [vmem:[%s470 + $0x38] sm:$0xf]
      %v486 = vld [vmem:[%s470 + $0x3c] sm:$0xf]
      %vm489 = vcmask 1046528
      %v490 = vrot.slane %v233, 1
      %v491 = vrot.slane %v347, 1
      %v492 = vsel %vm489, %v490, %v491
      %v510 = vunpack.c.l.b16 %v471
      %v511 = vunpack.c.l.b16 %v472
      %v512 = vunpack.c.l.b16 %v473
      %v513 = vunpack.c.l.b16 %v474
      %v514 = vunpack.c.l.b16 %v475
      %v515 = vunpack.c.l.b16 %v476
      %v516 = vunpack.c.l.b16 %v477
      %v517 = vunpack.c.l.b16 %v478
      %v518 = vunpack.c.l.b16 %v479
      %v519 = vunpack.c.l.b16 %v480
      %v520 = vunpack.c.l.b16 %v481
      %v521 = vunpack.c.l.b16 %v482
      %v522 = vunpack.c.l.b16 %v483
      %v523 = vunpack.c.l.b16 %v484
      %v524 = vunpack.c.l.b16 %v485
      %v525 = vunpack.c.l.b16 %v486
      %v526 = vpack.c.b16 %v511, %v510
      %v527 = vpack.c.b16 %v513, %v512
      %v528 = vpack.c.b16 %v515, %v514
      %v529 = vpack.c.b16 %v517, %v516
      %v530 = vpack.c.b16 %v519, %v518
      %v531 = vpack.c.b16 %v521, %v520
      %v532 = vpack.c.b16 %v523, %v522
      %v533 = vpack.c.b16 %v525, %v524
      %542 = vmatprep.subr.bf16.mxu0 0
      %543 = vmatpush1.bf16.msra.mxu0 %v533
      %544 = vmatprep.subr.bf16.mxu0 0
      %545 = vmatpush1.bf16.msra.mxu0 %v532
      %546 = vmatprep.subr.bf16.mxu0 0
      %547 = vmatpush1.bf16.msra.mxu0 %v531
      %548 = vmatprep.subr.bf16.mxu0 0
      %549 = vmatpush1.bf16.msra.mxu0 %v530
      %550 = vmatprep.subr.bf16.mxu0 0
      %551 = vmatpush1.bf16.msra.mxu0 %v529
      %552 = vmatprep.subr.bf16.mxu0 0
      %553 = vmatpush1.bf16.msra.mxu0 %v528
      %554 = vmatprep.subr.bf16.mxu0 0
      %555 = vmatpush1.bf16.msra.mxu0 %v527
      %556 = vmatprep.subr.bf16.mxu0 0
      %557 = vmatpush1.bf16.msra.mxu0 %v526
      %558 = vmatprep.subr.bf16.mxu0 0
      %559 = vmatpush2.bf16.msra.mxu0 0
      %560 = vmatprep.subr.bf16.mxu0 0
      %561 = vmatpush2.bf16.msra.mxu0 0
      %562 = vmatprep.subr.bf16.mxu0 0
      %563 = vmatpush2.bf16.msra.mxu0 0
      %564 = vmatprep.subr.bf16.mxu0 0
      %565 = vmatpush2.bf16.msra.mxu0 0
      %566 = vmatprep.subr.bf16.mxu0 0
      %567 = vmatpush2.bf16.msra.mxu0 0
      %568 = vmatprep.subr.bf16.mxu0 0
      %569 = vmatpush2.bf16.msra.mxu0 0
      %570 = vmatprep.subr.bf16.mxu0 0
      %571 = vmatpush2.bf16.msra.mxu0 0
      %572 = vmatprep.subr.bf16.mxu0 0
      %573 = vmatpush2.bf16.msra.mxu0 0
      %574 = vmatprep.mubr.bf16.mxu0 0
      %575 = vmatmul.mubr.bf16.gmra.mxu0 %v492
      %v576 = vpop.f32.mrf.mxu0
      %v577 = vadd.f32 0.0, %v576
      %v578 = vpop.f32.mrf.mxu0
      %v579 = vpop.f32.mrf.mxu0
      %v580 = vadd.f32 0.0, %v579
      %v581 = vpop.f32.mrf.mxu0
      %582 = vdwg.mxu0
      %v583 = vadd.f32 %v468, %v577
      %v584 = vadd.f32 %v469, %v580
      %v585 = vmax.f32 %v583, 0.0
      %v586 = vmax.f32 %v584, 0.0
      %v587 = vpack.c.bf16 %v586, %v585
      %v588 = vld [vmem:[%s4] sm:$0x1]
      %v589 = vld [vmem:[%s3] sm:$0xf]
      %v590 = vld [vmem:[%s3 + $0x4] sm:$0xf]
      %v591 = vld [vmem:[%s3 + $0x8] sm:$0xf]
      %v592 = vld [vmem:[%s3 + $0xc] sm:$0xf]
      %v593 = vld [vmem:[%s3 + $0x10] sm:$0xf]
      %v594 = vld [vmem:[%s3 + $0x14] sm:$0xf]
      %v595 = vld [vmem:[%s3 + $0x18] sm:$0xf]
      %v596 = vld [vmem:[%s3 + $0x1c] sm:$0xf]
      %v597 = vld [vmem:[%s3 + $0x20] sm:$0xf]
      %v598 = vld [vmem:[%s3 + $0x24] sm:$0xf]
      %v599 = vld [vmem:[%s3 + $0x28] sm:$0xf]
      %v600 = vld [vmem:[%s3 + $0x2c] sm:$0xf]
      %v601 = vld [vmem:[%s3 + $0x30] sm:$0xf]
      %v602 = vld [vmem:[%s3 + $0x34] sm:$0xf]
      %v603 = vld [vmem:[%s3 + $0x38] sm:$0xf]
      %v604 = vld [vmem:[%s3 + $0x3c] sm:$0xf]
      %v621 = vunpack.c.l.b16 %v589
      %v622 = vunpack.c.l.b16 %v590
      %v623 = vunpack.c.l.b16 %v591
      %v624 = vunpack.c.l.b16 %v592
      %v625 = vunpack.c.l.b16 %v593
      %v626 = vunpack.c.l.b16 %v594
      %v627 = vunpack.c.l.b16 %v595
      %v628 = vunpack.c.l.b16 %v596
      %v629 = vunpack.c.l.b16 %v597
      %v630 = vunpack.c.l.b16 %v598
      %v631 = vunpack.c.l.b16 %v599
      %v632 = vunpack.c.l.b16 %v600
      %v633 = vunpack.c.l.b16 %v601
      %v634 = vunpack.c.l.b16 %v602
      %v635 = vunpack.c.l.b16 %v603
      %v636 = vunpack.c.l.b16 %v604
      %v637 = vpack.c.b16 %v622, %v621
      %v638 = vpack.c.b16 %v624, %v623
      %v639 = vpack.c.b16 %v626, %v625
      %v640 = vpack.c.b16 %v628, %v627
      %v641 = vpack.c.b16 %v630, %v629
      %v642 = vpack.c.b16 %v632, %v631
      %v643 = vpack.c.b16 %v634, %v633
      %v644 = vpack.c.b16 %v636, %v635
      %653 = vmatprep.subr.bf16.mxu0 0
      %654 = vmatpush1.bf16.msra.mxu0 %v644
      %655 = vmatprep.subr.bf16.mxu0 0
      %656 = vmatpush1.bf16.msra.mxu0 %v643
      %657 = vmatprep.subr.bf16.mxu0 0
      %658 = vmatpush1.bf16.msra.mxu0 %v642
      %659 = vmatprep.subr.bf16.mxu0 0
      %660 = vmatpush1.bf16.msra.mxu0 %v641
      %661 = vmatprep.subr.bf16.mxu0 0
      %662 = vmatpush1.bf16.msra.mxu0 %v640
      %663 = vmatprep.subr.bf16.mxu0 0
      %664 = vmatpush1.bf16.msra.mxu0 %v639
      %665 = vmatprep.subr.bf16.mxu0 0
      %666 = vmatpush1.bf16.msra.mxu0 %v638
      %667 = vmatprep.subr.bf16.mxu0 0
      %668 = vmatpush1.bf16.msra.mxu0 %v637
      %669 = vmatprep.subr.bf16.mxu0 0
      %670 = vmatpush2.bf16.msra.mxu0 0
      %671 = vmatprep.subr.bf16.mxu0 0
      %672 = vmatpush2.bf16.msra.mxu0 0
      %673 = vmatprep.subr.bf16.mxu0 0
      %674 = vmatpush2.bf16.msra.mxu0 0
      %675 = vmatprep.subr.bf16.mxu0 0
      %676 = vmatpush2.bf16.msra.mxu0 0
      %677 = vmatprep.subr.bf16.mxu0 0
      %678 = vmatpush2.bf16.msra.mxu0 0
      %679 = vmatprep.subr.bf16.mxu0 0
      %680 = vmatpush2.bf16.msra.mxu0 0
      %681 = vmatprep.subr.bf16.mxu0 0
      %682 = vmatpush2.bf16.msra.mxu0 0
      %683 = vmatprep.subr.bf16.mxu0 0
      %684 = vmatpush2.bf16.msra.mxu0 0
      %685 = vmatprep.mubr.bf16.mxu0 0
      %686 = vmatmul.mubr.bf16.gmra.mxu0 %v587
      %v687 = vpop.f32.mrf.mxu0
      %v688 = vadd.f32 0.0, %v687
      %v689 = vpop.f32.mrf.mxu0
      %v690 = vpop.f32.mrf.mxu0
      %v691 = vadd.f32 0.0, %v690
      %v692 = vpop.f32.mrf.mxu0
      %693 = vdwg.mxu0
      %v695 = vlaneseq
      %v696 = vshrl.u32 %v695, 7
      %v697 = vsub.s32 0, %v696
      %v698 = vrot.slane %v588, %v697
      %v700 = vadd.f32 %v698, %v688
      %v701 = vadd.f32 %v698, %v691
      %vm705 = vcmask 1046528
      %v706 = vrot.slane %v226, 1
      %v707 = vrot.slane %v227, 1
      %v708 = vsel %vm705, %v706, %v707
      %v709 = vrot.slane %v228, 1
      %v710 = vsel %vm705, %v707, %v709
      %v713 = vadd.f32 %v700, %v708
      %v714 = vadd.f32 %v701, %v710
      %715 = vst [vmem:[%s224] sm:$0xff] %v713
      %716 = vst [vmem:[%s224 + $0x8] sm:$0xff] %v714
      %p717 = scmp.lt.s32.totalorder %s16, 1
      %s718 = scalar_select %p717, %s16, 1
      %s719 = smul.addr %s718, 2
      %s720 = smul.addr %s719, 8
      %s721 = scalar_lea.vmem %s5, %s720
      // Predicated region
      $region41: #{spatial_transformer_human_vqvae_forward.21} parent=39 // pred_check
        %p722 = pneg %p144
      $region42: #{spatial_transformer_human_vqvae_forward.21} parent=39 // pred_check_branch
        %724 = sbr.rel (%p722) target = $region44
      $region43: #{spatial_transformer_human_vqvae_forward.21} parent=39 // pred_region
        _
      $region44: #{spatial_transformer_human_vqvae_forward.21} parent=39 // pred_fallthru
        _
    $region40: #{spatial_transformer_human_vqvae_forward.21} parent=5 // pred_fallthru
      _
    %p725 = scmp.le.s32.totalorder 2, %s11
    // Predicated region
    $region45: #{spatial_transformer_human_vqvae_forward.21} parent=5 // pred_check
      %p726 = pneg %p725
    $region46: #{spatial_transformer_human_vqvae_forward.21} parent=5 // pred_check_branch
      %728 = sbr.rel (%p726) target = $region48
    $region47: #{spatial_transformer_human_vqvae_forward.21} parent=5 // pred_region
      %s729 = ssub.s32 %s11, 2
      // Predicated region
      $region49: #{spatial_transformer_human_vqvae_forward.21} parent=47 // pred_check
        %p730 = pneg %p150
      $region50: #{spatial_transformer_human_vqvae_forward.21} parent=47 // pred_check_branch
        %732 = sbr.rel (%p730) target = $region52
      $region51: #{spatial_transformer_human_vqvae_forward.21} parent=47 // pred_region
        %p733 = scmp.lt.s32.totalorder %s17, 1
        %s734 = scalar_select %p733, %s17, 1
        %s735 = smul.addr %s734, 2
        %s736 = smul.addr %s735, 8
        %s737 = scalar_lea.vmem %s5, %s736
      $region52: #{spatial_transformer_human_vqvae_forward.21} parent=47 // pred_fallthru
        _
    $region48: #{spatial_transformer_human_vqvae_forward.21} parent=5 // pred_fallthru
      _
  $region6: #{spatial_transformer_human_vqvae_forward.21} parent=0 // loop_footer
    %s15 = sadd.s32 1, %s11
  $region7: #{spatial_transformer_human_vqvae_forward.21} parent=0 // loop_footer_branch
    %10 = sbr.rel target = $region3
  $region8: #{spatial_transformer_human_vqvae_forward.21} parent=0 // loop_exit
    _

// kernel: spatial_transformer_human_vqvae_forward.24
$region0: #{spatial_transformer_human_vqvae_forward.24}
  #allocation0 [shape = 'u32[]', space=smem, size = 0x4, offset = 0x4, fixed_abs, tag = 'smem constant byte address 0x4 - core index']
  #allocation1 [shape = 'u32[144,128]{1,0:T(1,128)}', space=vmem, size = 0x12000, scoped, tag = 'internal scratch']
  %s0 = inlined_call_operand.vmem [shape: f32[2,10,128], index: 0, kind: input, shape index: {}]
  %s1 = inlined_call_operand.vmem [shape: bf16[3,128,128], index: 1, kind: input, shape index: {}]
  %s2 = inlined_call_operand.vmem [shape: f32[1,128], index: 2, kind: input, shape index: {}]
  %s3 = inlined_call_operand.vmem [shape: bf16[1,128,128], index: 3, kind: input, shape index: {}]
  %s4 = inlined_call_operand.vmem [shape: f32[1,128], index: 4, kind: input, shape index: {}]
  %s5 = inlined_call_operand.vmem [shape: f32[2,8,128], index: 5, kind: output, shape index: {}]
  %s6 = sld [smem:[#allocation0]]
  $region53: #{spatial_transformer_human_vqvae_forward.24} parent=0
    _
  %s8 = ssub.s32 1, %s6
  %s9 = scalar_select 0, %s8, %s6
  loop: start=0, step=1, limit=4
  $region2: #{spatial_transformer_human_vqvae_forward.24} parent=0 // loop_pre_header
    _
  $region3: #{spatial_transformer_human_vqvae_forward.24} parent=0 // loop_header
    %s11 = sphi 0, %s15
    %p12 = scmp.ge.s32.totalorder %s11, 4
    %s21 = sphi 0, %s23
    %s24 = sphi 0, %s21
    %s25 = sphi 0, %s24
    %s41 = sphi 0, %s25
    %s45 = sphi 0, %s45
    %s47 = sphi 0, %s45
    %s48 = sphi 0, %s47
    %s62 = sphi 0, %s48
    %s66 = sphi 0, %s66
    %s68 = sphi 0, %s66
    %s69 = sphi 0, %s68
    %s83 = sphi 0, %s69
    %s87 = sphi 0, %s87
    %s89 = sphi 0, %s87
    %s90 = sphi 0, %s89
    %s104 = sphi 0, %s90
    %s108 = sphi 0, %s108
    %s110 = sphi 0, %s108
    %s111 = sphi 0, %s110
    %s125 = sphi 0, %s111
    %s131 = sphi 0, %s133
    %s134 = sphi 0, %s131
    %s135 = sphi 0, %s134
    %s151 = sphi 0, %s135
  $region4: #{spatial_transformer_human_vqvae_forward.24} parent=0 // loop_header_branch
    %14 = sbr.rel (%p12) target = $region8
  $region5: #{spatial_transformer_human_vqvae_forward.24} parent=0 // loop_body
    %s16 = ssub.s32 %s11, 1
    %s17 = ssub.s32 %s11, 2
    %s18 = sadd.s32 %s11, 1
    %s19 = ssub.s32 %s11, %s18
    %p20 = scmp.eq.s32.totalorder %s19, 0
    %s22 = sadd.s32 %s21, 1
    %s23 = scalar_select %p20, %s21, %s22
    %p26 = pneg %p20
    %p27 = scmp.eq.s32.totalorder %s11, 1
    %p28 = por %p26, %p27
    %p29 = scmp.ne.s32.totalorder %s21, %s24
    %p30 = scmp.eq.s32.totalorder %s11, 0
    %p31 = por %p29, %p30
    %p32 = scmp.ne.s32.totalorder %s21, %s24
    %p33 = scmp.eq.s32.totalorder %s16, 1
    %p34 = por %p32, %p33
    %p35 = scmp.ne.s32.totalorder %s24, %s25
    %p36 = scmp.eq.s32.totalorder %s16, 0
    %p37 = por %p35, %p36
    %p38 = scmp.ne.s32.totalorder %s24, %s25
    %p39 = scmp.eq.s32.totalorder %s17, 1
    %p40 = por %p38, %p39
    %p42 = scmp.ne.s32.totalorder %s25, %s41
    %p43 = scmp.eq.s32.totalorder %s17, 0
    %p44 = por %p42, %p43
    %s46 = sadd.s32 %s45, 1
    %p49 = scmp.eq.s32.totalorder %s11, 1
    %p50 = scmp.ne.s32.totalorder %s45, %s47
    %p51 = scmp.eq.s32.totalorder %s11, 0
    %p52 = por %p50, %p51
    %p53 = scmp.ne.s32.totalorder %s45, %s47
    %p54 = scmp.eq.s32.totalorder %s16, 1
    %p55 = por %p53, %p54
    %p56 = scmp.ne.s32.totalorder %s47, %s48
    %p57 = scmp.eq.s32.totalorder %s16, 0
    %p58 = por %p56, %p57
    %p59 = scmp.ne.s32.totalorder %s47, %s48
    %p60 = scmp.eq.s32.totalorder %s17, 1
    %p61 = por %p59, %p60
    %p63 = scmp.ne.s32.totalorder %s48, %s62
    %p64 = scmp.eq.s32.totalorder %s17, 0
    %p65 = por %p63, %p64
    %s67 = sadd.s32 %s66, 1
    %p70 = scmp.eq.s32.totalorder %s11, 1
    %p71 = scmp.ne.s32.totalorder %s66, %s68
    %p72 = scmp.eq.s32.totalorder %s11, 0
    %p73 = por %p71, %p72
    %p74 = scmp.ne.s32.totalorder %s66, %s68
    %p75 = scmp.eq.s32.totalorder %s16, 1
    %p76 = por %p74, %p75
    %p77 = scmp.ne.s32.totalorder %s68, %s69
    %p78 = scmp.eq.s32.totalorder %s16, 0
    %p79 = por %p77, %p78
    %p80 = scmp.ne.s32.totalorder %s68, %s69
    %p81 = scmp.eq.s32.totalorder %s17, 1
    %p82 = por %p80, %p81
    %p84 = scmp.ne.s32.totalorder %s69, %s83
    %p85 = scmp.eq.s32.totalorder %s17, 0
    %p86 = por %p84, %p85
    %s88 = sadd.s32 %s87, 1
    %p91 = scmp.eq.s32.totalorder %s11, 1
    %p92 = scmp.ne.s32.totalorder %s87, %s89
    %p93 = scmp.eq.s32.totalorder %s11, 0
    %p94 = por %p92, %p93
    %p95 = scmp.ne.s32.totalorder %s87, %s89
    %p96 = scmp.eq.s32.totalorder %s16, 1
    %p97 = por %p95, %p96
    %p98 = scmp.ne.s32.totalorder %s89, %s90
    %p99 = scmp.eq.s32.totalorder %s16, 0
    %p100 = por %p98, %p99
    %p101 = scmp.ne.s32.totalorder %s89, %s90
    %p102 = scmp.eq.s32.totalorder %s17, 1
    %p103 = por %p101, %p102
    %p105 = scmp.ne.s32.totalorder %s90, %s104
    %p106 = scmp.eq.s32.totalorder %s17, 0
    %p107 = por %p105, %p106
    %s109 = sadd.s32 %s108, 1
    %p112 = scmp.eq.s32.totalorder %s11, 1
    %p113 = scmp.ne.s32.totalorder %s108, %s110
    %p114 = scmp.eq.s32.totalorder %s11, 0
    %p115 = por %p113, %p114
    %p116 = scmp.ne.s32.totalorder %s108, %s110
    %p117 = scmp.eq.s32.totalorder %s16, 1
    %p118 = por %p116, %p117
    %p119 = scmp.ne.s32.totalorder %s110, %s111
    %p120 = scmp.eq.s32.totalorder %s16, 0
    %p121 = por %p119, %p120
    %p122 = scmp.ne.s32.totalorder %s110, %s111
    %p123 = scmp.eq.s32.totalorder %s17, 1
    %p124 = por %p122, %p123
    %p126 = scmp.ne.s32.totalorder %s111, %s125
    %p127 = scmp.eq.s32.totalorder %s17, 0
    %p128 = por %p126, %p127
    %s129 = ssub.s32 %s11, %s18
    %p130 = scmp.eq.s32.totalorder %s129, 0
    %s132 = sadd.s32 %s131, 1
    %s133 = scalar_select %p130, %s131, %s132
    %p136 = pneg %p130
    %p137 = scmp.eq.s32.totalorder %s11, 1
    %p138 = por %p136, %p137
    %p139 = scmp.ne.s32.totalorder %s131, %s134
    %p140 = scmp.eq.s32.totalorder %s11, 0
    %p141 = por %p139, %p140
    %p142 = scmp.ne.s32.totalorder %s131, %s134
    %p143 = scmp.eq.s32.totalorder %s16, 1
    %p144 = por %p142, %p143
    %p145 = scmp.ne.s32.totalorder %s134, %s135
    %p146 = scmp.eq.s32.totalorder %s16, 0
    %p147 = por %p145, %p146
    %p148 = scmp.ne.s32.totalorder %s134, %s135
    %p149 = scmp.eq.s32.totalorder %s17, 1
    %p150 = por %p148, %p149
    %p152 = scmp.ne.s32.totalorder %s135, %s151
    %p153 = scmp.eq.s32.totalorder %s17, 0
    %p154 = por %p152, %p153
    %p155 = scmp.le.s32.totalorder 1, %s11
    %p156 = scmp.lt.s32.totalorder %s11, 3
    %p157 = pnand %p155, %p156
    %p158 = pneg %p157
    // Predicated region
    $region9: #{spatial_transformer_human_vqvae_forward.24} parent=5 // pred_check
      _
    $region10: #{spatial_transformer_human_vqvae_forward.24} parent=5 // pred_check_branch
      %160 = sbr.rel (%p157) target = $region12
    $region11: #{spatial_transformer_human_vqvae_forward.24} parent=5 // pred_region
      %s161 = ssub.s32 %s11, 1
      // Predicated region
      $region13: #{spatial_transformer_human_vqvae_forward.24} parent=11 // pred_check
        %p162 = pneg %p58
      $region14: #{spatial_transformer_human_vqvae_forward.24} parent=11 // pred_check_branch
        %164 = sbr.rel (%p162) target = $region16
      $region15: #{spatial_transformer_human_vqvae_forward.24} parent=11 // pred_region
        _
      $region16: #{spatial_transformer_human_vqvae_forward.24} parent=11 // pred_fallthru
        _
      // Predicated region
      $region17: #{spatial_transformer_human_vqvae_forward.24} parent=11 // pred_check
        %p165 = pneg %p79
      $region18: #{spatial_transformer_human_vqvae_forward.24} parent=11 // pred_check_branch
        %167 = sbr.rel (%p165) target = $region20
      $region19: #{spatial_transformer_human_vqvae_forward.24} parent=11 // pred_region
        _
      $region20: #{spatial_transformer_human_vqvae_forward.24} parent=11 // pred_fallthru
        _
      // Predicated region
      $region21: #{spatial_transformer_human_vqvae_forward.24} parent=11 // pred_check
        %p168 = pneg %p100
      $region22: #{spatial_transformer_human_vqvae_forward.24} parent=11 // pred_check_branch
        %170 = sbr.rel (%p168) target = $region24
      $region23: #{spatial_transformer_human_vqvae_forward.24} parent=11 // pred_region
        _
      $region24: #{spatial_transformer_human_vqvae_forward.24} parent=11 // pred_fallthru
        _
      // Predicated region
      $region25: #{spatial_transformer_human_vqvae_forward.24} parent=11 // pred_check
        %p171 = pneg %p121
      $region26: #{spatial_transformer_human_vqvae_forward.24} parent=11 // pred_check_branch
        %173 = sbr.rel (%p171) target = $region28
      $region27: #{spatial_transformer_human_vqvae_forward.24} parent=11 // pred_region
        _
      $region28: #{spatial_transformer_human_vqvae_forward.24} parent=11 // pred_fallthru
        _
    $region12: #{spatial_transformer_human_vqvae_forward.24} parent=5 // pred_fallthru
      _
    %p174 = scmp.lt.s32.totalorder %s11, 2
    // Predicated region
    $region29: #{spatial_transformer_human_vqvae_forward.24} parent=5 // pred_check
      %p175 = pneg %p174
    $region30: #{spatial_transformer_human_vqvae_forward.24} parent=5 // pred_check_branch
      %177 = sbr.rel (%p175) target = $region32
    $region31: #{spatial_transformer_human_vqvae_forward.24} parent=5 // pred_region
      // Predicated region
      $region33: #{spatial_transformer_human_vqvae_forward.24} parent=31 // pred_check
        %p178 = pneg %p31
      $region34: #{spatial_transformer_human_vqvae_forward.24} parent=31 // pred_check_branch
        %180 = sbr.rel (%p178) target = $region36
      $region35: #{spatial_transformer_human_vqvae_forward.24} parent=31 // pred_region
        %p181 = scmp.lt.s32.totalorder %s11, 1
        %s182 = scalar_select %p181, %s11, 1
        %s183 = smul.addr %s182, 2
        %s184 = smul.addr %s183, 8
        %s185 = scalar_lea.vmem %s0, %s184
      $region36: #{spatial_transformer_human_vqvae_forward.24} parent=31 // pred_fallthru
        _
    $region32: #{spatial_transformer_human_vqvae_forward.24} parent=5 // pred_fallthru
      _
    %p186 = scmp.le.s32.totalorder 1, %s11
    %p187 = scmp.lt.s32.totalorder %s11, 3
    %p188 = pnand %p186, %p187
    %p189 = pneg %p188
    // Predicated region
    $region37: #{spatial_transformer_human_vqvae_forward.24} parent=5 // pred_check
      _
    $region38: #{spatial_transformer_human_vqvae_forward.24} parent=5 // pred_check_branch
      %191 = sbr.rel (%p188) target = $region40
    $region39: #{spatial_transformer_human_vqvae_forward.24} parent=5 // pred_region
      %s192 = ssub.s32 %s11, 1
      %p193 = scmp.lt.s32.totalorder %s16, 1
      %s194 = scalar_select %p193, %s16, 1
      %s195 = smul.addr %s194, 2
      %s196 = smul.addr %s195, 8
      %s197 = scalar_lea.vmem %s0, %s196
      %p198 = pneg %p37
      %p199 = pneg %p34
      %p200 = pneg %p58
      %p201 = pneg %p55
      %p202 = pneg %p79
      %p203 = pneg %p76
      %p204 = pneg %p100
      %p205 = pneg %p97
      %p206 = pneg %p121
      %p207 = pneg %p118
      %p208 = pneg %p147
      %p209 = pneg %p144
      %p210 = scmp.lt.s32.totalorder %s16, 1
      %s211 = scalar_select %p210, %s16, 1
      %s212 = smul.addr %s211, 8
      %s213 = scalar_lea.vmem %s5, %s212
      %p214 = scmp.lt.s32.totalorder %s16, 1
      %s215 = scalar_select %p214, %s16, 1
      %s216 = smul.addr %s215, 2
      %s217 = smul.addr %s216, 8
      %s218 = scalar_lea.vmem %s0, %s217
      %p219 = scmp.lt.s32.totalorder %s16, 1
      %s220 = scalar_select %p219, %s16, 1
      %s221 = smul.addr %s220, 8
      %s222 = scalar_lea.vmem %s5, %s221
      %v224 = vld [vmem:[%s218] sm:$0xff]
      %v225 = vld [vmem:[%s218 + $0x8] sm:$0x3]
      %v226 = vmax.f32 %v224, 0.0
      %v227 = vmax.f32 %v225, 0.0
      %v228 = vld [vmem:[%s2] sm:$0x1]
      %v229 = vpack.c.bf16 %v226, %v226
      %v230 = vld [vmem:[%s1] sm:$0xf]
      %v231 = vld [vmem:[%s1 + $0x4] sm:$0xf]
      %v232 = vld [vmem:[%s1 + $0x8] sm:$0xf]
      %v233 = vld [vmem:[%s1 + $0xc] sm:$0xf]
      %v234 = vld [vmem:[%s1 + $0x10] sm:$0xf]
      %v235 = vld [vmem:[%s1 + $0x14] sm:$0xf]
      %v236 = vld [vmem:[%s1 + $0x18] sm:$0xf]
      %v237 = vld [vmem:[%s1 + $0x1c] sm:$0xf]
      %v238 = vld [vmem:[%s1 + $0x20] sm:$0xf]
      %v239 = vld [vmem:[%s1 + $0x24] sm:$0xf]
      %v240 = vld [vmem:[%s1 + $0x28] sm:$0xf]
      %v241 = vld [vmem:[%s1 + $0x2c] sm:$0xf]
      %v242 = vld [vmem:[%s1 + $0x30] sm:$0xf]
      %v243 = vld [vmem:[%s1 + $0x34] sm:$0xf]
      %v244 = vld [vmem:[%s1 + $0x38] sm:$0xf]
      %v245 = vld [vmem:[%s1 + $0x3c] sm:$0xf]
      %v262 = vunpack.c.l.b16 %v230
      %v263 = vunpack.c.l.b16 %v231
      %v264 = vunpack.c.l.b16 %v232
      %v265 = vunpack.c.l.b16 %v233
      %v266 = vunpack.c.l.b16 %v234
      %v267 = vunpack.c.l.b16 %v235
      %v268 = vunpack.c.l.b16 %v236
      %v269 = vunpack.c.l.b16 %v237
      %v270 = vunpack.c.l.b16 %v238
      %v271 = vunpack.c.l.b16 %v239
      %v272 = vunpack.c.l.b16 %v240
      %v273 = vunpack.c.l.b16 %v241
      %v274 = vunpack.c.l.b16 %v242
      %v275 = vunpack.c.l.b16 %v243
      %v276 = vunpack.c.l.b16 %v244
      %v277 = vunpack.c.l.b16 %v245
      %v278 = vpack.c.b16 %v263, %v262
      %v279 = vpack.c.b16 %v265, %v264
      %v280 = vpack.c.b16 %v267, %v266
      %v281 = vpack.c.b16 %v269, %v268
      %v282 = vpack.c.b16 %v271, %v270
      %v283 = vpack.c.b16 %v273, %v272
      %v284 = vpack.c.b16 %v275, %v274
      %v285 = vpack.c.b16 %v277, %v276
      %294 = vmatprep.subr.bf16.mxu0 0
      %295 = vmatpush1.bf16.msra.mxu0 %v285
      %296 = vmatprep.subr.bf16.mxu0 0
      %297 = vmatpush1.bf16.msra.mxu0 %v284
      %298 = vmatprep.subr.bf16.mxu0 0
      %299 = vmatpush1.bf16.msra.mxu0 %v283
      %300 = vmatprep.subr.bf16.mxu0 0
      %301 = vmatpush1.bf16.msra.mxu0 %v282
      %302 = vmatprep.subr.bf16.mxu0 0
      %303 = vmatpush1.bf16.msra.mxu0 %v281
      %304 = vmatprep.subr.bf16.mxu0 0
      %305 = vmatpush1.bf16.msra.mxu0 %v280
      %306 = vmatprep.subr.bf16.mxu0 0
      %307 = vmatpush1.bf16.msra.mxu0 %v279
      %308 = vmatprep.subr.bf16.mxu0 0
      %309 = vmatpush1.bf16.msra.mxu0 %v278
      %310 = vmatprep.subr.bf16.mxu0 0
      %311 = vmatpush2.bf16.msra.mxu0 0
      %312 = vmatprep.subr.bf16.mxu0 0
      %313 = vmatpush2.bf16.msra.mxu0 0
      %314 = vmatprep.subr.bf16.mxu0 0
      %315 = vmatpush2.bf16.msra.mxu0 0
      %316 = vmatprep.subr.bf16.mxu0 0
      %317 = vmatpush2.bf16.msra.mxu0 0
      %318 = vmatprep.subr.bf16.mxu0 0
      %319 = vmatpush2.bf16.msra.mxu0 0
      %320 = vmatprep.subr.bf16.mxu0 0
      %321 = vmatpush2.bf16.msra.mxu0 0
      %322 = vmatprep.subr.bf16.mxu0 0
      %323 = vmatpush2.bf16.msra.mxu0 0
      %324 = vmatprep.subr.bf16.mxu0 0
      %325 = vmatpush2.bf16.msra.mxu0 0
      %326 = vmatprep.mubr.bf16.mxu0 0
      %327 = vmatmul.mubr.bf16.gmra.mxu0 %v229
      %v328 = vpop.f32.mrf.mxu0
      %v329 = vadd.f32 0.0, %v328
      %v330 = vpop.f32.mrf.mxu0
      %v331 = vpop.f32.mrf.mxu0
      %v332 = vpop.f32.mrf.mxu0
      %333 = vdwg.mxu0
      %v335 = vlaneseq
      %v336 = vshrl.u32 %v335, 7
      %v337 = vsub.s32 0, %v336
      %v338 = vrot.slane %v228, %v337
      %v340 = vadd.f32 %v338, %v329
      %v341 = vpack.c.bf16 %v227, %v226
      %s342 = scalar_lea.vmem %s1, 64
      %v343 = vld [vmem:[%s342] sm:$0xf]
      %v344 = vld [vmem:[%s342 + $0x4] sm:$0xf]
      %v345 = vld [vmem:[%s342 + $0x8] sm:$0xf]
      %v346 = vld [vmem:[%s342 + $0xc] sm:$0xf]
      %v347 = vld [vmem:[%s342 + $0x10] sm:$0xf]
      %v348 = vld [vmem:[%s342 + $0x14] sm:$0xf]
      %v349 = vld [vmem:[%s342 + $0x18] sm:$0xf]
      %v350 = vld [vmem:[%s342 + $0x1c] sm:$0xf]
      %v351 = vld [vmem:[%s342 + $0x20] sm:$0xf]
      %v352 = vld [vmem:[%s342 + $0x24] sm:$0xf]
      %v353 = vld [vmem:[%s342 + $0x28] sm:$0xf]
      %v354 = vld [vmem:[%s342 + $0x2c] sm:$0xf]
      %v355 = vld [vmem:[%s342 + $0x30] sm:$0xf]
      %v356 = vld [vmem:[%s342 + $0x34] sm:$0xf]
      %v357 = vld [vmem:[%s342 + $0x38] sm:$0xf]
      %v358 = vld [vmem:[%s342 + $0x3c] sm:$0xf]
      %v360 = vshrl.u32 %v341, 16
      %v362 = vshll.u32 %v341, 16
      %v364 = vrot.slane %v362, 1
      %v365 = vor.u32 %v360, %v364
      %v383 = vunpack.c.l.b16 %v343
      %v384 = vunpack.c.l.b16 %v344
      %v385 = vunpack.c.l.b16 %v345
      %v386 = vunpack.c.l.b16 %v346
      %v387 = vunpack.c.l.b16 %v347
      %v388 = vunpack.c.l.b16 %v348
      %v389 = vunpack.c.l.b16 %v349
      %v390 = vunpack.c.l.b16 %v350
      %v391 = vunpack.c.l.b16 %v351
      %v392 = vunpack.c.l.b16 %v352
      %v393 = vunpack.c.l.b16 %v353
      %v394 = vunpack.c.l.b16 %v354
      %v395 = vunpack.c.l.b16 %v355
      %v396 = vunpack.c.l.b16 %v356
      %v397 = vunpack.c.l.b16 %v357
      %v398 = vunpack.c.l.b16 %v358
      %v399 = vpack.c.b16 %v384, %v383
      %v400 = vpack.c.b16 %v386, %v385
      %v401 = vpack.c.b16 %v388, %v387
      %v402 = vpack.c.b16 %v390, %v389
      %v403 = vpack.c.b16 %v392, %v391
      %v404 = vpack.c.b16 %v394, %v393
      %v405 = vpack.c.b16 %v396, %v395
      %v406 = vpack.c.b16 %v398, %v397
      %415 = vmatprep.subr.bf16.mxu0 0
      %416 = vmatpush1.bf16.msra.mxu0 %v406
      %417 = vmatprep.subr.bf16.mxu0 0
      %418 = vmatpush1.bf16.msra.mxu0 %v405
      %419 = vmatprep.subr.bf16.mxu0 0
      %420 = vmatpush1.bf16.msra.mxu0 %v404
      %421 = vmatprep.subr.bf16.mxu0 0
      %422 = vmatpush1.bf16.msra.mxu0 %v403
      %423 = vmatprep.subr.bf16.mxu0 0
      %424 = vmatpush1.bf16.msra.mxu0 %v402
      %425 = vmatprep.subr.bf16.mxu0 0
      %426 = vmatpush1.bf16.msra.mxu0 %v401
      %427 = vmatprep.subr.bf16.mxu0 0
      %428 = vmatpush1.bf16.msra.mxu0 %v400
      %429 = vmatprep.subr.bf16.mxu0 0
      %430 = vmatpush1.bf16.msra.mxu0 %v399
      %431 = vmatprep.subr.bf16.mxu0 0
      %432 = vmatpush2.bf16.msra.mxu0 0
      %433 = vmatprep.subr.bf16.mxu0 0
      %434 = vmatpush2.bf16.msra.mxu0 0
      %435 = vmatprep.subr.bf16.mxu0 0
      %436 = vmatpush2.bf16.msra.mxu0 0
      %437 = vmatprep.subr.bf16.mxu0 0
      %438 = vmatpush2.bf16.msra.mxu0 0
      %439 = vmatprep.subr.bf16.mxu0 0
      %440 = vmatpush2.bf16.msra.mxu0 0
      %441 = vmatprep.subr.bf16.mxu0 0
      %442 = vmatpush2.bf16.msra.mxu0 0
      %443 = vmatprep.subr.bf16.mxu0 0
      %444 = vmatpush2.bf16.msra.mxu0 0
      %445 = vmatprep.subr.bf16.mxu0 0
      %446 = vmatpush2.bf16.msra.mxu0 0
      %447 = vmatprep.mubr.bf16.mxu0 0
      %448 = vmatmul.mubr.bf16.gmra.mxu0 %v365
      %v449 = vpop.f32.mrf.mxu0
      %v450 = vadd.f32 0.0, %v449
      %v451 = vpop.f32.mrf.mxu0
      %v452 = vpop.f32.mrf.mxu0
      %v453 = vpop.f32.mrf.mxu0
      %454 = vdwg.mxu0
      %v455 = vadd.f32 %v340, %v450
      %s456 = scalar_lea.vmem %s1, 128
      %v457 = vld [vmem:[%s456] sm:$0xf]
      %v458 = vld [vmem:[%s456 + $0x4] sm:$0xf]
      %v459 = vld [vmem:[%s456 + $0x8] sm:$0xf]
      %v460 = vld [vmem:[%s456 + $0xc] sm:$0xf]
      %v461 = vld [vmem:[%s456 + $0x10] sm:$0xf]
      %v462 = vld [vmem:[%s456 + $0x14] sm:$0xf]
      %v463 = vld [vmem:[%s456 + $0x18] sm:$0xf]
      %v464 = vld [vmem:[%s456 + $0x1c] sm:$0xf]
      %v465 = vld [vmem:[%s456 + $0x20] sm:$0xf]
      %v466 = vld [vmem:[%s456 + $0x24] sm:$0xf]
      %v467 = vld [vmem:[%s456 + $0x28] sm:$0xf]
      %v468 = vld [vmem:[%s456 + $0x2c] sm:$0xf]
      %v469 = vld [vmem:[%s456 + $0x30] sm:$0xf]
      %v470 = vld [vmem:[%s456 + $0x34] sm:$0xf]
      %v471 = vld [vmem:[%s456 + $0x38] sm:$0xf]
      %v472 = vld [vmem:[%s456 + $0x3c] sm:$0xf]
      %v474 = vrot.slane %v341, 1
      %v492 = vunpack.c.l.b16 %v457
      %v493 = vunpack.c.l.b16 %v458
      %v494 = vunpack.c.l.b16 %v459
      %v495 = vunpack.c.l.b16 %v460
      %v496 = vunpack.c.l.b16 %v461
      %v497 = vunpack.c.l.b16 %v462
      %v498 = vunpack.c.l.b16 %v463
      %v499 = vunpack.c.l.b16 %v464
      %v500 = vunpack.c.l.b16 %v465
      %v501 = vunpack.c.l.b16 %v466
      %v502 = vunpack.c.l.b16 %v467
      %v503 = vunpack.c.l.b16 %v468
      %v504 = vunpack.c.l.b16 %v469
      %v505 = vunpack.c.l.b16 %v470
      %v506 = vunpack.c.l.b16 %v471
      %v507 = vunpack.c.l.b16 %v472
      %v508 = vpack.c.b16 %v493, %v492
      %v509 = vpack.c.b16 %v495, %v494
      %v510 = vpack.c.b16 %v497, %v496
      %v511 = vpack.c.b16 %v499, %v498
      %v512 = vpack.c.b16 %v501, %v500
      %v513 = vpack.c.b16 %v503, %v502
      %v514 = vpack.c.b16 %v505, %v504
      %v515 = vpack.c.b16 %v507, %v506
      %524 = vmatprep.subr.bf16.mxu0 0
      %525 = vmatpush1.bf16.msra.mxu0 %v515
      %526 = vmatprep.subr.bf16.mxu0 0
      %527 = vmatpush1.bf16.msra.mxu0 %v514
      %528 = vmatprep.subr.bf16.mxu0 0
      %529 = vmatpush1.bf16.msra.mxu0 %v513
      %530 = vmatprep.subr.bf16.mxu0 0
      %531 = vmatpush1.bf16.msra.mxu0 %v512
      %532 = vmatprep.subr.bf16.mxu0 0
      %533 = vmatpush1.bf16.msra.mxu0 %v511
      %534 = vmatprep.subr.bf16.mxu0 0
      %535 = vmatpush1.bf16.msra.mxu0 %v510
      %536 = vmatprep.subr.bf16.mxu0 0
      %537 = vmatpush1.bf16.msra.mxu0 %v509
      %538 = vmatprep.subr.bf16.mxu0 0
      %539 = vmatpush1.bf16.msra.mxu0 %v508
      %540 = vmatprep.subr.bf16.mxu0 0
      %541 = vmatpush2.bf16.msra.mxu0 0
      %542 = vmatprep.subr.bf16.mxu0 0
      %543 = vmatpush2.bf16.msra.mxu0 0
      %544 = vmatprep.subr.bf16.mxu0 0
      %545 = vmatpush2.bf16.msra.mxu0 0
      %546 = vmatprep.subr.bf16.mxu0 0
      %547 = vmatpush2.bf16.msra.mxu0 0
      %548 = vmatprep.subr.bf16.mxu0 0
      %549 = vmatpush2.bf16.msra.mxu0 0
      %550 = vmatprep.subr.bf16.mxu0 0
      %551 = vmatpush2.bf16.msra.mxu0 0
      %552 = vmatprep.subr.bf16.mxu0 0
      %553 = vmatpush2.bf16.msra.mxu0 0
      %554 = vmatprep.subr.bf16.mxu0 0
      %555 = vmatpush2.bf16.msra.mxu0 0
      %556 = vmatprep.mubr.bf16.mxu0 0
      %557 = vmatmul.mubr.bf16.gmra.mxu0 %v474
      %v558 = vpop.f32.mrf.mxu0
      %v559 = vadd.f32 0.0, %v558
      %v560 = vpop.f32.mrf.mxu0
      %v561 = vpop.f32.mrf.mxu0
      %v562 = vpop.f32.mrf.mxu0
      %563 = vdwg.mxu0
      %v564 = vadd.f32 %v455, %v559
      %v565 = vmax.f32 %v564, 0.0
      %v566 = vpack.c.bf16 %v565, %v565
      %v567 = vld [vmem:[%s4] sm:$0x1]
      %v568 = vld [vmem:[%s3] sm:$0xf]
      %v569 = vld [vmem:[%s3 + $0x4] sm:$0xf]
      %v570 = vld [vmem:[%s3 + $0x8] sm:$0xf]
      %v571 = vld [vmem:[%s3 + $0xc] sm:$0xf]
      %v572 = vld [vmem:[%s3 + $0x10] sm:$0xf]
      %v573 = vld [vmem:[%s3 + $0x14] sm:$0xf]
      %v574 = vld [vmem:[%s3 + $0x18] sm:$0xf]
      %v575 = vld [vmem:[%s3 + $0x1c] sm:$0xf]
      %v576 = vld [vmem:[%s3 + $0x20] sm:$0xf]
      %v577 = vld [vmem:[%s3 + $0x24] sm:$0xf]
      %v578 = vld [vmem:[%s3 + $0x28] sm:$0xf]
      %v579 = vld [vmem:[%s3 + $0x2c] sm:$0xf]
      %v580 = vld [vmem:[%s3 + $0x30] sm:$0xf]
      %v581 = vld [vmem:[%s3 + $0x34] sm:$0xf]
      %v582 = vld [vmem:[%s3 + $0x38] sm:$0xf]
      %v583 = vld [vmem:[%s3 + $0x3c] sm:$0xf]
      %v600 = vunpack.c.l.b16 %v568
      %v601 = vunpack.c.l.b16 %v569
      %v602 = vunpack.c.l.b16 %v570
      %v603 = vunpack.c.l.b16 %v571
      %v604 = vunpack.c.l.b16 %v572
      %v605 = vunpack.c.l.b16 %v573
      %v606 = vunpack.c.l.b16 %v574
      %v607 = vunpack.c.l.b16 %v575
      %v608 = vunpack.c.l.b16 %v576
      %v609 = vunpack.c.l.b16 %v577
      %v610 = vunpack.c.l.b16 %v578
      %v611 = vunpack.c.l.b16 %v579
      %v612 = vunpack.c.l.b16 %v580
      %v613 = vunpack.c.l.b16 %v581
      %v614 = vunpack.c.l.b16 %v582
      %v615 = vunpack.c.l.b16 %v583
      %v616 = vpack.c.b16 %v601, %v600
      %v617 = vpack.c.b16 %v603, %v602
      %v618 = vpack.c.b16 %v605, %v604
      %v619 = vpack.c.b16 %v607, %v606
      %v620 = vpack.c.b16 %v609, %v608
      %v621 = vpack.c.b16 %v611, %v610
      %v622 = vpack.c.b16 %v613, %v612
      %v623 = vpack.c.b16 %v615, %v614
      %632 = vmatprep.subr.bf16.mxu0 0
      %633 = vmatpush1.bf16.msra.mxu0 %v623
      %634 = vmatprep.subr.bf16.mxu0 0
      %635 = vmatpush1.bf16.msra.mxu0 %v622
      %636 = vmatprep.subr.bf16.mxu0 0
      %637 = vmatpush1.bf16.msra.mxu0 %v621
      %638 = vmatprep.subr.bf16.mxu0 0
      %639 = vmatpush1.bf16.msra.mxu0 %v620
      %640 = vmatprep.subr.bf16.mxu0 0
      %641 = vmatpush1.bf16.msra.mxu0 %v619
      %642 = vmatprep.subr.bf16.mxu0 0
      %643 = vmatpush1.bf16.msra.mxu0 %v618
      %644 = vmatprep.subr.bf16.mxu0 0
      %645 = vmatpush1.bf16.msra.mxu0 %v617
      %646 = vmatprep.subr.bf16.mxu0 0
      %647 = vmatpush1.bf16.msra.mxu0 %v616
      %648 = vmatprep.subr.bf16.mxu0 0
      %649 = vmatpush2.bf16.msra.mxu0 0
      %650 = vmatprep.subr.bf16.mxu0 0
      %651 = vmatpush2.bf16.msra.mxu0 0
      %652 = vmatprep.subr.bf16.mxu0 0
      %653 = vmatpush2.bf16.msra.mxu0 0
      %654 = vmatprep.subr.bf16.mxu0 0
      %655 = vmatpush2.bf16.msra.mxu0 0
      %656 = vmatprep.subr.bf16.mxu0 0
      %657 = vmatpush2.bf16.msra.mxu0 0
      %658 = vmatprep.subr.bf16.mxu0 0
      %659 = vmatpush2.bf16.msra.mxu0 0
      %660 = vmatprep.subr.bf16.mxu0 0
      %661 = vmatpush2.bf16.msra.mxu0 0
      %662 = vmatprep.subr.bf16.mxu0 0
      %663 = vmatpush2.bf16.msra.mxu0 0
      %664 = vmatprep.mubr.bf16.mxu0 0
      %665 = vmatmul.mubr.bf16.gmra.mxu0 %v566
      %v666 = vpop.f32.mrf.mxu0
      %v667 = vadd.f32 0.0, %v666
      %v668 = vpop.f32.mrf.mxu0
      %v669 = vpop.f32.mrf.mxu0
      %v670 = vpop.f32.mrf.mxu0
      %671 = vdwg.mxu0
      %v673 = vlaneseq
      %v674 = vshrl.u32 %v673, 7
      %v675 = vsub.s32 0, %v674
      %v676 = vrot.slane %v567, %v675
      %v678 = vadd.f32 %v676, %v667
      %vm681 = vcmask 1046528
      %v682 = vrot.slane %v224, 1
      %v683 = vrot.slane %v225, 1
      %v684 = vsel %vm681, %v682, %v683
      %v686 = vadd.f32 %v678, %v684
      %687 = vst [vmem:[%s222] sm:$0xff] %v686
      %p688 = scmp.lt.s32.totalorder %s16, 1
      %s689 = scalar_select %p688, %s16, 1
      %s690 = smul.addr %s689, 8
      %s691 = scalar_lea.vmem %s5, %s690
      // Predicated region
      $region41: #{spatial_transformer_human_vqvae_forward.24} parent=39 // pred_check
        %p692 = pneg %p144
      $region42: #{spatial_transformer_human_vqvae_forward.24} parent=39 // pred_check_branch
        %694 = sbr.rel (%p692) target = $region44
      $region43: #{spatial_transformer_human_vqvae_forward.24} parent=39 // pred_region
        _
      $region44: #{spatial_transformer_human_vqvae_forward.24} parent=39 // pred_fallthru
        _
    $region40: #{spatial_transformer_human_vqvae_forward.24} parent=5 // pred_fallthru
      _
    %p695 = scmp.le.s32.totalorder 2, %s11
    // Predicated region
    $region45: #{spatial_transformer_human_vqvae_forward.24} parent=5 // pred_check
      %p696 = pneg %p695
    $region46: #{spatial_transformer_human_vqvae_forward.24} parent=5 // pred_check_branch
      %698 = sbr.rel (%p696) target = $region48
    $region47: #{spatial_transformer_human_vqvae_forward.24} parent=5 // pred_region
      %s699 = ssub.s32 %s11, 2
      // Predicated region
      $region49: #{spatial_transformer_human_vqvae_forward.24} parent=47 // pred_check
        %p700 = pneg %p150
      $region50: #{spatial_transformer_human_vqvae_forward.24} parent=47 // pred_check_branch
        %702 = sbr.rel (%p700) target = $region52
      $region51: #{spatial_transformer_human_vqvae_forward.24} parent=47 // pred_region
        %p703 = scmp.lt.s32.totalorder %s17, 1
        %s704 = scalar_select %p703, %s17, 1
        %s705 = smul.addr %s704, 8
        %s706 = scalar_lea.vmem %s5, %s705
      $region52: #{spatial_transformer_human_vqvae_forward.24} parent=47 // pred_fallthru
        _
    $region48: #{spatial_transformer_human_vqvae_forward.24} parent=5 // pred_fallthru
      _
  $region6: #{spatial_transformer_human_vqvae_forward.24} parent=0 // loop_footer
    %s15 = sadd.s32 1, %s11
  $region7: #{spatial_transformer_human_vqvae_forward.24} parent=0 // loop_footer_branch
    %10 = sbr.rel target = $region3
  $region8: #{spatial_transformer_human_vqvae_forward.24} parent=0 // loop_exit
    _

// kernel: spatial_transformer_human_vqvae_forward.22
$region0: #{spatial_transformer_human_vqvae_forward.22}
  #allocation0 [shape = 'u32[]', space=smem, size = 0x4, offset = 0x4, fixed_abs, tag = 'smem constant byte address 0x4 - core index']
  #allocation1 [shape = 'u32[144,128]{1,0:T(1,128)}', space=vmem, size = 0x12000, scoped, tag = 'internal scratch']
  %s0 = inlined_call_operand.vmem [shape: f32[2,10,256], index: 0, kind: input, shape index: {}]
  %s1 = inlined_call_operand.vmem [shape: bf16[3,256,128], index: 1, kind: input, shape index: {}]
  %s2 = inlined_call_operand.vmem [shape: f32[1,128], index: 2, kind: input, shape index: {}]
  %s3 = inlined_call_operand.vmem [shape: f32[2,8,128], index: 3, kind: output, shape index: {}]
  %s4 = sld [smem:[#allocation0]]
  $region45: #{spatial_transformer_human_vqvae_forward.22} parent=0
    _
  %s6 = ssub.s32 1, %s4
  %s7 = scalar_select 0, %s6, %s4
  loop: start=0, step=1, limit=4
  $region2: #{spatial_transformer_human_vqvae_forward.22} parent=0 // loop_pre_header
    _
  $region3: #{spatial_transformer_human_vqvae_forward.22} parent=0 // loop_header
    %s9 = sphi 0, %s13
    %p10 = scmp.ge.s32.totalorder %s9, 4
    %s19 = sphi 0, %s21
    %s22 = sphi 0, %s19
    %s23 = sphi 0, %s22
    %s39 = sphi 0, %s23
    %s43 = sphi 0, %s43
    %s45 = sphi 0, %s43
    %s46 = sphi 0, %s45
    %s60 = sphi 0, %s46
    %s64 = sphi 0, %s64
    %s66 = sphi 0, %s64
    %s67 = sphi 0, %s66
    %s81 = sphi 0, %s67
    %s87 = sphi 0, %s89
    %s90 = sphi 0, %s87
    %s91 = sphi 0, %s90
    %s107 = sphi 0, %s91
  $region4: #{spatial_transformer_human_vqvae_forward.22} parent=0 // loop_header_branch
    %12 = sbr.rel (%p10) target = $region8
  $region5: #{spatial_transformer_human_vqvae_forward.22} parent=0 // loop_body
    %s14 = ssub.s32 %s9, 1
    %s15 = ssub.s32 %s9, 2
    %s16 = sadd.s32 %s9, 1
    %s17 = ssub.s32 %s9, %s16
    %p18 = scmp.eq.s32.totalorder %s17, 0
    %s20 = sadd.s32 %s19, 1
    %s21 = scalar_select %p18, %s19, %s20
    %p24 = pneg %p18
    %p25 = scmp.eq.s32.totalorder %s9, 1
    %p26 = por %p24, %p25
    %p27 = scmp.ne.s32.totalorder %s19, %s22
    %p28 = scmp.eq.s32.totalorder %s9, 0
    %p29 = por %p27, %p28
    %p30 = scmp.ne.s32.totalorder %s19, %s22
    %p31 = scmp.eq.s32.totalorder %s14, 1
    %p32 = por %p30, %p31
    %p33 = scmp.ne.s32.totalorder %s22, %s23
    %p34 = scmp.eq.s32.totalorder %s14, 0
    %p35 = por %p33, %p34
    %p36 = scmp.ne.s32.totalorder %s22, %s23
    %p37 = scmp.eq.s32.totalorder %s15, 1
    %p38 = por %p36, %p37
    %p40 = scmp.ne.s32.totalorder %s23, %s39
    %p41 = scmp.eq.s32.totalorder %s15, 0
    %p42 = por %p40, %p41
    %s44 = sadd.s32 %s43, 1
    %p47 = scmp.eq.s32.totalorder %s9, 1
    %p48 = scmp.ne.s32.totalorder %s43, %s45
    %p49 = scmp.eq.s32.totalorder %s9, 0
    %p50 = por %p48, %p49
    %p51 = scmp.ne.s32.totalorder %s43, %s45
    %p52 = scmp.eq.s32.totalorder %s14, 1
    %p53 = por %p51, %p52
    %p54 = scmp.ne.s32.totalorder %s45, %s46
    %p55 = scmp.eq.s32.totalorder %s14, 0
    %p56 = por %p54, %p55
    %p57 = scmp.ne.s32.totalorder %s45, %s46
    %p58 = scmp.eq.s32.totalorder %s15, 1
    %p59 = por %p57, %p58
    %p61 = scmp.ne.s32.totalorder %s46, %s60
    %p62 = scmp.eq.s32.totalorder %s15, 0
    %p63 = por %p61, %p62
    %s65 = sadd.s32 %s64, 1
    %p68 = scmp.eq.s32.totalorder %s9, 1
    %p69 = scmp.ne.s32.totalorder %s64, %s66
    %p70 = scmp.eq.s32.totalorder %s9, 0
    %p71 = por %p69, %p70
    %p72 = scmp.ne.s32.totalorder %s64, %s66
    %p73 = scmp.eq.s32.totalorder %s14, 1
    %p74 = por %p72, %p73
    %p75 = scmp.ne.s32.totalorder %s66, %s67
    %p76 = scmp.eq.s32.totalorder %s14, 0
    %p77 = por %p75, %p76
    %p78 = scmp.ne.s32.totalorder %s66, %s67
    %p79 = scmp.eq.s32.totalorder %s15, 1
    %p80 = por %p78, %p79
    %p82 = scmp.ne.s32.totalorder %s67, %s81
    %p83 = scmp.eq.s32.totalorder %s15, 0
    %p84 = por %p82, %p83
    %s85 = ssub.s32 %s9, %s16
    %p86 = scmp.eq.s32.totalorder %s85, 0
    %s88 = sadd.s32 %s87, 1
    %s89 = scalar_select %p86, %s87, %s88
    %p92 = pneg %p86
    %p93 = scmp.eq.s32.totalorder %s9, 1
    %p94 = por %p92, %p93
    %p95 = scmp.ne.s32.totalorder %s87, %s90
    %p96 = scmp.eq.s32.totalorder %s9, 0
    %p97 = por %p95, %p96
    %p98 = scmp.ne.s32.totalorder %s87, %s90
    %p99 = scmp.eq.s32.totalorder %s14, 1
    %p100 = por %p98, %p99
    %p101 = scmp.ne.s32.totalorder %s90, %s91
    %p102 = scmp.eq.s32.totalorder %s14, 0
    %p103 = por %p101, %p102
    %p104 = scmp.ne.s32.totalorder %s90, %s91
    %p105 = scmp.eq.s32.totalorder %s15, 1
    %p106 = por %p104, %p105
    %p108 = scmp.ne.s32.totalorder %s91, %s107
    %p109 = scmp.eq.s32.totalorder %s15, 0
    %p110 = por %p108, %p109
    %p111 = scmp.le.s32.totalorder 1, %s9
    %p112 = scmp.lt.s32.totalorder %s9, 3
    %p113 = pnand %p111, %p112
    %p114 = pneg %p113
    // Predicated region
    $region9: #{spatial_transformer_human_vqvae_forward.22} parent=5 // pred_check
      _
    $region10: #{spatial_transformer_human_vqvae_forward.22} parent=5 // pred_check_branch
      %116 = sbr.rel (%p113) target = $region12
    $region11: #{spatial_transformer_human_vqvae_forward.22} parent=5 // pred_region
      %s117 = ssub.s32 %s9, 1
      // Predicated region
      $region13: #{spatial_transformer_human_vqvae_forward.22} parent=11 // pred_check
        %p118 = pneg %p56
      $region14: #{spatial_transformer_human_vqvae_forward.22} parent=11 // pred_check_branch
        %120 = sbr.rel (%p118) target = $region16
      $region15: #{spatial_transformer_human_vqvae_forward.22} parent=11 // pred_region
        _
      $region16: #{spatial_transformer_human_vqvae_forward.22} parent=11 // pred_fallthru
        _
      // Predicated region
      $region17: #{spatial_transformer_human_vqvae_forward.22} parent=11 // pred_check
        %p121 = pneg %p77
      $region18: #{spatial_transformer_human_vqvae_forward.22} parent=11 // pred_check_branch
        %123 = sbr.rel (%p121) target = $region20
      $region19: #{spatial_transformer_human_vqvae_forward.22} parent=11 // pred_region
        _
      $region20: #{spatial_transformer_human_vqvae_forward.22} parent=11 // pred_fallthru
        _
    $region12: #{spatial_transformer_human_vqvae_forward.22} parent=5 // pred_fallthru
      _
    %p124 = scmp.lt.s32.totalorder %s9, 2
    // Predicated region
    $region21: #{spatial_transformer_human_vqvae_forward.22} parent=5 // pred_check
      %p125 = pneg %p124
    $region22: #{spatial_transformer_human_vqvae_forward.22} parent=5 // pred_check_branch
      %127 = sbr.rel (%p125) target = $region24
    $region23: #{spatial_transformer_human_vqvae_forward.22} parent=5 // pred_region
      // Predicated region
      $region25: #{spatial_transformer_human_vqvae_forward.22} parent=23 // pred_check
        %p128 = pneg %p29
      $region26: #{spatial_transformer_human_vqvae_forward.22} parent=23 // pred_check_branch
        %130 = sbr.rel (%p128) target = $region28
      $region27: #{spatial_transformer_human_vqvae_forward.22} parent=23 // pred_region
        %p131 = scmp.lt.s32.totalorder %s9, 1
        %s132 = scalar_select %p131, %s9, 1
        %s133 = smul.addr %s132, 4
        %s134 = smul.addr %s133, 8
        %s135 = scalar_lea.vmem %s0, %s134
      $region28: #{spatial_transformer_human_vqvae_forward.22} parent=23 // pred_fallthru
        _
    $region24: #{spatial_transformer_human_vqvae_forward.22} parent=5 // pred_fallthru
      _
    %p136 = scmp.le.s32.totalorder 1, %s9
    %p137 = scmp.lt.s32.totalorder %s9, 3
    %p138 = pnand %p136, %p137
    %p139 = pneg %p138
    // Predicated region
    $region29: #{spatial_transformer_human_vqvae_forward.22} parent=5 // pred_check
      _
    $region30: #{spatial_transformer_human_vqvae_forward.22} parent=5 // pred_check_branch
      %141 = sbr.rel (%p138) target = $region32
    $region31: #{spatial_transformer_human_vqvae_forward.22} parent=5 // pred_region
      %s142 = ssub.s32 %s9, 1
      %p143 = scmp.lt.s32.totalorder %s14, 1
      %s144 = scalar_select %p143, %s14, 1
      %s145 = smul.addr %s144, 4
      %s146 = smul.addr %s145, 8
      %s147 = scalar_lea.vmem %s0, %s146
      %p148 = pneg %p35
      %p149 = pneg %p32
      %p150 = pneg %p56
      %p151 = pneg %p53
      %p152 = pneg %p77
      %p153 = pneg %p74
      %p154 = pneg %p103
      %p155 = pneg %p100
      %p156 = scmp.lt.s32.totalorder %s14, 1
      %s157 = scalar_select %p156, %s14, 1
      %s158 = smul.addr %s157, 8
      %s159 = scalar_lea.vmem %s3, %s158
      %p160 = scmp.lt.s32.totalorder %s14, 1
      %s161 = scalar_select %p160, %s14, 1
      %s162 = smul.addr %s161, 4
      %s163 = smul.addr %s162, 8
      %s164 = scalar_lea.vmem %s0, %s163
      %p165 = scmp.lt.s32.totalorder %s14, 1
      %s166 = scalar_select %p165, %s14, 1
      %s167 = smul.addr %s166, 8
      %s168 = scalar_lea.vmem %s3, %s167
      %v170 = vld [vmem:[%s164] sm:$0xff]
      %v171 = vld [vmem:[%s164 + $0x8] sm:$0xff]
      %v172 = vld [vmem:[%s164 + $0x10] sm:$0x3]
      %v173 = vld [vmem:[%s164 + $0x18] sm:$0x3]
      %v174 = vld [vmem:[%s2] sm:$0x1]
      %v175 = vpack.c.bf16 %v170, %v170
      %v176 = vpack.c.bf16 %v171, %v171
      %v177 = vld [vmem:[%s1] sm:$0xf]
      %v178 = vld [vmem:[%s1 + $0x4] sm:$0xf]
      %v179 = vld [vmem:[%s1 + $0x8] sm:$0xf]
      %v180 = vld [vmem:[%s1 + $0xc] sm:$0xf]
      %v181 = vld [vmem:[%s1 + $0x10] sm:$0xf]
      %v182 = vld [vmem:[%s1 + $0x14] sm:$0xf]
      %v183 = vld [vmem:[%s1 + $0x18] sm:$0xf]
      %v184 = vld [vmem:[%s1 + $0x1c] sm:$0xf]
      %v185 = vld [vmem:[%s1 + $0x20] sm:$0xf]
      %v186 = vld [vmem:[%s1 + $0x24] sm:$0xf]
      %v187 = vld [vmem:[%s1 + $0x28] sm:$0xf]
      %v188 = vld [vmem:[%s1 + $0x2c] sm:$0xf]
      %v189 = vld [vmem:[%s1 + $0x30] sm:$0xf]
      %v190 = vld [vmem:[%s1 + $0x34] sm:$0xf]
      %v191 = vld [vmem:[%s1 + $0x38] sm:$0xf]
      %v192 = vld [vmem:[%s1 + $0x3c] sm:$0xf]
      %v193 = vld [vmem:[%s1 + $0x40] sm:$0xf]
      %v194 = vld [vmem:[%s1 + $0x44] sm:$0xf]
      %v195 = vld [vmem:[%s1 + $0x48] sm:$0xf]
      %v196 = vld [vmem:[%s1 + $0x4c] sm:$0xf]
      %v197 = vld [vmem:[%s1 + $0x50] sm:$0xf]
      %v198 = vld [vmem:[%s1 + $0x54] sm:$0xf]
      %v199 = vld [vmem:[%s1 + $0x58] sm:$0xf]
      %v200 = vld [vmem:[%s1 + $0x5c] sm:$0xf]
      %v201 = vld [vmem:[%s1 + $0x60] sm:$0xf]
      %v202 = vld [vmem:[%s1 + $0x64] sm:$0xf]
      %v203 = vld [vmem:[%s1 + $0x68] sm:$0xf]
      %v204 = vld [vmem:[%s1 + $0x6c] sm:$0xf]
      %v205 = vld [vmem:[%s1 + $0x70] sm:$0xf]
      %v206 = vld [vmem:[%s1 + $0x74] sm:$0xf]
      %v207 = vld [vmem:[%s1 + $0x78] sm:$0xf]
      %v208 = vld [vmem:[%s1 + $0x7c] sm:$0xf]
      %v241 = vunpack.c.l.b16 %v177
      %v242 = vunpack.c.l.b16 %v178
      %v243 = vunpack.c.l.b16 %v179
      %v244 = vunpack.c.l.b16 %v180
      %v245 = vunpack.c.l.b16 %v181
      %v246 = vunpack.c.l.b16 %v182
      %v247 = vunpack.c.l.b16 %v183
      %v248 = vunpack.c.l.b16 %v184
      %v249 = vunpack.c.l.b16 %v185
      %v250 = vunpack.c.l.b16 %v186
      %v251 = vunpack.c.l.b16 %v187
      %v252 = vunpack.c.l.b16 %v188
      %v253 = vunpack.c.l.b16 %v189
      %v254 = vunpack.c.l.b16 %v190
      %v255 = vunpack.c.l.b16 %v191
      %v256 = vunpack.c.l.b16 %v192
      %v257 = vunpack.c.l.b16 %v193
      %v258 = vunpack.c.l.b16 %v194
      %v259 = vunpack.c.l.b16 %v195
      %v260 = vunpack.c.l.b16 %v196
      %v261 = vunpack.c.l.b16 %v197
      %v262 = vunpack.c.l.b16 %v198
      %v263 = vunpack.c.l.b16 %v199
      %v264 = vunpack.c.l.b16 %v200
      %v265 = vunpack.c.l.b16 %v201
      %v266 = vunpack.c.l.b16 %v202
      %v267 = vunpack.c.l.b16 %v203
      %v268 = vunpack.c.l.b16 %v204
      %v269 = vunpack.c.l.b16 %v205
      %v270 = vunpack.c.l.b16 %v206
      %v271 = vunpack.c.l.b16 %v207
      %v272 = vunpack.c.l.b16 %v208
      %v273 = vpack.c.b16 %v242, %v241
      %v274 = vpack.c.b16 %v244, %v243
      %v275 = vpack.c.b16 %v246, %v245
      %v276 = vpack.c.b16 %v248, %v247
      %v277 = vpack.c.b16 %v250, %v249
      %v278 = vpack.c.b16 %v252, %v251
      %v279 = vpack.c.b16 %v254, %v253
      %v280 = vpack.c.b16 %v256, %v255
      %v281 = vpack.c.b16 %v258, %v257
      %v282 = vpack.c.b16 %v260, %v259
      %v283 = vpack.c.b16 %v262, %v261
      %v284 = vpack.c.b16 %v264, %v263
      %v285 = vpack.c.b16 %v266, %v265
      %v286 = vpack.c.b16 %v268, %v267
      %v287 = vpack.c.b16 %v270, %v269
      %v288 = vpack.c.b16 %v272, %v271
      %305 = vmatprep.subr.bf16.mxu0 0
      %306 = vmatpush1.bf16.msra.mxu0 %v280
      %307 = vmatprep.subr.bf16.mxu0 0
      %308 = vmatpush1.bf16.msra.mxu0 %v279
      %309 = vmatprep.subr.bf16.mxu0 0
      %310 = vmatpush1.bf16.msra.mxu0 %v278
      %311 = vmatprep.subr.bf16.mxu0 0
      %312 = vmatpush1.bf16.msra.mxu0 %v277
      %313 = vmatprep.subr.bf16.mxu0 0
      %314 = vmatpush1.bf16.msra.mxu0 %v276
      %315 = vmatprep.subr.bf16.mxu0 0
      %316 = vmatpush1.bf16.msra.mxu0 %v275
      %317 = vmatprep.subr.bf16.mxu0 0
      %318 = vmatpush1.bf16.msra.mxu0 %v274
      %319 = vmatprep.subr.bf16.mxu0 0
      %320 = vmatpush1.bf16.msra.mxu0 %v273
      %321 = vmatprep.subr.bf16.mxu0 0
      %322 = vmatpush2.bf16.msra.mxu0 %v288
      %323 = vmatprep.subr.bf16.mxu0 0
      %324 = vmatpush2.bf16.msra.mxu0 %v287
      %325 = vmatprep.subr.bf16.mxu0 0
      %326 = vmatpush2.bf16.msra.mxu0 %v286
      %327 = vmatprep.subr.bf16.mxu0 0
      %328 = vmatpush2.bf16.msra.mxu0 %v285
      %329 = vmatprep.subr.bf16.mxu0 0
      %330 = vmatpush2.bf16.msra.mxu0 %v284
      %331 = vmatprep.subr.bf16.mxu0 0
      %332 = vmatpush2.bf16.msra.mxu0 %v283
      %333 = vmatprep.subr.bf16.mxu0 0
      %334 = vmatpush2.bf16.msra.mxu0 %v282
      %335 = vmatprep.subr.bf16.mxu0 0
      %336 = vmatpush2.bf16.msra.mxu0 %v281
      %337 = vmatprep.mubr.bf16.mxu0 %v176
      %338 = vmatmul.mubr.bf16.gmra.mxu0 %v175
      %v339 = vpop.f32.mrf.mxu0
      %v340 = vadd.f32 0.0, %v339
      %v341 = vpop.f32.mrf.mxu0
      %v342 = vpop.f32.mrf.mxu0
      %v343 = vpop.f32.mrf.mxu0
      %344 = vdwg.mxu0
      %v346 = vlaneseq
      %v347 = vshrl.u32 %v346, 7
      %v348 = vsub.s32 0, %v347
      %v349 = vrot.slane %v174, %v348
      %v351 = vadd.f32 %v349, %v340
      %v352 = vpack.c.bf16 %v172, %v170
      %v353 = vpack.c.bf16 %v173, %v171
      %s354 = scalar_lea.vmem %s1, 128
      %v355 = vld [vmem:[%s354] sm:$0xf]
      %v356 = vld [vmem:[%s354 + $0x4] sm:$0xf]
      %v357 = vld [vmem:[%s354 + $0x8] sm:$0xf]
      %v358 = vld [vmem:[%s354 + $0xc] sm:$0xf]
      %v359 = vld [vmem:[%s354 + $0x10] sm:$0xf]
      %v360 = vld [vmem:[%s354 + $0x14] sm:$0xf]
      %v361 = vld [vmem:[%s354 + $0x18] sm:$0xf]
      %v362 = vld [vmem:[%s354 + $0x1c] sm:$0xf]
      %v363 = vld [vmem:[%s354 + $0x20] sm:$0xf]
      %v364 = vld [vmem:[%s354 + $0x24] sm:$0xf]
      %v365 = vld [vmem:[%s354 + $0x28] sm:$0xf]
      %v366 = vld [vmem:[%s354 + $0x2c] sm:$0xf]
      %v367 = vld [vmem:[%s354 + $0x30] sm:$0xf]
      %v368 = vld [vmem:[%s354 + $0x34] sm:$0xf]
      %v369 = vld [vmem:[%s354 + $0x38] sm:$0xf]
      %v370 = vld [vmem:[%s354 + $0x3c] sm:$0xf]
      %v371 = vld [vmem:[%s354 + $0x40] sm:$0xf]
      %v372 = vld [vmem:[%s354 + $0x44] sm:$0xf]
      %v373 = vld [vmem:[%s354 + $0x48] sm:$0xf]
      %v374 = vld [vmem:[%s354 + $0x4c] sm:$0xf]
      %v375 = vld [vmem:[%s354 + $0x50] sm:$0xf]
      %v376 = vld [vmem:[%s354 + $0x54] sm:$0xf]
      %v377 = vld [vmem:[%s354 + $0x58] sm:$0xf]
      %v378 = vld [vmem:[%s354 + $0x5c] sm:$0xf]
      %v379 = vld [vmem:[%s354 + $0x60] sm:$0xf]
      %v380 = vld [vmem:[%s354 + $0x64] sm:$0xf]
      %v381 = vld [vmem:[%s354 + $0x68] sm:$0xf]
      %v382 = vld [vmem:[%s354 + $0x6c] sm:$0xf]
      %v383 = vld [vmem:[%s354 + $0x70] sm:$0xf]
      %v384 = vld [vmem:[%s354 + $0x74] sm:$0xf]
      %v385 = vld [vmem:[%s354 + $0x78] sm:$0xf]
      %v386 = vld [vmem:[%s354 + $0x7c] sm:$0xf]
      %v388 = vshrl.u32 %v352, 16
      %v390 = vshll.u32 %v352, 16
      %v392 = vrot.slane %v390, 1
      %v393 = vor.u32 %v388, %v392
      %v395 = vshrl.u32 %v353, 16
      %v397 = vshll.u32 %v353, 16
      %v399 = vrot.slane %v397, 1
      %v400 = vor.u32 %v395, %v399
      %v435 = vunpack.c.l.b16 %v355
      %v436 = vunpack.c.l.b16 %v356
      %v437 = vunpack.c.l.b16 %v357
      %v438 = vunpack.c.l.b16 %v358
      %v439 = vunpack.c.l.b16 %v359
      %v440 = vunpack.c.l.b16 %v360
      %v441 = vunpack.c.l.b16 %v361
      %v442 = vunpack.c.l.b16 %v362
      %v443 = vunpack.c.l.b16 %v363
      %v444 = vunpack.c.l.b16 %v364
      %v445 = vunpack.c.l.b16 %v365
      %v446 = vunpack.c.l.b16 %v366
      %v447 = vunpack.c.l.b16 %v367
      %v448 = vunpack.c.l.b16 %v368
      %v449 = vunpack.c.l.b16 %v369
      %v450 = vunpack.c.l.b16 %v370
      %v451 = vunpack.c.l.b16 %v371
      %v452 = vunpack.c.l.b16 %v372
      %v453 = vunpack.c.l.b16 %v373
      %v454 = vunpack.c.l.b16 %v374
      %v455 = vunpack.c.l.b16 %v375
      %v456 = vunpack.c.l.b16 %v376
      %v457 = vunpack.c.l.b16 %v377
      %v458 = vunpack.c.l.b16 %v378
      %v459 = vunpack.c.l.b16 %v379
      %v460 = vunpack.c.l.b16 %v380
      %v461 = vunpack.c.l.b16 %v381
      %v462 = vunpack.c.l.b16 %v382
      %v463 = vunpack.c.l.b16 %v383
      %v464 = vunpack.c.l.b16 %v384
      %v465 = vunpack.c.l.b16 %v385
      %v466 = vunpack.c.l.b16 %v386
      %v467 = vpack.c.b16 %v436, %v435
      %v468 = vpack.c.b16 %v438, %v437
      %v469 = vpack.c.b16 %v440, %v439
      %v470 = vpack.c.b16 %v442, %v441
      %v471 = vpack.c.b16 %v444, %v443
      %v472 = vpack.c.b16 %v446, %v445
      %v473 = vpack.c.b16 %v448, %v447
      %v474 = vpack.c.b16 %v450, %v449
      %v475 = vpack.c.b16 %v452, %v451
      %v476 = vpack.c.b16 %v454, %v453
      %v477 = vpack.c.b16 %v456, %v455
      %v478 = vpack.c.b16 %v458, %v457
      %v479 = vpack.c.b16 %v460, %v459
      %v480 = vpack.c.b16 %v462, %v461
      %v481 = vpack.c.b16 %v464, %v463
      %v482 = vpack.c.b16 %v466, %v465
      %499 = vmatprep.subr.bf16.mxu0 0
      %500 = vmatpush1.bf16.msra.mxu0 %v474
      %501 = vmatprep.subr.bf16.mxu0 0
      %502 = vmatpush1.bf16.msra.mxu0 %v473
      %503 = vmatprep.subr.bf16.mxu0 0
      %504 = vmatpush1.bf16.msra.mxu0 %v472
      %505 = vmatprep.subr.bf16.mxu0 0
      %506 = vmatpush1.bf16.msra.mxu0 %v471
      %507 = vmatprep.subr.bf16.mxu0 0
      %508 = vmatpush1.bf16.msra.mxu0 %v470
      %509 = vmatprep.subr.bf16.mxu0 0
      %510 = vmatpush1.bf16.msra.mxu0 %v469
      %511 = vmatprep.subr.bf16.mxu0 0
      %512 = vmatpush1.bf16.msra.mxu0 %v468
      %513 = vmatprep.subr.bf16.mxu0 0
      %514 = vmatpush1.bf16.msra.mxu0 %v467
      %515 = vmatprep.subr.bf16.mxu0 0
      %516 = vmatpush2.bf16.msra.mxu0 %v482
      %517 = vmatprep.subr.bf16.mxu0 0
      %518 = vmatpush2.bf16.msra.mxu0 %v481
      %519 = vmatprep.subr.bf16.mxu0 0
      %520 = vmatpush2.bf16.msra.mxu0 %v480
      %521 = vmatprep.subr.bf16.mxu0 0
      %522 = vmatpush2.bf16.msra.mxu0 %v479
      %523 = vmatprep.subr.bf16.mxu0 0
      %524 = vmatpush2.bf16.msra.mxu0 %v478
      %525 = vmatprep.subr.bf16.mxu0 0
      %526 = vmatpush2.bf16.msra.mxu0 %v477
      %527 = vmatprep.subr.bf16.mxu0 0
      %528 = vmatpush2.bf16.msra.mxu0 %v476
      %529 = vmatprep.subr.bf16.mxu0 0
      %530 = vmatpush2.bf16.msra.mxu0 %v475
      %531 = vmatprep.mubr.bf16.mxu0 %v400
      %532 = vmatmul.mubr.bf16.gmra.mxu0 %v393
      %v533 = vpop.f32.mrf.mxu0
      %v534 = vadd.f32 0.0, %v533
      %v535 = vpop.f32.mrf.mxu0
      %v536 = vpop.f32.mrf.mxu0
      %v537 = vpop.f32.mrf.mxu0
      %538 = vdwg.mxu0
      %v539 = vadd.f32 %v351, %v534
      %s540 = scalar_lea.vmem %s1, 256
      %v541 = vld [vmem:[%s540] sm:$0xf]
      %v542 = vld [vmem:[%s540 + $0x4] sm:$0xf]
      %v543 = vld [vmem:[%s540 + $0x8] sm:$0xf]
      %v544 = vld [vmem:[%s540 + $0xc] sm:$0xf]
      %v545 = vld [vmem:[%s540 + $0x10] sm:$0xf]
      %v546 = vld [vmem:[%s540 + $0x14] sm:$0xf]
      %v547 = vld [vmem:[%s540 + $0x18] sm:$0xf]
      %v548 = vld [vmem:[%s540 + $0x1c] sm:$0xf]
      %v549 = vld [vmem:[%s540 + $0x20] sm:$0xf]
      %v550 = vld [vmem:[%s540 + $0x24] sm:$0xf]
      %v551 = vld [vmem:[%s540 + $0x28] sm:$0xf]
      %v552 = vld [vmem:[%s540 + $0x2c] sm:$0xf]
      %v553 = vld [vmem:[%s540 + $0x30] sm:$0xf]
      %v554 = vld [vmem:[%s540 + $0x34] sm:$0xf]
      %v555 = vld [vmem:[%s540 + $0x38] sm:$0xf]
      %v556 = vld [vmem:[%s540 + $0x3c] sm:$0xf]
      %v557 = vld [vmem:[%s540 + $0x40] sm:$0xf]
      %v558 = vld [vmem:[%s540 + $0x44] sm:$0xf]
      %v559 = vld [vmem:[%s540 + $0x48] sm:$0xf]
      %v560 = vld [vmem:[%s540 + $0x4c] sm:$0xf]
      %v561 = vld [vmem:[%s540 + $0x50] sm:$0xf]
      %v562 = vld [vmem:[%s540 + $0x54] sm:$0xf]
      %v563 = vld [vmem:[%s540 + $0x58] sm:$0xf]
      %v564 = vld [vmem:[%s540 + $0x5c] sm:$0xf]
      %v565 = vld [vmem:[%s540 + $0x60] sm:$0xf]
      %v566 = vld [vmem:[%s540 + $0x64] sm:$0xf]
      %v567 = vld [vmem:[%s540 + $0x68] sm:$0xf]
      %v568 = vld [vmem:[%s540 + $0x6c] sm:$0xf]
      %v569 = vld [vmem:[%s540 + $0x70] sm:$0xf]
      %v570 = vld [vmem:[%s540 + $0x74] sm:$0xf]
      %v571 = vld [vmem:[%s540 + $0x78] sm:$0xf]
      %v572 = vld [vmem:[%s540 + $0x7c] sm:$0xf]
      %v575 = vrot.slane %v352, 1
      %v576 = vrot.slane %v353, 1
      %v611 = vunpack.c.l.b16 %v541
      %v612 = vunpack.c.l.b16 %v542
      %v613 = vunpack.c.l.b16 %v543
      %v614 = vunpack.c.l.b16 %v544
      %v615 = vunpack.c.l.b16 %v545
      %v616 = vunpack.c.l.b16 %v546
      %v617 = vunpack.c.l.b16 %v547
      %v618 = vunpack.c.l.b16 %v548
      %v619 = vunpack.c.l.b16 %v549
      %v620 = vunpack.c.l.b16 %v550
      %v621 = vunpack.c.l.b16 %v551
      %v622 = vunpack.c.l.b16 %v552
      %v623 = vunpack.c.l.b16 %v553
      %v624 = vunpack.c.l.b16 %v554
      %v625 = vunpack.c.l.b16 %v555
      %v626 = vunpack.c.l.b16 %v556
      %v627 = vunpack.c.l.b16 %v557
      %v628 = vunpack.c.l.b16 %v558
      %v629 = vunpack.c.l.b16 %v559
      %v630 = vunpack.c.l.b16 %v560
      %v631 = vunpack.c.l.b16 %v561
      %v632 = vunpack.c.l.b16 %v562
      %v633 = vunpack.c.l.b16 %v563
      %v634 = vunpack.c.l.b16 %v564
      %v635 = vunpack.c.l.b16 %v565
      %v636 = vunpack.c.l.b16 %v566
      %v637 = vunpack.c.l.b16 %v567
      %v638 = vunpack.c.l.b16 %v568
      %v639 = vunpack.c.l.b16 %v569
      %v640 = vunpack.c.l.b16 %v570
      %v641 = vunpack.c.l.b16 %v571
      %v642 = vunpack.c.l.b16 %v572
      %v643 = vpack.c.b16 %v612, %v611
      %v644 = vpack.c.b16 %v614, %v613
      %v645 = vpack.c.b16 %v616, %v615
      %v646 = vpack.c.b16 %v618, %v617
      %v647 = vpack.c.b16 %v620, %v619
      %v648 = vpack.c.b16 %v622, %v621
      %v649 = vpack.c.b16 %v624, %v623
      %v650 = vpack.c.b16 %v626, %v625
      %v651 = vpack.c.b16 %v628, %v627
      %v652 = vpack.c.b16 %v630, %v629
      %v653 = vpack.c.b16 %v632, %v631
      %v654 = vpack.c.b16 %v634, %v633
      %v655 = vpack.c.b16 %v636, %v635
      %v656 = vpack.c.b16 %v638, %v637
      %v657 = vpack.c.b16 %v640, %v639
      %v658 = vpack.c.b16 %v642, %v641
      %675 = vmatprep.subr.bf16.mxu0 0
      %676 = vmatpush1.bf16.msra.mxu0 %v650
      %677 = vmatprep.subr.bf16.mxu0 0
      %678 = vmatpush1.bf16.msra.mxu0 %v649
      %679 = vmatprep.subr.bf16.mxu0 0
      %680 = vmatpush1.bf16.msra.mxu0 %v648
      %681 = vmatprep.subr.bf16.mxu0 0
      %682 = vmatpush1.bf16.msra.mxu0 %v647
      %683 = vmatprep.subr.bf16.mxu0 0
      %684 = vmatpush1.bf16.msra.mxu0 %v646
      %685 = vmatprep.subr.bf16.mxu0 0
      %686 = vmatpush1.bf16.msra.mxu0 %v645
      %687 = vmatprep.subr.bf16.mxu0 0
      %688 = vmatpush1.bf16.msra.mxu0 %v644
      %689 = vmatprep.subr.bf16.mxu0 0
      %690 = vmatpush1.bf16.msra.mxu0 %v643
      %691 = vmatprep.subr.bf16.mxu0 0
      %692 = vmatpush2.bf16.msra.mxu0 %v658
      %693 = vmatprep.subr.bf16.mxu0 0
      %694 = vmatpush2.bf16.msra.mxu0 %v657
      %695 = vmatprep.subr.bf16.mxu0 0
      %696 = vmatpush2.bf16.msra.mxu0 %v656
      %697 = vmatprep.subr.bf16.mxu0 0
      %698 = vmatpush2.bf16.msra.mxu0 %v655
      %699 = vmatprep.subr.bf16.mxu0 0
      %700 = vmatpush2.bf16.msra.mxu0 %v654
      %701 = vmatprep.subr.bf16.mxu0 0
      %702 = vmatpush2.bf16.msra.mxu0 %v653
      %703 = vmatprep.subr.bf16.mxu0 0
      %704 = vmatpush2.bf16.msra.mxu0 %v652
      %705 = vmatprep.subr.bf16.mxu0 0
      %706 = vmatpush2.bf16.msra.mxu0 %v651
      %707 = vmatprep.mubr.bf16.mxu0 %v576
      %708 = vmatmul.mubr.bf16.gmra.mxu0 %v575
      %v709 = vpop.f32.mrf.mxu0
      %v710 = vadd.f32 0.0, %v709
      %v711 = vpop.f32.mrf.mxu0
      %v712 = vpop.f32.mrf.mxu0
      %v713 = vpop.f32.mrf.mxu0
      %714 = vdwg.mxu0
      %v715 = vadd.f32 %v539, %v710
      %716 = vst [vmem:[%s168] sm:$0xff] %v715
      %p717 = scmp.lt.s32.totalorder %s14, 1
      %s718 = scalar_select %p717, %s14, 1
      %s719 = smul.addr %s718, 8
      %s720 = scalar_lea.vmem %s3, %s719
      // Predicated region
      $region33: #{spatial_transformer_human_vqvae_forward.22} parent=31 // pred_check
        %p721 = pneg %p100
      $region34: #{spatial_transformer_human_vqvae_forward.22} parent=31 // pred_check_branch
        %723 = sbr.rel (%p721) target = $region36
      $region35: #{spatial_transformer_human_vqvae_forward.22} parent=31 // pred_region
        _
      $region36: #{spatial_transformer_human_vqvae_forward.22} parent=31 // pred_fallthru
        _
    $region32: #{spatial_transformer_human_vqvae_forward.22} parent=5 // pred_fallthru
      _
    %p724 = scmp.le.s32.totalorder 2, %s9
    // Predicated region
    $region37: #{spatial_transformer_human_vqvae_forward.22} parent=5 // pred_check
      %p725 = pneg %p724
    $region38: #{spatial_transformer_human_vqvae_forward.22} parent=5 // pred_check_branch
      %727 = sbr.rel (%p725) target = $region40
    $region39: #{spatial_transformer_human_vqvae_forward.22} parent=5 // pred_region
      %s728 = ssub.s32 %s9, 2
      // Predicated region
      $region41: #{spatial_transformer_human_vqvae_forward.22} parent=39 // pred_check
        %p729 = pneg %p106
      $region42: #{spatial_transformer_human_vqvae_forward.22} parent=39 // pred_check_branch
        %731 = sbr.rel (%p729) target = $region44
      $region43: #{spatial_transformer_human_vqvae_forward.22} parent=39 // pred_region
        %p732 = scmp.lt.s32.totalorder %s15, 1
        %s733 = scalar_select %p732, %s15, 1
        %s734 = smul.addr %s733, 8
        %s735 = scalar_lea.vmem %s3, %s734
      $region44: #{spatial_transformer_human_vqvae_forward.22} parent=39 // pred_fallthru
        _
    $region40: #{spatial_transformer_human_vqvae_forward.22} parent=5 // pred_fallthru
      _
  $region6: #{spatial_transformer_human_vqvae_forward.22} parent=0 // loop_footer
    %s13 = sadd.s32 1, %s9
  $region7: #{spatial_transformer_human_vqvae_forward.22} parent=0 // loop_footer_branch
    %8 = sbr.rel target = $region3
  $region8: #{spatial_transformer_human_vqvae_forward.22} parent=0 // loop_exit
    _

// kernel: spatial_transformer_human_vqvae_forward.23
$region0: #{spatial_transformer_human_vqvae_forward.23}
  #allocation0 [shape = 'u32[]', space=smem, size = 0x4, offset = 0x4, fixed_abs, tag = 'smem constant byte address 0x4 - core index']
  #allocation1 [shape = 'u32[144,128]{1,0:T(1,128)}', space=vmem, size = 0x12000, scoped, tag = 'internal scratch']
  %s0 = inlined_call_operand.vmem [shape: f32[2,14,128], index: 0, kind: input, shape index: {}]
  %s1 = inlined_call_operand.vmem [shape: bf16[3,128,128], index: 1, kind: input, shape index: {}]
  %s2 = inlined_call_operand.vmem [shape: f32[1,128], index: 2, kind: input, shape index: {}]
  %s3 = inlined_call_operand.vmem [shape: bf16[1,128,128], index: 3, kind: input, shape index: {}]
  %s4 = inlined_call_operand.vmem [shape: f32[1,128], index: 4, kind: input, shape index: {}]
  %s5 = inlined_call_operand.vmem [shape: f32[2,8,128], index: 5, kind: output, shape index: {}]
  %s6 = sld [smem:[#allocation0]]
  $region53: #{spatial_transformer_human_vqvae_forward.23} parent=0
    _
  %s8 = ssub.s32 1, %s6
  %s9 = scalar_select 0, %s8, %s6
  loop: start=0, step=1, limit=4
  $region2: #{spatial_transformer_human_vqvae_forward.23} parent=0 // loop_pre_header
    _
  $region3: #{spatial_transformer_human_vqvae_forward.23} parent=0 // loop_header
    %s11 = sphi 0, %s15
    %p12 = scmp.ge.s32.totalorder %s11, 4
    %s21 = sphi 0, %s23
    %s24 = sphi 0, %s21
    %s25 = sphi 0, %s24
    %s41 = sphi 0, %s25
    %s45 = sphi 0, %s45
    %s47 = sphi 0, %s45
    %s48 = sphi 0, %s47
    %s62 = sphi 0, %s48
    %s66 = sphi 0, %s66
    %s68 = sphi 0, %s66
    %s69 = sphi 0, %s68
    %s83 = sphi 0, %s69
    %s87 = sphi 0, %s87
    %s89 = sphi 0, %s87
    %s90 = sphi 0, %s89
    %s104 = sphi 0, %s90
    %s108 = sphi 0, %s108
    %s110 = sphi 0, %s108
    %s111 = sphi 0, %s110
    %s125 = sphi 0, %s111
    %s131 = sphi 0, %s133
    %s134 = sphi 0, %s131
    %s135 = sphi 0, %s134
    %s151 = sphi 0, %s135
  $region4: #{spatial_transformer_human_vqvae_forward.23} parent=0 // loop_header_branch
    %14 = sbr.rel (%p12) target = $region8
  $region5: #{spatial_transformer_human_vqvae_forward.23} parent=0 // loop_body
    %s16 = ssub.s32 %s11, 1
    %s17 = ssub.s32 %s11, 2
    %s18 = sadd.s32 %s11, 1
    %s19 = ssub.s32 %s11, %s18
    %p20 = scmp.eq.s32.totalorder %s19, 0
    %s22 = sadd.s32 %s21, 1
    %s23 = scalar_select %p20, %s21, %s22
    %p26 = pneg %p20
    %p27 = scmp.eq.s32.totalorder %s11, 1
    %p28 = por %p26, %p27
    %p29 = scmp.ne.s32.totalorder %s21, %s24
    %p30 = scmp.eq.s32.totalorder %s11, 0
    %p31 = por %p29, %p30
    %p32 = scmp.ne.s32.totalorder %s21, %s24
    %p33 = scmp.eq.s32.totalorder %s16, 1
    %p34 = por %p32, %p33
    %p35 = scmp.ne.s32.totalorder %s24, %s25
    %p36 = scmp.eq.s32.totalorder %s16, 0
    %p37 = por %p35, %p36
    %p38 = scmp.ne.s32.totalorder %s24, %s25
    %p39 = scmp.eq.s32.totalorder %s17, 1
    %p40 = por %p38, %p39
    %p42 = scmp.ne.s32.totalorder %s25, %s41
    %p43 = scmp.eq.s32.totalorder %s17, 0
    %p44 = por %p42, %p43
    %s46 = sadd.s32 %s45, 1
    %p49 = scmp.eq.s32.totalorder %s11, 1
    %p50 = scmp.ne.s32.totalorder %s45, %s47
    %p51 = scmp.eq.s32.totalorder %s11, 0
    %p52 = por %p50, %p51
    %p53 = scmp.ne.s32.totalorder %s45, %s47
    %p54 = scmp.eq.s32.totalorder %s16, 1
    %p55 = por %p53, %p54
    %p56 = scmp.ne.s32.totalorder %s47, %s48
    %p57 = scmp.eq.s32.totalorder %s16, 0
    %p58 = por %p56, %p57
    %p59 = scmp.ne.s32.totalorder %s47, %s48
    %p60 = scmp.eq.s32.totalorder %s17, 1
    %p61 = por %p59, %p60
    %p63 = scmp.ne.s32.totalorder %s48, %s62
    %p64 = scmp.eq.s32.totalorder %s17, 0
    %p65 = por %p63, %p64
    %s67 = sadd.s32 %s66, 1
    %p70 = scmp.eq.s32.totalorder %s11, 1
    %p71 = scmp.ne.s32.totalorder %s66, %s68
    %p72 = scmp.eq.s32.totalorder %s11, 0
    %p73 = por %p71, %p72
    %p74 = scmp.ne.s32.totalorder %s66, %s68
    %p75 = scmp.eq.s32.totalorder %s16, 1
    %p76 = por %p74, %p75
    %p77 = scmp.ne.s32.totalorder %s68, %s69
    %p78 = scmp.eq.s32.totalorder %s16, 0
    %p79 = por %p77, %p78
    %p80 = scmp.ne.s32.totalorder %s68, %s69
    %p81 = scmp.eq.s32.totalorder %s17, 1
    %p82 = por %p80, %p81
    %p84 = scmp.ne.s32.totalorder %s69, %s83
    %p85 = scmp.eq.s32.totalorder %s17, 0
    %p86 = por %p84, %p85
    %s88 = sadd.s32 %s87, 1
    %p91 = scmp.eq.s32.totalorder %s11, 1
    %p92 = scmp.ne.s32.totalorder %s87, %s89
    %p93 = scmp.eq.s32.totalorder %s11, 0
    %p94 = por %p92, %p93
    %p95 = scmp.ne.s32.totalorder %s87, %s89
    %p96 = scmp.eq.s32.totalorder %s16, 1
    %p97 = por %p95, %p96
    %p98 = scmp.ne.s32.totalorder %s89, %s90
    %p99 = scmp.eq.s32.totalorder %s16, 0
    %p100 = por %p98, %p99
    %p101 = scmp.ne.s32.totalorder %s89, %s90
    %p102 = scmp.eq.s32.totalorder %s17, 1
    %p103 = por %p101, %p102
    %p105 = scmp.ne.s32.totalorder %s90, %s104
    %p106 = scmp.eq.s32.totalorder %s17, 0
    %p107 = por %p105, %p106
    %s109 = sadd.s32 %s108, 1
    %p112 = scmp.eq.s32.totalorder %s11, 1
    %p113 = scmp.ne.s32.totalorder %s108, %s110
    %p114 = scmp.eq.s32.totalorder %s11, 0
    %p115 = por %p113, %p114
    %p116 = scmp.ne.s32.totalorder %s108, %s110
    %p117 = scmp.eq.s32.totalorder %s16, 1
    %p118 = por %p116, %p117
    %p119 = scmp.ne.s32.totalorder %s110, %s111
    %p120 = scmp.eq.s32.totalorder %s16, 0
    %p121 = por %p119, %p120
    %p122 = scmp.ne.s32.totalorder %s110, %s111
    %p123 = scmp.eq.s32.totalorder %s17, 1
    %p124 = por %p122, %p123
    %p126 = scmp.ne.s32.totalorder %s111, %s125
    %p127 = scmp.eq.s32.totalorder %s17, 0
    %p128 = por %p126, %p127
    %s129 = ssub.s32 %s11, %s18
    %p130 = scmp.eq.s32.totalorder %s129, 0
    %s132 = sadd.s32 %s131, 1
    %s133 = scalar_select %p130, %s131, %s132
    %p136 = pneg %p130
    %p137 = scmp.eq.s32.totalorder %s11, 1
    %p138 = por %p136, %p137
    %p139 = scmp.ne.s32.totalorder %s131, %s134
    %p140 = scmp.eq.s32.totalorder %s11, 0
    %p141 = por %p139, %p140
    %p142 = scmp.ne.s32.totalorder %s131, %s134
    %p143 = scmp.eq.s32.totalorder %s16, 1
    %p144 = por %p142, %p143
    %p145 = scmp.ne.s32.totalorder %s134, %s135
    %p146 = scmp.eq.s32.totalorder %s16, 0
    %p147 = por %p145, %p146
    %p148 = scmp.ne.s32.totalorder %s134, %s135
    %p149 = scmp.eq.s32.totalorder %s17, 1
    %p150 = por %p148, %p149
    %p152 = scmp.ne.s32.totalorder %s135, %s151
    %p153 = scmp.eq.s32.totalorder %s17, 0
    %p154 = por %p152, %p153
    %p155 = scmp.le.s32.totalorder 1, %s11
    %p156 = scmp.lt.s32.totalorder %s11, 3
    %p157 = pnand %p155, %p156
    %p158 = pneg %p157
    // Predicated region
    $region9: #{spatial_transformer_human_vqvae_forward.23} parent=5 // pred_check
      _
    $region10: #{spatial_transformer_human_vqvae_forward.23} parent=5 // pred_check_branch
      %160 = sbr.rel (%p157) target = $region12
    $region11: #{spatial_transformer_human_vqvae_forward.23} parent=5 // pred_region
      %s161 = ssub.s32 %s11, 1
      // Predicated region
      $region13: #{spatial_transformer_human_vqvae_forward.23} parent=11 // pred_check
        %p162 = pneg %p58
      $region14: #{spatial_transformer_human_vqvae_forward.23} parent=11 // pred_check_branch
        %164 = sbr.rel (%p162) target = $region16
      $region15: #{spatial_transformer_human_vqvae_forward.23} parent=11 // pred_region
        _
      $region16: #{spatial_transformer_human_vqvae_forward.23} parent=11 // pred_fallthru
        _
      // Predicated region
      $region17: #{spatial_transformer_human_vqvae_forward.23} parent=11 // pred_check
        %p165 = pneg %p79
      $region18: #{spatial_transformer_human_vqvae_forward.23} parent=11 // pred_check_branch
        %167 = sbr.rel (%p165) target = $region20
      $region19: #{spatial_transformer_human_vqvae_forward.23} parent=11 // pred_region
        _
      $region20: #{spatial_transformer_human_vqvae_forward.23} parent=11 // pred_fallthru
        _
      // Predicated region
      $region21: #{spatial_transformer_human_vqvae_forward.23} parent=11 // pred_check
        %p168 = pneg %p100
      $region22: #{spatial_transformer_human_vqvae_forward.23} parent=11 // pred_check_branch
        %170 = sbr.rel (%p168) target = $region24
      $region23: #{spatial_transformer_human_vqvae_forward.23} parent=11 // pred_region
        _
      $region24: #{spatial_transformer_human_vqvae_forward.23} parent=11 // pred_fallthru
        _
      // Predicated region
      $region25: #{spatial_transformer_human_vqvae_forward.23} parent=11 // pred_check
        %p171 = pneg %p121
      $region26: #{spatial_transformer_human_vqvae_forward.23} parent=11 // pred_check_branch
        %173 = sbr.rel (%p171) target = $region28
      $region27: #{spatial_transformer_human_vqvae_forward.23} parent=11 // pred_region
        _
      $region28: #{spatial_transformer_human_vqvae_forward.23} parent=11 // pred_fallthru
        _
    $region12: #{spatial_transformer_human_vqvae_forward.23} parent=5 // pred_fallthru
      _
    %p174 = scmp.lt.s32.totalorder %s11, 2
    // Predicated region
    $region29: #{spatial_transformer_human_vqvae_forward.23} parent=5 // pred_check
      %p175 = pneg %p174
    $region30: #{spatial_transformer_human_vqvae_forward.23} parent=5 // pred_check_branch
      %177 = sbr.rel (%p175) target = $region32
    $region31: #{spatial_transformer_human_vqvae_forward.23} parent=5 // pred_region
      // Predicated region
      $region33: #{spatial_transformer_human_vqvae_forward.23} parent=31 // pred_check
        %p178 = pneg %p31
      $region34: #{spatial_transformer_human_vqvae_forward.23} parent=31 // pred_check_branch
        %180 = sbr.rel (%p178) target = $region36
      $region35: #{spatial_transformer_human_vqvae_forward.23} parent=31 // pred_region
        %p181 = scmp.lt.s32.totalorder %s11, 1
        %s182 = scalar_select %p181, %s11, 1
        %s183 = smul.addr %s182, 2
        %s184 = smul.addr %s183, 8
        %s185 = scalar_lea.vmem %s0, %s184
      $region36: #{spatial_transformer_human_vqvae_forward.23} parent=31 // pred_fallthru
        _
    $region32: #{spatial_transformer_human_vqvae_forward.23} parent=5 // pred_fallthru
      _
    %p186 = scmp.le.s32.totalorder 1, %s11
    %p187 = scmp.lt.s32.totalorder %s11, 3
    %p188 = pnand %p186, %p187
    %p189 = pneg %p188
    // Predicated region
    $region37: #{spatial_transformer_human_vqvae_forward.23} parent=5 // pred_check
      _
    $region38: #{spatial_transformer_human_vqvae_forward.23} parent=5 // pred_check_branch
      %191 = sbr.rel (%p188) target = $region40
    $region39: #{spatial_transformer_human_vqvae_forward.23} parent=5 // pred_region
      %s192 = ssub.s32 %s11, 1
      %p193 = scmp.lt.s32.totalorder %s16, 1
      %s194 = scalar_select %p193, %s16, 1
      %s195 = smul.addr %s194, 2
      %s196 = smul.addr %s195, 8
      %s197 = scalar_lea.vmem %s0, %s196
      %p198 = pneg %p37
      %p199 = pneg %p34
      %p200 = pneg %p58
      %p201 = pneg %p55
      %p202 = pneg %p79
      %p203 = pneg %p76
      %p204 = pneg %p100
      %p205 = pneg %p97
      %p206 = pneg %p121
      %p207 = pneg %p118
      %p208 = pneg %p147
      %p209 = pneg %p144
      %p210 = scmp.lt.s32.totalorder %s16, 1
      %s211 = scalar_select %p210, %s16, 1
      %s212 = smul.addr %s211, 8
      %s213 = scalar_lea.vmem %s5, %s212
      %p214 = scmp.lt.s32.totalorder %s16, 1
      %s215 = scalar_select %p214, %s16, 1
      %s216 = smul.addr %s215, 2
      %s217 = smul.addr %s216, 8
      %s218 = scalar_lea.vmem %s0, %s217
      %p219 = scmp.lt.s32.totalorder %s16, 1
      %s220 = scalar_select %p219, %s16, 1
      %s221 = smul.addr %s220, 8
      %s222 = scalar_lea.vmem %s5, %s221
      %v224 = vld [vmem:[%s218] sm:$0xff]
      %v225 = vld [vmem:[%s218 + $0x8] sm:$0x3f]
      %v226 = vmax.f32 %v224, 0.0
      %v227 = vmax.f32 %v225, 0.0
      %v228 = vld [vmem:[%s2] sm:$0x1]
      %v229 = vpack.c.bf16 %v226, %v226
      %v230 = vld [vmem:[%s1] sm:$0xf]
      %v231 = vld [vmem:[%s1 + $0x4] sm:$0xf]
      %v232 = vld [vmem:[%s1 + $0x8] sm:$0xf]
      %v233 = vld [vmem:[%s1 + $0xc] sm:$0xf]
      %v234 = vld [vmem:[%s1 + $0x10] sm:$0xf]
      %v235 = vld [vmem:[%s1 + $0x14] sm:$0xf]
      %v236 = vld [vmem:[%s1 + $0x18] sm:$0xf]
      %v237 = vld [vmem:[%s1 + $0x1c] sm:$0xf]
      %v238 = vld [vmem:[%s1 + $0x20] sm:$0xf]
      %v239 = vld [vmem:[%s1 + $0x24] sm:$0xf]
      %v240 = vld [vmem:[%s1 + $0x28] sm:$0xf]
      %v241 = vld [vmem:[%s1 + $0x2c] sm:$0xf]
      %v242 = vld [vmem:[%s1 + $0x30] sm:$0xf]
      %v243 = vld [vmem:[%s1 + $0x34] sm:$0xf]
      %v244 = vld [vmem:[%s1 + $0x38] sm:$0xf]
      %v245 = vld [vmem:[%s1 + $0x3c] sm:$0xf]
      %v262 = vunpack.c.l.b16 %v230
      %v263 = vunpack.c.l.b16 %v231
      %v264 = vunpack.c.l.b16 %v232
      %v265 = vunpack.c.l.b16 %v233
      %v266 = vunpack.c.l.b16 %v234
      %v267 = vunpack.c.l.b16 %v235
      %v268 = vunpack.c.l.b16 %v236
      %v269 = vunpack.c.l.b16 %v237
      %v270 = vunpack.c.l.b16 %v238
      %v271 = vunpack.c.l.b16 %v239
      %v272 = vunpack.c.l.b16 %v240
      %v273 = vunpack.c.l.b16 %v241
      %v274 = vunpack.c.l.b16 %v242
      %v275 = vunpack.c.l.b16 %v243
      %v276 = vunpack.c.l.b16 %v244
      %v277 = vunpack.c.l.b16 %v245
      %v278 = vpack.c.b16 %v263, %v262
      %v279 = vpack.c.b16 %v265, %v264
      %v280 = vpack.c.b16 %v267, %v266
      %v281 = vpack.c.b16 %v269, %v268
      %v282 = vpack.c.b16 %v271, %v270
      %v283 = vpack.c.b16 %v273, %v272
      %v284 = vpack.c.b16 %v275, %v274
      %v285 = vpack.c.b16 %v277, %v276
      %294 = vmatprep.subr.bf16.mxu0 0
      %295 = vmatpush1.bf16.msra.mxu0 %v285
      %296 = vmatprep.subr.bf16.mxu0 0
      %297 = vmatpush1.bf16.msra.mxu0 %v284
      %298 = vmatprep.subr.bf16.mxu0 0
      %299 = vmatpush1.bf16.msra.mxu0 %v283
      %300 = vmatprep.subr.bf16.mxu0 0
      %301 = vmatpush1.bf16.msra.mxu0 %v282
      %302 = vmatprep.subr.bf16.mxu0 0
      %303 = vmatpush1.bf16.msra.mxu0 %v281
      %304 = vmatprep.subr.bf16.mxu0 0
      %305 = vmatpush1.bf16.msra.mxu0 %v280
      %306 = vmatprep.subr.bf16.mxu0 0
      %307 = vmatpush1.bf16.msra.mxu0 %v279
      %308 = vmatprep.subr.bf16.mxu0 0
      %309 = vmatpush1.bf16.msra.mxu0 %v278
      %310 = vmatprep.subr.bf16.mxu0 0
      %311 = vmatpush2.bf16.msra.mxu0 0
      %312 = vmatprep.subr.bf16.mxu0 0
      %313 = vmatpush2.bf16.msra.mxu0 0
      %314 = vmatprep.subr.bf16.mxu0 0
      %315 = vmatpush2.bf16.msra.mxu0 0
      %316 = vmatprep.subr.bf16.mxu0 0
      %317 = vmatpush2.bf16.msra.mxu0 0
      %318 = vmatprep.subr.bf16.mxu0 0
      %319 = vmatpush2.bf16.msra.mxu0 0
      %320 = vmatprep.subr.bf16.mxu0 0
      %321 = vmatpush2.bf16.msra.mxu0 0
      %322 = vmatprep.subr.bf16.mxu0 0
      %323 = vmatpush2.bf16.msra.mxu0 0
      %324 = vmatprep.subr.bf16.mxu0 0
      %325 = vmatpush2.bf16.msra.mxu0 0
      %326 = vmatprep.mubr.bf16.mxu0 0
      %327 = vmatmul.mubr.bf16.gmra.mxu0 %v229
      %v328 = vpop.f32.mrf.mxu0
      %v329 = vadd.f32 0.0, %v328
      %v330 = vpop.f32.mrf.mxu0
      %v331 = vpop.f32.mrf.mxu0
      %v332 = vpop.f32.mrf.mxu0
      %333 = vdwg.mxu0
      %v335 = vlaneseq
      %v336 = vshrl.u32 %v335, 7
      %v337 = vsub.s32 0, %v336
      %v338 = vrot.slane %v228, %v337
      %v340 = vadd.f32 %v338, %v329
      %v341 = vpack.c.bf16 %v227, %v226
      %s342 = scalar_lea.vmem %s1, 64
      %v343 = vld [vmem:[%s342] sm:$0xf]
      %v344 = vld [vmem:[%s342 + $0x4] sm:$0xf]
      %v345 = vld [vmem:[%s342 + $0x8] sm:$0xf]
      %v346 = vld [vmem:[%s342 + $0xc] sm:$0xf]
      %v347 = vld [vmem:[%s342 + $0x10] sm:$0xf]
      %v348 = vld [vmem:[%s342 + $0x14] sm:$0xf]
      %v349 = vld [vmem:[%s342 + $0x18] sm:$0xf]
      %v350 = vld [vmem:[%s342 + $0x1c] sm:$0xf]
      %v351 = vld [vmem:[%s342 + $0x20] sm:$0xf]
      %v352 = vld [vmem:[%s342 + $0x24] sm:$0xf]
      %v353 = vld [vmem:[%s342 + $0x28] sm:$0xf]
      %v354 = vld [vmem:[%s342 + $0x2c] sm:$0xf]
      %v355 = vld [vmem:[%s342 + $0x30] sm:$0xf]
      %v356 = vld [vmem:[%s342 + $0x34] sm:$0xf]
      %v357 = vld [vmem:[%s342 + $0x38] sm:$0xf]
      %v358 = vld [vmem:[%s342 + $0x3c] sm:$0xf]
      %v360 = vshrl.u32 %v341, 16
      %v362 = vrot.slane %v360, 1
      %v363 = vshll.u32 %v341, 16
      %v365 = vrot.slane %v363, 2
      %v366 = vor.u32 %v362, %v365
      %v384 = vunpack.c.l.b16 %v343
      %v385 = vunpack.c.l.b16 %v344
      %v386 = vunpack.c.l.b16 %v345
      %v387 = vunpack.c.l.b16 %v346
      %v388 = vunpack.c.l.b16 %v347
      %v389 = vunpack.c.l.b16 %v348
      %v390 = vunpack.c.l.b16 %v349
      %v391 = vunpack.c.l.b16 %v350
      %v392 = vunpack.c.l.b16 %v351
      %v393 = vunpack.c.l.b16 %v352
      %v394 = vunpack.c.l.b16 %v353
      %v395 = vunpack.c.l.b16 %v354
      %v396 = vunpack.c.l.b16 %v355
      %v397 = vunpack.c.l.b16 %v356
      %v398 = vunpack.c.l.b16 %v357
      %v399 = vunpack.c.l.b16 %v358
      %v400 = vpack.c.b16 %v385, %v384
      %v401 = vpack.c.b16 %v387, %v386
      %v402 = vpack.c.b16 %v389, %v388
      %v403 = vpack.c.b16 %v391, %v390
      %v404 = vpack.c.b16 %v393, %v392
      %v405 = vpack.c.b16 %v395, %v394
      %v406 = vpack.c.b16 %v397, %v396
      %v407 = vpack.c.b16 %v399, %v398
      %416 = vmatprep.subr.bf16.mxu0 0
      %417 = vmatpush1.bf16.msra.mxu0 %v407
      %418 = vmatprep.subr.bf16.mxu0 0
      %419 = vmatpush1.bf16.msra.mxu0 %v406
      %420 = vmatprep.subr.bf16.mxu0 0
      %421 = vmatpush1.bf16.msra.mxu0 %v405
      %422 = vmatprep.subr.bf16.mxu0 0
      %423 = vmatpush1.bf16.msra.mxu0 %v404
      %424 = vmatprep.subr.bf16.mxu0 0
      %425 = vmatpush1.bf16.msra.mxu0 %v403
      %426 = vmatprep.subr.bf16.mxu0 0
      %427 = vmatpush1.bf16.msra.mxu0 %v402
      %428 = vmatprep.subr.bf16.mxu0 0
      %429 = vmatpush1.bf16.msra.mxu0 %v401
      %430 = vmatprep.subr.bf16.mxu0 0
      %431 = vmatpush1.bf16.msra.mxu0 %v400
      %432 = vmatprep.subr.bf16.mxu0 0
      %433 = vmatpush2.bf16.msra.mxu0 0
      %434 = vmatprep.subr.bf16.mxu0 0
      %435 = vmatpush2.bf16.msra.mxu0 0
      %436 = vmatprep.subr.bf16.mxu0 0
      %437 = vmatpush2.bf16.msra.mxu0 0
      %438 = vmatprep.subr.bf16.mxu0 0
      %439 = vmatpush2.bf16.msra.mxu0 0
      %440 = vmatprep.subr.bf16.mxu0 0
      %441 = vmatpush2.bf16.msra.mxu0 0
      %442 = vmatprep.subr.bf16.mxu0 0
      %443 = vmatpush2.bf16.msra.mxu0 0
      %444 = vmatprep.subr.bf16.mxu0 0
      %445 = vmatpush2.bf16.msra.mxu0 0
      %446 = vmatprep.subr.bf16.mxu0 0
      %447 = vmatpush2.bf16.msra.mxu0 0
      %448 = vmatprep.mubr.bf16.mxu0 0
      %449 = vmatmul.mubr.bf16.gmra.mxu0 %v366
      %v450 = vpop.f32.mrf.mxu0
      %v451 = vadd.f32 0.0, %v450
      %v452 = vpop.f32.mrf.mxu0
      %v453 = vpop.f32.mrf.mxu0
      %v454 = vpop.f32.mrf.mxu0
      %455 = vdwg.mxu0
      %v456 = vadd.f32 %v340, %v451
      %s457 = scalar_lea.vmem %s1, 128
      %v458 = vld [vmem:[%s457] sm:$0xf]
      %v459 = vld [vmem:[%s457 + $0x4] sm:$0xf]
      %v460 = vld [vmem:[%s457 + $0x8] sm:$0xf]
      %v461 = vld [vmem:[%s457 + $0xc] sm:$0xf]
      %v462 = vld [vmem:[%s457 + $0x10] sm:$0xf]
      %v463 = vld [vmem:[%s457 + $0x14] sm:$0xf]
      %v464 = vld [vmem:[%s457 + $0x18] sm:$0xf]
      %v465 = vld [vmem:[%s457 + $0x1c] sm:$0xf]
      %v466 = vld [vmem:[%s457 + $0x20] sm:$0xf]
      %v467 = vld [vmem:[%s457 + $0x24] sm:$0xf]
      %v468 = vld [vmem:[%s457 + $0x28] sm:$0xf]
      %v469 = vld [vmem:[%s457 + $0x2c] sm:$0xf]
      %v470 = vld [vmem:[%s457 + $0x30] sm:$0xf]
      %v471 = vld [vmem:[%s457 + $0x34] sm:$0xf]
      %v472 = vld [vmem:[%s457 + $0x38] sm:$0xf]
      %v473 = vld [vmem:[%s457 + $0x3c] sm:$0xf]
      %v475 = vrot.slane %v341, 3
      %v493 = vunpack.c.l.b16 %v458
      %v494 = vunpack.c.l.b16 %v459
      %v495 = vunpack.c.l.b16 %v460
      %v496 = vunpack.c.l.b16 %v461
      %v497 = vunpack.c.l.b16 %v462
      %v498 = vunpack.c.l.b16 %v463
      %v499 = vunpack.c.l.b16 %v464
      %v500 = vunpack.c.l.b16 %v465
      %v501 = vunpack.c.l.b16 %v466
      %v502 = vunpack.c.l.b16 %v467
      %v503 = vunpack.c.l.b16 %v468
      %v504 = vunpack.c.l.b16 %v469
      %v505 = vunpack.c.l.b16 %v470
      %v506 = vunpack.c.l.b16 %v471
      %v507 = vunpack.c.l.b16 %v472
      %v508 = vunpack.c.l.b16 %v473
      %v509 = vpack.c.b16 %v494, %v493
      %v510 = vpack.c.b16 %v496, %v495
      %v511 = vpack.c.b16 %v498, %v497
      %v512 = vpack.c.b16 %v500, %v499
      %v513 = vpack.c.b16 %v502, %v501
      %v514 = vpack.c.b16 %v504, %v503
      %v515 = vpack.c.b16 %v506, %v505
      %v516 = vpack.c.b16 %v508, %v507
      %525 = vmatprep.subr.bf16.mxu0 0
      %526 = vmatpush1.bf16.msra.mxu0 %v516
      %527 = vmatprep.subr.bf16.mxu0 0
      %528 = vmatpush1.bf16.msra.mxu0 %v515
      %529 = vmatprep.subr.bf16.mxu0 0
      %530 = vmatpush1.bf16.msra.mxu0 %v514
      %531 = vmatprep.subr.bf16.mxu0 0
      %532 = vmatpush1.bf16.msra.mxu0 %v513
      %533 = vmatprep.subr.bf16.mxu0 0
      %534 = vmatpush1.bf16.msra.mxu0 %v512
      %535 = vmatprep.subr.bf16.mxu0 0
      %536 = vmatpush1.bf16.msra.mxu0 %v511
      %537 = vmatprep.subr.bf16.mxu0 0
      %538 = vmatpush1.bf16.msra.mxu0 %v510
      %539 = vmatprep.subr.bf16.mxu0 0
      %540 = vmatpush1.bf16.msra.mxu0 %v509
      %541 = vmatprep.subr.bf16.mxu0 0
      %542 = vmatpush2.bf16.msra.mxu0 0
      %543 = vmatprep.subr.bf16.mxu0 0
      %544 = vmatpush2.bf16.msra.mxu0 0
      %545 = vmatprep.subr.bf16.mxu0 0
      %546 = vmatpush2.bf16.msra.mxu0 0
      %547 = vmatprep.subr.bf16.mxu0 0
      %548 = vmatpush2.bf16.msra.mxu0 0
      %549 = vmatprep.subr.bf16.mxu0 0
      %550 = vmatpush2.bf16.msra.mxu0 0
      %551 = vmatprep.subr.bf16.mxu0 0
      %552 = vmatpush2.bf16.msra.mxu0 0
      %553 = vmatprep.subr.bf16.mxu0 0
      %554 = vmatpush2.bf16.msra.mxu0 0
      %555 = vmatprep.subr.bf16.mxu0 0
      %556 = vmatpush2.bf16.msra.mxu0 0
      %557 = vmatprep.mubr.bf16.mxu0 0
      %558 = vmatmul.mubr.bf16.gmra.mxu0 %v475
      %v559 = vpop.f32.mrf.mxu0
      %v560 = vadd.f32 0.0, %v559
      %v561 = vpop.f32.mrf.mxu0
      %v562 = vpop.f32.mrf.mxu0
      %v563 = vpop.f32.mrf.mxu0
      %564 = vdwg.mxu0
      %v565 = vadd.f32 %v456, %v560
      %v566 = vmax.f32 %v565, 0.0
      %v567 = vpack.c.bf16 %v566, %v566
      %v568 = vld [vmem:[%s4] sm:$0x1]
      %v569 = vld [vmem:[%s3] sm:$0xf]
      %v570 = vld [vmem:[%s3 + $0x4] sm:$0xf]
      %v571 = vld [vmem:[%s3 + $0x8] sm:$0xf]
      %v572 = vld [vmem:[%s3 + $0xc] sm:$0xf]
      %v573 = vld [vmem:[%s3 + $0x10] sm:$0xf]
      %v574 = vld [vmem:[%s3 + $0x14] sm:$0xf]
      %v575 = vld [vmem:[%s3 + $0x18] sm:$0xf]
      %v576 = vld [vmem:[%s3 + $0x1c] sm:$0xf]
      %v577 = vld [vmem:[%s3 + $0x20] sm:$0xf]
      %v578 = vld [vmem:[%s3 + $0x24] sm:$0xf]
      %v579 = vld [vmem:[%s3 + $0x28] sm:$0xf]
      %v580 = vld [vmem:[%s3 + $0x2c] sm:$0xf]
      %v581 = vld [vmem:[%s3 + $0x30] sm:$0xf]
      %v582 = vld [vmem:[%s3 + $0x34] sm:$0xf]
      %v583 = vld [vmem:[%s3 + $0x38] sm:$0xf]
      %v584 = vld [vmem:[%s3 + $0x3c] sm:$0xf]
      %v601 = vunpack.c.l.b16 %v569
      %v602 = vunpack.c.l.b16 %v570
      %v603 = vunpack.c.l.b16 %v571
      %v604 = vunpack.c.l.b16 %v572
      %v605 = vunpack.c.l.b16 %v573
      %v606 = vunpack.c.l.b16 %v574
      %v607 = vunpack.c.l.b16 %v575
      %v608 = vunpack.c.l.b16 %v576
      %v609 = vunpack.c.l.b16 %v577
      %v610 = vunpack.c.l.b16 %v578
      %v611 = vunpack.c.l.b16 %v579
      %v612 = vunpack.c.l.b16 %v580
      %v613 = vunpack.c.l.b16 %v581
      %v614 = vunpack.c.l.b16 %v582
      %v615 = vunpack.c.l.b16 %v583
      %v616 = vunpack.c.l.b16 %v584
      %v617 = vpack.c.b16 %v602, %v601
      %v618 = vpack.c.b16 %v604, %v603
      %v619 = vpack.c.b16 %v606, %v605
      %v620 = vpack.c.b16 %v608, %v607
      %v621 = vpack.c.b16 %v610, %v609
      %v622 = vpack.c.b16 %v612, %v611
      %v623 = vpack.c.b16 %v614, %v613
      %v624 = vpack.c.b16 %v616, %v615
      %633 = vmatprep.subr.bf16.mxu0 0
      %634 = vmatpush1.bf16.msra.mxu0 %v624
      %635 = vmatprep.subr.bf16.mxu0 0
      %636 = vmatpush1.bf16.msra.mxu0 %v623
      %637 = vmatprep.subr.bf16.mxu0 0
      %638 = vmatpush1.bf16.msra.mxu0 %v622
      %639 = vmatprep.subr.bf16.mxu0 0
      %640 = vmatpush1.bf16.msra.mxu0 %v621
      %641 = vmatprep.subr.bf16.mxu0 0
      %642 = vmatpush1.bf16.msra.mxu0 %v620
      %643 = vmatprep.subr.bf16.mxu0 0
      %644 = vmatpush1.bf16.msra.mxu0 %v619
      %645 = vmatprep.subr.bf16.mxu0 0
      %646 = vmatpush1.bf16.msra.mxu0 %v618
      %647 = vmatprep.subr.bf16.mxu0 0
      %648 = vmatpush1.bf16.msra.mxu0 %v617
      %649 = vmatprep.subr.bf16.mxu0 0
      %650 = vmatpush2.bf16.msra.mxu0 0
      %651 = vmatprep.subr.bf16.mxu0 0
      %652 = vmatpush2.bf16.msra.mxu0 0
      %653 = vmatprep.subr.bf16.mxu0 0
      %654 = vmatpush2.bf16.msra.mxu0 0
      %655 = vmatprep.subr.bf16.mxu0 0
      %656 = vmatpush2.bf16.msra.mxu0 0
      %657 = vmatprep.subr.bf16.mxu0 0
      %658 = vmatpush2.bf16.msra.mxu0 0
      %659 = vmatprep.subr.bf16.mxu0 0
      %660 = vmatpush2.bf16.msra.mxu0 0
      %661 = vmatprep.subr.bf16.mxu0 0
      %662 = vmatpush2.bf16.msra.mxu0 0
      %663 = vmatprep.subr.bf16.mxu0 0
      %664 = vmatpush2.bf16.msra.mxu0 0
      %665 = vmatprep.mubr.bf16.mxu0 0
      %666 = vmatmul.mubr.bf16.gmra.mxu0 %v567
      %v667 = vpop.f32.mrf.mxu0
      %v668 = vadd.f32 0.0, %v667
      %v669 = vpop.f32.mrf.mxu0
      %v670 = vpop.f32.mrf.mxu0
      %v671 = vpop.f32.mrf.mxu0
      %672 = vdwg.mxu0
      %v674 = vlaneseq
      %v675 = vshrl.u32 %v674, 7
      %v676 = vsub.s32 0, %v675
      %v677 = vrot.slane %v568, %v676
      %v679 = vadd.f32 %v677, %v668
      %vm682 = vcmask 1044480
      %v683 = vrot.slane %v224, 3
      %v684 = vrot.slane %v225, 3
      %v685 = vsel %vm682, %v683, %v684
      %v687 = vadd.f32 %v679, %v685
      %688 = vst [vmem:[%s222] sm:$0xff] %v687
      %p689 = scmp.lt.s32.totalorder %s16, 1
      %s690 = scalar_select %p689, %s16, 1
      %s691 = smul.addr %s690, 8
      %s692 = scalar_lea.vmem %s5, %s691
      // Predicated region
      $region41: #{spatial_transformer_human_vqvae_forward.23} parent=39 // pred_check
        %p693 = pneg %p144
      $region42: #{spatial_transformer_human_vqvae_forward.23} parent=39 // pred_check_branch
        %695 = sbr.rel (%p693) target = $region44
      $region43: #{spatial_transformer_human_vqvae_forward.23} parent=39 // pred_region
        _
      $region44: #{spatial_transformer_human_vqvae_forward.23} parent=39 // pred_fallthru
        _
    $region40: #{spatial_transformer_human_vqvae_forward.23} parent=5 // pred_fallthru
      _
    %p696 = scmp.le.s32.totalorder 2, %s11
    // Predicated region
    $region45: #{spatial_transformer_human_vqvae_forward.23} parent=5 // pred_check
      %p697 = pneg %p696
    $region46: #{spatial_transformer_human_vqvae_forward.23} parent=5 // pred_check_branch
      %699 = sbr.rel (%p697) target = $region48
    $region47: #{spatial_transformer_human_vqvae_forward.23} parent=5 // pred_region
      %s700 = ssub.s32 %s11, 2
      // Predicated region
      $region49: #{spatial_transformer_human_vqvae_forward.23} parent=47 // pred_check
        %p701 = pneg %p150
      $region50: #{spatial_transformer_human_vqvae_forward.23} parent=47 // pred_check_branch
        %703 = sbr.rel (%p701) target = $region52
      $region51: #{spatial_transformer_human_vqvae_forward.23} parent=47 // pred_region
        %p704 = scmp.lt.s32.totalorder %s17, 1
        %s705 = scalar_select %p704, %s17, 1
        %s706 = smul.addr %s705, 8
        %s707 = scalar_lea.vmem %s5, %s706
      $region52: #{spatial_transformer_human_vqvae_forward.23} parent=47 // pred_fallthru
        _
    $region48: #{spatial_transformer_human_vqvae_forward.23} parent=5 // pred_fallthru
      _
  $region6: #{spatial_transformer_human_vqvae_forward.23} parent=0 // loop_footer
    %s15 = sadd.s32 1, %s11
  $region7: #{spatial_transformer_human_vqvae_forward.23} parent=0 // loop_footer_branch
    %10 = sbr.rel target = $region3
  $region8: #{spatial_transformer_human_vqvae_forward.23} parent=0 // loop_exit
    _

// kernel: spatial_transformer_human_vqvae_forward.25
$region0: #{spatial_transformer_human_vqvae_forward.25}
  #allocation0 [shape = 'u32[]', space=smem, size = 0x4, offset = 0x4, fixed_abs, tag = 'smem constant byte address 0x4 - core index']
  #allocation1 [shape = 'u32[144,128]{1,0:T(1,128)}', space=vmem, size = 0x12000, scoped, tag = 'internal scratch']
  %s0 = inlined_call_operand.vmem [shape: f32[2,10,128], index: 0, kind: input, shape index: {}]
  %s1 = inlined_call_operand.vmem [shape: bf16[3,128,128], index: 1, kind: input, shape index: {}]
  %s2 = inlined_call_operand.vmem [shape: f32[1,128], index: 2, kind: input, shape index: {}]
  %s3 = inlined_call_operand.vmem [shape: f32[2,8,128], index: 3, kind: output, shape index: {}]
  %s4 = sld [smem:[#allocation0]]
  $region45: #{spatial_transformer_human_vqvae_forward.25} parent=0
    _
  %s6 = ssub.s32 1, %s4
  %s7 = scalar_select 0, %s6, %s4
  loop: start=0, step=1, limit=4
  $region2: #{spatial_transformer_human_vqvae_forward.25} parent=0 // loop_pre_header
    _
  $region3: #{spatial_transformer_human_vqvae_forward.25} parent=0 // loop_header
    %s9 = sphi 0, %s13
    %p10 = scmp.ge.s32.totalorder %s9, 4
    %s19 = sphi 0, %s21
    %s22 = sphi 0, %s19
    %s23 = sphi 0, %s22
    %s39 = sphi 0, %s23
    %s43 = sphi 0, %s43
    %s45 = sphi 0, %s43
    %s46 = sphi 0, %s45
    %s60 = sphi 0, %s46
    %s64 = sphi 0, %s64
    %s66 = sphi 0, %s64
    %s67 = sphi 0, %s66
    %s81 = sphi 0, %s67
    %s87 = sphi 0, %s89
    %s90 = sphi 0, %s87
    %s91 = sphi 0, %s90
    %s107 = sphi 0, %s91
  $region4: #{spatial_transformer_human_vqvae_forward.25} parent=0 // loop_header_branch
    %12 = sbr.rel (%p10) target = $region8
  $region5: #{spatial_transformer_human_vqvae_forward.25} parent=0 // loop_body
    %s14 = ssub.s32 %s9, 1
    %s15 = ssub.s32 %s9, 2
    %s16 = sadd.s32 %s9, 1
    %s17 = ssub.s32 %s9, %s16
    %p18 = scmp.eq.s32.totalorder %s17, 0
    %s20 = sadd.s32 %s19, 1
    %s21 = scalar_select %p18, %s19, %s20
    %p24 = pneg %p18
    %p25 = scmp.eq.s32.totalorder %s9, 1
    %p26 = por %p24, %p25
    %p27 = scmp.ne.s32.totalorder %s19, %s22
    %p28 = scmp.eq.s32.totalorder %s9, 0
    %p29 = por %p27, %p28
    %p30 = scmp.ne.s32.totalorder %s19, %s22
    %p31 = scmp.eq.s32.totalorder %s14, 1
    %p32 = por %p30, %p31
    %p33 = scmp.ne.s32.totalorder %s22, %s23
    %p34 = scmp.eq.s32.totalorder %s14, 0
    %p35 = por %p33, %p34
    %p36 = scmp.ne.s32.totalorder %s22, %s23
    %p37 = scmp.eq.s32.totalorder %s15, 1
    %p38 = por %p36, %p37
    %p40 = scmp.ne.s32.totalorder %s23, %s39
    %p41 = scmp.eq.s32.totalorder %s15, 0
    %p42 = por %p40, %p41
    %s44 = sadd.s32 %s43, 1
    %p47 = scmp.eq.s32.totalorder %s9, 1
    %p48 = scmp.ne.s32.totalorder %s43, %s45
    %p49 = scmp.eq.s32.totalorder %s9, 0
    %p50 = por %p48, %p49
    %p51 = scmp.ne.s32.totalorder %s43, %s45
    %p52 = scmp.eq.s32.totalorder %s14, 1
    %p53 = por %p51, %p52
    %p54 = scmp.ne.s32.totalorder %s45, %s46
    %p55 = scmp.eq.s32.totalorder %s14, 0
    %p56 = por %p54, %p55
    %p57 = scmp.ne.s32.totalorder %s45, %s46
    %p58 = scmp.eq.s32.totalorder %s15, 1
    %p59 = por %p57, %p58
    %p61 = scmp.ne.s32.totalorder %s46, %s60
    %p62 = scmp.eq.s32.totalorder %s15, 0
    %p63 = por %p61, %p62
    %s65 = sadd.s32 %s64, 1
    %p68 = scmp.eq.s32.totalorder %s9, 1
    %p69 = scmp.ne.s32.totalorder %s64, %s66
    %p70 = scmp.eq.s32.totalorder %s9, 0
    %p71 = por %p69, %p70
    %p72 = scmp.ne.s32.totalorder %s64, %s66
    %p73 = scmp.eq.s32.totalorder %s14, 1
    %p74 = por %p72, %p73
    %p75 = scmp.ne.s32.totalorder %s66, %s67
    %p76 = scmp.eq.s32.totalorder %s14, 0
    %p77 = por %p75, %p76
    %p78 = scmp.ne.s32.totalorder %s66, %s67
    %p79 = scmp.eq.s32.totalorder %s15, 1
    %p80 = por %p78, %p79
    %p82 = scmp.ne.s32.totalorder %s67, %s81
    %p83 = scmp.eq.s32.totalorder %s15, 0
    %p84 = por %p82, %p83
    %s85 = ssub.s32 %s9, %s16
    %p86 = scmp.eq.s32.totalorder %s85, 0
    %s88 = sadd.s32 %s87, 1
    %s89 = scalar_select %p86, %s87, %s88
    %p92 = pneg %p86
    %p93 = scmp.eq.s32.totalorder %s9, 1
    %p94 = por %p92, %p93
    %p95 = scmp.ne.s32.totalorder %s87, %s90
    %p96 = scmp.eq.s32.totalorder %s9, 0
    %p97 = por %p95, %p96
    %p98 = scmp.ne.s32.totalorder %s87, %s90
    %p99 = scmp.eq.s32.totalorder %s14, 1
    %p100 = por %p98, %p99
    %p101 = scmp.ne.s32.totalorder %s90, %s91
    %p102 = scmp.eq.s32.totalorder %s14, 0
    %p103 = por %p101, %p102
    %p104 = scmp.ne.s32.totalorder %s90, %s91
    %p105 = scmp.eq.s32.totalorder %s15, 1
    %p106 = por %p104, %p105
    %p108 = scmp.ne.s32.totalorder %s91, %s107
    %p109 = scmp.eq.s32.totalorder %s15, 0
    %p110 = por %p108, %p109
    %p111 = scmp.le.s32.totalorder 1, %s9
    %p112 = scmp.lt.s32.totalorder %s9, 3
    %p113 = pnand %p111, %p112
    %p114 = pneg %p113
    // Predicated region
    $region9: #{spatial_transformer_human_vqvae_forward.25} parent=5 // pred_check
      _
    $region10: #{spatial_transformer_human_vqvae_forward.25} parent=5 // pred_check_branch
      %116 = sbr.rel (%p113) target = $region12
    $region11: #{spatial_transformer_human_vqvae_forward.25} parent=5 // pred_region
      %s117 = ssub.s32 %s9, 1
      // Predicated region
      $region13: #{spatial_transformer_human_vqvae_forward.25} parent=11 // pred_check
        %p118 = pneg %p56
      $region14: #{spatial_transformer_human_vqvae_forward.25} parent=11 // pred_check_branch
        %120 = sbr.rel (%p118) target = $region16
      $region15: #{spatial_transformer_human_vqvae_forward.25} parent=11 // pred_region
        _
      $region16: #{spatial_transformer_human_vqvae_forward.25} parent=11 // pred_fallthru
        _
      // Predicated region
      $region17: #{spatial_transformer_human_vqvae_forward.25} parent=11 // pred_check
        %p121 = pneg %p77
      $region18: #{spatial_transformer_human_vqvae_forward.25} parent=11 // pred_check_branch
        %123 = sbr.rel (%p121) target = $region20
      $region19: #{spatial_transformer_human_vqvae_forward.25} parent=11 // pred_region
        _
      $region20: #{spatial_transformer_human_vqvae_forward.25} parent=11 // pred_fallthru
        _
    $region12: #{spatial_transformer_human_vqvae_forward.25} parent=5 // pred_fallthru
      _
    %p124 = scmp.lt.s32.totalorder %s9, 2
    // Predicated region
    $region21: #{spatial_transformer_human_vqvae_forward.25} parent=5 // pred_check
      %p125 = pneg %p124
    $region22: #{spatial_transformer_human_vqvae_forward.25} parent=5 // pred_check_branch
      %127 = sbr.rel (%p125) target = $region24
    $region23: #{spatial_transformer_human_vqvae_forward.25} parent=5 // pred_region
      // Predicated region
      $region25: #{spatial_transformer_human_vqvae_forward.25} parent=23 // pred_check
        %p128 = pneg %p29
      $region26: #{spatial_transformer_human_vqvae_forward.25} parent=23 // pred_check_branch
        %130 = sbr.rel (%p128) target = $region28
      $region27: #{spatial_transformer_human_vqvae_forward.25} parent=23 // pred_region
        %p131 = scmp.lt.s32.totalorder %s9, 1
        %s132 = scalar_select %p131, %s9, 1
        %s133 = smul.addr %s132, 2
        %s134 = smul.addr %s133, 8
        %s135 = scalar_lea.vmem %s0, %s134
      $region28: #{spatial_transformer_human_vqvae_forward.25} parent=23 // pred_fallthru
        _
    $region24: #{spatial_transformer_human_vqvae_forward.25} parent=5 // pred_fallthru
      _
    %p136 = scmp.le.s32.totalorder 1, %s9
    %p137 = scmp.lt.s32.totalorder %s9, 3
    %p138 = pnand %p136, %p137
    %p139 = pneg %p138
    // Predicated region
    $region29: #{spatial_transformer_human_vqvae_forward.25} parent=5 // pred_check
      _
    $region30: #{spatial_transformer_human_vqvae_forward.25} parent=5 // pred_check_branch
      %141 = sbr.rel (%p138) target = $region32
    $region31: #{spatial_transformer_human_vqvae_forward.25} parent=5 // pred_region
      %s142 = ssub.s32 %s9, 1
      %p143 = scmp.lt.s32.totalorder %s14, 1
      %s144 = scalar_select %p143, %s14, 1
      %s145 = smul.addr %s144, 2
      %s146 = smul.addr %s145, 8
      %s147 = scalar_lea.vmem %s0, %s146
      %p148 = pneg %p35
      %p149 = pneg %p32
      %p150 = pneg %p56
      %p151 = pneg %p53
      %p152 = pneg %p77
      %p153 = pneg %p74
      %p154 = pneg %p103
      %p155 = pneg %p100
      %p156 = scmp.lt.s32.totalorder %s14, 1
      %s157 = scalar_select %p156, %s14, 1
      %s158 = smul.addr %s157, 8
      %s159 = scalar_lea.vmem %s3, %s158
      %p160 = scmp.lt.s32.totalorder %s14, 1
      %s161 = scalar_select %p160, %s14, 1
      %s162 = smul.addr %s161, 2
      %s163 = smul.addr %s162, 8
      %s164 = scalar_lea.vmem %s0, %s163
      %p165 = scmp.lt.s32.totalorder %s14, 1
      %s166 = scalar_select %p165, %s14, 1
      %s167 = smul.addr %s166, 8
      %s168 = scalar_lea.vmem %s3, %s167
      %v170 = vld [vmem:[%s164] sm:$0xff]
      %v171 = vld [vmem:[%s164 + $0x8] sm:$0x3]
      %v172 = vld [vmem:[%s2] sm:$0x1]
      %v173 = vpack.c.bf16 %v170, %v170
      %v174 = vld [vmem:[%s1] sm:$0xf]
      %v175 = vld [vmem:[%s1 + $0x4] sm:$0xf]
      %v176 = vld [vmem:[%s1 + $0x8] sm:$0xf]
      %v177 = vld [vmem:[%s1 + $0xc] sm:$0xf]
      %v178 = vld [vmem:[%s1 + $0x10] sm:$0xf]
      %v179 = vld [vmem:[%s1 + $0x14] sm:$0xf]
      %v180 = vld [vmem:[%s1 + $0x18] sm:$0xf]
      %v181 = vld [vmem:[%s1 + $0x1c] sm:$0xf]
      %v182 = vld [vmem:[%s1 + $0x20] sm:$0xf]
      %v183 = vld [vmem:[%s1 + $0x24] sm:$0xf]
      %v184 = vld [vmem:[%s1 + $0x28] sm:$0xf]
      %v185 = vld [vmem:[%s1 + $0x2c] sm:$0xf]
      %v186 = vld [vmem:[%s1 + $0x30] sm:$0xf]
      %v187 = vld [vmem:[%s1 + $0x34] sm:$0xf]
      %v188 = vld [vmem:[%s1 + $0x38] sm:$0xf]
      %v189 = vld [vmem:[%s1 + $0x3c] sm:$0xf]
      %v206 = vunpack.c.l.b16 %v174
      %v207 = vunpack.c.l.b16 %v175
      %v208 = vunpack.c.l.b16 %v176
      %v209 = vunpack.c.l.b16 %v177
      %v210 = vunpack.c.l.b16 %v178
      %v211 = vunpack.c.l.b16 %v179
      %v212 = vunpack.c.l.b16 %v180
      %v213 = vunpack.c.l.b16 %v181
      %v214 = vunpack.c.l.b16 %v182
      %v215 = vunpack.c.l.b16 %v183
      %v216 = vunpack.c.l.b16 %v184
      %v217 = vunpack.c.l.b16 %v185
      %v218 = vunpack.c.l.b16 %v186
      %v219 = vunpack.c.l.b16 %v187
      %v220 = vunpack.c.l.b16 %v188
      %v221 = vunpack.c.l.b16 %v189
      %v222 = vpack.c.b16 %v207, %v206
      %v223 = vpack.c.b16 %v209, %v208
      %v224 = vpack.c.b16 %v211, %v210
      %v225 = vpack.c.b16 %v213, %v212
      %v226 = vpack.c.b16 %v215, %v214
      %v227 = vpack.c.b16 %v217, %v216
      %v228 = vpack.c.b16 %v219, %v218
      %v229 = vpack.c.b16 %v221, %v220
      %238 = vmatprep.subr.bf16.mxu0 0
      %239 = vmatpush1.bf16.msra.mxu0 %v229
      %240 = vmatprep.subr.bf16.mxu0 0
      %241 = vmatpush1.bf16.msra.mxu0 %v228
      %242 = vmatprep.subr.bf16.mxu0 0
      %243 = vmatpush1.bf16.msra.mxu0 %v227
      %244 = vmatprep.subr.bf16.mxu0 0
      %245 = vmatpush1.bf16.msra.mxu0 %v226
      %246 = vmatprep.subr.bf16.mxu0 0
      %247 = vmatpush1.bf16.msra.mxu0 %v225
      %248 = vmatprep.subr.bf16.mxu0 0
      %249 = vmatpush1.bf16.msra.mxu0 %v224
      %250 = vmatprep.subr.bf16.mxu0 0
      %251 = vmatpush1.bf16.msra.mxu0 %v223
      %252 = vmatprep.subr.bf16.mxu0 0
      %253 = vmatpush1.bf16.msra.mxu0 %v222
      %254 = vmatprep.subr.bf16.mxu0 0
      %255 = vmatpush2.bf16.msra.mxu0 0
      %256 = vmatprep.subr.bf16.mxu0 0
      %257 = vmatpush2.bf16.msra.mxu0 0
      %258 = vmatprep.subr.bf16.mxu0 0
      %259 = vmatpush2.bf16.msra.mxu0 0
      %260 = vmatprep.subr.bf16.mxu0 0
      %261 = vmatpush2.bf16.msra.mxu0 0
      %262 = vmatprep.subr.bf16.mxu0 0
      %263 = vmatpush2.bf16.msra.mxu0 0
      %264 = vmatprep.subr.bf16.mxu0 0
      %265 = vmatpush2.bf16.msra.mxu0 0
      %266 = vmatprep.subr.bf16.mxu0 0
      %267 = vmatpush2.bf16.msra.mxu0 0
      %268 = vmatprep.subr.bf16.mxu0 0
      %269 = vmatpush2.bf16.msra.mxu0 0
      %270 = vmatprep.mubr.bf16.mxu0 0
      %271 = vmatmul.mubr.bf16.gmra.mxu0 %v173
      %v272 = vpop.f32.mrf.mxu0
      %v273 = vadd.f32 0.0, %v272
      %v274 = vpop.f32.mrf.mxu0
      %v275 = vpop.f32.mrf.mxu0
      %v276 = vpop.f32.mrf.mxu0
      %277 = vdwg.mxu0
      %v279 = vlaneseq
      %v280 = vshrl.u32 %v279, 7
      %v281 = vsub.s32 0, %v280
      %v282 = vrot.slane %v172, %v281
      %v284 = vadd.f32 %v282, %v273
      %v285 = vpack.c.bf16 %v171, %v170
      %s286 = scalar_lea.vmem %s1, 64
      %v287 = vld [vmem:[%s286] sm:$0xf]
      %v288 = vld [vmem:[%s286 + $0x4] sm:$0xf]
      %v289 = vld [vmem:[%s286 + $0x8] sm:$0xf]
      %v290 = vld [vmem:[%s286 + $0xc] sm:$0xf]
      %v291 = vld [vmem:[%s286 + $0x10] sm:$0xf]
      %v292 = vld [vmem:[%s286 + $0x14] sm:$0xf]
      %v293 = vld [vmem:[%s286 + $0x18] sm:$0xf]
      %v294 = vld [vmem:[%s286 + $0x1c] sm:$0xf]
      %v295 = vld [vmem:[%s286 + $0x20] sm:$0xf]
      %v296 = vld [vmem:[%s286 + $0x24] sm:$0xf]
      %v297 = vld [vmem:[%s286 + $0x28] sm:$0xf]
      %v298 = vld [vmem:[%s286 + $0x2c] sm:$0xf]
      %v299 = vld [vmem:[%s286 + $0x30] sm:$0xf]
      %v300 = vld [vmem:[%s286 + $0x34] sm:$0xf]
      %v301 = vld [vmem:[%s286 + $0x38] sm:$0xf]
      %v302 = vld [vmem:[%s286 + $0x3c] sm:$0xf]
      %v304 = vshrl.u32 %v285, 16
      %v306 = vshll.u32 %v285, 16
      %v308 = vrot.slane %v306, 1
      %v309 = vor.u32 %v304, %v308
      %v327 = vunpack.c.l.b16 %v287
      %v328 = vunpack.c.l.b16 %v288
      %v329 = vunpack.c.l.b16 %v289
      %v330 = vunpack.c.l.b16 %v290
      %v331 = vunpack.c.l.b16 %v291
      %v332 = vunpack.c.l.b16 %v292
      %v333 = vunpack.c.l.b16 %v293
      %v334 = vunpack.c.l.b16 %v294
      %v335 = vunpack.c.l.b16 %v295
      %v336 = vunpack.c.l.b16 %v296
      %v337 = vunpack.c.l.b16 %v297
      %v338 = vunpack.c.l.b16 %v298
      %v339 = vunpack.c.l.b16 %v299
      %v340 = vunpack.c.l.b16 %v300
      %v341 = vunpack.c.l.b16 %v301
      %v342 = vunpack.c.l.b16 %v302
      %v343 = vpack.c.b16 %v328, %v327
      %v344 = vpack.c.b16 %v330, %v329
      %v345 = vpack.c.b16 %v332, %v331
      %v346 = vpack.c.b16 %v334, %v333
      %v347 = vpack.c.b16 %v336, %v335
      %v348 = vpack.c.b16 %v338, %v337
      %v349 = vpack.c.b16 %v340, %v339
      %v350 = vpack.c.b16 %v342, %v341
      %359 = vmatprep.subr.bf16.mxu0 0
      %360 = vmatpush1.bf16.msra.mxu0 %v350
      %361 = vmatprep.subr.bf16.mxu0 0
      %362 = vmatpush1.bf16.msra.mxu0 %v349
      %363 = vmatprep.subr.bf16.mxu0 0
      %364 = vmatpush1.bf16.msra.mxu0 %v348
      %365 = vmatprep.subr.bf16.mxu0 0
      %366 = vmatpush1.bf16.msra.mxu0 %v347
      %367 = vmatprep.subr.bf16.mxu0 0
      %368 = vmatpush1.bf16.msra.mxu0 %v346
      %369 = vmatprep.subr.bf16.mxu0 0
      %370 = vmatpush1.bf16.msra.mxu0 %v345
      %371 = vmatprep.subr.bf16.mxu0 0
      %372 = vmatpush1.bf16.msra.mxu0 %v344
      %373 = vmatprep.subr.bf16.mxu0 0
      %374 = vmatpush1.bf16.msra.mxu0 %v343
      %375 = vmatprep.subr.bf16.mxu0 0
      %376 = vmatpush2.bf16.msra.mxu0 0
      %377 = vmatprep.subr.bf16.mxu0 0
      %378 = vmatpush2.bf16.msra.mxu0 0
      %379 = vmatprep.subr.bf16.mxu0 0
      %380 = vmatpush2.bf16.msra.mxu0 0
      %381 = vmatprep.subr.bf16.mxu0 0
      %382 = vmatpush2.bf16.msra.mxu0 0
      %383 = vmatprep.subr.bf16.mxu0 0
      %384 = vmatpush2.bf16.msra.mxu0 0
      %385 = vmatprep.subr.bf16.mxu0 0
      %386 = vmatpush2.bf16.msra.mxu0 0
      %387 = vmatprep.subr.bf16.mxu0 0
      %388 = vmatpush2.bf16.msra.mxu0 0
      %389 = vmatprep.subr.bf16.mxu0 0
      %390 = vmatpush2.bf16.msra.mxu0 0
      %391 = vmatprep.mubr.bf16.mxu0 0
      %392 = vmatmul.mubr.bf16.gmra.mxu0 %v309
      %v393 = vpop.f32.mrf.mxu0
      %v394 = vadd.f32 0.0, %v393
      %v395 = vpop.f32.mrf.mxu0
      %v396 = vpop.f32.mrf.mxu0
      %v397 = vpop.f32.mrf.mxu0
      %398 = vdwg.mxu0
      %v399 = vadd.f32 %v284, %v394
      %s400 = scalar_lea.vmem %s1, 128
      %v401 = vld [vmem:[%s400] sm:$0xf]
      %v402 = vld [vmem:[%s400 + $0x4] sm:$0xf]
      %v403 = vld [vmem:[%s400 + $0x8] sm:$0xf]
      %v404 = vld [vmem:[%s400 + $0xc] sm:$0xf]
      %v405 = vld [vmem:[%s400 + $0x10] sm:$0xf]
      %v406 = vld [vmem:[%s400 + $0x14] sm:$0xf]
      %v407 = vld [vmem:[%s400 + $0x18] sm:$0xf]
      %v408 = vld [vmem:[%s400 + $0x1c] sm:$0xf]
      %v409 = vld [vmem:[%s400 + $0x20] sm:$0xf]
      %v410 = vld [vmem:[%s400 + $0x24] sm:$0xf]
      %v411 = vld [vmem:[%s400 + $0x28] sm:$0xf]
      %v412 = vld [vmem:[%s400 + $0x2c] sm:$0xf]
      %v413 = vld [vmem:[%s400 + $0x30] sm:$0xf]
      %v414 = vld [vmem:[%s400 + $0x34] sm:$0xf]
      %v415 = vld [vmem:[%s400 + $0x38] sm:$0xf]
      %v416 = vld [vmem:[%s400 + $0x3c] sm:$0xf]
      %v418 = vrot.slane %v285, 1
      %v436 = vunpack.c.l.b16 %v401
      %v437 = vunpack.c.l.b16 %v402
      %v438 = vunpack.c.l.b16 %v403
      %v439 = vunpack.c.l.b16 %v404
      %v440 = vunpack.c.l.b16 %v405
      %v441 = vunpack.c.l.b16 %v406
      %v442 = vunpack.c.l.b16 %v407
      %v443 = vunpack.c.l.b16 %v408
      %v444 = vunpack.c.l.b16 %v409
      %v445 = vunpack.c.l.b16 %v410
      %v446 = vunpack.c.l.b16 %v411
      %v447 = vunpack.c.l.b16 %v412
      %v448 = vunpack.c.l.b16 %v413
      %v449 = vunpack.c.l.b16 %v414
      %v450 = vunpack.c.l.b16 %v415
      %v451 = vunpack.c.l.b16 %v416
      %v452 = vpack.c.b16 %v437, %v436
      %v453 = vpack.c.b16 %v439, %v438
      %v454 = vpack.c.b16 %v441, %v440
      %v455 = vpack.c.b16 %v443, %v442
      %v456 = vpack.c.b16 %v445, %v444
      %v457 = vpack.c.b16 %v447, %v446
      %v458 = vpack.c.b16 %v449, %v448
      %v459 = vpack.c.b16 %v451, %v450
      %468 = vmatprep.subr.bf16.mxu0 0
      %469 = vmatpush1.bf16.msra.mxu0 %v459
      %470 = vmatprep.subr.bf16.mxu0 0
      %471 = vmatpush1.bf16.msra.mxu0 %v458
      %472 = vmatprep.subr.bf16.mxu0 0
      %473 = vmatpush1.bf16.msra.mxu0 %v457
      %474 = vmatprep.subr.bf16.mxu0 0
      %475 = vmatpush1.bf16.msra.mxu0 %v456
      %476 = vmatprep.subr.bf16.mxu0 0
      %477 = vmatpush1.bf16.msra.mxu0 %v455
      %478 = vmatprep.subr.bf16.mxu0 0
      %479 = vmatpush1.bf16.msra.mxu0 %v454
      %480 = vmatprep.subr.bf16.mxu0 0
      %481 = vmatpush1.bf16.msra.mxu0 %v453
      %482 = vmatprep.subr.bf16.mxu0 0
      %483 = vmatpush1.bf16.msra.mxu0 %v452
      %484 = vmatprep.subr.bf16.mxu0 0
      %485 = vmatpush2.bf16.msra.mxu0 0
      %486 = vmatprep.subr.bf16.mxu0 0
      %487 = vmatpush2.bf16.msra.mxu0 0
      %488 = vmatprep.subr.bf16.mxu0 0
      %489 = vmatpush2.bf16.msra.mxu0 0
      %490 = vmatprep.subr.bf16.mxu0 0
      %491 = vmatpush2.bf16.msra.mxu0 0
      %492 = vmatprep.subr.bf16.mxu0 0
      %493 = vmatpush2.bf16.msra.mxu0 0
      %494 = vmatprep.subr.bf16.mxu0 0
      %495 = vmatpush2.bf16.msra.mxu0 0
      %496 = vmatprep.subr.bf16.mxu0 0
      %497 = vmatpush2.bf16.msra.mxu0 0
      %498 = vmatprep.subr.bf16.mxu0 0
      %499 = vmatpush2.bf16.msra.mxu0 0
      %500 = vmatprep.mubr.bf16.mxu0 0
      %501 = vmatmul.mubr.bf16.gmra.mxu0 %v418
      %v502 = vpop.f32.mrf.mxu0
      %v503 = vadd.f32 0.0, %v502
      %v504 = vpop.f32.mrf.mxu0
      %v505 = vpop.f32.mrf.mxu0
      %v506 = vpop.f32.mrf.mxu0
      %507 = vdwg.mxu0
      %v508 = vadd.f32 %v399, %v503
      %509 = vst [vmem:[%s168] sm:$0xff] %v508
      %p510 = scmp.lt.s32.totalorder %s14, 1
      %s511 = scalar_select %p510, %s14, 1
      %s512 = smul.addr %s511, 8
      %s513 = scalar_lea.vmem %s3, %s512
      // Predicated region
      $region33: #{spatial_transformer_human_vqvae_forward.25} parent=31 // pred_check
        %p514 = pneg %p100
      $region34: #{spatial_transformer_human_vqvae_forward.25} parent=31 // pred_check_branch
        %516 = sbr.rel (%p514) target = $region36
      $region35: #{spatial_transformer_human_vqvae_forward.25} parent=31 // pred_region
        _
      $region36: #{spatial_transformer_human_vqvae_forward.25} parent=31 // pred_fallthru
        _
    $region32: #{spatial_transformer_human_vqvae_forward.25} parent=5 // pred_fallthru
      _
    %p517 = scmp.le.s32.totalorder 2, %s9
    // Predicated region
    $region37: #{spatial_transformer_human_vqvae_forward.25} parent=5 // pred_check
      %p518 = pneg %p517
    $region38: #{spatial_transformer_human_vqvae_forward.25} parent=5 // pred_check_branch
      %520 = sbr.rel (%p518) target = $region40
    $region39: #{spatial_transformer_human_vqvae_forward.25} parent=5 // pred_region
      %s521 = ssub.s32 %s9, 2
      // Predicated region
      $region41: #{spatial_transformer_human_vqvae_forward.25} parent=39 // pred_check
        %p522 = pneg %p106
      $region42: #{spatial_transformer_human_vqvae_forward.25} parent=39 // pred_check_branch
        %524 = sbr.rel (%p522) target = $region44
      $region43: #{spatial_transformer_human_vqvae_forward.25} parent=39 // pred_region
        %p525 = scmp.lt.s32.totalorder %s15, 1
        %s526 = scalar_select %p525, %s15, 1
        %s527 = smul.addr %s526, 8
        %s528 = scalar_lea.vmem %s3, %s527
      $region44: #{spatial_transformer_human_vqvae_forward.25} parent=39 // pred_fallthru
        _
    $region40: #{spatial_transformer_human_vqvae_forward.25} parent=5 // pred_fallthru
      _
  $region6: #{spatial_transformer_human_vqvae_forward.25} parent=0 // loop_footer
    %s13 = sadd.s32 1, %s9
  $region7: #{spatial_transformer_human_vqvae_forward.25} parent=0 // loop_footer_branch
    %8 = sbr.rel target = $region3
  $region8: #{spatial_transformer_human_vqvae_forward.25} parent=0 // loop_exit
    _

// kernel: spatial_transformer_human_vqvae_forward.26
$region0: #{spatial_transformer_human_vqvae_forward.26}
  #allocation0 [shape = 'u32[]', space=smem, size = 0x4, offset = 0x4, fixed_abs, tag = 'smem constant byte address 0x4 - core index']
  #allocation1 [shape = 'u32[144,128]{1,0:T(1,128)}', space=vmem, size = 0x12000, scoped, tag = 'internal scratch']
  %s0 = inlined_call_operand.vmem [shape: f32[16,128], index: 0, kind: input, shape index: {}]
  %s1 = inlined_call_operand.vmem [shape: f32[128,128], index: 1, kind: input, shape index: {}]
  %s2 = inlined_call_operand.vmem [shape: f32[1,128], index: 2, kind: input, shape index: {}]
  %s3 = inlined_call_operand.vmem [shape: f32[128,128], index: 3, kind: input, shape index: {}]
  %s4 = inlined_call_operand.vmem [shape: f32[16,128], index: 4, kind: output, shape index: {0}]
  %s5 = inlined_call_operand.hbm [shape: s32[16,1], index: 5, kind: output, shape index: {1}]
  %s6 = inlined_call_operand.vmem [shape: f32[1,128], index: 6, kind: output, shape index: {2}]
  %7 = xla_tuple %s4, %s5, %s6
  %s8 = sld [smem:[#allocation0]]
  $region42: #{spatial_transformer_human_vqvae_forward.26} parent=0
    _
  %s10 = ssub.s32 1, %s8
  %s11 = scalar_select 0, %s10, %s8
  $region1: #{spatial_transformer_human_vqvae_forward.26} parent=0
    #allocation2 [shape = 'u8[8192]{0}', space=vmem, size = 0x2000, scoped, tag = 'output window, operand 1, single buffered']
    #allocation3 [shape = 's32[1]{0}', space=sflag, size = 0x4, scoped, tag = 'scoped memory for spatial_transformer_human_vqvae_forward.26']
    %12 = vsyncpa [#allocation3], 0
    // Predicated region
    $region2: #{spatial_transformer_human_vqvae_forward.26} parent=1 // pred_check
      _
    $region3: #{spatial_transformer_human_vqvae_forward.26} parent=1 // pred_check_branch
      %14 = sbr.rel (0) target = $region5
    $region4: #{spatial_transformer_human_vqvae_forward.26} parent=1 // pred_region
      _
    $region5: #{spatial_transformer_human_vqvae_forward.26} parent=1 // pred_fallthru
      _
    // Predicated region
    $region6: #{spatial_transformer_human_vqvae_forward.26} parent=1 // pred_check
      _
    $region7: #{spatial_transformer_human_vqvae_forward.26} parent=1 // pred_check_branch
      %16 = sbr.rel (0) target = $region9
    $region8: #{spatial_transformer_human_vqvae_forward.26} parent=1 // pred_region
      _
    $region9: #{spatial_transformer_human_vqvae_forward.26} parent=1 // pred_fallthru
      _
    // Predicated region
    $region10: #{spatial_transformer_human_vqvae_forward.26} parent=1 // pred_check
      _
    $region11: #{spatial_transformer_human_vqvae_forward.26} parent=1 // pred_check_branch
      %18 = sbr.rel (0) target = $region13
    $region12: #{spatial_transformer_human_vqvae_forward.26} parent=1 // pred_region
      _
    $region13: #{spatial_transformer_human_vqvae_forward.26} parent=1 // pred_fallthru
      _
    // Predicated region
    $region14: #{spatial_transformer_human_vqvae_forward.26} parent=1 // pred_check
      _
    $region15: #{spatial_transformer_human_vqvae_forward.26} parent=1 // pred_check_branch
      %20 = sbr.rel (0) target = $region17
    $region16: #{spatial_transformer_human_vqvae_forward.26} parent=1 // pred_region
      _
    $region17: #{spatial_transformer_human_vqvae_forward.26} parent=1 // pred_fallthru
      _
    %v21 = vld [vmem:[%s0] sm:$0xff]
    %v22 = vld [vmem:[%s0 + $0x8] sm:$0xff]
    %v23 = vld [vmem:[%s2] sm:$0x1]
    %v24 = vld [vmem:[%s1] sm:$0xff]
    %v25 = vld [vmem:[%s1 + $0x8] sm:$0xff]
    %v26 = vld [vmem:[%s1 + $0x10] sm:$0xff]
    %v27 = vld [vmem:[%s1 + $0x18] sm:$0xff]
    %v28 = vld [vmem:[%s1 + $0x20] sm:$0xff]
    %v29 = vld [vmem:[%s1 + $0x28] sm:$0xff]
    %v30 = vld [vmem:[%s1 + $0x30] sm:$0xff]
    %v31 = vld [vmem:[%s1 + $0x38] sm:$0xff]
    %v32 = vld [vmem:[%s1 + $0x40] sm:$0xff]
    %v33 = vld [vmem:[%s1 + $0x48] sm:$0xff]
    %v34 = vld [vmem:[%s1 + $0x50] sm:$0xff]
    %v35 = vld [vmem:[%s1 + $0x58] sm:$0xff]
    %v36 = vld [vmem:[%s1 + $0x60] sm:$0xff]
    %v37 = vld [vmem:[%s1 + $0x68] sm:$0xff]
    %v38 = vld [vmem:[%s1 + $0x70] sm:$0xff]
    %v39 = vld [vmem:[%s1 + $0x78] sm:$0xff]
    %40 = vmatprep.subr.mxu0 0.0
    %41 = vmatpush1.msra.mxu0 %v39
    %42 = vmatprep.subr.mxu0 0.0
    %43 = vmatpush1.msra.mxu0 %v38
    %44 = vmatprep.subr.mxu0 0.0
    %45 = vmatpush1.msra.mxu0 %v37
    %46 = vmatprep.subr.mxu0 0.0
    %47 = vmatpush1.msra.mxu0 %v36
    %48 = vmatprep.subr.mxu0 0.0
    %49 = vmatpush1.msra.mxu0 %v35
    %50 = vmatprep.subr.mxu0 0.0
    %51 = vmatpush1.msra.mxu0 %v34
    %52 = vmatprep.subr.mxu0 0.0
    %53 = vmatpush1.msra.mxu0 %v33
    %54 = vmatprep.subr.mxu0 0.0
    %55 = vmatpush1.msra.mxu0 %v32
    %56 = vmatprep.subr.mxu0 0.0
    %57 = vmatpush1.msra.mxu0 %v31
    %58 = vmatprep.subr.mxu0 0.0
    %59 = vmatpush1.msra.mxu0 %v30
    %60 = vmatprep.subr.mxu0 0.0
    %61 = vmatpush1.msra.mxu0 %v29
    %62 = vmatprep.subr.mxu0 0.0
    %63 = vmatpush1.msra.mxu0 %v28
    %64 = vmatprep.subr.mxu0 0.0
    %65 = vmatpush1.msra.mxu0 %v27
    %66 = vmatprep.subr.mxu0 0.0
    %67 = vmatpush1.msra.mxu0 %v26
    %68 = vmatprep.subr.mxu0 0.0
    %69 = vmatpush1.msra.mxu0 %v25
    %70 = vmatprep.subr.mxu0 0.0
    %71 = vmatpush1.msra.mxu0 %v24
    %72 = vmatprep.subr.mxu0 0.0
    %73 = vmatpush2.msra.mxu0 0.0
    %74 = vmatprep.subr.mxu0 0.0
    %75 = vmatpush2.msra.mxu0 0.0
    %76 = vmatprep.subr.mxu0 0.0
    %77 = vmatpush2.msra.mxu0 0.0
    %78 = vmatprep.subr.mxu0 0.0
    %79 = vmatpush2.msra.mxu0 0.0
    %80 = vmatprep.subr.mxu0 0.0
    %81 = vmatpush2.msra.mxu0 0.0
    %82 = vmatprep.subr.mxu0 0.0
    %83 = vmatpush2.msra.mxu0 0.0
    %84 = vmatprep.subr.mxu0 0.0
    %85 = vmatpush2.msra.mxu0 0.0
    %86 = vmatprep.subr.mxu0 0.0
    %87 = vmatpush2.msra.mxu0 0.0
    %88 = vmatprep.subr.mxu0 0.0
    %89 = vmatpush2.msra.mxu0 0.0
    %90 = vmatprep.subr.mxu0 0.0
    %91 = vmatpush2.msra.mxu0 0.0
    %92 = vmatprep.subr.mxu0 0.0
    %93 = vmatpush2.msra.mxu0 0.0
    %94 = vmatprep.subr.mxu0 0.0
    %95 = vmatpush2.msra.mxu0 0.0
    %96 = vmatprep.subr.mxu0 0.0
    %97 = vmatpush2.msra.mxu0 0.0
    %98 = vmatprep.subr.mxu0 0.0
    %99 = vmatpush2.msra.mxu0 0.0
    %100 = vmatprep.subr.mxu0 0.0
    %101 = vmatpush2.msra.mxu0 0.0
    %102 = vmatprep.subr.mxu0 0.0
    %103 = vmatpush2.msra.mxu0 0.0
    %104 = vmatprep.mubr.f32.mxu0 0.0
    %105 = vmatmul.mubr.f32.gmra.mxu0 %v21
    %v106 = vpop.f32.mrf.mxu0
    %v107 = vadd.f32 0.0, %v106
    %v108 = vpop.f32.mrf.mxu0
    %109 = vmatprep.mubr.f32.mxu0 0.0
    %110 = vmatmul.mubr.f32.gmra.mxu0 %v22
    %v111 = vpop.f32.mrf.mxu0
    %v112 = vadd.f32 0.0, %v111
    %v113 = vpop.f32.mrf.mxu0
    %114 = vdwg.mxu0
    %v115 = vmul.f32 %v107, 2.0
    %v116 = vmul.f32 %v112, 2.0
    %v118 = vlaneseq
    %v119 = vshrl.u32 %v118, 7
    %v120 = vsub.s32 0, %v119
    %v121 = vrot.slane %v23, %v120
    %v123 = vsub.f32 %v121, %v115
    %v124 = vsub.f32 %v121, %v116
    %125 = vmin.xlane.f32.xlu0 %v123
    %v126 = vpop.xlane.xlu0 %125
    %127 = vmin.xlane.f32.xlu0 %v124
    %v128 = vpop.xlane.xlu0 %127
    %v129 = vlaneseq
    %v130 = vand.u32 %v129, 127
    %vm131 = vcmp.le.f32.partialorder %v123, %v126
    %vm132 = vcmp.le.f32.partialorder %v124, %v128
    %v133 = vsel %vm131, %v130, 2147483647
    %v134 = vsel %vm132, %v130, 2147483647
    %v135 = vand.u32 %v133, 65535
    %v136 = vshra.s32 %v133, 16
    %v137 = vcvt.s32.f32 %v135
    %v138 = vcvt.s32.f32 %v136
    %139 = vmin.xlane.f32.xlu0 %v138
    %v140 = vpop.xlane.xlu0 %139
    %vm141 = vcmp.eq.f32.partialorder %v138, %v140
    %v142 = vsel %vm141, %v137, inf
    %143 = vmin.xlane.f32.xlu0 %v142
    %v144 = vpop.xlane.xlu0 %143
    %v145 = vcvt.f32.s32 %v144
    %v146 = vcvt.f32.s32 %v140
    %v147 = vshll.u32 %v146, 16
    %v148 = vadd.s32 %v147, %v145
    %v149 = vand.u32 %v134, 65535
    %v150 = vshra.s32 %v134, 16
    %v151 = vcvt.s32.f32 %v149
    %v152 = vcvt.s32.f32 %v150
    %153 = vmin.xlane.f32.xlu0 %v152
    %v154 = vpop.xlane.xlu0 %153
    %vm155 = vcmp.eq.f32.partialorder %v152, %v154
    %v156 = vsel %vm155, %v151, inf
    %157 = vmin.xlane.f32.xlu0 %v156
    %v158 = vpop.xlane.xlu0 %157
    %v159 = vcvt.f32.s32 %v158
    %v160 = vcvt.f32.s32 %v154
    %v161 = vshll.u32 %v160, 16
    %v162 = vadd.s32 %v161, %v159
    %vm163 = vcmp.eq.s32.totalorder %v130, %v148
    %vm164 = vcmp.eq.s32.totalorder %v130, %v162
    %v165 = vsel %vm163, 1, 0
    %v166 = vsel %vm164, 1, 0
    %v167 = vcvt.s32.f32 %v165
    %v168 = vcvt.s32.f32 %v166
    %v169 = vld [vmem:[%s3] sm:$0xff]
    %v170 = vld [vmem:[%s3 + $0x8] sm:$0xff]
    %v171 = vld [vmem:[%s3 + $0x10] sm:$0xff]
    %v172 = vld [vmem:[%s3 + $0x18] sm:$0xff]
    %v173 = vld [vmem:[%s3 + $0x20] sm:$0xff]
    %v174 = vld [vmem:[%s3 + $0x28] sm:$0xff]
    %v175 = vld [vmem:[%s3 + $0x30] sm:$0xff]
    %v176 = vld [vmem:[%s3 + $0x38] sm:$0xff]
    %v177 = vld [vmem:[%s3 + $0x40] sm:$0xff]
    %v178 = vld [vmem:[%s3 + $0x48] sm:$0xff]
    %v179 = vld [vmem:[%s3 + $0x50] sm:$0xff]
    %v180 = vld [vmem:[%s3 + $0x58] sm:$0xff]
    %v181 = vld [vmem:[%s3 + $0x60] sm:$0xff]
    %v182 = vld [vmem:[%s3 + $0x68] sm:$0xff]
    %v183 = vld [vmem:[%s3 + $0x70] sm:$0xff]
    %v184 = vld [vmem:[%s3 + $0x78] sm:$0xff]
    %185 = vmatprep.subr.mxu0 0.0
    %186 = vmatpush1.msra.mxu0 %v184
    %187 = vmatprep.subr.mxu0 0.0
    %188 = vmatpush1.msra.mxu0 %v183
    %189 = vmatprep.subr.mxu0 0.0
    %190 = vmatpush1.msra.mxu0 %v182
    %191 = vmatprep.subr.mxu0 0.0
    %192 = vmatpush1.msra.mxu0 %v181
    %193 = vmatprep.subr.mxu0 0.0
    %194 = vmatpush1.msra.mxu0 %v180
    %195 = vmatprep.subr.mxu0 0.0
    %196 = vmatpush1.msra.mxu0 %v179
    %197 = vmatprep.subr.mxu0 0.0
    %198 = vmatpush1.msra.mxu0 %v178
    %199 = vmatprep.subr.mxu0 0.0
    %200 = vmatpush1.msra.mxu0 %v177
    %201 = vmatprep.subr.mxu0 0.0
    %202 = vmatpush1.msra.mxu0 %v176
    %203 = vmatprep.subr.mxu0 0.0
    %204 = vmatpush1.msra.mxu0 %v175
    %205 = vmatprep.subr.mxu0 0.0
    %206 = vmatpush1.msra.mxu0 %v174
    %207 = vmatprep.subr.mxu0 0.0
    %208 = vmatpush1.msra.mxu0 %v173
    %209 = vmatprep.subr.mxu0 0.0
    %210 = vmatpush1.msra.mxu0 %v172
    %211 = vmatprep.subr.mxu0 0.0
    %212 = vmatpush1.msra.mxu0 %v171
    %213 = vmatprep.subr.mxu0 0.0
    %214 = vmatpush1.msra.mxu0 %v170
    %215 = vmatprep.subr.mxu0 0.0
    %216 = vmatpush1.msra.mxu0 %v169
    %217 = vmatprep.subr.mxu0 0.0
    %218 = vmatpush2.msra.mxu0 0.0
    %219 = vmatprep.subr.mxu0 0.0
    %220 = vmatpush2.msra.mxu0 0.0
    %221 = vmatprep.subr.mxu0 0.0
    %222 = vmatpush2.msra.mxu0 0.0
    %223 = vmatprep.subr.mxu0 0.0
    %224 = vmatpush2.msra.mxu0 0.0
    %225 = vmatprep.subr.mxu0 0.0
    %226 = vmatpush2.msra.mxu0 0.0
    %227 = vmatprep.subr.mxu0 0.0
    %228 = vmatpush2.msra.mxu0 0.0
    %229 = vmatprep.subr.mxu0 0.0
    %230 = vmatpush2.msra.mxu0 0.0
    %231 = vmatprep.subr.mxu0 0.0
    %232 = vmatpush2.msra.mxu0 0.0
    %233 = vmatprep.subr.mxu0 0.0
    %234 = vmatpush2.msra.mxu0 0.0
    %235 = vmatprep.subr.mxu0 0.0
    %236 = vmatpush2.msra.mxu0 0.0
    %237 = vmatprep.subr.mxu0 0.0
    %238 = vmatpush2.msra.mxu0 0.0
    %239 = vmatprep.subr.mxu0 0.0
    %240 = vmatpush2.msra.mxu0 0.0
    %241 = vmatprep.subr.mxu0 0.0
    %242 = vmatpush2.msra.mxu0 0.0
    %243 = vmatprep.subr.mxu0 0.0
    %244 = vmatpush2.msra.mxu0 0.0
    %245 = vmatprep.subr.mxu0 0.0
    %246 = vmatpush2.msra.mxu0 0.0
    %247 = vmatprep.subr.mxu0 0.0
    %248 = vmatpush2.msra.mxu0 0.0
    %249 = vmatprep.mubr.f32.mxu0 0.0
    %250 = vmatmul.mubr.f32.gmra.mxu0 %v167
    %v251 = vpop.f32.mrf.mxu0
    %v252 = vadd.f32 0.0, %v251
    %v253 = vpop.f32.mrf.mxu0
    %254 = vmatprep.mubr.f32.mxu0 0.0
    %255 = vmatmul.mubr.f32.gmra.mxu0 %v168
    %v256 = vpop.f32.mrf.mxu0
    %v257 = vadd.f32 0.0, %v256
    %v258 = vpop.f32.mrf.mxu0
    %259 = vdwg.mxu0
    %260 = vst [vmem:[%s4] sm:$0xff] %v252
    %261 = vst [vmem:[%s4 + $0x8] sm:$0xff] %v257
    %vm262 = vcmask 7168
    %263 = vst.msk [vmem:[#allocation2] sm:$0xff] %vm262, %v148
    %264 = vst.msk [vmem:[#allocation2 + $0x8] sm:$0xff] %vm262, %v162
    %v265 = vadd.f32 %v167, %v168
    %v266 = vrot.slane %v265, 4
    %v267 = vadd.f32 %v265, %v266
    %v268 = vrot.slane %v267, 2
    %v269 = vadd.f32 %v267, %v268
    %v270 = vrot.slane %v269, 1
    %v271 = vadd.f32 %v269, %v270
    %272 = vst [vmem:[%s6] sm:$0x1] %v271
    // Predicated region
    $region18: #{spatial_transformer_human_vqvae_forward.26} parent=1 // pred_check
      _
    $region19: #{spatial_transformer_human_vqvae_forward.26} parent=1 // pred_check_branch
      %274 = sbr.rel (0) target = $region21
    $region20: #{spatial_transformer_human_vqvae_forward.26} parent=1 // pred_region
      _
    $region21: #{spatial_transformer_human_vqvae_forward.26} parent=1 // pred_fallthru
      _
    // Predicated region
    $region22: #{spatial_transformer_human_vqvae_forward.26} parent=1 // pred_check
      _
    $region23: #{spatial_transformer_human_vqvae_forward.26} parent=1 // pred_check_branch
      %276 = sbr.rel (0) target = $region25
    $region24: #{spatial_transformer_human_vqvae_forward.26} parent=1 // pred_region
      %s278 = ssub.s32 256, 256
      %279 = vsyncadd [#allocation3], %s278
      %s280 = sshll.u32 [#allocation2], 4
      %s281 = int_to_ptr.vmem [resolvable:$true] %s280
      %286 = dma.vmem_to_hbm [thread:$0]  %s281, 256, %s5, [#allocation3], 128, 128, 8
    $region25: #{spatial_transformer_human_vqvae_forward.26} parent=1 // pred_fallthru
      _
    // Predicated region
    $region26: #{spatial_transformer_human_vqvae_forward.26} parent=1 // pred_check
      _
    $region27: #{spatial_transformer_human_vqvae_forward.26} parent=1 // pred_check_branch
      %288 = sbr.rel (0) target = $region29
    $region28: #{spatial_transformer_human_vqvae_forward.26} parent=1 // pred_region
      _
    $region29: #{spatial_transformer_human_vqvae_forward.26} parent=1 // pred_fallthru
      _
    // Predicated region
    $region30: #{spatial_transformer_human_vqvae_forward.26} parent=1 // pred_check
      _
    $region31: #{spatial_transformer_human_vqvae_forward.26} parent=1 // pred_check_branch
      %290 = sbr.rel (0) target = $region33
    $region32: #{spatial_transformer_human_vqvae_forward.26} parent=1 // pred_region
      _
    $region33: #{spatial_transformer_human_vqvae_forward.26} parent=1 // pred_fallthru
      _
    // Predicated region
    $region34: #{spatial_transformer_human_vqvae_forward.26} parent=1 // pred_check
      _
    $region35: #{spatial_transformer_human_vqvae_forward.26} parent=1 // pred_check_branch
      %292 = sbr.rel (0) target = $region37
    $region36: #{spatial_transformer_human_vqvae_forward.26} parent=1 // pred_region
      %293 = dma.done [#allocation3], 256
    $region37: #{spatial_transformer_human_vqvae_forward.26} parent=1 // pred_fallthru
      _
    // Predicated region
    $region38: #{spatial_transformer_human_vqvae_forward.26} parent=1 // pred_check
      _
    $region39: #{spatial_transformer_human_vqvae_forward.26} parent=1 // pred_check_branch
      %295 = sbr.rel (0) target = $region41
    $region40: #{spatial_transformer_human_vqvae_forward.26} parent=1 // pred_region
      _
    $region41: #{spatial_transformer_human_vqvae_forward.26} parent=1 // pred_fallthru
      _
    %296 = vsyncpa [#allocation3], 1

// kernel: spatial_transformer_human_vqvae_forward.27
$region0: #{spatial_transformer_human_vqvae_forward.27}
  #allocation0 [shape = 'u32[]', space=smem, size = 0x4, offset = 0x4, fixed_abs, tag = 'smem constant byte address 0x4 - core index']
  #allocation1 [shape = 'u32[144,128]{1,0:T(1,128)}', space=vmem, size = 0x12000, scoped, tag = 'internal scratch']
  %s0 = inlined_call_operand.vmem [shape: f32[2,10,128], index: 0, kind: input, shape index: {}]
  %s1 = inlined_call_operand.vmem [shape: bf16[3,128,128], index: 1, kind: input, shape index: {}]
  %s2 = inlined_call_operand.vmem [shape: f32[1,128], index: 2, kind: input, shape index: {}]
  %s3 = inlined_call_operand.vmem [shape: f32[2,8,128], index: 3, kind: output, shape index: {}]
  %s4 = sld [smem:[#allocation0]]
  $region45: #{spatial_transformer_human_vqvae_forward.27} parent=0
    _
  %s6 = ssub.s32 1, %s4
  %s7 = scalar_select 0, %s6, %s4
  loop: start=0, step=1, limit=4
  $region2: #{spatial_transformer_human_vqvae_forward.27} parent=0 // loop_pre_header
    _
  $region3: #{spatial_transformer_human_vqvae_forward.27} parent=0 // loop_header
    %s9 = sphi 0, %s13
    %p10 = scmp.ge.s32.totalorder %s9, 4
    %s19 = sphi 0, %s21
    %s22 = sphi 0, %s19
    %s23 = sphi 0, %s22
    %s39 = sphi 0, %s23
    %s43 = sphi 0, %s43
    %s45 = sphi 0, %s43
    %s46 = sphi 0, %s45
    %s60 = sphi 0, %s46
    %s64 = sphi 0, %s64
    %s66 = sphi 0, %s64
    %s67 = sphi 0, %s66
    %s81 = sphi 0, %s67
    %s87 = sphi 0, %s89
    %s90 = sphi 0, %s87
    %s91 = sphi 0, %s90
    %s107 = sphi 0, %s91
  $region4: #{spatial_transformer_human_vqvae_forward.27} parent=0 // loop_header_branch
    %12 = sbr.rel (%p10) target = $region8
  $region5: #{spatial_transformer_human_vqvae_forward.27} parent=0 // loop_body
    %s14 = ssub.s32 %s9, 1
    %s15 = ssub.s32 %s9, 2
    %s16 = sadd.s32 %s9, 1
    %s17 = ssub.s32 %s9, %s16
    %p18 = scmp.eq.s32.totalorder %s17, 0
    %s20 = sadd.s32 %s19, 1
    %s21 = scalar_select %p18, %s19, %s20
    %p24 = pneg %p18
    %p25 = scmp.eq.s32.totalorder %s9, 1
    %p26 = por %p24, %p25
    %p27 = scmp.ne.s32.totalorder %s19, %s22
    %p28 = scmp.eq.s32.totalorder %s9, 0
    %p29 = por %p27, %p28
    %p30 = scmp.ne.s32.totalorder %s19, %s22
    %p31 = scmp.eq.s32.totalorder %s14, 1
    %p32 = por %p30, %p31
    %p33 = scmp.ne.s32.totalorder %s22, %s23
    %p34 = scmp.eq.s32.totalorder %s14, 0
    %p35 = por %p33, %p34
    %p36 = scmp.ne.s32.totalorder %s22, %s23
    %p37 = scmp.eq.s32.totalorder %s15, 1
    %p38 = por %p36, %p37
    %p40 = scmp.ne.s32.totalorder %s23, %s39
    %p41 = scmp.eq.s32.totalorder %s15, 0
    %p42 = por %p40, %p41
    %s44 = sadd.s32 %s43, 1
    %p47 = scmp.eq.s32.totalorder %s9, 1
    %p48 = scmp.ne.s32.totalorder %s43, %s45
    %p49 = scmp.eq.s32.totalorder %s9, 0
    %p50 = por %p48, %p49
    %p51 = scmp.ne.s32.totalorder %s43, %s45
    %p52 = scmp.eq.s32.totalorder %s14, 1
    %p53 = por %p51, %p52
    %p54 = scmp.ne.s32.totalorder %s45, %s46
    %p55 = scmp.eq.s32.totalorder %s14, 0
    %p56 = por %p54, %p55
    %p57 = scmp.ne.s32.totalorder %s45, %s46
    %p58 = scmp.eq.s32.totalorder %s15, 1
    %p59 = por %p57, %p58
    %p61 = scmp.ne.s32.totalorder %s46, %s60
    %p62 = scmp.eq.s32.totalorder %s15, 0
    %p63 = por %p61, %p62
    %s65 = sadd.s32 %s64, 1
    %p68 = scmp.eq.s32.totalorder %s9, 1
    %p69 = scmp.ne.s32.totalorder %s64, %s66
    %p70 = scmp.eq.s32.totalorder %s9, 0
    %p71 = por %p69, %p70
    %p72 = scmp.ne.s32.totalorder %s64, %s66
    %p73 = scmp.eq.s32.totalorder %s14, 1
    %p74 = por %p72, %p73
    %p75 = scmp.ne.s32.totalorder %s66, %s67
    %p76 = scmp.eq.s32.totalorder %s14, 0
    %p77 = por %p75, %p76
    %p78 = scmp.ne.s32.totalorder %s66, %s67
    %p79 = scmp.eq.s32.totalorder %s15, 1
    %p80 = por %p78, %p79
    %p82 = scmp.ne.s32.totalorder %s67, %s81
    %p83 = scmp.eq.s32.totalorder %s15, 0
    %p84 = por %p82, %p83
    %s85 = ssub.s32 %s9, %s16
    %p86 = scmp.eq.s32.totalorder %s85, 0
    %s88 = sadd.s32 %s87, 1
    %s89 = scalar_select %p86, %s87, %s88
    %p92 = pneg %p86
    %p93 = scmp.eq.s32.totalorder %s9, 1
    %p94 = por %p92, %p93
    %p95 = scmp.ne.s32.totalorder %s87, %s90
    %p96 = scmp.eq.s32.totalorder %s9, 0
    %p97 = por %p95, %p96
    %p98 = scmp.ne.s32.totalorder %s87, %s90
    %p99 = scmp.eq.s32.totalorder %s14, 1
    %p100 = por %p98, %p99
    %p101 = scmp.ne.s32.totalorder %s90, %s91
    %p102 = scmp.eq.s32.totalorder %s14, 0
    %p103 = por %p101, %p102
    %p104 = scmp.ne.s32.totalorder %s90, %s91
    %p105 = scmp.eq.s32.totalorder %s15, 1
    %p106 = por %p104, %p105
    %p108 = scmp.ne.s32.totalorder %s91, %s107
    %p109 = scmp.eq.s32.totalorder %s15, 0
    %p110 = por %p108, %p109
    %p111 = scmp.le.s32.totalorder 1, %s9
    %p112 = scmp.lt.s32.totalorder %s9, 3
    %p113 = pnand %p111, %p112
    %p114 = pneg %p113
    // Predicated region
    $region9: #{spatial_transformer_human_vqvae_forward.27} parent=5 // pred_check
      _
    $region10: #{spatial_transformer_human_vqvae_forward.27} parent=5 // pred_check_branch
      %116 = sbr.rel (%p113) target = $region12
    $region11: #{spatial_transformer_human_vqvae_forward.27} parent=5 // pred_region
      %s117 = ssub.s32 %s9, 1
      // Predicated region
      $region13: #{spatial_transformer_human_vqvae_forward.27} parent=11 // pred_check
        %p118 = pneg %p56
      $region14: #{spatial_transformer_human_vqvae_forward.27} parent=11 // pred_check_branch
        %120 = sbr.rel (%p118) target = $region16
      $region15: #{spatial_transformer_human_vqvae_forward.27} parent=11 // pred_region
        _
      $region16: #{spatial_transformer_human_vqvae_forward.27} parent=11 // pred_fallthru
        _
      // Predicated region
      $region17: #{spatial_transformer_human_vqvae_forward.27} parent=11 // pred_check
        %p121 = pneg %p77
      $region18: #{spatial_transformer_human_vqvae_forward.27} parent=11 // pred_check_branch
        %123 = sbr.rel (%p121) target = $region20
      $region19: #{spatial_transformer_human_vqvae_forward.27} parent=11 // pred_region
        _
      $region20: #{spatial_transformer_human_vqvae_forward.27} parent=11 // pred_fallthru
        _
    $region12: #{spatial_transformer_human_vqvae_forward.27} parent=5 // pred_fallthru
      _
    %p124 = scmp.lt.s32.totalorder %s9, 2
    // Predicated region
    $region21: #{spatial_transformer_human_vqvae_forward.27} parent=5 // pred_check
      %p125 = pneg %p124
    $region22: #{spatial_transformer_human_vqvae_forward.27} parent=5 // pred_check_branch
      %127 = sbr.rel (%p125) target = $region24
    $region23: #{spatial_transformer_human_vqvae_forward.27} parent=5 // pred_region
      // Predicated region
      $region25: #{spatial_transformer_human_vqvae_forward.27} parent=23 // pred_check
        %p128 = pneg %p29
      $region26: #{spatial_transformer_human_vqvae_forward.27} parent=23 // pred_check_branch
        %130 = sbr.rel (%p128) target = $region28
      $region27: #{spatial_transformer_human_vqvae_forward.27} parent=23 // pred_region
        %p131 = scmp.lt.s32.totalorder %s9, 1
        %s132 = scalar_select %p131, %s9, 1
        %s133 = smul.addr %s132, 2
        %s134 = smul.addr %s133, 8
        %s135 = scalar_lea.vmem %s0, %s134
      $region28: #{spatial_transformer_human_vqvae_forward.27} parent=23 // pred_fallthru
        _
    $region24: #{spatial_transformer_human_vqvae_forward.27} parent=5 // pred_fallthru
      _
    %p136 = scmp.le.s32.totalorder 1, %s9
    %p137 = scmp.lt.s32.totalorder %s9, 3
    %p138 = pnand %p136, %p137
    %p139 = pneg %p138
    // Predicated region
    $region29: #{spatial_transformer_human_vqvae_forward.27} parent=5 // pred_check
      _
    $region30: #{spatial_transformer_human_vqvae_forward.27} parent=5 // pred_check_branch
      %141 = sbr.rel (%p138) target = $region32
    $region31: #{spatial_transformer_human_vqvae_forward.27} parent=5 // pred_region
      %s142 = ssub.s32 %s9, 1
      %p143 = scmp.lt.s32.totalorder %s14, 1
      %s144 = scalar_select %p143, %s14, 1
      %s145 = smul.addr %s144, 2
      %s146 = smul.addr %s145, 8
      %s147 = scalar_lea.vmem %s0, %s146
      %p148 = pneg %p35
      %p149 = pneg %p32
      %p150 = pneg %p56
      %p151 = pneg %p53
      %p152 = pneg %p77
      %p153 = pneg %p74
      %p154 = pneg %p103
      %p155 = pneg %p100
      %p156 = scmp.lt.s32.totalorder %s14, 1
      %s157 = scalar_select %p156, %s14, 1
      %s158 = smul.addr %s157, 8
      %s159 = scalar_lea.vmem %s3, %s158
      %p160 = scmp.lt.s32.totalorder %s14, 1
      %s161 = scalar_select %p160, %s14, 1
      %s162 = smul.addr %s161, 2
      %s163 = smul.addr %s162, 8
      %s164 = scalar_lea.vmem %s0, %s163
      %p165 = scmp.lt.s32.totalorder %s14, 1
      %s166 = scalar_select %p165, %s14, 1
      %s167 = smul.addr %s166, 8
      %s168 = scalar_lea.vmem %s3, %s167
      %v170 = vld [vmem:[%s164] sm:$0xff]
      %v171 = vld [vmem:[%s164 + $0x8] sm:$0x3]
      %v172 = vld [vmem:[%s2] sm:$0x1]
      %v173 = vpack.c.bf16 %v170, %v170
      %v174 = vld [vmem:[%s1] sm:$0xf]
      %v175 = vld [vmem:[%s1 + $0x4] sm:$0xf]
      %v176 = vld [vmem:[%s1 + $0x8] sm:$0xf]
      %v177 = vld [vmem:[%s1 + $0xc] sm:$0xf]
      %v178 = vld [vmem:[%s1 + $0x10] sm:$0xf]
      %v179 = vld [vmem:[%s1 + $0x14] sm:$0xf]
      %v180 = vld [vmem:[%s1 + $0x18] sm:$0xf]
      %v181 = vld [vmem:[%s1 + $0x1c] sm:$0xf]
      %v182 = vld [vmem:[%s1 + $0x20] sm:$0xf]
      %v183 = vld [vmem:[%s1 + $0x24] sm:$0xf]
      %v184 = vld [vmem:[%s1 + $0x28] sm:$0xf]
      %v185 = vld [vmem:[%s1 + $0x2c] sm:$0xf]
      %v186 = vld [vmem:[%s1 + $0x30] sm:$0xf]
      %v187 = vld [vmem:[%s1 + $0x34] sm:$0xf]
      %v188 = vld [vmem:[%s1 + $0x38] sm:$0xf]
      %v189 = vld [vmem:[%s1 + $0x3c] sm:$0xf]
      %v206 = vunpack.c.l.b16 %v174
      %v207 = vunpack.c.l.b16 %v175
      %v208 = vunpack.c.l.b16 %v176
      %v209 = vunpack.c.l.b16 %v177
      %v210 = vunpack.c.l.b16 %v178
      %v211 = vunpack.c.l.b16 %v179
      %v212 = vunpack.c.l.b16 %v180
      %v213 = vunpack.c.l.b16 %v181
      %v214 = vunpack.c.l.b16 %v182
      %v215 = vunpack.c.l.b16 %v183
      %v216 = vunpack.c.l.b16 %v184
      %v217 = vunpack.c.l.b16 %v185
      %v218 = vunpack.c.l.b16 %v186
      %v219 = vunpack.c.l.b16 %v187
      %v220 = vunpack.c.l.b16 %v188
      %v221 = vunpack.c.l.b16 %v189
      %v222 = vpack.c.b16 %v207, %v206
      %v223 = vpack.c.b16 %v209, %v208
      %v224 = vpack.c.b16 %v211, %v210
      %v225 = vpack.c.b16 %v213, %v212
      %v226 = vpack.c.b16 %v215, %v214
      %v227 = vpack.c.b16 %v217, %v216
      %v228 = vpack.c.b16 %v219, %v218
      %v229 = vpack.c.b16 %v221, %v220
      %238 = vmatprep.subr.bf16.mxu0 0
      %239 = vmatpush1.bf16.msra.mxu0 %v229
      %240 = vmatprep.subr.bf16.mxu0 0
      %241 = vmatpush1.bf16.msra.mxu0 %v228
      %242 = vmatprep.subr.bf16.mxu0 0
      %243 = vmatpush1.bf16.msra.mxu0 %v227
      %244 = vmatprep.subr.bf16.mxu0 0
      %245 = vmatpush1.bf16.msra.mxu0 %v226
      %246 = vmatprep.subr.bf16.mxu0 0
      %247 = vmatpush1.bf16.msra.mxu0 %v225
      %248 = vmatprep.subr.bf16.mxu0 0
      %249 = vmatpush1.bf16.msra.mxu0 %v224
      %250 = vmatprep.subr.bf16.mxu0 0
      %251 = vmatpush1.bf16.msra.mxu0 %v223
      %252 = vmatprep.subr.bf16.mxu0 0
      %253 = vmatpush1.bf16.msra.mxu0 %v222
      %254 = vmatprep.subr.bf16.mxu0 0
      %255 = vmatpush2.bf16.msra.mxu0 0
      %256 = vmatprep.subr.bf16.mxu0 0
      %257 = vmatpush2.bf16.msra.mxu0 0
      %258 = vmatprep.subr.bf16.mxu0 0
      %259 = vmatpush2.bf16.msra.mxu0 0
      %260 = vmatprep.subr.bf16.mxu0 0
      %261 = vmatpush2.bf16.msra.mxu0 0
      %262 = vmatprep.subr.bf16.mxu0 0
      %263 = vmatpush2.bf16.msra.mxu0 0
      %264 = vmatprep.subr.bf16.mxu0 0
      %265 = vmatpush2.bf16.msra.mxu0 0
      %266 = vmatprep.subr.bf16.mxu0 0
      %267 = vmatpush2.bf16.msra.mxu0 0
      %268 = vmatprep.subr.bf16.mxu0 0
      %269 = vmatpush2.bf16.msra.mxu0 0
      %270 = vmatprep.mubr.bf16.mxu0 0
      %271 = vmatmul.mubr.bf16.gmra.mxu0 %v173
      %v272 = vpop.f32.mrf.mxu0
      %v273 = vadd.f32 0.0, %v272
      %v274 = vpop.f32.mrf.mxu0
      %v275 = vpop.f32.mrf.mxu0
      %v276 = vpop.f32.mrf.mxu0
      %277 = vdwg.mxu0
      %v279 = vlaneseq
      %v280 = vshrl.u32 %v279, 7
      %v281 = vsub.s32 0, %v280
      %v282 = vrot.slane %v172, %v281
      %v284 = vadd.f32 %v282, %v273
      %v285 = vpack.c.bf16 %v171, %v170
      %s286 = scalar_lea.vmem %s1, 64
      %v287 = vld [vmem:[%s286] sm:$0xf]
      %v288 = vld [vmem:[%s286 + $0x4] sm:$0xf]
      %v289 = vld [vmem:[%s286 + $0x8] sm:$0xf]
      %v290 = vld [vmem:[%s286 + $0xc] sm:$0xf]
      %v291 = vld [vmem:[%s286 + $0x10] sm:$0xf]
      %v292 = vld [vmem:[%s286 + $0x14] sm:$0xf]
      %v293 = vld [vmem:[%s286 + $0x18] sm:$0xf]
      %v294 = vld [vmem:[%s286 + $0x1c] sm:$0xf]
      %v295 = vld [vmem:[%s286 + $0x20] sm:$0xf]
      %v296 = vld [vmem:[%s286 + $0x24] sm:$0xf]
      %v297 = vld [vmem:[%s286 + $0x28] sm:$0xf]
      %v298 = vld [vmem:[%s286 + $0x2c] sm:$0xf]
      %v299 = vld [vmem:[%s286 + $0x30] sm:$0xf]
      %v300 = vld [vmem:[%s286 + $0x34] sm:$0xf]
      %v301 = vld [vmem:[%s286 + $0x38] sm:$0xf]
      %v302 = vld [vmem:[%s286 + $0x3c] sm:$0xf]
      %v304 = vshrl.u32 %v285, 16
      %v306 = vshll.u32 %v285, 16
      %v308 = vrot.slane %v306, 1
      %v309 = vor.u32 %v304, %v308
      %v327 = vunpack.c.l.b16 %v287
      %v328 = vunpack.c.l.b16 %v288
      %v329 = vunpack.c.l.b16 %v289
      %v330 = vunpack.c.l.b16 %v290
      %v331 = vunpack.c.l.b16 %v291
      %v332 = vunpack.c.l.b16 %v292
      %v333 = vunpack.c.l.b16 %v293
      %v334 = vunpack.c.l.b16 %v294
      %v335 = vunpack.c.l.b16 %v295
      %v336 = vunpack.c.l.b16 %v296
      %v337 = vunpack.c.l.b16 %v297
      %v338 = vunpack.c.l.b16 %v298
      %v339 = vunpack.c.l.b16 %v299
      %v340 = vunpack.c.l.b16 %v300
      %v341 = vunpack.c.l.b16 %v301
      %v342 = vunpack.c.l.b16 %v302
      %v343 = vpack.c.b16 %v328, %v327
      %v344 = vpack.c.b16 %v330, %v329
      %v345 = vpack.c.b16 %v332, %v331
      %v346 = vpack.c.b16 %v334, %v333
      %v347 = vpack.c.b16 %v336, %v335
      %v348 = vpack.c.b16 %v338, %v337
      %v349 = vpack.c.b16 %v340, %v339
      %v350 = vpack.c.b16 %v342, %v341
      %359 = vmatprep.subr.bf16.mxu0 0
      %360 = vmatpush1.bf16.msra.mxu0 %v350
      %361 = vmatprep.subr.bf16.mxu0 0
      %362 = vmatpush1.bf16.msra.mxu0 %v349
      %363 = vmatprep.subr.bf16.mxu0 0
      %364 = vmatpush1.bf16.msra.mxu0 %v348
      %365 = vmatprep.subr.bf16.mxu0 0
      %366 = vmatpush1.bf16.msra.mxu0 %v347
      %367 = vmatprep.subr.bf16.mxu0 0
      %368 = vmatpush1.bf16.msra.mxu0 %v346
      %369 = vmatprep.subr.bf16.mxu0 0
      %370 = vmatpush1.bf16.msra.mxu0 %v345
      %371 = vmatprep.subr.bf16.mxu0 0
      %372 = vmatpush1.bf16.msra.mxu0 %v344
      %373 = vmatprep.subr.bf16.mxu0 0
      %374 = vmatpush1.bf16.msra.mxu0 %v343
      %375 = vmatprep.subr.bf16.mxu0 0
      %376 = vmatpush2.bf16.msra.mxu0 0
      %377 = vmatprep.subr.bf16.mxu0 0
      %378 = vmatpush2.bf16.msra.mxu0 0
      %379 = vmatprep.subr.bf16.mxu0 0
      %380 = vmatpush2.bf16.msra.mxu0 0
      %381 = vmatprep.subr.bf16.mxu0 0
      %382 = vmatpush2.bf16.msra.mxu0 0
      %383 = vmatprep.subr.bf16.mxu0 0
      %384 = vmatpush2.bf16.msra.mxu0 0
      %385 = vmatprep.subr.bf16.mxu0 0
      %386 = vmatpush2.bf16.msra.mxu0 0
      %387 = vmatprep.subr.bf16.mxu0 0
      %388 = vmatpush2.bf16.msra.mxu0 0
      %389 = vmatprep.subr.bf16.mxu0 0
      %390 = vmatpush2.bf16.msra.mxu0 0
      %391 = vmatprep.mubr.bf16.mxu0 0
      %392 = vmatmul.mubr.bf16.gmra.mxu0 %v309
      %v393 = vpop.f32.mrf.mxu0
      %v394 = vadd.f32 0.0, %v393
      %v395 = vpop.f32.mrf.mxu0
      %v396 = vpop.f32.mrf.mxu0
      %v397 = vpop.f32.mrf.mxu0
      %398 = vdwg.mxu0
      %v399 = vadd.f32 %v284, %v394
      %s400 = scalar_lea.vmem %s1, 128
      %v401 = vld [vmem:[%s400] sm:$0xf]
      %v402 = vld [vmem:[%s400 + $0x4] sm:$0xf]
      %v403 = vld [vmem:[%s400 + $0x8] sm:$0xf]
      %v404 = vld [vmem:[%s400 + $0xc] sm:$0xf]
      %v405 = vld [vmem:[%s400 + $0x10] sm:$0xf]
      %v406 = vld [vmem:[%s400 + $0x14] sm:$0xf]
      %v407 = vld [vmem:[%s400 + $0x18] sm:$0xf]
      %v408 = vld [vmem:[%s400 + $0x1c] sm:$0xf]
      %v409 = vld [vmem:[%s400 + $0x20] sm:$0xf]
      %v410 = vld [vmem:[%s400 + $0x24] sm:$0xf]
      %v411 = vld [vmem:[%s400 + $0x28] sm:$0xf]
      %v412 = vld [vmem:[%s400 + $0x2c] sm:$0xf]
      %v413 = vld [vmem:[%s400 + $0x30] sm:$0xf]
      %v414 = vld [vmem:[%s400 + $0x34] sm:$0xf]
      %v415 = vld [vmem:[%s400 + $0x38] sm:$0xf]
      %v416 = vld [vmem:[%s400 + $0x3c] sm:$0xf]
      %v418 = vrot.slane %v285, 1
      %v436 = vunpack.c.l.b16 %v401
      %v437 = vunpack.c.l.b16 %v402
      %v438 = vunpack.c.l.b16 %v403
      %v439 = vunpack.c.l.b16 %v404
      %v440 = vunpack.c.l.b16 %v405
      %v441 = vunpack.c.l.b16 %v406
      %v442 = vunpack.c.l.b16 %v407
      %v443 = vunpack.c.l.b16 %v408
      %v444 = vunpack.c.l.b16 %v409
      %v445 = vunpack.c.l.b16 %v410
      %v446 = vunpack.c.l.b16 %v411
      %v447 = vunpack.c.l.b16 %v412
      %v448 = vunpack.c.l.b16 %v413
      %v449 = vunpack.c.l.b16 %v414
      %v450 = vunpack.c.l.b16 %v415
      %v451 = vunpack.c.l.b16 %v416
      %v452 = vpack.c.b16 %v437, %v436
      %v453 = vpack.c.b16 %v439, %v438
      %v454 = vpack.c.b16 %v441, %v440
      %v455 = vpack.c.b16 %v443, %v442
      %v456 = vpack.c.b16 %v445, %v444
      %v457 = vpack.c.b16 %v447, %v446
      %v458 = vpack.c.b16 %v449, %v448
      %v459 = vpack.c.b16 %v451, %v450
      %468 = vmatprep.subr.bf16.mxu0 0
      %469 = vmatpush1.bf16.msra.mxu0 %v459
      %470 = vmatprep.subr.bf16.mxu0 0
      %471 = vmatpush1.bf16.msra.mxu0 %v458
      %472 = vmatprep.subr.bf16.mxu0 0
      %473 = vmatpush1.bf16.msra.mxu0 %v457
      %474 = vmatprep.subr.bf16.mxu0 0
      %475 = vmatpush1.bf16.msra.mxu0 %v456
      %476 = vmatprep.subr.bf16.mxu0 0
      %477 = vmatpush1.bf16.msra.mxu0 %v455
      %478 = vmatprep.subr.bf16.mxu0 0
      %479 = vmatpush1.bf16.msra.mxu0 %v454
      %480 = vmatprep.subr.bf16.mxu0 0
      %481 = vmatpush1.bf16.msra.mxu0 %v453
      %482 = vmatprep.subr.bf16.mxu0 0
      %483 = vmatpush1.bf16.msra.mxu0 %v452
      %484 = vmatprep.subr.bf16.mxu0 0
      %485 = vmatpush2.bf16.msra.mxu0 0
      %486 = vmatprep.subr.bf16.mxu0 0
      %487 = vmatpush2.bf16.msra.mxu0 0
      %488 = vmatprep.subr.bf16.mxu0 0
      %489 = vmatpush2.bf16.msra.mxu0 0
      %490 = vmatprep.subr.bf16.mxu0 0
      %491 = vmatpush2.bf16.msra.mxu0 0
      %492 = vmatprep.subr.bf16.mxu0 0
      %493 = vmatpush2.bf16.msra.mxu0 0
      %494 = vmatprep.subr.bf16.mxu0 0
      %495 = vmatpush2.bf16.msra.mxu0 0
      %496 = vmatprep.subr.bf16.mxu0 0
      %497 = vmatpush2.bf16.msra.mxu0 0
      %498 = vmatprep.subr.bf16.mxu0 0
      %499 = vmatpush2.bf16.msra.mxu0 0
      %500 = vmatprep.mubr.bf16.mxu0 0
      %501 = vmatmul.mubr.bf16.gmra.mxu0 %v418
      %v502 = vpop.f32.mrf.mxu0
      %v503 = vadd.f32 0.0, %v502
      %v504 = vpop.f32.mrf.mxu0
      %v505 = vpop.f32.mrf.mxu0
      %v506 = vpop.f32.mrf.mxu0
      %507 = vdwg.mxu0
      %v508 = vadd.f32 %v399, %v503
      %v509 = vmax.f32 %v508, 0.0
      %510 = vst [vmem:[%s168] sm:$0xff] %v509
      %p511 = scmp.lt.s32.totalorder %s14, 1
      %s512 = scalar_select %p511, %s14, 1
      %s513 = smul.addr %s512, 8
      %s514 = scalar_lea.vmem %s3, %s513
      // Predicated region
      $region33: #{spatial_transformer_human_vqvae_forward.27} parent=31 // pred_check
        %p515 = pneg %p100
      $region34: #{spatial_transformer_human_vqvae_forward.27} parent=31 // pred_check_branch
        %517 = sbr.rel (%p515) target = $region36
      $region35: #{spatial_transformer_human_vqvae_forward.27} parent=31 // pred_region
        _
      $region36: #{spatial_transformer_human_vqvae_forward.27} parent=31 // pred_fallthru
        _
    $region32: #{spatial_transformer_human_vqvae_forward.27} parent=5 // pred_fallthru
      _
    %p518 = scmp.le.s32.totalorder 2, %s9
    // Predicated region
    $region37: #{spatial_transformer_human_vqvae_forward.27} parent=5 // pred_check
      %p519 = pneg %p518
    $region38: #{spatial_transformer_human_vqvae_forward.27} parent=5 // pred_check_branch
      %521 = sbr.rel (%p519) target = $region40
    $region39: #{spatial_transformer_human_vqvae_forward.27} parent=5 // pred_region
      %s522 = ssub.s32 %s9, 2
      // Predicated region
      $region41: #{spatial_transformer_human_vqvae_forward.27} parent=39 // pred_check
        %p523 = pneg %p106
      $region42: #{spatial_transformer_human_vqvae_forward.27} parent=39 // pred_check_branch
        %525 = sbr.rel (%p523) target = $region44
      $region43: #{spatial_transformer_human_vqvae_forward.27} parent=39 // pred_region
        %p526 = scmp.lt.s32.totalorder %s15, 1
        %s527 = scalar_select %p526, %s15, 1
        %s528 = smul.addr %s527, 8
        %s529 = scalar_lea.vmem %s3, %s528
      $region44: #{spatial_transformer_human_vqvae_forward.27} parent=39 // pred_fallthru
        _
    $region40: #{spatial_transformer_human_vqvae_forward.27} parent=5 // pred_fallthru
      _
  $region6: #{spatial_transformer_human_vqvae_forward.27} parent=0 // loop_footer
    %s13 = sadd.s32 1, %s9
  $region7: #{spatial_transformer_human_vqvae_forward.27} parent=0 // loop_footer_branch
    %8 = sbr.rel target = $region3
  $region8: #{spatial_transformer_human_vqvae_forward.27} parent=0 // loop_exit
    _

// kernel: spatial_transformer_human_vqvae_forward.30
$region0: #{spatial_transformer_human_vqvae_forward.30}
  #allocation0 [shape = 'u32[]', space=smem, size = 0x4, offset = 0x4, fixed_abs, tag = 'smem constant byte address 0x4 - core index']
  #allocation1 [shape = 'u32[144,128]{1,0:T(1,128)}', space=vmem, size = 0x12000, scoped, tag = 'internal scratch']
  %s0 = inlined_call_operand.vmem [shape: f32[2,10,128], index: 0, kind: input, shape index: {}]
  %s1 = inlined_call_operand.vmem [shape: bf16[2,128,128], index: 1, kind: input, shape index: {}]
  %s2 = inlined_call_operand.vmem [shape: bf16[2,128,128], index: 2, kind: input, shape index: {}]
  %s3 = inlined_call_operand.vmem [shape: f32[1,128], index: 3, kind: input, shape index: {}]
  %s4 = inlined_call_operand.vmem [shape: f32[2,8,128], index: 4, kind: output, shape index: {0}]
  %s5 = inlined_call_operand.vmem [shape: f32[2,8,128], index: 5, kind: output, shape index: {1}]
  %6 = xla_tuple %s4, %s5
  %s7 = sld [smem:[#allocation0]]
  $region57: #{spatial_transformer_human_vqvae_forward.30} parent=0
    _
  %s9 = ssub.s32 1, %s7
  %s10 = scalar_select 0, %s9, %s7
  loop: start=0, step=1, limit=4
  $region2: #{spatial_transformer_human_vqvae_forward.30} parent=0 // loop_pre_header
    _
  $region3: #{spatial_transformer_human_vqvae_forward.30} parent=0 // loop_header
    %s12 = sphi 0, %s16
    %p13 = scmp.ge.s32.totalorder %s12, 4
    %s22 = sphi 0, %s24
    %s25 = sphi 0, %s22
    %s26 = sphi 0, %s25
    %s42 = sphi 0, %s26
    %s46 = sphi 0, %s46
    %s48 = sphi 0, %s46
    %s49 = sphi 0, %s48
    %s63 = sphi 0, %s49
    %s67 = sphi 0, %s67
    %s69 = sphi 0, %s67
    %s70 = sphi 0, %s69
    %s84 = sphi 0, %s70
    %s88 = sphi 0, %s88
    %s90 = sphi 0, %s88
    %s91 = sphi 0, %s90
    %s105 = sphi 0, %s91
    %s111 = sphi 0, %s113
    %s114 = sphi 0, %s111
    %s115 = sphi 0, %s114
    %s131 = sphi 0, %s115
    %s137 = sphi 0, %s139
    %s140 = sphi 0, %s137
    %s141 = sphi 0, %s140
    %s157 = sphi 0, %s141
  $region4: #{spatial_transformer_human_vqvae_forward.30} parent=0 // loop_header_branch
    %15 = sbr.rel (%p13) target = $region8
  $region5: #{spatial_transformer_human_vqvae_forward.30} parent=0 // loop_body
    %s17 = ssub.s32 %s12, 1
    %s18 = ssub.s32 %s12, 2
    %s19 = sadd.s32 %s12, 1
    %s20 = ssub.s32 %s12, %s19
    %p21 = scmp.eq.s32.totalorder %s20, 0
    %s23 = sadd.s32 %s22, 1
    %s24 = scalar_select %p21, %s22, %s23
    %p27 = pneg %p21
    %p28 = scmp.eq.s32.totalorder %s12, 1
    %p29 = por %p27, %p28
    %p30 = scmp.ne.s32.totalorder %s22, %s25
    %p31 = scmp.eq.s32.totalorder %s12, 0
    %p32 = por %p30, %p31
    %p33 = scmp.ne.s32.totalorder %s22, %s25
    %p34 = scmp.eq.s32.totalorder %s17, 1
    %p35 = por %p33, %p34
    %p36 = scmp.ne.s32.totalorder %s25, %s26
    %p37 = scmp.eq.s32.totalorder %s17, 0
    %p38 = por %p36, %p37
    %p39 = scmp.ne.s32.totalorder %s25, %s26
    %p40 = scmp.eq.s32.totalorder %s18, 1
    %p41 = por %p39, %p40
    %p43 = scmp.ne.s32.totalorder %s26, %s42
    %p44 = scmp.eq.s32.totalorder %s18, 0
    %p45 = por %p43, %p44
    %s47 = sadd.s32 %s46, 1
    %p50 = scmp.eq.s32.totalorder %s12, 1
    %p51 = scmp.ne.s32.totalorder %s46, %s48
    %p52 = scmp.eq.s32.totalorder %s12, 0
    %p53 = por %p51, %p52
    %p54 = scmp.ne.s32.totalorder %s46, %s48
    %p55 = scmp.eq.s32.totalorder %s17, 1
    %p56 = por %p54, %p55
    %p57 = scmp.ne.s32.totalorder %s48, %s49
    %p58 = scmp.eq.s32.totalorder %s17, 0
    %p59 = por %p57, %p58
    %p60 = scmp.ne.s32.totalorder %s48, %s49
    %p61 = scmp.eq.s32.totalorder %s18, 1
    %p62 = por %p60, %p61
    %p64 = scmp.ne.s32.totalorder %s49, %s63
    %p65 = scmp.eq.s32.totalorder %s18, 0
    %p66 = por %p64, %p65
    %s68 = sadd.s32 %s67, 1
    %p71 = scmp.eq.s32.totalorder %s12, 1
    %p72 = scmp.ne.s32.totalorder %s67, %s69
    %p73 = scmp.eq.s32.totalorder %s12, 0
    %p74 = por %p72, %p73
    %p75 = scmp.ne.s32.totalorder %s67, %s69
    %p76 = scmp.eq.s32.totalorder %s17, 1
    %p77 = por %p75, %p76
    %p78 = scmp.ne.s32.totalorder %s69, %s70
    %p79 = scmp.eq.s32.totalorder %s17, 0
    %p80 = por %p78, %p79
    %p81 = scmp.ne.s32.totalorder %s69, %s70
    %p82 = scmp.eq.s32.totalorder %s18, 1
    %p83 = por %p81, %p82
    %p85 = scmp.ne.s32.totalorder %s70, %s84
    %p86 = scmp.eq.s32.totalorder %s18, 0
    %p87 = por %p85, %p86
    %s89 = sadd.s32 %s88, 1
    %p92 = scmp.eq.s32.totalorder %s12, 1
    %p93 = scmp.ne.s32.totalorder %s88, %s90
    %p94 = scmp.eq.s32.totalorder %s12, 0
    %p95 = por %p93, %p94
    %p96 = scmp.ne.s32.totalorder %s88, %s90
    %p97 = scmp.eq.s32.totalorder %s17, 1
    %p98 = por %p96, %p97
    %p99 = scmp.ne.s32.totalorder %s90, %s91
    %p100 = scmp.eq.s32.totalorder %s17, 0
    %p101 = por %p99, %p100
    %p102 = scmp.ne.s32.totalorder %s90, %s91
    %p103 = scmp.eq.s32.totalorder %s18, 1
    %p104 = por %p102, %p103
    %p106 = scmp.ne.s32.totalorder %s91, %s105
    %p107 = scmp.eq.s32.totalorder %s18, 0
    %p108 = por %p106, %p107
    %s109 = ssub.s32 %s12, %s19
    %p110 = scmp.eq.s32.totalorder %s109, 0
    %s112 = sadd.s32 %s111, 1
    %s113 = scalar_select %p110, %s111, %s112
    %p116 = pneg %p110
    %p117 = scmp.eq.s32.totalorder %s12, 1
    %p118 = por %p116, %p117
    %p119 = scmp.ne.s32.totalorder %s111, %s114
    %p120 = scmp.eq.s32.totalorder %s12, 0
    %p121 = por %p119, %p120
    %p122 = scmp.ne.s32.totalorder %s111, %s114
    %p123 = scmp.eq.s32.totalorder %s17, 1
    %p124 = por %p122, %p123
    %p125 = scmp.ne.s32.totalorder %s114, %s115
    %p126 = scmp.eq.s32.totalorder %s17, 0
    %p127 = por %p125, %p126
    %p128 = scmp.ne.s32.totalorder %s114, %s115
    %p129 = scmp.eq.s32.totalorder %s18, 1
    %p130 = por %p128, %p129
    %p132 = scmp.ne.s32.totalorder %s115, %s131
    %p133 = scmp.eq.s32.totalorder %s18, 0
    %p134 = por %p132, %p133
    %s135 = ssub.s32 %s12, %s19
    %p136 = scmp.eq.s32.totalorder %s135, 0
    %s138 = sadd.s32 %s137, 1
    %s139 = scalar_select %p136, %s137, %s138
    %p142 = pneg %p136
    %p143 = scmp.eq.s32.totalorder %s12, 1
    %p144 = por %p142, %p143
    %p145 = scmp.ne.s32.totalorder %s137, %s140
    %p146 = scmp.eq.s32.totalorder %s12, 0
    %p147 = por %p145, %p146
    %p148 = scmp.ne.s32.totalorder %s137, %s140
    %p149 = scmp.eq.s32.totalorder %s17, 1
    %p150 = por %p148, %p149
    %p151 = scmp.ne.s32.totalorder %s140, %s141
    %p152 = scmp.eq.s32.totalorder %s17, 0
    %p153 = por %p151, %p152
    %p154 = scmp.ne.s32.totalorder %s140, %s141
    %p155 = scmp.eq.s32.totalorder %s18, 1
    %p156 = por %p154, %p155
    %p158 = scmp.ne.s32.totalorder %s141, %s157
    %p159 = scmp.eq.s32.totalorder %s18, 0
    %p160 = por %p158, %p159
    %p161 = scmp.le.s32.totalorder 1, %s12
    %p162 = scmp.lt.s32.totalorder %s12, 3
    %p163 = pnand %p161, %p162
    %p164 = pneg %p163
    // Predicated region
    $region9: #{spatial_transformer_human_vqvae_forward.30} parent=5 // pred_check
      _
    $region10: #{spatial_transformer_human_vqvae_forward.30} parent=5 // pred_check_branch
      %166 = sbr.rel (%p163) target = $region12
    $region11: #{spatial_transformer_human_vqvae_forward.30} parent=5 // pred_region
      %s167 = ssub.s32 %s12, 1
      // Predicated region
      $region13: #{spatial_transformer_human_vqvae_forward.30} parent=11 // pred_check
        %p168 = pneg %p59
      $region14: #{spatial_transformer_human_vqvae_forward.30} parent=11 // pred_check_branch
        %170 = sbr.rel (%p168) target = $region16
      $region15: #{spatial_transformer_human_vqvae_forward.30} parent=11 // pred_region
        _
      $region16: #{spatial_transformer_human_vqvae_forward.30} parent=11 // pred_fallthru
        _
      // Predicated region
      $region17: #{spatial_transformer_human_vqvae_forward.30} parent=11 // pred_check
        %p171 = pneg %p80
      $region18: #{spatial_transformer_human_vqvae_forward.30} parent=11 // pred_check_branch
        %173 = sbr.rel (%p171) target = $region20
      $region19: #{spatial_transformer_human_vqvae_forward.30} parent=11 // pred_region
        _
      $region20: #{spatial_transformer_human_vqvae_forward.30} parent=11 // pred_fallthru
        _
      // Predicated region
      $region21: #{spatial_transformer_human_vqvae_forward.30} parent=11 // pred_check
        %p174 = pneg %p101
      $region22: #{spatial_transformer_human_vqvae_forward.30} parent=11 // pred_check_branch
        %176 = sbr.rel (%p174) target = $region24
      $region23: #{spatial_transformer_human_vqvae_forward.30} parent=11 // pred_region
        _
      $region24: #{spatial_transformer_human_vqvae_forward.30} parent=11 // pred_fallthru
        _
    $region12: #{spatial_transformer_human_vqvae_forward.30} parent=5 // pred_fallthru
      _
    %p177 = scmp.lt.s32.totalorder %s12, 2
    // Predicated region
    $region25: #{spatial_transformer_human_vqvae_forward.30} parent=5 // pred_check
      %p178 = pneg %p177
    $region26: #{spatial_transformer_human_vqvae_forward.30} parent=5 // pred_check_branch
      %180 = sbr.rel (%p178) target = $region28
    $region27: #{spatial_transformer_human_vqvae_forward.30} parent=5 // pred_region
      // Predicated region
      $region29: #{spatial_transformer_human_vqvae_forward.30} parent=27 // pred_check
        %p181 = pneg %p32
      $region30: #{spatial_transformer_human_vqvae_forward.30} parent=27 // pred_check_branch
        %183 = sbr.rel (%p181) target = $region32
      $region31: #{spatial_transformer_human_vqvae_forward.30} parent=27 // pred_region
        %p184 = scmp.lt.s32.totalorder %s12, 1
        %s185 = scalar_select %p184, %s12, 1
        %s186 = smul.addr %s185, 2
        %s187 = smul.addr %s186, 8
        %s188 = scalar_lea.vmem %s0, %s187
      $region32: #{spatial_transformer_human_vqvae_forward.30} parent=27 // pred_fallthru
        _
    $region28: #{spatial_transformer_human_vqvae_forward.30} parent=5 // pred_fallthru
      _
    %p189 = scmp.le.s32.totalorder 1, %s12
    %p190 = scmp.lt.s32.totalorder %s12, 3
    %p191 = pnand %p189, %p190
    %p192 = pneg %p191
    // Predicated region
    $region33: #{spatial_transformer_human_vqvae_forward.30} parent=5 // pred_check
      _
    $region34: #{spatial_transformer_human_vqvae_forward.30} parent=5 // pred_check_branch
      %194 = sbr.rel (%p191) target = $region36
    $region35: #{spatial_transformer_human_vqvae_forward.30} parent=5 // pred_region
      %s195 = ssub.s32 %s12, 1
      %p196 = scmp.lt.s32.totalorder %s17, 1
      %s197 = scalar_select %p196, %s17, 1
      %s198 = smul.addr %s197, 2
      %s199 = smul.addr %s198, 8
      %s200 = scalar_lea.vmem %s0, %s199
      %p201 = pneg %p38
      %p202 = pneg %p35
      %p203 = pneg %p59
      %p204 = pneg %p56
      %p205 = pneg %p80
      %p206 = pneg %p77
      %p207 = pneg %p101
      %p208 = pneg %p98
      %p209 = pneg %p127
      %p210 = pneg %p124
      %p211 = scmp.lt.s32.totalorder %s17, 1
      %s212 = scalar_select %p211, %s17, 1
      %s213 = smul.addr %s212, 8
      %s214 = scalar_lea.vmem %s4, %s213
      %p215 = pneg %p153
      %p216 = pneg %p150
      %p217 = scmp.lt.s32.totalorder %s17, 1
      %s218 = scalar_select %p217, %s17, 1
      %s219 = smul.addr %s218, 8
      %s220 = scalar_lea.vmem %s5, %s219
      %p221 = scmp.lt.s32.totalorder %s17, 1
      %s222 = scalar_select %p221, %s17, 1
      %s223 = smul.addr %s222, 2
      %s224 = smul.addr %s223, 8
      %s225 = scalar_lea.vmem %s0, %s224
      %p226 = scmp.lt.s32.totalorder %s17, 1
      %s227 = scalar_select %p226, %s17, 1
      %s228 = smul.addr %s227, 8
      %s229 = scalar_lea.vmem %s4, %s228
      %p230 = scmp.lt.s32.totalorder %s17, 1
      %s231 = scalar_select %p230, %s17, 1
      %s232 = smul.addr %s231, 8
      %s233 = scalar_lea.vmem %s5, %s232
      %v235 = vld [vmem:[%s225] sm:$0xff]
      %v236 = vld [vmem:[%s225 + $0x8] sm:$0x3]
      %v237 = vld [vmem:[%s3] sm:$0x1]
      %v238 = vpack.c.bf16 %v235, %v235
      %v239 = vpack.c.bf16 %v236, %v235
      %v240 = vld [vmem:[%s1] sm:$0xf]
      %v241 = vld [vmem:[%s1 + $0x4] sm:$0xf]
      %v242 = vld [vmem:[%s1 + $0x8] sm:$0xf]
      %v243 = vld [vmem:[%s1 + $0xc] sm:$0xf]
      %v244 = vld [vmem:[%s1 + $0x10] sm:$0xf]
      %v245 = vld [vmem:[%s1 + $0x14] sm:$0xf]
      %v246 = vld [vmem:[%s1 + $0x18] sm:$0xf]
      %v247 = vld [vmem:[%s1 + $0x1c] sm:$0xf]
      %v248 = vld [vmem:[%s1 + $0x20] sm:$0xf]
      %v249 = vld [vmem:[%s1 + $0x24] sm:$0xf]
      %v250 = vld [vmem:[%s1 + $0x28] sm:$0xf]
      %v251 = vld [vmem:[%s1 + $0x2c] sm:$0xf]
      %v252 = vld [vmem:[%s1 + $0x30] sm:$0xf]
      %v253 = vld [vmem:[%s1 + $0x34] sm:$0xf]
      %v254 = vld [vmem:[%s1 + $0x38] sm:$0xf]
      %v255 = vld [vmem:[%s1 + $0x3c] sm:$0xf]
      %v272 = vunpack.c.l.b16 %v240
      %v273 = vunpack.c.l.b16 %v241
      %v274 = vunpack.c.l.b16 %v242
      %v275 = vunpack.c.l.b16 %v243
      %v276 = vunpack.c.l.b16 %v244
      %v277 = vunpack.c.l.b16 %v245
      %v278 = vunpack.c.l.b16 %v246
      %v279 = vunpack.c.l.b16 %v247
      %v280 = vunpack.c.l.b16 %v248
      %v281 = vunpack.c.l.b16 %v249
      %v282 = vunpack.c.l.b16 %v250
      %v283 = vunpack.c.l.b16 %v251
      %v284 = vunpack.c.l.b16 %v252
      %v285 = vunpack.c.l.b16 %v253
      %v286 = vunpack.c.l.b16 %v254
      %v287 = vunpack.c.l.b16 %v255
      %v288 = vpack.c.b16 %v273, %v272
      %v289 = vpack.c.b16 %v275, %v274
      %v290 = vpack.c.b16 %v277, %v276
      %v291 = vpack.c.b16 %v279, %v278
      %v292 = vpack.c.b16 %v281, %v280
      %v293 = vpack.c.b16 %v283, %v282
      %v294 = vpack.c.b16 %v285, %v284
      %v295 = vpack.c.b16 %v287, %v286
      %304 = vmatprep.subr.bf16.mxu0 0
      %305 = vmatpush1.bf16.msra.mxu0 %v295
      %306 = vmatprep.subr.bf16.mxu0 0
      %307 = vmatpush1.bf16.msra.mxu0 %v294
      %308 = vmatprep.subr.bf16.mxu0 0
      %309 = vmatpush1.bf16.msra.mxu0 %v293
      %310 = vmatprep.subr.bf16.mxu0 0
      %311 = vmatpush1.bf16.msra.mxu0 %v292
      %312 = vmatprep.subr.bf16.mxu0 0
      %313 = vmatpush1.bf16.msra.mxu0 %v291
      %314 = vmatprep.subr.bf16.mxu0 0
      %315 = vmatpush1.bf16.msra.mxu0 %v290
      %316 = vmatprep.subr.bf16.mxu0 0
      %317 = vmatpush1.bf16.msra.mxu0 %v289
      %318 = vmatprep.subr.bf16.mxu0 0
      %319 = vmatpush1.bf16.msra.mxu0 %v288
      %320 = vmatprep.subr.bf16.mxu0 0
      %321 = vmatpush2.bf16.msra.mxu0 0
      %322 = vmatprep.subr.bf16.mxu0 0
      %323 = vmatpush2.bf16.msra.mxu0 0
      %324 = vmatprep.subr.bf16.mxu0 0
      %325 = vmatpush2.bf16.msra.mxu0 0
      %326 = vmatprep.subr.bf16.mxu0 0
      %327 = vmatpush2.bf16.msra.mxu0 0
      %328 = vmatprep.subr.bf16.mxu0 0
      %329 = vmatpush2.bf16.msra.mxu0 0
      %330 = vmatprep.subr.bf16.mxu0 0
      %331 = vmatpush2.bf16.msra.mxu0 0
      %332 = vmatprep.subr.bf16.mxu0 0
      %333 = vmatpush2.bf16.msra.mxu0 0
      %334 = vmatprep.subr.bf16.mxu0 0
      %335 = vmatpush2.bf16.msra.mxu0 0
      %336 = vmatprep.mubr.bf16.mxu0 0
      %337 = vmatmul.mubr.bf16.gmra.mxu0 %v238
      %v338 = vpop.f32.mrf.mxu0
      %v339 = vadd.f32 0.0, %v338
      %v340 = vpop.f32.mrf.mxu0
      %v341 = vpop.f32.mrf.mxu0
      %v342 = vpop.f32.mrf.mxu0
      %343 = vdwg.mxu0
      %v345 = vlaneseq
      %v346 = vshrl.u32 %v345, 7
      %v347 = vsub.s32 0, %v346
      %v348 = vrot.slane %v237, %v347
      %v350 = vadd.f32 %v348, %v339
      %s351 = scalar_lea.vmem %s1, 64
      %v352 = vld [vmem:[%s351] sm:$0xf]
      %v353 = vld [vmem:[%s351 + $0x4] sm:$0xf]
      %v354 = vld [vmem:[%s351 + $0x8] sm:$0xf]
      %v355 = vld [vmem:[%s351 + $0xc] sm:$0xf]
      %v356 = vld [vmem:[%s351 + $0x10] sm:$0xf]
      %v357 = vld [vmem:[%s351 + $0x14] sm:$0xf]
      %v358 = vld [vmem:[%s351 + $0x18] sm:$0xf]
      %v359 = vld [vmem:[%s351 + $0x1c] sm:$0xf]
      %v360 = vld [vmem:[%s351 + $0x20] sm:$0xf]
      %v361 = vld [vmem:[%s351 + $0x24] sm:$0xf]
      %v362 = vld [vmem:[%s351 + $0x28] sm:$0xf]
      %v363 = vld [vmem:[%s351 + $0x2c] sm:$0xf]
      %v364 = vld [vmem:[%s351 + $0x30] sm:$0xf]
      %v365 = vld [vmem:[%s351 + $0x34] sm:$0xf]
      %v366 = vld [vmem:[%s351 + $0x38] sm:$0xf]
      %v367 = vld [vmem:[%s351 + $0x3c] sm:$0xf]
      %v369 = vshrl.u32 %v239, 16
      %v371 = vshll.u32 %v239, 16
      %v373 = vrot.slane %v371, 1
      %v374 = vor.u32 %v369, %v373
      %v392 = vunpack.c.l.b16 %v352
      %v393 = vunpack.c.l.b16 %v353
      %v394 = vunpack.c.l.b16 %v354
      %v395 = vunpack.c.l.b16 %v355
      %v396 = vunpack.c.l.b16 %v356
      %v397 = vunpack.c.l.b16 %v357
      %v398 = vunpack.c.l.b16 %v358
      %v399 = vunpack.c.l.b16 %v359
      %v400 = vunpack.c.l.b16 %v360
      %v401 = vunpack.c.l.b16 %v361
      %v402 = vunpack.c.l.b16 %v362
      %v403 = vunpack.c.l.b16 %v363
      %v404 = vunpack.c.l.b16 %v364
      %v405 = vunpack.c.l.b16 %v365
      %v406 = vunpack.c.l.b16 %v366
      %v407 = vunpack.c.l.b16 %v367
      %v408 = vpack.c.b16 %v393, %v392
      %v409 = vpack.c.b16 %v395, %v394
      %v410 = vpack.c.b16 %v397, %v396
      %v411 = vpack.c.b16 %v399, %v398
      %v412 = vpack.c.b16 %v401, %v400
      %v413 = vpack.c.b16 %v403, %v402
      %v414 = vpack.c.b16 %v405, %v404
      %v415 = vpack.c.b16 %v407, %v406
      %424 = vmatprep.subr.bf16.mxu0 0
      %425 = vmatpush1.bf16.msra.mxu0 %v415
      %426 = vmatprep.subr.bf16.mxu0 0
      %427 = vmatpush1.bf16.msra.mxu0 %v414
      %428 = vmatprep.subr.bf16.mxu0 0
      %429 = vmatpush1.bf16.msra.mxu0 %v413
      %430 = vmatprep.subr.bf16.mxu0 0
      %431 = vmatpush1.bf16.msra.mxu0 %v412
      %432 = vmatprep.subr.bf16.mxu0 0
      %433 = vmatpush1.bf16.msra.mxu0 %v411
      %434 = vmatprep.subr.bf16.mxu0 0
      %435 = vmatpush1.bf16.msra.mxu0 %v410
      %436 = vmatprep.subr.bf16.mxu0 0
      %437 = vmatpush1.bf16.msra.mxu0 %v409
      %438 = vmatprep.subr.bf16.mxu0 0
      %439 = vmatpush1.bf16.msra.mxu0 %v408
      %440 = vmatprep.subr.bf16.mxu0 0
      %441 = vmatpush2.bf16.msra.mxu0 0
      %442 = vmatprep.subr.bf16.mxu0 0
      %443 = vmatpush2.bf16.msra.mxu0 0
      %444 = vmatprep.subr.bf16.mxu0 0
      %445 = vmatpush2.bf16.msra.mxu0 0
      %446 = vmatprep.subr.bf16.mxu0 0
      %447 = vmatpush2.bf16.msra.mxu0 0
      %448 = vmatprep.subr.bf16.mxu0 0
      %449 = vmatpush2.bf16.msra.mxu0 0
      %450 = vmatprep.subr.bf16.mxu0 0
      %451 = vmatpush2.bf16.msra.mxu0 0
      %452 = vmatprep.subr.bf16.mxu0 0
      %453 = vmatpush2.bf16.msra.mxu0 0
      %454 = vmatprep.subr.bf16.mxu0 0
      %455 = vmatpush2.bf16.msra.mxu0 0
      %456 = vmatprep.mubr.bf16.mxu0 0
      %457 = vmatmul.mubr.bf16.gmra.mxu0 %v374
      %v458 = vpop.f32.mrf.mxu0
      %v459 = vadd.f32 0.0, %v458
      %v460 = vpop.f32.mrf.mxu0
      %v461 = vpop.f32.mrf.mxu0
      %v462 = vpop.f32.mrf.mxu0
      %463 = vdwg.mxu0
      %v464 = vadd.f32 %v350, %v459
      %v465 = vld [vmem:[%s2] sm:$0xf]
      %v466 = vld [vmem:[%s2 + $0x4] sm:$0xf]
      %v467 = vld [vmem:[%s2 + $0x8] sm:$0xf]
      %v468 = vld [vmem:[%s2 + $0xc] sm:$0xf]
      %v469 = vld [vmem:[%s2 + $0x10] sm:$0xf]
      %v470 = vld [vmem:[%s2 + $0x14] sm:$0xf]
      %v471 = vld [vmem:[%s2 + $0x18] sm:$0xf]
      %v472 = vld [vmem:[%s2 + $0x1c] sm:$0xf]
      %v473 = vld [vmem:[%s2 + $0x20] sm:$0xf]
      %v474 = vld [vmem:[%s2 + $0x24] sm:$0xf]
      %v475 = vld [vmem:[%s2 + $0x28] sm:$0xf]
      %v476 = vld [vmem:[%s2 + $0x2c] sm:$0xf]
      %v477 = vld [vmem:[%s2 + $0x30] sm:$0xf]
      %v478 = vld [vmem:[%s2 + $0x34] sm:$0xf]
      %v479 = vld [vmem:[%s2 + $0x38] sm:$0xf]
      %v480 = vld [vmem:[%s2 + $0x3c] sm:$0xf]
      %v497 = vunpack.c.l.b16 %v465
      %v498 = vunpack.c.l.b16 %v466
      %v499 = vunpack.c.l.b16 %v467
      %v500 = vunpack.c.l.b16 %v468
      %v501 = vunpack.c.l.b16 %v469
      %v502 = vunpack.c.l.b16 %v470
      %v503 = vunpack.c.l.b16 %v471
      %v504 = vunpack.c.l.b16 %v472
      %v505 = vunpack.c.l.b16 %v473
      %v506 = vunpack.c.l.b16 %v474
      %v507 = vunpack.c.l.b16 %v475
      %v508 = vunpack.c.l.b16 %v476
      %v509 = vunpack.c.l.b16 %v477
      %v510 = vunpack.c.l.b16 %v478
      %v511 = vunpack.c.l.b16 %v479
      %v512 = vunpack.c.l.b16 %v480
      %v513 = vpack.c.b16 %v498, %v497
      %v514 = vpack.c.b16 %v500, %v499
      %v515 = vpack.c.b16 %v502, %v501
      %v516 = vpack.c.b16 %v504, %v503
      %v517 = vpack.c.b16 %v506, %v505
      %v518 = vpack.c.b16 %v508, %v507
      %v519 = vpack.c.b16 %v510, %v509
      %v520 = vpack.c.b16 %v512, %v511
      %529 = vmatprep.subr.bf16.mxu0 0
      %530 = vmatpush1.bf16.msra.mxu0 %v520
      %531 = vmatprep.subr.bf16.mxu0 0
      %532 = vmatpush1.bf16.msra.mxu0 %v519
      %533 = vmatprep.subr.bf16.mxu0 0
      %534 = vmatpush1.bf16.msra.mxu0 %v518
      %535 = vmatprep.subr.bf16.mxu0 0
      %536 = vmatpush1.bf16.msra.mxu0 %v517
      %537 = vmatprep.subr.bf16.mxu0 0
      %538 = vmatpush1.bf16.msra.mxu0 %v516
      %539 = vmatprep.subr.bf16.mxu0 0
      %540 = vmatpush1.bf16.msra.mxu0 %v515
      %541 = vmatprep.subr.bf16.mxu0 0
      %542 = vmatpush1.bf16.msra.mxu0 %v514
      %543 = vmatprep.subr.bf16.mxu0 0
      %544 = vmatpush1.bf16.msra.mxu0 %v513
      %545 = vmatprep.subr.bf16.mxu0 0
      %546 = vmatpush2.bf16.msra.mxu0 0
      %547 = vmatprep.subr.bf16.mxu0 0
      %548 = vmatpush2.bf16.msra.mxu0 0
      %549 = vmatprep.subr.bf16.mxu0 0
      %550 = vmatpush2.bf16.msra.mxu0 0
      %551 = vmatprep.subr.bf16.mxu0 0
      %552 = vmatpush2.bf16.msra.mxu0 0
      %553 = vmatprep.subr.bf16.mxu0 0
      %554 = vmatpush2.bf16.msra.mxu0 0
      %555 = vmatprep.subr.bf16.mxu0 0
      %556 = vmatpush2.bf16.msra.mxu0 0
      %557 = vmatprep.subr.bf16.mxu0 0
      %558 = vmatpush2.bf16.msra.mxu0 0
      %559 = vmatprep.subr.bf16.mxu0 0
      %560 = vmatpush2.bf16.msra.mxu0 0
      %561 = vmatprep.mubr.bf16.mxu0 0
      %562 = vmatmul.mubr.bf16.gmra.mxu0 %v374
      %v563 = vpop.f32.mrf.mxu0
      %v564 = vadd.f32 0.0, %v563
      %v565 = vpop.f32.mrf.mxu0
      %v566 = vpop.f32.mrf.mxu0
      %v567 = vpop.f32.mrf.mxu0
      %568 = vdwg.mxu0
      %v569 = vadd.f32 %v348, %v564
      %s570 = scalar_lea.vmem %s2, 64
      %v571 = vld [vmem:[%s570] sm:$0xf]
      %v572 = vld [vmem:[%s570 + $0x4] sm:$0xf]
      %v573 = vld [vmem:[%s570 + $0x8] sm:$0xf]
      %v574 = vld [vmem:[%s570 + $0xc] sm:$0xf]
      %v575 = vld [vmem:[%s570 + $0x10] sm:$0xf]
      %v576 = vld [vmem:[%s570 + $0x14] sm:$0xf]
      %v577 = vld [vmem:[%s570 + $0x18] sm:$0xf]
      %v578 = vld [vmem:[%s570 + $0x1c] sm:$0xf]
      %v579 = vld [vmem:[%s570 + $0x20] sm:$0xf]
      %v580 = vld [vmem:[%s570 + $0x24] sm:$0xf]
      %v581 = vld [vmem:[%s570 + $0x28] sm:$0xf]
      %v582 = vld [vmem:[%s570 + $0x2c] sm:$0xf]
      %v583 = vld [vmem:[%s570 + $0x30] sm:$0xf]
      %v584 = vld [vmem:[%s570 + $0x34] sm:$0xf]
      %v585 = vld [vmem:[%s570 + $0x38] sm:$0xf]
      %v586 = vld [vmem:[%s570 + $0x3c] sm:$0xf]
      %v588 = vrot.slane %v239, 1
      %v606 = vunpack.c.l.b16 %v571
      %v607 = vunpack.c.l.b16 %v572
      %v608 = vunpack.c.l.b16 %v573
      %v609 = vunpack.c.l.b16 %v574
      %v610 = vunpack.c.l.b16 %v575
      %v611 = vunpack.c.l.b16 %v576
      %v612 = vunpack.c.l.b16 %v577
      %v613 = vunpack.c.l.b16 %v578
      %v614 = vunpack.c.l.b16 %v579
      %v615 = vunpack.c.l.b16 %v580
      %v616 = vunpack.c.l.b16 %v581
      %v617 = vunpack.c.l.b16 %v582
      %v618 = vunpack.c.l.b16 %v583
      %v619 = vunpack.c.l.b16 %v584
      %v620 = vunpack.c.l.b16 %v585
      %v621 = vunpack.c.l.b16 %v586
      %v622 = vpack.c.b16 %v607, %v606
      %v623 = vpack.c.b16 %v609, %v608
      %v624 = vpack.c.b16 %v611, %v610
      %v625 = vpack.c.b16 %v613, %v612
      %v626 = vpack.c.b16 %v615, %v614
      %v627 = vpack.c.b16 %v617, %v616
      %v628 = vpack.c.b16 %v619, %v618
      %v629 = vpack.c.b16 %v621, %v620
      %638 = vmatprep.subr.bf16.mxu0 0
      %639 = vmatpush1.bf16.msra.mxu0 %v629
      %640 = vmatprep.subr.bf16.mxu0 0
      %641 = vmatpush1.bf16.msra.mxu0 %v628
      %642 = vmatprep.subr.bf16.mxu0 0
      %643 = vmatpush1.bf16.msra.mxu0 %v627
      %644 = vmatprep.subr.bf16.mxu0 0
      %645 = vmatpush1.bf16.msra.mxu0 %v626
      %646 = vmatprep.subr.bf16.mxu0 0
      %647 = vmatpush1.bf16.msra.mxu0 %v625
      %648 = vmatprep.subr.bf16.mxu0 0
      %649 = vmatpush1.bf16.msra.mxu0 %v624
      %650 = vmatprep.subr.bf16.mxu0 0
      %651 = vmatpush1.bf16.msra.mxu0 %v623
      %652 = vmatprep.subr.bf16.mxu0 0
      %653 = vmatpush1.bf16.msra.mxu0 %v622
      %654 = vmatprep.subr.bf16.mxu0 0
      %655 = vmatpush2.bf16.msra.mxu0 0
      %656 = vmatprep.subr.bf16.mxu0 0
      %657 = vmatpush2.bf16.msra.mxu0 0
      %658 = vmatprep.subr.bf16.mxu0 0
      %659 = vmatpush2.bf16.msra.mxu0 0
      %660 = vmatprep.subr.bf16.mxu0 0
      %661 = vmatpush2.bf16.msra.mxu0 0
      %662 = vmatprep.subr.bf16.mxu0 0
      %663 = vmatpush2.bf16.msra.mxu0 0
      %664 = vmatprep.subr.bf16.mxu0 0
      %665 = vmatpush2.bf16.msra.mxu0 0
      %666 = vmatprep.subr.bf16.mxu0 0
      %667 = vmatpush2.bf16.msra.mxu0 0
      %668 = vmatprep.subr.bf16.mxu0 0
      %669 = vmatpush2.bf16.msra.mxu0 0
      %670 = vmatprep.mubr.bf16.mxu0 0
      %671 = vmatmul.mubr.bf16.gmra.mxu0 %v588
      %v672 = vpop.f32.mrf.mxu0
      %v673 = vadd.f32 0.0, %v672
      %v674 = vpop.f32.mrf.mxu0
      %v675 = vpop.f32.mrf.mxu0
      %v676 = vpop.f32.mrf.mxu0
      %677 = vdwg.mxu0
      %v678 = vadd.f32 %v569, %v673
      %679 = vst [vmem:[%s229] sm:$0xff] %v464
      %680 = vst [vmem:[%s233] sm:$0xff] %v678
      %p681 = scmp.lt.s32.totalorder %s17, 1
      %s682 = scalar_select %p681, %s17, 1
      %s683 = smul.addr %s682, 8
      %s684 = scalar_lea.vmem %s4, %s683
      %p685 = scmp.lt.s32.totalorder %s17, 1
      %s686 = scalar_select %p685, %s17, 1
      %s687 = smul.addr %s686, 8
      %s688 = scalar_lea.vmem %s5, %s687
      // Predicated region
      $region37: #{spatial_transformer_human_vqvae_forward.30} parent=35 // pred_check
        %p689 = pneg %p124
      $region38: #{spatial_transformer_human_vqvae_forward.30} parent=35 // pred_check_branch
        %691 = sbr.rel (%p689) target = $region40
      $region39: #{spatial_transformer_human_vqvae_forward.30} parent=35 // pred_region
        _
      $region40: #{spatial_transformer_human_vqvae_forward.30} parent=35 // pred_fallthru
        _
      // Predicated region
      $region41: #{spatial_transformer_human_vqvae_forward.30} parent=35 // pred_check
        %p692 = pneg %p150
      $region42: #{spatial_transformer_human_vqvae_forward.30} parent=35 // pred_check_branch
        %694 = sbr.rel (%p692) target = $region44
      $region43: #{spatial_transformer_human_vqvae_forward.30} parent=35 // pred_region
        _
      $region44: #{spatial_transformer_human_vqvae_forward.30} parent=35 // pred_fallthru
        _
    $region36: #{spatial_transformer_human_vqvae_forward.30} parent=5 // pred_fallthru
      _
    %p695 = scmp.le.s32.totalorder 2, %s12
    // Predicated region
    $region45: #{spatial_transformer_human_vqvae_forward.30} parent=5 // pred_check
      %p696 = pneg %p695
    $region46: #{spatial_transformer_human_vqvae_forward.30} parent=5 // pred_check_branch
      %698 = sbr.rel (%p696) target = $region48
    $region47: #{spatial_transformer_human_vqvae_forward.30} parent=5 // pred_region
      %s699 = ssub.s32 %s12, 2
      // Predicated region
      $region49: #{spatial_transformer_human_vqvae_forward.30} parent=47 // pred_check
        %p700 = pneg %p130
      $region50: #{spatial_transformer_human_vqvae_forward.30} parent=47 // pred_check_branch
        %702 = sbr.rel (%p700) target = $region52
      $region51: #{spatial_transformer_human_vqvae_forward.30} parent=47 // pred_region
        %p703 = scmp.lt.s32.totalorder %s18, 1
        %s704 = scalar_select %p703, %s18, 1
        %s705 = smul.addr %s704, 8
        %s706 = scalar_lea.vmem %s4, %s705
      $region52: #{spatial_transformer_human_vqvae_forward.30} parent=47 // pred_fallthru
        _
      // Predicated region
      $region53: #{spatial_transformer_human_vqvae_forward.30} parent=47 // pred_check
        %p707 = pneg %p156
      $region54: #{spatial_transformer_human_vqvae_forward.30} parent=47 // pred_check_branch
        %709 = sbr.rel (%p707) target = $region56
      $region55: #{spatial_transformer_human_vqvae_forward.30} parent=47 // pred_region
        %p710 = scmp.lt.s32.totalorder %s18, 1
        %s711 = scalar_select %p710, %s18, 1
        %s712 = smul.addr %s711, 8
        %s713 = scalar_lea.vmem %s5, %s712
      $region56: #{spatial_transformer_human_vqvae_forward.30} parent=47 // pred_fallthru
        _
    $region48: #{spatial_transformer_human_vqvae_forward.30} parent=5 // pred_fallthru
      _
  $region6: #{spatial_transformer_human_vqvae_forward.30} parent=0 // loop_footer
    %s16 = sadd.s32 1, %s12
  $region7: #{spatial_transformer_human_vqvae_forward.30} parent=0 // loop_footer_branch
    %11 = sbr.rel target = $region3
  $region8: #{spatial_transformer_human_vqvae_forward.30} parent=0 // loop_exit
    _

// kernel: spatial_transformer_human_vqvae_forward.33
$region0: #{spatial_transformer_human_vqvae_forward.33}
  #allocation0 [shape = 'u32[]', space=smem, size = 0x4, offset = 0x4, fixed_abs, tag = 'smem constant byte address 0x4 - core index']
  #allocation1 [shape = 'u32[144,128]{1,0:T(1,128)}', space=vmem, size = 0x12000, scoped, tag = 'internal scratch']
  %s0 = inlined_call_operand.vmem [shape: f32[2,18,128], index: 0, kind: input, shape index: {}]
  %s1 = inlined_call_operand.vmem [shape: bf16[2,128,128], index: 1, kind: input, shape index: {}]
  %s2 = inlined_call_operand.vmem [shape: bf16[2,128,128], index: 2, kind: input, shape index: {}]
  %s3 = inlined_call_operand.vmem [shape: f32[1,128], index: 3, kind: input, shape index: {}]
  %s4 = inlined_call_operand.vmem [shape: f32[2,16,128], index: 4, kind: output, shape index: {0}]
  %s5 = inlined_call_operand.vmem [shape: f32[2,16,128], index: 5, kind: output, shape index: {1}]
  %6 = xla_tuple %s4, %s5
  %s7 = sld [smem:[#allocation0]]
  $region57: #{spatial_transformer_human_vqvae_forward.33} parent=0
    _
  %s9 = ssub.s32 1, %s7
  %s10 = scalar_select 0, %s9, %s7
  loop: start=0, step=1, limit=4
  $region2: #{spatial_transformer_human_vqvae_forward.33} parent=0 // loop_pre_header
    _
  $region3: #{spatial_transformer_human_vqvae_forward.33} parent=0 // loop_header
    %s12 = sphi 0, %s16
    %p13 = scmp.ge.s32.totalorder %s12, 4
    %s22 = sphi 0, %s24
    %s25 = sphi 0, %s22
    %s26 = sphi 0, %s25
    %s42 = sphi 0, %s26
    %s46 = sphi 0, %s46
    %s48 = sphi 0, %s46
    %s49 = sphi 0, %s48
    %s63 = sphi 0, %s49
    %s67 = sphi 0, %s67
    %s69 = sphi 0, %s67
    %s70 = sphi 0, %s69
    %s84 = sphi 0, %s70
    %s88 = sphi 0, %s88
    %s90 = sphi 0, %s88
    %s91 = sphi 0, %s90
    %s105 = sphi 0, %s91
    %s111 = sphi 0, %s113
    %s114 = sphi 0, %s111
    %s115 = sphi 0, %s114
    %s131 = sphi 0, %s115
    %s137 = sphi 0, %s139
    %s140 = sphi 0, %s137
    %s141 = sphi 0, %s140
    %s157 = sphi 0, %s141
  $region4: #{spatial_transformer_human_vqvae_forward.33} parent=0 // loop_header_branch
    %15 = sbr.rel (%p13) target = $region8
  $region5: #{spatial_transformer_human_vqvae_forward.33} parent=0 // loop_body
    %s17 = ssub.s32 %s12, 1
    %s18 = ssub.s32 %s12, 2
    %s19 = sadd.s32 %s12, 1
    %s20 = ssub.s32 %s12, %s19
    %p21 = scmp.eq.s32.totalorder %s20, 0
    %s23 = sadd.s32 %s22, 1
    %s24 = scalar_select %p21, %s22, %s23
    %p27 = pneg %p21
    %p28 = scmp.eq.s32.totalorder %s12, 1
    %p29 = por %p27, %p28
    %p30 = scmp.ne.s32.totalorder %s22, %s25
    %p31 = scmp.eq.s32.totalorder %s12, 0
    %p32 = por %p30, %p31
    %p33 = scmp.ne.s32.totalorder %s22, %s25
    %p34 = scmp.eq.s32.totalorder %s17, 1
    %p35 = por %p33, %p34
    %p36 = scmp.ne.s32.totalorder %s25, %s26
    %p37 = scmp.eq.s32.totalorder %s17, 0
    %p38 = por %p36, %p37
    %p39 = scmp.ne.s32.totalorder %s25, %s26
    %p40 = scmp.eq.s32.totalorder %s18, 1
    %p41 = por %p39, %p40
    %p43 = scmp.ne.s32.totalorder %s26, %s42
    %p44 = scmp.eq.s32.totalorder %s18, 0
    %p45 = por %p43, %p44
    %s47 = sadd.s32 %s46, 1
    %p50 = scmp.eq.s32.totalorder %s12, 1
    %p51 = scmp.ne.s32.totalorder %s46, %s48
    %p52 = scmp.eq.s32.totalorder %s12, 0
    %p53 = por %p51, %p52
    %p54 = scmp.ne.s32.totalorder %s46, %s48
    %p55 = scmp.eq.s32.totalorder %s17, 1
    %p56 = por %p54, %p55
    %p57 = scmp.ne.s32.totalorder %s48, %s49
    %p58 = scmp.eq.s32.totalorder %s17, 0
    %p59 = por %p57, %p58
    %p60 = scmp.ne.s32.totalorder %s48, %s49
    %p61 = scmp.eq.s32.totalorder %s18, 1
    %p62 = por %p60, %p61
    %p64 = scmp.ne.s32.totalorder %s49, %s63
    %p65 = scmp.eq.s32.totalorder %s18, 0
    %p66 = por %p64, %p65
    %s68 = sadd.s32 %s67, 1
    %p71 = scmp.eq.s32.totalorder %s12, 1
    %p72 = scmp.ne.s32.totalorder %s67, %s69
    %p73 = scmp.eq.s32.totalorder %s12, 0
    %p74 = por %p72, %p73
    %p75 = scmp.ne.s32.totalorder %s67, %s69
    %p76 = scmp.eq.s32.totalorder %s17, 1
    %p77 = por %p75, %p76
    %p78 = scmp.ne.s32.totalorder %s69, %s70
    %p79 = scmp.eq.s32.totalorder %s17, 0
    %p80 = por %p78, %p79
    %p81 = scmp.ne.s32.totalorder %s69, %s70
    %p82 = scmp.eq.s32.totalorder %s18, 1
    %p83 = por %p81, %p82
    %p85 = scmp.ne.s32.totalorder %s70, %s84
    %p86 = scmp.eq.s32.totalorder %s18, 0
    %p87 = por %p85, %p86
    %s89 = sadd.s32 %s88, 1
    %p92 = scmp.eq.s32.totalorder %s12, 1
    %p93 = scmp.ne.s32.totalorder %s88, %s90
    %p94 = scmp.eq.s32.totalorder %s12, 0
    %p95 = por %p93, %p94
    %p96 = scmp.ne.s32.totalorder %s88, %s90
    %p97 = scmp.eq.s32.totalorder %s17, 1
    %p98 = por %p96, %p97
    %p99 = scmp.ne.s32.totalorder %s90, %s91
    %p100 = scmp.eq.s32.totalorder %s17, 0
    %p101 = por %p99, %p100
    %p102 = scmp.ne.s32.totalorder %s90, %s91
    %p103 = scmp.eq.s32.totalorder %s18, 1
    %p104 = por %p102, %p103
    %p106 = scmp.ne.s32.totalorder %s91, %s105
    %p107 = scmp.eq.s32.totalorder %s18, 0
    %p108 = por %p106, %p107
    %s109 = ssub.s32 %s12, %s19
    %p110 = scmp.eq.s32.totalorder %s109, 0
    %s112 = sadd.s32 %s111, 1
    %s113 = scalar_select %p110, %s111, %s112
    %p116 = pneg %p110
    %p117 = scmp.eq.s32.totalorder %s12, 1
    %p118 = por %p116, %p117
    %p119 = scmp.ne.s32.totalorder %s111, %s114
    %p120 = scmp.eq.s32.totalorder %s12, 0
    %p121 = por %p119, %p120
    %p122 = scmp.ne.s32.totalorder %s111, %s114
    %p123 = scmp.eq.s32.totalorder %s17, 1
    %p124 = por %p122, %p123
    %p125 = scmp.ne.s32.totalorder %s114, %s115
    %p126 = scmp.eq.s32.totalorder %s17, 0
    %p127 = por %p125, %p126
    %p128 = scmp.ne.s32.totalorder %s114, %s115
    %p129 = scmp.eq.s32.totalorder %s18, 1
    %p130 = por %p128, %p129
    %p132 = scmp.ne.s32.totalorder %s115, %s131
    %p133 = scmp.eq.s32.totalorder %s18, 0
    %p134 = por %p132, %p133
    %s135 = ssub.s32 %s12, %s19
    %p136 = scmp.eq.s32.totalorder %s135, 0
    %s138 = sadd.s32 %s137, 1
    %s139 = scalar_select %p136, %s137, %s138
    %p142 = pneg %p136
    %p143 = scmp.eq.s32.totalorder %s12, 1
    %p144 = por %p142, %p143
    %p145 = scmp.ne.s32.totalorder %s137, %s140
    %p146 = scmp.eq.s32.totalorder %s12, 0
    %p147 = por %p145, %p146
    %p148 = scmp.ne.s32.totalorder %s137, %s140
    %p149 = scmp.eq.s32.totalorder %s17, 1
    %p150 = por %p148, %p149
    %p151 = scmp.ne.s32.totalorder %s140, %s141
    %p152 = scmp.eq.s32.totalorder %s17, 0
    %p153 = por %p151, %p152
    %p154 = scmp.ne.s32.totalorder %s140, %s141
    %p155 = scmp.eq.s32.totalorder %s18, 1
    %p156 = por %p154, %p155
    %p158 = scmp.ne.s32.totalorder %s141, %s157
    %p159 = scmp.eq.s32.totalorder %s18, 0
    %p160 = por %p158, %p159
    %p161 = scmp.le.s32.totalorder 1, %s12
    %p162 = scmp.lt.s32.totalorder %s12, 3
    %p163 = pnand %p161, %p162
    %p164 = pneg %p163
    // Predicated region
    $region9: #{spatial_transformer_human_vqvae_forward.33} parent=5 // pred_check
      _
    $region10: #{spatial_transformer_human_vqvae_forward.33} parent=5 // pred_check_branch
      %166 = sbr.rel (%p163) target = $region12
    $region11: #{spatial_transformer_human_vqvae_forward.33} parent=5 // pred_region
      %s167 = ssub.s32 %s12, 1
      // Predicated region
      $region13: #{spatial_transformer_human_vqvae_forward.33} parent=11 // pred_check
        %p168 = pneg %p59
      $region14: #{spatial_transformer_human_vqvae_forward.33} parent=11 // pred_check_branch
        %170 = sbr.rel (%p168) target = $region16
      $region15: #{spatial_transformer_human_vqvae_forward.33} parent=11 // pred_region
        _
      $region16: #{spatial_transformer_human_vqvae_forward.33} parent=11 // pred_fallthru
        _
      // Predicated region
      $region17: #{spatial_transformer_human_vqvae_forward.33} parent=11 // pred_check
        %p171 = pneg %p80
      $region18: #{spatial_transformer_human_vqvae_forward.33} parent=11 // pred_check_branch
        %173 = sbr.rel (%p171) target = $region20
      $region19: #{spatial_transformer_human_vqvae_forward.33} parent=11 // pred_region
        _
      $region20: #{spatial_transformer_human_vqvae_forward.33} parent=11 // pred_fallthru
        _
      // Predicated region
      $region21: #{spatial_transformer_human_vqvae_forward.33} parent=11 // pred_check
        %p174 = pneg %p101
      $region22: #{spatial_transformer_human_vqvae_forward.33} parent=11 // pred_check_branch
        %176 = sbr.rel (%p174) target = $region24
      $region23: #{spatial_transformer_human_vqvae_forward.33} parent=11 // pred_region
        _
      $region24: #{spatial_transformer_human_vqvae_forward.33} parent=11 // pred_fallthru
        _
    $region12: #{spatial_transformer_human_vqvae_forward.33} parent=5 // pred_fallthru
      _
    %p177 = scmp.lt.s32.totalorder %s12, 2
    // Predicated region
    $region25: #{spatial_transformer_human_vqvae_forward.33} parent=5 // pred_check
      %p178 = pneg %p177
    $region26: #{spatial_transformer_human_vqvae_forward.33} parent=5 // pred_check_branch
      %180 = sbr.rel (%p178) target = $region28
    $region27: #{spatial_transformer_human_vqvae_forward.33} parent=5 // pred_region
      // Predicated region
      $region29: #{spatial_transformer_human_vqvae_forward.33} parent=27 // pred_check
        %p181 = pneg %p32
      $region30: #{spatial_transformer_human_vqvae_forward.33} parent=27 // pred_check_branch
        %183 = sbr.rel (%p181) target = $region32
      $region31: #{spatial_transformer_human_vqvae_forward.33} parent=27 // pred_region
        %p184 = scmp.lt.s32.totalorder %s12, 1
        %s185 = scalar_select %p184, %s12, 1
        %s186 = smul.addr %s185, 3
        %s187 = smul.addr %s186, 8
        %s188 = scalar_lea.vmem %s0, %s187
      $region32: #{spatial_transformer_human_vqvae_forward.33} parent=27 // pred_fallthru
        _
    $region28: #{spatial_transformer_human_vqvae_forward.33} parent=5 // pred_fallthru
      _
    %p189 = scmp.le.s32.totalorder 1, %s12
    %p190 = scmp.lt.s32.totalorder %s12, 3
    %p191 = pnand %p189, %p190
    %p192 = pneg %p191
    // Predicated region
    $region33: #{spatial_transformer_human_vqvae_forward.33} parent=5 // pred_check
      _
    $region34: #{spatial_transformer_human_vqvae_forward.33} parent=5 // pred_check_branch
      %194 = sbr.rel (%p191) target = $region36
    $region35: #{spatial_transformer_human_vqvae_forward.33} parent=5 // pred_region
      %s195 = ssub.s32 %s12, 1
      %p196 = scmp.lt.s32.totalorder %s17, 1
      %s197 = scalar_select %p196, %s17, 1
      %s198 = smul.addr %s197, 3
      %s199 = smul.addr %s198, 8
      %s200 = scalar_lea.vmem %s0, %s199
      %p201 = pneg %p38
      %p202 = pneg %p35
      %p203 = pneg %p59
      %p204 = pneg %p56
      %p205 = pneg %p80
      %p206 = pneg %p77
      %p207 = pneg %p101
      %p208 = pneg %p98
      %p209 = pneg %p127
      %p210 = pneg %p124
      %p211 = scmp.lt.s32.totalorder %s17, 1
      %s212 = scalar_select %p211, %s17, 1
      %s213 = smul.addr %s212, 2
      %s214 = smul.addr %s213, 8
      %s215 = scalar_lea.vmem %s4, %s214
      %p216 = pneg %p153
      %p217 = pneg %p150
      %p218 = scmp.lt.s32.totalorder %s17, 1
      %s219 = scalar_select %p218, %s17, 1
      %s220 = smul.addr %s219, 2
      %s221 = smul.addr %s220, 8
      %s222 = scalar_lea.vmem %s5, %s221
      %p223 = scmp.lt.s32.totalorder %s17, 1
      %s224 = scalar_select %p223, %s17, 1
      %s225 = smul.addr %s224, 3
      %s226 = smul.addr %s225, 8
      %s227 = scalar_lea.vmem %s0, %s226
      %p228 = scmp.lt.s32.totalorder %s17, 1
      %s229 = scalar_select %p228, %s17, 1
      %s230 = smul.addr %s229, 2
      %s231 = smul.addr %s230, 8
      %s232 = scalar_lea.vmem %s4, %s231
      %p233 = scmp.lt.s32.totalorder %s17, 1
      %s234 = scalar_select %p233, %s17, 1
      %s235 = smul.addr %s234, 2
      %s236 = smul.addr %s235, 8
      %s237 = scalar_lea.vmem %s5, %s236
      %v239 = vld [vmem:[%s227] sm:$0xff]
      %v240 = vld [vmem:[%s227 + $0x8] sm:$0xff]
      %v241 = vld [vmem:[%s227 + $0x10] sm:$0x3]
      %v242 = vld [vmem:[%s3] sm:$0x1]
      %v243 = vpack.c.bf16 %v240, %v239
      %v244 = vpack.c.bf16 %v241, %v241
      %v245 = vld [vmem:[%s1] sm:$0xf]
      %v246 = vld [vmem:[%s1 + $0x4] sm:$0xf]
      %v247 = vld [vmem:[%s1 + $0x8] sm:$0xf]
      %v248 = vld [vmem:[%s1 + $0xc] sm:$0xf]
      %v249 = vld [vmem:[%s1 + $0x10] sm:$0xf]
      %v250 = vld [vmem:[%s1 + $0x14] sm:$0xf]
      %v251 = vld [vmem:[%s1 + $0x18] sm:$0xf]
      %v252 = vld [vmem:[%s1 + $0x1c] sm:$0xf]
      %v253 = vld [vmem:[%s1 + $0x20] sm:$0xf]
      %v254 = vld [vmem:[%s1 + $0x24] sm:$0xf]
      %v255 = vld [vmem:[%s1 + $0x28] sm:$0xf]
      %v256 = vld [vmem:[%s1 + $0x2c] sm:$0xf]
      %v257 = vld [vmem:[%s1 + $0x30] sm:$0xf]
      %v258 = vld [vmem:[%s1 + $0x34] sm:$0xf]
      %v259 = vld [vmem:[%s1 + $0x38] sm:$0xf]
      %v260 = vld [vmem:[%s1 + $0x3c] sm:$0xf]
      %v277 = vunpack.c.l.b16 %v245
      %v278 = vunpack.c.l.b16 %v246
      %v279 = vunpack.c.l.b16 %v247
      %v280 = vunpack.c.l.b16 %v248
      %v281 = vunpack.c.l.b16 %v249
      %v282 = vunpack.c.l.b16 %v250
      %v283 = vunpack.c.l.b16 %v251
      %v284 = vunpack.c.l.b16 %v252
      %v285 = vunpack.c.l.b16 %v253
      %v286 = vunpack.c.l.b16 %v254
      %v287 = vunpack.c.l.b16 %v255
      %v288 = vunpack.c.l.b16 %v256
      %v289 = vunpack.c.l.b16 %v257
      %v290 = vunpack.c.l.b16 %v258
      %v291 = vunpack.c.l.b16 %v259
      %v292 = vunpack.c.l.b16 %v260
      %v293 = vpack.c.b16 %v278, %v277
      %v294 = vpack.c.b16 %v280, %v279
      %v295 = vpack.c.b16 %v282, %v281
      %v296 = vpack.c.b16 %v284, %v283
      %v297 = vpack.c.b16 %v286, %v285
      %v298 = vpack.c.b16 %v288, %v287
      %v299 = vpack.c.b16 %v290, %v289
      %v300 = vpack.c.b16 %v292, %v291
      %309 = vmatprep.subr.bf16.mxu0 0
      %310 = vmatpush1.bf16.msra.mxu0 %v300
      %311 = vmatprep.subr.bf16.mxu0 0
      %312 = vmatpush1.bf16.msra.mxu0 %v299
      %313 = vmatprep.subr.bf16.mxu0 0
      %314 = vmatpush1.bf16.msra.mxu0 %v298
      %315 = vmatprep.subr.bf16.mxu0 0
      %316 = vmatpush1.bf16.msra.mxu0 %v297
      %317 = vmatprep.subr.bf16.mxu0 0
      %318 = vmatpush1.bf16.msra.mxu0 %v296
      %319 = vmatprep.subr.bf16.mxu0 0
      %320 = vmatpush1.bf16.msra.mxu0 %v295
      %321 = vmatprep.subr.bf16.mxu0 0
      %322 = vmatpush1.bf16.msra.mxu0 %v294
      %323 = vmatprep.subr.bf16.mxu0 0
      %324 = vmatpush1.bf16.msra.mxu0 %v293
      %325 = vmatprep.subr.bf16.mxu0 0
      %326 = vmatpush2.bf16.msra.mxu0 0
      %327 = vmatprep.subr.bf16.mxu0 0
      %328 = vmatpush2.bf16.msra.mxu0 0
      %329 = vmatprep.subr.bf16.mxu0 0
      %330 = vmatpush2.bf16.msra.mxu0 0
      %331 = vmatprep.subr.bf16.mxu0 0
      %332 = vmatpush2.bf16.msra.mxu0 0
      %333 = vmatprep.subr.bf16.mxu0 0
      %334 = vmatpush2.bf16.msra.mxu0 0
      %335 = vmatprep.subr.bf16.mxu0 0
      %336 = vmatpush2.bf16.msra.mxu0 0
      %337 = vmatprep.subr.bf16.mxu0 0
      %338 = vmatpush2.bf16.msra.mxu0 0
      %339 = vmatprep.subr.bf16.mxu0 0
      %340 = vmatpush2.bf16.msra.mxu0 0
      %341 = vmatprep.mubr.bf16.mxu0 0
      %342 = vmatmul.mubr.bf16.gmra.mxu0 %v243
      %v343 = vpop.f32.mrf.mxu0
      %v344 = vadd.f32 0.0, %v343
      %v345 = vpop.f32.mrf.mxu0
      %v346 = vpop.f32.mrf.mxu0
      %v347 = vadd.f32 0.0, %v346
      %v348 = vpop.f32.mrf.mxu0
      %349 = vdwg.mxu0
      %v351 = vlaneseq
      %v352 = vshrl.u32 %v351, 7
      %v353 = vsub.s32 0, %v352
      %v354 = vrot.slane %v242, %v353
      %v356 = vadd.f32 %v354, %v344
      %v357 = vadd.f32 %v354, %v347
      %s358 = scalar_lea.vmem %s1, 64
      %v359 = vld [vmem:[%s358] sm:$0xf]
      %v360 = vld [vmem:[%s358 + $0x4] sm:$0xf]
      %v361 = vld [vmem:[%s358 + $0x8] sm:$0xf]
      %v362 = vld [vmem:[%s358 + $0xc] sm:$0xf]
      %v363 = vld [vmem:[%s358 + $0x10] sm:$0xf]
      %v364 = vld [vmem:[%s358 + $0x14] sm:$0xf]
      %v365 = vld [vmem:[%s358 + $0x18] sm:$0xf]
      %v366 = vld [vmem:[%s358 + $0x1c] sm:$0xf]
      %v367 = vld [vmem:[%s358 + $0x20] sm:$0xf]
      %v368 = vld [vmem:[%s358 + $0x24] sm:$0xf]
      %v369 = vld [vmem:[%s358 + $0x28] sm:$0xf]
      %v370 = vld [vmem:[%s358 + $0x2c] sm:$0xf]
      %v371 = vld [vmem:[%s358 + $0x30] sm:$0xf]
      %v372 = vld [vmem:[%s358 + $0x34] sm:$0xf]
      %v373 = vld [vmem:[%s358 + $0x38] sm:$0xf]
      %v374 = vld [vmem:[%s358 + $0x3c] sm:$0xf]
      %vm375 = vsmask.f32 7424
      %v377 = vshrl.u32 %v243, 16
      %v379 = vshll.u32 %v243, 16
      %v381 = vrot.slane %v379, 1
      %v382 = vor.u32 %v377, %v381
      %v384 = vshll.u32 %v244, 16
      %v386 = vrot.slane %v384, 1
      %v387 = vsel %vm375, %v382, %v386
      %v405 = vunpack.c.l.b16 %v359
      %v406 = vunpack.c.l.b16 %v360
      %v407 = vunpack.c.l.b16 %v361
      %v408 = vunpack.c.l.b16 %v362
      %v409 = vunpack.c.l.b16 %v363
      %v410 = vunpack.c.l.b16 %v364
      %v411 = vunpack.c.l.b16 %v365
      %v412 = vunpack.c.l.b16 %v366
      %v413 = vunpack.c.l.b16 %v367
      %v414 = vunpack.c.l.b16 %v368
      %v415 = vunpack.c.l.b16 %v369
      %v416 = vunpack.c.l.b16 %v370
      %v417 = vunpack.c.l.b16 %v371
      %v418 = vunpack.c.l.b16 %v372
      %v419 = vunpack.c.l.b16 %v373
      %v420 = vunpack.c.l.b16 %v374
      %v421 = vpack.c.b16 %v406, %v405
      %v422 = vpack.c.b16 %v408, %v407
      %v423 = vpack.c.b16 %v410, %v409
      %v424 = vpack.c.b16 %v412, %v411
      %v425 = vpack.c.b16 %v414, %v413
      %v426 = vpack.c.b16 %v416, %v415
      %v427 = vpack.c.b16 %v418, %v417
      %v428 = vpack.c.b16 %v420, %v419
      %437 = vmatprep.subr.bf16.mxu0 0
      %438 = vmatpush1.bf16.msra.mxu0 %v428
      %439 = vmatprep.subr.bf16.mxu0 0
      %440 = vmatpush1.bf16.msra.mxu0 %v427
      %441 = vmatprep.subr.bf16.mxu0 0
      %442 = vmatpush1.bf16.msra.mxu0 %v426
      %443 = vmatprep.subr.bf16.mxu0 0
      %444 = vmatpush1.bf16.msra.mxu0 %v425
      %445 = vmatprep.subr.bf16.mxu0 0
      %446 = vmatpush1.bf16.msra.mxu0 %v424
      %447 = vmatprep.subr.bf16.mxu0 0
      %448 = vmatpush1.bf16.msra.mxu0 %v423
      %449 = vmatprep.subr.bf16.mxu0 0
      %450 = vmatpush1.bf16.msra.mxu0 %v422
      %451 = vmatprep.subr.bf16.mxu0 0
      %452 = vmatpush1.bf16.msra.mxu0 %v421
      %453 = vmatprep.subr.bf16.mxu0 0
      %454 = vmatpush2.bf16.msra.mxu0 0
      %455 = vmatprep.subr.bf16.mxu0 0
      %456 = vmatpush2.bf16.msra.mxu0 0
      %457 = vmatprep.subr.bf16.mxu0 0
      %458 = vmatpush2.bf16.msra.mxu0 0
      %459 = vmatprep.subr.bf16.mxu0 0
      %460 = vmatpush2.bf16.msra.mxu0 0
      %461 = vmatprep.subr.bf16.mxu0 0
      %462 = vmatpush2.bf16.msra.mxu0 0
      %463 = vmatprep.subr.bf16.mxu0 0
      %464 = vmatpush2.bf16.msra.mxu0 0
      %465 = vmatprep.subr.bf16.mxu0 0
      %466 = vmatpush2.bf16.msra.mxu0 0
      %467 = vmatprep.subr.bf16.mxu0 0
      %468 = vmatpush2.bf16.msra.mxu0 0
      %469 = vmatprep.mubr.bf16.mxu0 0
      %470 = vmatmul.mubr.bf16.gmra.mxu0 %v387
      %v471 = vpop.f32.mrf.mxu0
      %v472 = vadd.f32 0.0, %v471
      %v473 = vpop.f32.mrf.mxu0
      %v474 = vpop.f32.mrf.mxu0
      %v475 = vadd.f32 0.0, %v474
      %v476 = vpop.f32.mrf.mxu0
      %477 = vdwg.mxu0
      %v478 = vadd.f32 %v356, %v472
      %v479 = vadd.f32 %v357, %v475
      %v480 = vld [vmem:[%s2] sm:$0xf]
      %v481 = vld [vmem:[%s2 + $0x4] sm:$0xf]
      %v482 = vld [vmem:[%s2 + $0x8] sm:$0xf]
      %v483 = vld [vmem:[%s2 + $0xc] sm:$0xf]
      %v484 = vld [vmem:[%s2 + $0x10] sm:$0xf]
      %v485 = vld [vmem:[%s2 + $0x14] sm:$0xf]
      %v486 = vld [vmem:[%s2 + $0x18] sm:$0xf]
      %v487 = vld [vmem:[%s2 + $0x1c] sm:$0xf]
      %v488 = vld [vmem:[%s2 + $0x20] sm:$0xf]
      %v489 = vld [vmem:[%s2 + $0x24] sm:$0xf]
      %v490 = vld [vmem:[%s2 + $0x28] sm:$0xf]
      %v491 = vld [vmem:[%s2 + $0x2c] sm:$0xf]
      %v492 = vld [vmem:[%s2 + $0x30] sm:$0xf]
      %v493 = vld [vmem:[%s2 + $0x34] sm:$0xf]
      %v494 = vld [vmem:[%s2 + $0x38] sm:$0xf]
      %v495 = vld [vmem:[%s2 + $0x3c] sm:$0xf]
      %v512 = vunpack.c.l.b16 %v480
      %v513 = vunpack.c.l.b16 %v481
      %v514 = vunpack.c.l.b16 %v482
      %v515 = vunpack.c.l.b16 %v483
      %v516 = vunpack.c.l.b16 %v484
      %v517 = vunpack.c.l.b16 %v485
      %v518 = vunpack.c.l.b16 %v486
      %v519 = vunpack.c.l.b16 %v487
      %v520 = vunpack.c.l.b16 %v488
      %v521 = vunpack.c.l.b16 %v489
      %v522 = vunpack.c.l.b16 %v490
      %v523 = vunpack.c.l.b16 %v491
      %v524 = vunpack.c.l.b16 %v492
      %v525 = vunpack.c.l.b16 %v493
      %v526 = vunpack.c.l.b16 %v494
      %v527 = vunpack.c.l.b16 %v495
      %v528 = vpack.c.b16 %v513, %v512
      %v529 = vpack.c.b16 %v515, %v514
      %v530 = vpack.c.b16 %v517, %v516
      %v531 = vpack.c.b16 %v519, %v518
      %v532 = vpack.c.b16 %v521, %v520
      %v533 = vpack.c.b16 %v523, %v522
      %v534 = vpack.c.b16 %v525, %v524
      %v535 = vpack.c.b16 %v527, %v526
      %544 = vmatprep.subr.bf16.mxu0 0
      %545 = vmatpush1.bf16.msra.mxu0 %v535
      %546 = vmatprep.subr.bf16.mxu0 0
      %547 = vmatpush1.bf16.msra.mxu0 %v534
      %548 = vmatprep.subr.bf16.mxu0 0
      %549 = vmatpush1.bf16.msra.mxu0 %v533
      %550 = vmatprep.subr.bf16.mxu0 0
      %551 = vmatpush1.bf16.msra.mxu0 %v532
      %552 = vmatprep.subr.bf16.mxu0 0
      %553 = vmatpush1.bf16.msra.mxu0 %v531
      %554 = vmatprep.subr.bf16.mxu0 0
      %555 = vmatpush1.bf16.msra.mxu0 %v530
      %556 = vmatprep.subr.bf16.mxu0 0
      %557 = vmatpush1.bf16.msra.mxu0 %v529
      %558 = vmatprep.subr.bf16.mxu0 0
      %559 = vmatpush1.bf16.msra.mxu0 %v528
      %560 = vmatprep.subr.bf16.mxu0 0
      %561 = vmatpush2.bf16.msra.mxu0 0
      %562 = vmatprep.subr.bf16.mxu0 0
      %563 = vmatpush2.bf16.msra.mxu0 0
      %564 = vmatprep.subr.bf16.mxu0 0
      %565 = vmatpush2.bf16.msra.mxu0 0
      %566 = vmatprep.subr.bf16.mxu0 0
      %567 = vmatpush2.bf16.msra.mxu0 0
      %568 = vmatprep.subr.bf16.mxu0 0
      %569 = vmatpush2.bf16.msra.mxu0 0
      %570 = vmatprep.subr.bf16.mxu0 0
      %571 = vmatpush2.bf16.msra.mxu0 0
      %572 = vmatprep.subr.bf16.mxu0 0
      %573 = vmatpush2.bf16.msra.mxu0 0
      %574 = vmatprep.subr.bf16.mxu0 0
      %575 = vmatpush2.bf16.msra.mxu0 0
      %576 = vmatprep.mubr.bf16.mxu0 0
      %577 = vmatmul.mubr.bf16.gmra.mxu0 %v387
      %v578 = vpop.f32.mrf.mxu0
      %v579 = vadd.f32 0.0, %v578
      %v580 = vpop.f32.mrf.mxu0
      %v581 = vpop.f32.mrf.mxu0
      %v582 = vadd.f32 0.0, %v581
      %v583 = vpop.f32.mrf.mxu0
      %584 = vdwg.mxu0
      %v585 = vadd.f32 %v354, %v579
      %v586 = vadd.f32 %v354, %v582
      %s587 = scalar_lea.vmem %s2, 64
      %v588 = vld [vmem:[%s587] sm:$0xf]
      %v589 = vld [vmem:[%s587 + $0x4] sm:$0xf]
      %v590 = vld [vmem:[%s587 + $0x8] sm:$0xf]
      %v591 = vld [vmem:[%s587 + $0xc] sm:$0xf]
      %v592 = vld [vmem:[%s587 + $0x10] sm:$0xf]
      %v593 = vld [vmem:[%s587 + $0x14] sm:$0xf]
      %v594 = vld [vmem:[%s587 + $0x18] sm:$0xf]
      %v595 = vld [vmem:[%s587 + $0x1c] sm:$0xf]
      %v596 = vld [vmem:[%s587 + $0x20] sm:$0xf]
      %v597 = vld [vmem:[%s587 + $0x24] sm:$0xf]
      %v598 = vld [vmem:[%s587 + $0x28] sm:$0xf]
      %v599 = vld [vmem:[%s587 + $0x2c] sm:$0xf]
      %v600 = vld [vmem:[%s587 + $0x30] sm:$0xf]
      %v601 = vld [vmem:[%s587 + $0x34] sm:$0xf]
      %v602 = vld [vmem:[%s587 + $0x38] sm:$0xf]
      %v603 = vld [vmem:[%s587 + $0x3c] sm:$0xf]
      %vm606 = vcmask 1046528
      %v607 = vrot.slane %v243, 1
      %v608 = vrot.slane %v244, 1
      %v609 = vsel %vm606, %v607, %v608
      %v627 = vunpack.c.l.b16 %v588
      %v628 = vunpack.c.l.b16 %v589
      %v629 = vunpack.c.l.b16 %v590
      %v630 = vunpack.c.l.b16 %v591
      %v631 = vunpack.c.l.b16 %v592
      %v632 = vunpack.c.l.b16 %v593
      %v633 = vunpack.c.l.b16 %v594
      %v634 = vunpack.c.l.b16 %v595
      %v635 = vunpack.c.l.b16 %v596
      %v636 = vunpack.c.l.b16 %v597
      %v637 = vunpack.c.l.b16 %v598
      %v638 = vunpack.c.l.b16 %v599
      %v639 = vunpack.c.l.b16 %v600
      %v640 = vunpack.c.l.b16 %v601
      %v641 = vunpack.c.l.b16 %v602
      %v642 = vunpack.c.l.b16 %v603
      %v643 = vpack.c.b16 %v628, %v627
      %v644 = vpack.c.b16 %v630, %v629
      %v645 = vpack.c.b16 %v632, %v631
      %v646 = vpack.c.b16 %v634, %v633
      %v647 = vpack.c.b16 %v636, %v635
      %v648 = vpack.c.b16 %v638, %v637
      %v649 = vpack.c.b16 %v640, %v639
      %v650 = vpack.c.b16 %v642, %v641
      %659 = vmatprep.subr.bf16.mxu0 0
      %660 = vmatpush1.bf16.msra.mxu0 %v650
      %661 = vmatprep.subr.bf16.mxu0 0
      %662 = vmatpush1.bf16.msra.mxu0 %v649
      %663 = vmatprep.subr.bf16.mxu0 0
      %664 = vmatpush1.bf16.msra.mxu0 %v648
      %665 = vmatprep.subr.bf16.mxu0 0
      %666 = vmatpush1.bf16.msra.mxu0 %v647
      %667 = vmatprep.subr.bf16.mxu0 0
      %668 = vmatpush1.bf16.msra.mxu0 %v646
      %669 = vmatprep.subr.bf16.mxu0 0
      %670 = vmatpush1.bf16.msra.mxu0 %v645
      %671 = vmatprep.subr.bf16.mxu0 0
      %672 = vmatpush1.bf16.msra.mxu0 %v644
      %673 = vmatprep.subr.bf16.mxu0 0
      %674 = vmatpush1.bf16.msra.mxu0 %v643
      %675 = vmatprep.subr.bf16.mxu0 0
      %676 = vmatpush2.bf16.msra.mxu0 0
      %677 = vmatprep.subr.bf16.mxu0 0
      %678 = vmatpush2.bf16.msra.mxu0 0
      %679 = vmatprep.subr.bf16.mxu0 0
      %680 = vmatpush2.bf16.msra.mxu0 0
      %681 = vmatprep.subr.bf16.mxu0 0
      %682 = vmatpush2.bf16.msra.mxu0 0
      %683 = vmatprep.subr.bf16.mxu0 0
      %684 = vmatpush2.bf16.msra.mxu0 0
      %685 = vmatprep.subr.bf16.mxu0 0
      %686 = vmatpush2.bf16.msra.mxu0 0
      %687 = vmatprep.subr.bf16.mxu0 0
      %688 = vmatpush2.bf16.msra.mxu0 0
      %689 = vmatprep.subr.bf16.mxu0 0
      %690 = vmatpush2.bf16.msra.mxu0 0
      %691 = vmatprep.mubr.bf16.mxu0 0
      %692 = vmatmul.mubr.bf16.gmra.mxu0 %v609
      %v693 = vpop.f32.mrf.mxu0
      %v694 = vadd.f32 0.0, %v693
      %v695 = vpop.f32.mrf.mxu0
      %v696 = vpop.f32.mrf.mxu0
      %v697 = vadd.f32 0.0, %v696
      %v698 = vpop.f32.mrf.mxu0
      %699 = vdwg.mxu0
      %v700 = vadd.f32 %v585, %v694
      %v701 = vadd.f32 %v586, %v697
      %702 = vst [vmem:[%s232] sm:$0xff] %v478
      %703 = vst [vmem:[%s232 + $0x8] sm:$0xff] %v479
      %704 = vst [vmem:[%s237] sm:$0xff] %v700
      %705 = vst [vmem:[%s237 + $0x8] sm:$0xff] %v701
      %p706 = scmp.lt.s32.totalorder %s17, 1
      %s707 = scalar_select %p706, %s17, 1
      %s708 = smul.addr %s707, 2
      %s709 = smul.addr %s708, 8
      %s710 = scalar_lea.vmem %s4, %s709
      %p711 = scmp.lt.s32.totalorder %s17, 1
      %s712 = scalar_select %p711, %s17, 1
      %s713 = smul.addr %s712, 2
      %s714 = smul.addr %s713, 8
      %s715 = scalar_lea.vmem %s5, %s714
      // Predicated region
      $region37: #{spatial_transformer_human_vqvae_forward.33} parent=35 // pred_check
        %p716 = pneg %p124
      $region38: #{spatial_transformer_human_vqvae_forward.33} parent=35 // pred_check_branch
        %718 = sbr.rel (%p716) target = $region40
      $region39: #{spatial_transformer_human_vqvae_forward.33} parent=35 // pred_region
        _
      $region40: #{spatial_transformer_human_vqvae_forward.33} parent=35 // pred_fallthru
        _
      // Predicated region
      $region41: #{spatial_transformer_human_vqvae_forward.33} parent=35 // pred_check
        %p719 = pneg %p150
      $region42: #{spatial_transformer_human_vqvae_forward.33} parent=35 // pred_check_branch
        %721 = sbr.rel (%p719) target = $region44
      $region43: #{spatial_transformer_human_vqvae_forward.33} parent=35 // pred_region
        _
      $region44: #{spatial_transformer_human_vqvae_forward.33} parent=35 // pred_fallthru
        _
    $region36: #{spatial_transformer_human_vqvae_forward.33} parent=5 // pred_fallthru
      _
    %p722 = scmp.le.s32.totalorder 2, %s12
    // Predicated region
    $region45: #{spatial_transformer_human_vqvae_forward.33} parent=5 // pred_check
      %p723 = pneg %p722
    $region46: #{spatial_transformer_human_vqvae_forward.33} parent=5 // pred_check_branch
      %725 = sbr.rel (%p723) target = $region48
    $region47: #{spatial_transformer_human_vqvae_forward.33} parent=5 // pred_region
      %s726 = ssub.s32 %s12, 2
      // Predicated region
      $region49: #{spatial_transformer_human_vqvae_forward.33} parent=47 // pred_check
        %p727 = pneg %p130
      $region50: #{spatial_transformer_human_vqvae_forward.33} parent=47 // pred_check_branch
        %729 = sbr.rel (%p727) target = $region52
      $region51: #{spatial_transformer_human_vqvae_forward.33} parent=47 // pred_region
        %p730 = scmp.lt.s32.totalorder %s18, 1
        %s731 = scalar_select %p730, %s18, 1
        %s732 = smul.addr %s731, 2
        %s733 = smul.addr %s732, 8
        %s734 = scalar_lea.vmem %s4, %s733
      $region52: #{spatial_transformer_human_vqvae_forward.33} parent=47 // pred_fallthru
        _
      // Predicated region
      $region53: #{spatial_transformer_human_vqvae_forward.33} parent=47 // pred_check
        %p735 = pneg %p156
      $region54: #{spatial_transformer_human_vqvae_forward.33} parent=47 // pred_check_branch
        %737 = sbr.rel (%p735) target = $region56
      $region55: #{spatial_transformer_human_vqvae_forward.33} parent=47 // pred_region
        %p738 = scmp.lt.s32.totalorder %s18, 1
        %s739 = scalar_select %p738, %s18, 1
        %s740 = smul.addr %s739, 2
        %s741 = smul.addr %s740, 8
        %s742 = scalar_lea.vmem %s5, %s741
      $region56: #{spatial_transformer_human_vqvae_forward.33} parent=47 // pred_fallthru
        _
    $region48: #{spatial_transformer_human_vqvae_forward.33} parent=5 // pred_fallthru
      _
  $region6: #{spatial_transformer_human_vqvae_forward.33} parent=0 // loop_footer
    %s16 = sadd.s32 1, %s12
  $region7: #{spatial_transformer_human_vqvae_forward.33} parent=0 // loop_footer_branch
    %11 = sbr.rel target = $region3
  $region8: #{spatial_transformer_human_vqvae_forward.33} parent=0 // loop_exit
    _

// kernel: spatial_transformer_human_vqvae_forward.35
$region0: #{spatial_transformer_human_vqvae_forward.35}
  #allocation0 [shape = 'u32[]', space=smem, size = 0x4, offset = 0x4, fixed_abs, tag = 'smem constant byte address 0x4 - core index']
  #allocation1 [shape = 'u32[144,128]{1,0:T(1,128)}', space=vmem, size = 0x12000, scoped, tag = 'internal scratch']
  %s0 = inlined_call_operand.vmem [shape: f32[2,34,128], index: 0, kind: input, shape index: {}]
  %s1 = inlined_call_operand.vmem [shape: bf16[3,128,128], index: 1, kind: input, shape index: {}]
  %s2 = inlined_call_operand.vmem [shape: f32[1,128], index: 2, kind: input, shape index: {}]
  %s3 = inlined_call_operand.vmem [shape: f32[2,32,128], index: 3, kind: output, shape index: {}]
  %s4 = sld [smem:[#allocation0]]
  $region45: #{spatial_transformer_human_vqvae_forward.35} parent=0
    _
  %s6 = ssub.s32 1, %s4
  %s7 = scalar_select 0, %s6, %s4
  loop: start=0, step=1, limit=4
  $region2: #{spatial_transformer_human_vqvae_forward.35} parent=0 // loop_pre_header
    _
  $region3: #{spatial_transformer_human_vqvae_forward.35} parent=0 // loop_header
    %s9 = sphi 0, %s13
    %p10 = scmp.ge.s32.totalorder %s9, 4
    %s19 = sphi 0, %s21
    %s22 = sphi 0, %s19
    %s23 = sphi 0, %s22
    %s39 = sphi 0, %s23
    %s43 = sphi 0, %s43
    %s45 = sphi 0, %s43
    %s46 = sphi 0, %s45
    %s60 = sphi 0, %s46
    %s64 = sphi 0, %s64
    %s66 = sphi 0, %s64
    %s67 = sphi 0, %s66
    %s81 = sphi 0, %s67
    %s87 = sphi 0, %s89
    %s90 = sphi 0, %s87
    %s91 = sphi 0, %s90
    %s107 = sphi 0, %s91
  $region4: #{spatial_transformer_human_vqvae_forward.35} parent=0 // loop_header_branch
    %12 = sbr.rel (%p10) target = $region8
  $region5: #{spatial_transformer_human_vqvae_forward.35} parent=0 // loop_body
    %s14 = ssub.s32 %s9, 1
    %s15 = ssub.s32 %s9, 2
    %s16 = sadd.s32 %s9, 1
    %s17 = ssub.s32 %s9, %s16
    %p18 = scmp.eq.s32.totalorder %s17, 0
    %s20 = sadd.s32 %s19, 1
    %s21 = scalar_select %p18, %s19, %s20
    %p24 = pneg %p18
    %p25 = scmp.eq.s32.totalorder %s9, 1
    %p26 = por %p24, %p25
    %p27 = scmp.ne.s32.totalorder %s19, %s22
    %p28 = scmp.eq.s32.totalorder %s9, 0
    %p29 = por %p27, %p28
    %p30 = scmp.ne.s32.totalorder %s19, %s22
    %p31 = scmp.eq.s32.totalorder %s14, 1
    %p32 = por %p30, %p31
    %p33 = scmp.ne.s32.totalorder %s22, %s23
    %p34 = scmp.eq.s32.totalorder %s14, 0
    %p35 = por %p33, %p34
    %p36 = scmp.ne.s32.totalorder %s22, %s23
    %p37 = scmp.eq.s32.totalorder %s15, 1
    %p38 = por %p36, %p37
    %p40 = scmp.ne.s32.totalorder %s23, %s39
    %p41 = scmp.eq.s32.totalorder %s15, 0
    %p42 = por %p40, %p41
    %s44 = sadd.s32 %s43, 1
    %p47 = scmp.eq.s32.totalorder %s9, 1
    %p48 = scmp.ne.s32.totalorder %s43, %s45
    %p49 = scmp.eq.s32.totalorder %s9, 0
    %p50 = por %p48, %p49
    %p51 = scmp.ne.s32.totalorder %s43, %s45
    %p52 = scmp.eq.s32.totalorder %s14, 1
    %p53 = por %p51, %p52
    %p54 = scmp.ne.s32.totalorder %s45, %s46
    %p55 = scmp.eq.s32.totalorder %s14, 0
    %p56 = por %p54, %p55
    %p57 = scmp.ne.s32.totalorder %s45, %s46
    %p58 = scmp.eq.s32.totalorder %s15, 1
    %p59 = por %p57, %p58
    %p61 = scmp.ne.s32.totalorder %s46, %s60
    %p62 = scmp.eq.s32.totalorder %s15, 0
    %p63 = por %p61, %p62
    %s65 = sadd.s32 %s64, 1
    %p68 = scmp.eq.s32.totalorder %s9, 1
    %p69 = scmp.ne.s32.totalorder %s64, %s66
    %p70 = scmp.eq.s32.totalorder %s9, 0
    %p71 = por %p69, %p70
    %p72 = scmp.ne.s32.totalorder %s64, %s66
    %p73 = scmp.eq.s32.totalorder %s14, 1
    %p74 = por %p72, %p73
    %p75 = scmp.ne.s32.totalorder %s66, %s67
    %p76 = scmp.eq.s32.totalorder %s14, 0
    %p77 = por %p75, %p76
    %p78 = scmp.ne.s32.totalorder %s66, %s67
    %p79 = scmp.eq.s32.totalorder %s15, 1
    %p80 = por %p78, %p79
    %p82 = scmp.ne.s32.totalorder %s67, %s81
    %p83 = scmp.eq.s32.totalorder %s15, 0
    %p84 = por %p82, %p83
    %s85 = ssub.s32 %s9, %s16
    %p86 = scmp.eq.s32.totalorder %s85, 0
    %s88 = sadd.s32 %s87, 1
    %s89 = scalar_select %p86, %s87, %s88
    %p92 = pneg %p86
    %p93 = scmp.eq.s32.totalorder %s9, 1
    %p94 = por %p92, %p93
    %p95 = scmp.ne.s32.totalorder %s87, %s90
    %p96 = scmp.eq.s32.totalorder %s9, 0
    %p97 = por %p95, %p96
    %p98 = scmp.ne.s32.totalorder %s87, %s90
    %p99 = scmp.eq.s32.totalorder %s14, 1
    %p100 = por %p98, %p99
    %p101 = scmp.ne.s32.totalorder %s90, %s91
    %p102 = scmp.eq.s32.totalorder %s14, 0
    %p103 = por %p101, %p102
    %p104 = scmp.ne.s32.totalorder %s90, %s91
    %p105 = scmp.eq.s32.totalorder %s15, 1
    %p106 = por %p104, %p105
    %p108 = scmp.ne.s32.totalorder %s91, %s107
    %p109 = scmp.eq.s32.totalorder %s15, 0
    %p110 = por %p108, %p109
    %p111 = scmp.le.s32.totalorder 1, %s9
    %p112 = scmp.lt.s32.totalorder %s9, 3
    %p113 = pnand %p111, %p112
    %p114 = pneg %p113
    // Predicated region
    $region9: #{spatial_transformer_human_vqvae_forward.35} parent=5 // pred_check
      _
    $region10: #{spatial_transformer_human_vqvae_forward.35} parent=5 // pred_check_branch
      %116 = sbr.rel (%p113) target = $region12
    $region11: #{spatial_transformer_human_vqvae_forward.35} parent=5 // pred_region
      %s117 = ssub.s32 %s9, 1
      // Predicated region
      $region13: #{spatial_transformer_human_vqvae_forward.35} parent=11 // pred_check
        %p118 = pneg %p56
      $region14: #{spatial_transformer_human_vqvae_forward.35} parent=11 // pred_check_branch
        %120 = sbr.rel (%p118) target = $region16
      $region15: #{spatial_transformer_human_vqvae_forward.35} parent=11 // pred_region
        _
      $region16: #{spatial_transformer_human_vqvae_forward.35} parent=11 // pred_fallthru
        _
      // Predicated region
      $region17: #{spatial_transformer_human_vqvae_forward.35} parent=11 // pred_check
        %p121 = pneg %p77
      $region18: #{spatial_transformer_human_vqvae_forward.35} parent=11 // pred_check_branch
        %123 = sbr.rel (%p121) target = $region20
      $region19: #{spatial_transformer_human_vqvae_forward.35} parent=11 // pred_region
        _
      $region20: #{spatial_transformer_human_vqvae_forward.35} parent=11 // pred_fallthru
        _
    $region12: #{spatial_transformer_human_vqvae_forward.35} parent=5 // pred_fallthru
      _
    %p124 = scmp.lt.s32.totalorder %s9, 2
    // Predicated region
    $region21: #{spatial_transformer_human_vqvae_forward.35} parent=5 // pred_check
      %p125 = pneg %p124
    $region22: #{spatial_transformer_human_vqvae_forward.35} parent=5 // pred_check_branch
      %127 = sbr.rel (%p125) target = $region24
    $region23: #{spatial_transformer_human_vqvae_forward.35} parent=5 // pred_region
      // Predicated region
      $region25: #{spatial_transformer_human_vqvae_forward.35} parent=23 // pred_check
        %p128 = pneg %p29
      $region26: #{spatial_transformer_human_vqvae_forward.35} parent=23 // pred_check_branch
        %130 = sbr.rel (%p128) target = $region28
      $region27: #{spatial_transformer_human_vqvae_forward.35} parent=23 // pred_region
        %p131 = scmp.lt.s32.totalorder %s9, 1
        %s132 = scalar_select %p131, %s9, 1
        %s133 = smul.addr %s132, 5
        %s134 = smul.addr %s133, 8
        %s135 = scalar_lea.vmem %s0, %s134
      $region28: #{spatial_transformer_human_vqvae_forward.35} parent=23 // pred_fallthru
        _
    $region24: #{spatial_transformer_human_vqvae_forward.35} parent=5 // pred_fallthru
      _
    %p136 = scmp.le.s32.totalorder 1, %s9
    %p137 = scmp.lt.s32.totalorder %s9, 3
    %p138 = pnand %p136, %p137
    %p139 = pneg %p138
    // Predicated region
    $region29: #{spatial_transformer_human_vqvae_forward.35} parent=5 // pred_check
      _
    $region30: #{spatial_transformer_human_vqvae_forward.35} parent=5 // pred_check_branch
      %141 = sbr.rel (%p138) target = $region32
    $region31: #{spatial_transformer_human_vqvae_forward.35} parent=5 // pred_region
      %s142 = ssub.s32 %s9, 1
      %p143 = scmp.lt.s32.totalorder %s14, 1
      %s144 = scalar_select %p143, %s14, 1
      %s145 = smul.addr %s144, 5
      %s146 = smul.addr %s145, 8
      %s147 = scalar_lea.vmem %s0, %s146
      %p148 = pneg %p35
      %p149 = pneg %p32
      %p150 = pneg %p56
      %p151 = pneg %p53
      %p152 = pneg %p77
      %p153 = pneg %p74
      %p154 = pneg %p103
      %p155 = pneg %p100
      %p156 = scmp.lt.s32.totalorder %s14, 1
      %s157 = scalar_select %p156, %s14, 1
      %s158 = smul.addr %s157, 4
      %s159 = smul.addr %s158, 8
      %s160 = scalar_lea.vmem %s3, %s159
      %p161 = scmp.lt.s32.totalorder %s14, 1
      %s162 = scalar_select %p161, %s14, 1
      %s163 = smul.addr %s162, 5
      %s164 = smul.addr %s163, 8
      %s165 = scalar_lea.vmem %s0, %s164
      %p166 = scmp.lt.s32.totalorder %s14, 1
      %s167 = scalar_select %p166, %s14, 1
      %s168 = smul.addr %s167, 4
      %s169 = smul.addr %s168, 8
      %s170 = scalar_lea.vmem %s3, %s169
      %v172 = vld [vmem:[%s165] sm:$0xff]
      %v173 = vld [vmem:[%s165 + $0x8] sm:$0xff]
      %v174 = vld [vmem:[%s165 + $0x10] sm:$0xff]
      %v175 = vld [vmem:[%s165 + $0x18] sm:$0xff]
      %v176 = vld [vmem:[%s165 + $0x20] sm:$0x3]
      %v177 = vld [vmem:[%s2] sm:$0x1]
      %v178 = vpack.c.bf16 %v173, %v172
      %v179 = vpack.c.bf16 %v175, %v174
      %v180 = vld [vmem:[%s1] sm:$0xf]
      %v181 = vld [vmem:[%s1 + $0x4] sm:$0xf]
      %v182 = vld [vmem:[%s1 + $0x8] sm:$0xf]
      %v183 = vld [vmem:[%s1 + $0xc] sm:$0xf]
      %v184 = vld [vmem:[%s1 + $0x10] sm:$0xf]
      %v185 = vld [vmem:[%s1 + $0x14] sm:$0xf]
      %v186 = vld [vmem:[%s1 + $0x18] sm:$0xf]
      %v187 = vld [vmem:[%s1 + $0x1c] sm:$0xf]
      %v188 = vld [vmem:[%s1 + $0x20] sm:$0xf]
      %v189 = vld [vmem:[%s1 + $0x24] sm:$0xf]
      %v190 = vld [vmem:[%s1 + $0x28] sm:$0xf]
      %v191 = vld [vmem:[%s1 + $0x2c] sm:$0xf]
      %v192 = vld [vmem:[%s1 + $0x30] sm:$0xf]
      %v193 = vld [vmem:[%s1 + $0x34] sm:$0xf]
      %v194 = vld [vmem:[%s1 + $0x38] sm:$0xf]
      %v195 = vld [vmem:[%s1 + $0x3c] sm:$0xf]
      %v212 = vunpack.c.l.b16 %v180
      %v213 = vunpack.c.l.b16 %v181
      %v214 = vunpack.c.l.b16 %v182
      %v215 = vunpack.c.l.b16 %v183
      %v216 = vunpack.c.l.b16 %v184
      %v217 = vunpack.c.l.b16 %v185
      %v218 = vunpack.c.l.b16 %v186
      %v219 = vunpack.c.l.b16 %v187
      %v220 = vunpack.c.l.b16 %v188
      %v221 = vunpack.c.l.b16 %v189
      %v222 = vunpack.c.l.b16 %v190
      %v223 = vunpack.c.l.b16 %v191
      %v224 = vunpack.c.l.b16 %v192
      %v225 = vunpack.c.l.b16 %v193
      %v226 = vunpack.c.l.b16 %v194
      %v227 = vunpack.c.l.b16 %v195
      %v228 = vpack.c.b16 %v213, %v212
      %v229 = vpack.c.b16 %v215, %v214
      %v230 = vpack.c.b16 %v217, %v216
      %v231 = vpack.c.b16 %v219, %v218
      %v232 = vpack.c.b16 %v221, %v220
      %v233 = vpack.c.b16 %v223, %v222
      %v234 = vpack.c.b16 %v225, %v224
      %v235 = vpack.c.b16 %v227, %v226
      %244 = vmatprep.subr.bf16.mxu0 0
      %245 = vmatpush1.bf16.msra.mxu0 %v235
      %246 = vmatprep.subr.bf16.mxu0 0
      %247 = vmatpush1.bf16.msra.mxu0 %v234
      %248 = vmatprep.subr.bf16.mxu0 0
      %249 = vmatpush1.bf16.msra.mxu0 %v233
      %250 = vmatprep.subr.bf16.mxu0 0
      %251 = vmatpush1.bf16.msra.mxu0 %v232
      %252 = vmatprep.subr.bf16.mxu0 0
      %253 = vmatpush1.bf16.msra.mxu0 %v231
      %254 = vmatprep.subr.bf16.mxu0 0
      %255 = vmatpush1.bf16.msra.mxu0 %v230
      %256 = vmatprep.subr.bf16.mxu0 0
      %257 = vmatpush1.bf16.msra.mxu0 %v229
      %258 = vmatprep.subr.bf16.mxu0 0
      %259 = vmatpush1.bf16.msra.mxu0 %v228
      %260 = vmatprep.subr.bf16.mxu0 0
      %261 = vmatpush2.bf16.msra.mxu0 0
      %262 = vmatprep.subr.bf16.mxu0 0
      %263 = vmatpush2.bf16.msra.mxu0 0
      %264 = vmatprep.subr.bf16.mxu0 0
      %265 = vmatpush2.bf16.msra.mxu0 0
      %266 = vmatprep.subr.bf16.mxu0 0
      %267 = vmatpush2.bf16.msra.mxu0 0
      %268 = vmatprep.subr.bf16.mxu0 0
      %269 = vmatpush2.bf16.msra.mxu0 0
      %270 = vmatprep.subr.bf16.mxu0 0
      %271 = vmatpush2.bf16.msra.mxu0 0
      %272 = vmatprep.subr.bf16.mxu0 0
      %273 = vmatpush2.bf16.msra.mxu0 0
      %274 = vmatprep.subr.bf16.mxu0 0
      %275 = vmatpush2.bf16.msra.mxu0 0
      %276 = vmatprep.mubr.bf16.mxu0 0
      %277 = vmatmul.mubr.bf16.gmra.mxu0 %v178
      %v278 = vpop.f32.mrf.mxu0
      %v279 = vadd.f32 0.0, %v278
      %v280 = vpop.f32.mrf.mxu0
      %v281 = vpop.f32.mrf.mxu0
      %v282 = vadd.f32 0.0, %v281
      %v283 = vpop.f32.mrf.mxu0
      %284 = vmatprep.mubr.bf16.mxu0 0
      %285 = vmatmul.mubr.bf16.gmra.mxu0 %v179
      %v286 = vpop.f32.mrf.mxu0
      %v287 = vadd.f32 0.0, %v286
      %v288 = vpop.f32.mrf.mxu0
      %v289 = vpop.f32.mrf.mxu0
      %v290 = vadd.f32 0.0, %v289
      %v291 = vpop.f32.mrf.mxu0
      %292 = vdwg.mxu0
      %v294 = vlaneseq
      %v295 = vshrl.u32 %v294, 7
      %v296 = vsub.s32 0, %v295
      %v297 = vrot.slane %v177, %v296
      %v299 = vadd.f32 %v297, %v279
      %v300 = vadd.f32 %v297, %v282
      %v301 = vadd.f32 %v297, %v287
      %v302 = vadd.f32 %v297, %v290
      %v303 = vpack.c.bf16 %v176, %v176
      %s304 = scalar_lea.vmem %s1, 64
      %v305 = vld [vmem:[%s304] sm:$0xf]
      %v306 = vld [vmem:[%s304 + $0x4] sm:$0xf]
      %v307 = vld [vmem:[%s304 + $0x8] sm:$0xf]
      %v308 = vld [vmem:[%s304 + $0xc] sm:$0xf]
      %v309 = vld [vmem:[%s304 + $0x10] sm:$0xf]
      %v310 = vld [vmem:[%s304 + $0x14] sm:$0xf]
      %v311 = vld [vmem:[%s304 + $0x18] sm:$0xf]
      %v312 = vld [vmem:[%s304 + $0x1c] sm:$0xf]
      %v313 = vld [vmem:[%s304 + $0x20] sm:$0xf]
      %v314 = vld [vmem:[%s304 + $0x24] sm:$0xf]
      %v315 = vld [vmem:[%s304 + $0x28] sm:$0xf]
      %v316 = vld [vmem:[%s304 + $0x2c] sm:$0xf]
      %v317 = vld [vmem:[%s304 + $0x30] sm:$0xf]
      %v318 = vld [vmem:[%s304 + $0x34] sm:$0xf]
      %v319 = vld [vmem:[%s304 + $0x38] sm:$0xf]
      %v320 = vld [vmem:[%s304 + $0x3c] sm:$0xf]
      %vm321 = vsmask.f32 7424
      %v323 = vshrl.u32 %v178, 16
      %v325 = vshll.u32 %v178, 16
      %v327 = vrot.slane %v325, 1
      %v328 = vor.u32 %v323, %v327
      %v330 = vshll.u32 %v179, 16
      %v332 = vrot.slane %v330, 1
      %v333 = vsel %vm321, %v328, %v332
      %v334 = vshrl.u32 %v179, 16
      %v336 = vor.u32 %v334, %v332
      %v338 = vshll.u32 %v303, 16
      %v340 = vrot.slane %v338, 1
      %v341 = vsel %vm321, %v336, %v340
      %v360 = vunpack.c.l.b16 %v305
      %v361 = vunpack.c.l.b16 %v306
      %v362 = vunpack.c.l.b16 %v307
      %v363 = vunpack.c.l.b16 %v308
      %v364 = vunpack.c.l.b16 %v309
      %v365 = vunpack.c.l.b16 %v310
      %v366 = vunpack.c.l.b16 %v311
      %v367 = vunpack.c.l.b16 %v312
      %v368 = vunpack.c.l.b16 %v313
      %v369 = vunpack.c.l.b16 %v314
      %v370 = vunpack.c.l.b16 %v315
      %v371 = vunpack.c.l.b16 %v316
      %v372 = vunpack.c.l.b16 %v317
      %v373 = vunpack.c.l.b16 %v318
      %v374 = vunpack.c.l.b16 %v319
      %v375 = vunpack.c.l.b16 %v320
      %v376 = vpack.c.b16 %v361, %v360
      %v377 = vpack.c.b16 %v363, %v362
      %v378 = vpack.c.b16 %v365, %v364
      %v379 = vpack.c.b16 %v367, %v366
      %v380 = vpack.c.b16 %v369, %v368
      %v381 = vpack.c.b16 %v371, %v370
      %v382 = vpack.c.b16 %v373, %v372
      %v383 = vpack.c.b16 %v375, %v374
      %392 = vmatprep.subr.bf16.mxu0 0
      %393 = vmatpush1.bf16.msra.mxu0 %v383
      %394 = vmatprep.subr.bf16.mxu0 0
      %395 = vmatpush1.bf16.msra.mxu0 %v382
      %396 = vmatprep.subr.bf16.mxu0 0
      %397 = vmatpush1.bf16.msra.mxu0 %v381
      %398 = vmatprep.subr.bf16.mxu0 0
      %399 = vmatpush1.bf16.msra.mxu0 %v380
      %400 = vmatprep.subr.bf16.mxu0 0
      %401 = vmatpush1.bf16.msra.mxu0 %v379
      %402 = vmatprep.subr.bf16.mxu0 0
      %403 = vmatpush1.bf16.msra.mxu0 %v378
      %404 = vmatprep.subr.bf16.mxu0 0
      %405 = vmatpush1.bf16.msra.mxu0 %v377
      %406 = vmatprep.subr.bf16.mxu0 0
      %407 = vmatpush1.bf16.msra.mxu0 %v376
      %408 = vmatprep.subr.bf16.mxu0 0
      %409 = vmatpush2.bf16.msra.mxu0 0
      %410 = vmatprep.subr.bf16.mxu0 0
      %411 = vmatpush2.bf16.msra.mxu0 0
      %412 = vmatprep.subr.bf16.mxu0 0
      %413 = vmatpush2.bf16.msra.mxu0 0
      %414 = vmatprep.subr.bf16.mxu0 0
      %415 = vmatpush2.bf16.msra.mxu0 0
      %416 = vmatprep.subr.bf16.mxu0 0
      %417 = vmatpush2.bf16.msra.mxu0 0
      %418 = vmatprep.subr.bf16.mxu0 0
      %419 = vmatpush2.bf16.msra.mxu0 0
      %420 = vmatprep.subr.bf16.mxu0 0
      %421 = vmatpush2.bf16.msra.mxu0 0
      %422 = vmatprep.subr.bf16.mxu0 0
      %423 = vmatpush2.bf16.msra.mxu0 0
      %424 = vmatprep.mubr.bf16.mxu0 0
      %425 = vmatmul.mubr.bf16.gmra.mxu0 %v333
      %v426 = vpop.f32.mrf.mxu0
      %v427 = vadd.f32 0.0, %v426
      %v428 = vpop.f32.mrf.mxu0
      %v429 = vpop.f32.mrf.mxu0
      %v430 = vadd.f32 0.0, %v429
      %v431 = vpop.f32.mrf.mxu0
      %432 = vmatprep.mubr.bf16.mxu0 0
      %433 = vmatmul.mubr.bf16.gmra.mxu0 %v341
      %v434 = vpop.f32.mrf.mxu0
      %v435 = vadd.f32 0.0, %v434
      %v436 = vpop.f32.mrf.mxu0
      %v437 = vpop.f32.mrf.mxu0
      %v438 = vadd.f32 0.0, %v437
      %v439 = vpop.f32.mrf.mxu0
      %440 = vdwg.mxu0
      %v441 = vadd.f32 %v299, %v427
      %v442 = vadd.f32 %v300, %v430
      %v443 = vadd.f32 %v301, %v435
      %v444 = vadd.f32 %v302, %v438
      %s445 = scalar_lea.vmem %s1, 128
      %v446 = vld [vmem:[%s445] sm:$0xf]
      %v447 = vld [vmem:[%s445 + $0x4] sm:$0xf]
      %v448 = vld [vmem:[%s445 + $0x8] sm:$0xf]
      %v449 = vld [vmem:[%s445 + $0xc] sm:$0xf]
      %v450 = vld [vmem:[%s445 + $0x10] sm:$0xf]
      %v451 = vld [vmem:[%s445 + $0x14] sm:$0xf]
      %v452 = vld [vmem:[%s445 + $0x18] sm:$0xf]
      %v453 = vld [vmem:[%s445 + $0x1c] sm:$0xf]
      %v454 = vld [vmem:[%s445 + $0x20] sm:$0xf]
      %v455 = vld [vmem:[%s445 + $0x24] sm:$0xf]
      %v456 = vld [vmem:[%s445 + $0x28] sm:$0xf]
      %v457 = vld [vmem:[%s445 + $0x2c] sm:$0xf]
      %v458 = vld [vmem:[%s445 + $0x30] sm:$0xf]
      %v459 = vld [vmem:[%s445 + $0x34] sm:$0xf]
      %v460 = vld [vmem:[%s445 + $0x38] sm:$0xf]
      %v461 = vld [vmem:[%s445 + $0x3c] sm:$0xf]
      %vm465 = vcmask 1046528
      %v466 = vrot.slane %v178, 1
      %v467 = vrot.slane %v179, 1
      %v468 = vsel %vm465, %v466, %v467
      %v469 = vrot.slane %v303, 1
      %v470 = vsel %vm465, %v467, %v469
      %v489 = vunpack.c.l.b16 %v446
      %v490 = vunpack.c.l.b16 %v447
      %v491 = vunpack.c.l.b16 %v448
      %v492 = vunpack.c.l.b16 %v449
      %v493 = vunpack.c.l.b16 %v450
      %v494 = vunpack.c.l.b16 %v451
      %v495 = vunpack.c.l.b16 %v452
      %v496 = vunpack.c.l.b16 %v453
      %v497 = vunpack.c.l.b16 %v454
      %v498 = vunpack.c.l.b16 %v455
      %v499 = vunpack.c.l.b16 %v456
      %v500 = vunpack.c.l.b16 %v457
      %v501 = vunpack.c.l.b16 %v458
      %v502 = vunpack.c.l.b16 %v459
      %v503 = vunpack.c.l.b16 %v460
      %v504 = vunpack.c.l.b16 %v461
      %v505 = vpack.c.b16 %v490, %v489
      %v506 = vpack.c.b16 %v492, %v491
      %v507 = vpack.c.b16 %v494, %v493
      %v508 = vpack.c.b16 %v496, %v495
      %v509 = vpack.c.b16 %v498, %v497
      %v510 = vpack.c.b16 %v500, %v499
      %v511 = vpack.c.b16 %v502, %v501
      %v512 = vpack.c.b16 %v504, %v503
      %521 = vmatprep.subr.bf16.mxu0 0
      %522 = vmatpush1.bf16.msra.mxu0 %v512
      %523 = vmatprep.subr.bf16.mxu0 0
      %524 = vmatpush1.bf16.msra.mxu0 %v511
      %525 = vmatprep.subr.bf16.mxu0 0
      %526 = vmatpush1.bf16.msra.mxu0 %v510
      %527 = vmatprep.subr.bf16.mxu0 0
      %528 = vmatpush1.bf16.msra.mxu0 %v509
      %529 = vmatprep.subr.bf16.mxu0 0
      %530 = vmatpush1.bf16.msra.mxu0 %v508
      %531 = vmatprep.subr.bf16.mxu0 0
      %532 = vmatpush1.bf16.msra.mxu0 %v507
      %533 = vmatprep.subr.bf16.mxu0 0
      %534 = vmatpush1.bf16.msra.mxu0 %v506
      %535 = vmatprep.subr.bf16.mxu0 0
      %536 = vmatpush1.bf16.msra.mxu0 %v505
      %537 = vmatprep.subr.bf16.mxu0 0
      %538 = vmatpush2.bf16.msra.mxu0 0
      %539 = vmatprep.subr.bf16.mxu0 0
      %540 = vmatpush2.bf16.msra.mxu0 0
      %541 = vmatprep.subr.bf16.mxu0 0
      %542 = vmatpush2.bf16.msra.mxu0 0
      %543 = vmatprep.subr.bf16.mxu0 0
      %544 = vmatpush2.bf16.msra.mxu0 0
      %545 = vmatprep.subr.bf16.mxu0 0
      %546 = vmatpush2.bf16.msra.mxu0 0
      %547 = vmatprep.subr.bf16.mxu0 0
      %548 = vmatpush2.bf16.msra.mxu0 0
      %549 = vmatprep.subr.bf16.mxu0 0
      %550 = vmatpush2.bf16.msra.mxu0 0
      %551 = vmatprep.subr.bf16.mxu0 0
      %552 = vmatpush2.bf16.msra.mxu0 0
      %553 = vmatprep.mubr.bf16.mxu0 0
      %554 = vmatmul.mubr.bf16.gmra.mxu0 %v468
      %v555 = vpop.f32.mrf.mxu0
      %v556 = vadd.f32 0.0, %v555
      %v557 = vpop.f32.mrf.mxu0
      %v558 = vpop.f32.mrf.mxu0
      %v559 = vadd.f32 0.0, %v558
      %v560 = vpop.f32.mrf.mxu0
      %561 = vmatprep.mubr.bf16.mxu0 0
      %562 = vmatmul.mubr.bf16.gmra.mxu0 %v470
      %v563 = vpop.f32.mrf.mxu0
      %v564 = vadd.f32 0.0, %v563
      %v565 = vpop.f32.mrf.mxu0
      %v566 = vpop.f32.mrf.mxu0
      %v567 = vadd.f32 0.0, %v566
      %v568 = vpop.f32.mrf.mxu0
      %569 = vdwg.mxu0
      %v570 = vadd.f32 %v441, %v556
      %v571 = vadd.f32 %v442, %v559
      %v572 = vadd.f32 %v443, %v564
      %v573 = vadd.f32 %v444, %v567
      %574 = vst [vmem:[%s170] sm:$0xff] %v570
      %575 = vst [vmem:[%s170 + $0x8] sm:$0xff] %v571
      %576 = vst [vmem:[%s170 + $0x10] sm:$0xff] %v572
      %577 = vst [vmem:[%s170 + $0x18] sm:$0xff] %v573
      %p578 = scmp.lt.s32.totalorder %s14, 1
      %s579 = scalar_select %p578, %s14, 1
      %s580 = smul.addr %s579, 4
      %s581 = smul.addr %s580, 8
      %s582 = scalar_lea.vmem %s3, %s581
      // Predicated region
      $region33: #{spatial_transformer_human_vqvae_forward.35} parent=31 // pred_check
        %p583 = pneg %p100
      $region34: #{spatial_transformer_human_vqvae_forward.35} parent=31 // pred_check_branch
        %585 = sbr.rel (%p583) target = $region36
      $region35: #{spatial_transformer_human_vqvae_forward.35} parent=31 // pred_region
        _
      $region36: #{spatial_transformer_human_vqvae_forward.35} parent=31 // pred_fallthru
        _
    $region32: #{spatial_transformer_human_vqvae_forward.35} parent=5 // pred_fallthru
      _
    %p586 = scmp.le.s32.totalorder 2, %s9
    // Predicated region
    $region37: #{spatial_transformer_human_vqvae_forward.35} parent=5 // pred_check
      %p587 = pneg %p586
    $region38: #{spatial_transformer_human_vqvae_forward.35} parent=5 // pred_check_branch
      %589 = sbr.rel (%p587) target = $region40
    $region39: #{spatial_transformer_human_vqvae_forward.35} parent=5 // pred_region
      %s590 = ssub.s32 %s9, 2
      // Predicated region
      $region41: #{spatial_transformer_human_vqvae_forward.35} parent=39 // pred_check
        %p591 = pneg %p106
      $region42: #{spatial_transformer_human_vqvae_forward.35} parent=39 // pred_check_branch
        %593 = sbr.rel (%p591) target = $region44
      $region43: #{spatial_transformer_human_vqvae_forward.35} parent=39 // pred_region
        %p594 = scmp.lt.s32.totalorder %s15, 1
        %s595 = scalar_select %p594, %s15, 1
        %s596 = smul.addr %s595, 4
        %s597 = smul.addr %s596, 8
        %s598 = scalar_lea.vmem %s3, %s597
      $region44: #{spatial_transformer_human_vqvae_forward.35} parent=39 // pred_fallthru
        _
    $region40: #{spatial_transformer_human_vqvae_forward.35} parent=5 // pred_fallthru
      _
  $region6: #{spatial_transformer_human_vqvae_forward.35} parent=0 // loop_footer
    %s13 = sadd.s32 1, %s9
  $region7: #{spatial_transformer_human_vqvae_forward.35} parent=0 // loop_footer_branch
    %8 = sbr.rel target = $region3
  $region8: #{spatial_transformer_human_vqvae_forward.35} parent=0 // loop_exit
    _

</llo_original>
